<compile_context>
chip_gen: v6e
topology: v6e:2x2x1
jax: 0.10.0
libtpu: 0.0.40
codegen_flags: <defaults>
</compile_context>

<pallas_src>
import functools
import math

import numpy as np
import jax
import jax.numpy as jnp
from jax.experimental import pallas as pl
from jax.experimental.pallas import tpu as pltpu


# --------------------------------------------------------------------------
# configuration (small synthetic sizes, consistent with the module's forward)
# --------------------------------------------------------------------------
CFG = dict(
    batch=2,
    node_num=4,
    node_list=(4,),          # single-level spatial tree
    enc_in=2, dec_in=2, c_out=2,   # per-node variables
    seq_len=12, label_len=6, pred_len=6,
    d_model=32, n_heads=2, d_ff=64,
    e_layers=1, d_layers=1,
    enc_tcn_layers=1, dec_tcn_layers=1,
    moving_avg=5,
    factor_temporal=1, factor_spatial=1,
    dropout=0.0,             # eval mode -> dropout is identity
    activation="gelu",
    embed="timeF",
    num_time_features=2,
)

_PARALLEL = pltpu.CompilerParams(dimension_semantics=("parallel",))


def _activate(x, act):
    if act == "relu":
        return jnp.maximum(x, 0.0)
    if act == "gelu":
        # TODO(synk): tanh-approximate GELU fused in-kernel (EUP); differs from
        # torch's exact-erf F.gelu by <~1e-3 absolute.
        return jax.nn.gelu(x, approximate=True)
    return x


# --------------------------------------------------------------------------
# Pallas kernels
# --------------------------------------------------------------------------
def _linear_kernel(x_ref, w_ref, b_ref, o_ref, *, act):
    acc = jnp.dot(x_ref[...], w_ref[...], preferred_element_type=jnp.float32)
    acc = acc + b_ref[...]
    acc = _activate(acc, act)
    o_ref[...] = acc.astype(o_ref.dtype)


def pallas_linear(x, w, b=None, act=None):
    """y = act(x @ w + b); bf16 operands, f32 accumulation."""
    lead, K = x.shape[:-1], x.shape[-1]
    N = w.shape[-1]
    M = int(np.prod(lead)) if lead else 1
    x2 = x.reshape(M, K).astype(jnp.bfloat16)
    bias = (jnp.zeros((1, N), jnp.float32) if b is None
            else b.reshape(1, N).astype(jnp.float32))
    tm = 128 if M >= 128 else M           # VMEM-safe row tile; full rows for tiny M
    grid = (pl.cdiv(M, tm),)
    out = pl.pallas_call(
        functools.partial(_linear_kernel, act=act),
        grid=grid,
        in_specs=[
            pl.BlockSpec((tm, K), lambda i: (i, 0)),
            pl.BlockSpec((K, N), lambda i: (0, 0)),
            pl.BlockSpec((1, N), lambda i: (0, 0)),
        ],
        out_specs=pl.BlockSpec((tm, N), lambda i: (i, 0)),
        out_shape=jax.ShapeDtypeStruct((M, N), jnp.float32),
        compiler_params=_PARALLEL,
    )(x2, w.astype(jnp.bfloat16), bias)
    return out.reshape(lead + (N,))


def _ffn_kernel(x_ref, w1_ref, w2_ref, o_ref, *, act):
    """out = x + W2(act(W1(x))) -- conv1/conv2 (kernel 1) + residual fused."""
    x = x_ref[...]
    h = jnp.dot(x.astype(jnp.bfloat16), w1_ref[...], preferred_element_type=jnp.float32)
    h = _activate(h, act)
    y = jnp.dot(h.astype(jnp.bfloat16), w2_ref[...], preferred_element_type=jnp.float32)
    o_ref[...] = (x + y).astype(o_ref.dtype)


def pallas_ffn(x, w1, w2, act):
    lead, K = x.shape[:-1], x.shape[-1]
    F = w1.shape[-1]
    M = int(np.prod(lead))
    x2 = x.reshape(M, K).astype(jnp.float32)
    tm = 128 if M >= 128 else M
    grid = (pl.cdiv(M, tm),)
    out = pl.pallas_call(
        functools.partial(_ffn_kernel, act=act),
        grid=grid,
        in_specs=[
            pl.BlockSpec((tm, K), lambda i: (i, 0)),
            pl.BlockSpec((K, F), lambda i: (0, 0)),
            pl.BlockSpec((F, K), lambda i: (0, 0)),
        ],
        out_specs=pl.BlockSpec((tm, K), lambda i: (i, 0)),
        out_shape=jax.ShapeDtypeStruct((M, K), jnp.float32),
        compiler_params=_PARALLEL,
    )(x2, w1.astype(jnp.bfloat16), w2.astype(jnp.bfloat16))
    return out.reshape(lead + (K,))


def _my_layernorm_kernel(x_ref, g_ref, b_ref, o_ref):
    x = x_ref[...]
    mu = jnp.mean(x, axis=-1, keepdims=True)
    var = jnp.mean((x - mu) ** 2, axis=-1, keepdims=True)
    xh = (x - mu) * jax.lax.rsqrt(var + 1e-5)
    xh = xh * g_ref[...] + b_ref[...]
    o_ref[...] = xh - jnp.mean(xh, axis=1, keepdims=True)   # my_Layernorm bias removal


def my_layernorm(x, gamma, beta):
    return pl.pallas_call(
        _my_layernorm_kernel,
        out_shape=jax.ShapeDtypeStruct(x.shape, jnp.float32),
    )(x.astype(jnp.float32), gamma.reshape(1, 1, -1), beta.reshape(1, 1, -1))


def _decomp_kernel(*refs, k, L):
    """Moving-average decomposition in lane-dense (L, M) layout with in-kernel
    clamp-to-edge padding.  Optionally fuses a residual add (two inputs)."""
    if len(refs) == 4:
        x_ref, y_ref, res_ref, mean_ref = refs
        x = x_ref[...] + y_ref[...]
    else:
        x_ref, res_ref, mean_ref = refs
        x = x_ref[...]
    pad = (k - 1) // 2
    M = x.shape[1]
    acc = x
    for off in range(1, pad + 1):
        top = jnp.broadcast_to(x[0:1, :], (off, M))
        bot = jnp.broadcast_to(x[L - 1:L, :], (off, M))
        fwd = jnp.concatenate([x[off:, :], bot], axis=0)     # x[clamp(t+off)]
        bwd = jnp.concatenate([top, x[:L - off, :]], axis=0)  # x[clamp(t-off)]
        acc = acc + fwd + bwd
    mm = acc * (1.0 / k)
    mean_ref[...] = mm
    res_ref[...] = x - mm


def series_decomp(x, kernel_size, add=None):
    """Autoformer series_decomp (+ optional fused residual add): (res, mean)."""
    N, L, D = x.shape
    M = N * D

    def to2d(t):
        return jnp.transpose(t, (1, 0, 2)).reshape(L, M).astype(jnp.float32)

    inputs = [to2d(x)] if add is None else [to2d(x), to2d(add)]
    tn = 128 if (M % 128 == 0 and M > 128) else M
    grid = (M // tn,)
    spec = pl.BlockSpec((L, tn), lambda i: (0, i))
    res, mm = pl.pallas_call(
        functools.partial(_decomp_kernel, k=kernel_size, L=L),
        grid=grid,
        in_specs=[spec] * len(inputs),
        out_specs=(pl.BlockSpec((L, tn), lambda i: (0, i)),
                   pl.BlockSpec((L, tn), lambda i: (0, i))),
        out_shape=(jax.ShapeDtypeStruct((L, M), jnp.float32),
                   jax.ShapeDtypeStruct((L, M), jnp.float32)),
        compiler_params=_PARALLEL,
    )(*inputs)

    def back(t):
        return jnp.transpose(t.reshape(L, N, D), (1, 0, 2))

    return back(res), back(mm)


def _circ_corr_kernel(q_ref, k_ref, o_ref, *, L):
    # corrT[tau, n] = sum_t qT[t, n] * kT[(t - tau) % L, n]
    # lane-dense: n (the big B*H*E batch dim) on lanes; one full-tile store.
    q = q_ref[...]
    k = k_ref[...]
    rows = []
    for tau in range(L):
        if tau == 0:
            rolled = k
        else:
            rolled = jnp.concatenate([k[L - tau:, :], k[:L - tau, :]], axis=0)
        rows.append(jnp.sum(q * rolled, axis=0, keepdims=True))
    o_ref[...] = jnp.concatenate(rows, axis=0)


def circular_correlation_T(qT, kT):
    """qT/kT: (L, N) with N lane-dense. Returns corrT: (L, N)."""
    L, N = qT.shape
    tn = 128 if (N % 128 == 0 and N > 128) else N
    grid = (N // tn,)
    return pl.pallas_call(
        functools.partial(_circ_corr_kernel, L=L),
        grid=grid,
        in_specs=[pl.BlockSpec((L, tn), lambda i: (0, i)),
                  pl.BlockSpec((L, tn), lambda i: (0, i))],
        out_specs=pl.BlockSpec((L, tn), lambda i: (0, i)),
        out_shape=jax.ShapeDtypeStruct((L, N), jnp.float32),
        compiler_params=_PARALLEL,
    )(qT.astype(jnp.float32), kT.astype(jnp.float32))


def _bmm_kernel(a_ref, b_ref, o_ref):
    o_ref[...] = jnp.einsum("bmk,bkn->bmn", a_ref[...], b_ref[...],
                            preferred_element_type=jnp.float32).astype(o_ref.dtype)


def pallas_bmm(a, b):
    """Batched matmul for delay aggregation (replaces take_along_axis gathers)."""
    B, M, K = a.shape
    N = b.shape[-1]
    return pl.pallas_call(
        _bmm_kernel,
        out_shape=jax.ShapeDtypeStruct((B, M, N), jnp.float32),
    )(a.astype(jnp.float32), b.astype(jnp.float32))


def _embed_kernel(x_ref, xm_ref, wtok_ref, wtime_ref, nemb_ref, o_ref):
    """DataEmbedding: circular token conv (k=3) + time linear + node emb, fused."""
    x = x_ref[...]
    B, L, Cin = x.shape
    d_model = wtok_ref.shape[-1]
    xm1 = jnp.concatenate([x[:, L - 1:, :], x[:, :L - 1, :]], axis=1)   # x[(t-1)%L]
    xp1 = jnp.concatenate([x[:, 1:, :], x[:, :1, :]], axis=1)           # x[(t+1)%L]
    stacked = jnp.concatenate([xm1, x, xp1], axis=-1).reshape(B * L, 3 * Cin)
    ve = jnp.dot(stacked.astype(jnp.bfloat16), wtok_ref[...],
                 preferred_element_type=jnp.float32)
    xm = xm_ref[...]
    Cm = xm.shape[-1]
    te = jnp.dot(xm.reshape(B * L, Cm).astype(jnp.bfloat16), wtime_ref[...],
                 preferred_element_type=jnp.float32)
    out = ve.reshape(B, L, d_model) + te.reshape(B, L, d_model) + nemb_ref[...]
    o_ref[...] = out.astype(o_ref.dtype)


def _circconv3_kernel(x_ref, w_ref, o_ref):
    """Circular Conv1d(k=3, pad=1) as in-kernel shift-stack + matmul (no bias)."""
    x = x_ref[...]
    B, L, C = x.shape
    xm1 = jnp.concatenate([x[:, L - 1:, :], x[:, :L - 1, :]], axis=1)
    xp1 = jnp.concatenate([x[:, 1:, :], x[:, :1, :]], axis=1)
    st = jnp.concatenate([xm1, x, xp1], axis=-1).reshape(B * L, 3 * C)
    y = jnp.dot(st.astype(jnp.bfloat16), w_ref[...], preferred_element_type=jnp.float32)
    o_ref[...] = y.reshape(B, L, -1).astype(o_ref.dtype)


def circular_conv3(x, w):
    Bn, L, C = x.shape
    Nout = w.shape[-1]
    return pl.pallas_call(
        _circconv3_kernel,
        out_shape=jax.ShapeDtypeStruct((Bn, L, Nout), jnp.float32),
    )(x.astype(jnp.float32), w.astype(jnp.bfloat16))


def _tcn_kernel(x_ref, w1_ref, b1_ref, w2_ref, b2_ref, o_ref):
    """CausalConv TemporalBlock (k=3, dil=1): relu(conv2(relu(conv1(x))) + x),
    both causal convs + residual + ReLUs fused.  Layout: (N, T, C) channel-last."""
    x = x_ref[...]
    N, T, C = x.shape

    def cconv(z, w_ref_, b_ref_):
        zpad = jnp.concatenate([jnp.zeros((N, 2, C), z.dtype), z], axis=1)   # left pad 2
        st = jnp.concatenate([zpad[:, 0:T], zpad[:, 1:T + 1], zpad[:, 2:T + 2]], axis=-1)
        y = jnp.dot(st.reshape(N * T, 3 * C).astype(jnp.bfloat16), w_ref_[...],
                    preferred_element_type=jnp.float32) + b_ref_[...]
        return jnp.maximum(y, 0.0).reshape(N, T, C)

    h = cconv(x, w1_ref, b1_ref)
    h = cconv(h, w2_ref, b2_ref)
    o_ref[...] = jnp.maximum(h + x, 0.0).astype(o_ref.dtype)


def causal_conv_tcn(p, x_ntc):
    N, T, C = x_ntc.shape
    return pl.pallas_call(
        _tcn_kernel,
        out_shape=jax.ShapeDtypeStruct((N, T, C), jnp.float32),
    )(x_ntc.astype(jnp.float32),
      p["W1"].astype(jnp.bfloat16), p["b1"].reshape(1, C).astype(jnp.float32),
      p["W2"].astype(jnp.bfloat16), p["b2"].reshape(1, C).astype(jnp.float32))


# --------------------------------------------------------------------------
# Correlation mechanisms (glue around the Pallas kernels)
# --------------------------------------------------------------------------
def delay_agg(values, corr, factor):
    """time_delay_agg_inference: values/corr [B, H, E, L].
    Gather-free: the top-k circular shifts + softmax weights are folded into a
    small (B, L, L) shift matrix, applied by a Pallas batched matmul."""
    B, H, E, L = values.shape
    top_k = int(factor * math.log(L))
    mean_value = jnp.mean(corr, axis=(1, 2))                  # [B, L]
    weights, delay = jax.lax.top_k(mean_value, top_k)         # [B, top_k]
    tmp_corr = jax.nn.softmax(weights, axis=-1)
    l_idx = jnp.arange(L, dtype=jnp.int32)
    gather_idx = (l_idx[None, None, :] + delay[:, :, None]) % L          # [B, top_k, L]
    onehot = jax.nn.one_hot(gather_idx, L, dtype=jnp.float32)            # [B, top_k, L, Lsrc]
    shift_mat = jnp.einsum("bi,bilj->bjl", tmp_corr, onehot)             # [B, Lsrc, Lout]
    agg = pallas_bmm(values.reshape(B, H * E, L), shift_mat)             # [B, H*E, L]
    return agg.reshape(B, H, E, L)


def auto_correlation(q, k, v, factor):
    """AutoCorrelation (temporal).  q: [B, L, H, E], k/v: [B, S, H, E]."""
    B, L, H, E = q.shape
    S = k.shape[1]
    if L > S:
        pad = jnp.zeros((B, L - S, H, E), jnp.float32)
        k = jnp.concatenate([k, pad], axis=1)
        v = jnp.concatenate([v, pad], axis=1)
    else:
        k = k[:, :L]
        v = v[:, :L]
    qT = jnp.transpose(q, (1, 0, 2, 3)).reshape(L, B * H * E)   # lane-dense layout
    kT = jnp.transpose(k, (1, 0, 2, 3)).reshape(L, B * H * E)
    corrT = circular_correlation_T(qT, kT)                      # (L, B*H*E)
    corr = jnp.transpose(corrT.reshape(L, B, H, E), (1, 2, 3, 0))   # [B, H, E, L]
    vp = jnp.transpose(v, (0, 2, 3, 1))                         # [B, H, E, L]
    agg = delay_agg(vp, corr, factor)
    return jnp.transpose(agg, (0, 3, 1, 2))                     # [B, L, H, E]


def auto_correlation_layer(p, xq, xkv, n_heads, factor):
    Bn, L, d_model = xq.shape
    S = xkv.shape[1]
    hd = d_model // n_heads
    if xq is xkv:                                               # fused QKV projection
        qkv = pallas_linear(xq, p["Wqkv"], p["bqkv"])
        q = qkv[..., :d_model].reshape(Bn, L, n_heads, hd)
        k = qkv[..., d_model:2 * d_model].reshape(Bn, L, n_heads, hd)
        v = qkv[..., 2 * d_model:].reshape(Bn, L, n_heads, hd)
    else:
        q = pallas_linear(xq, p["Wqkv"][:, :d_model], p["bqkv"][:d_model]
                          ).reshape(Bn, L, n_heads, hd)
        kv = pallas_linear(xkv, p["Wqkv"][:, d_model:], p["bqkv"][d_model:])
        k = kv[..., :d_model].reshape(Bn, S, n_heads, hd)
        v = kv[..., d_model:].reshape(Bn, S, n_heads, hd)
    out = auto_correlation(q, k, v, factor).reshape(Bn, L, d_model)
    return pallas_linear(out, p["Wo"], p["bo"])


def cross_correlation_layer(p, xq, xkv, node_num, n_heads, factor):
    """CrossCorrelation over the spatial (node) axis + causal TCN smoothing."""
    Bn, Lq, d_model = xq.shape
    S = xkv.shape[1]
    batch = Bn // node_num
    hd = d_model // n_heads
    if xq is xkv:                                               # fused QKV projection
        qkv = pallas_linear(xq, p["Wqkv"], p["bqkv"])
        q = qkv[..., :d_model]
        k = qkv[..., d_model:2 * d_model]
        v = qkv[..., 2 * d_model:]
    else:
        q = pallas_linear(xq, p["Wqkv"][:, :d_model], p["bqkv"][:d_model])
        kv = pallas_linear(xkv, p["Wqkv"][:, d_model:], p["bqkv"][d_model:])
        k = kv[..., :d_model]
        v = kv[..., d_model:]
    if Lq > S:
        pad = jnp.zeros((Bn, Lq - S, d_model), jnp.float32)
        k = jnp.concatenate([k, pad], axis=1)
        v = jnp.concatenate([v, pad], axis=1)
    else:
        k = k[:, :Lq]
        v = v[:, :Lq]
    E = Lq * hd

    def arrange(t):
        t = t.reshape(batch, node_num, Lq, n_heads, hd)
        t = jnp.transpose(t, (0, 3, 1, 2, 4))                   # [batch, H, node, Lq, hd]
        return t.reshape(batch, n_heads, node_num, E)

    qs, ks, vs = arrange(q), arrange(k), arrange(v)
    qT = jnp.transpose(qs, (2, 0, 1, 3)).reshape(node_num, batch * n_heads * E)
    kT = jnp.transpose(ks, (2, 0, 1, 3)).reshape(node_num, batch * n_heads * E)
    corrT = circular_correlation_T(qT, kT)                      # (node, batch*H*E)
    corr = jnp.transpose(corrT.reshape(node_num, batch, n_heads, E), (1, 2, 3, 0))
    vp = jnp.transpose(vs, (0, 1, 3, 2))                        # [batch, H, E, node]
    agg = delay_agg(vp, corr, factor)                           # spatial delay aggregation
    x_tcn = jnp.transpose(agg, (0, 1, 3, 2)).reshape(batch * n_heads, node_num, E)
    v_tcn = causal_conv_tcn(p["tcn"], x_tcn)                    # (batch*H, node, Lq*hd)
    v_tcn = v_tcn.reshape(batch, n_heads, node_num, Lq, hd)
    out = jnp.transpose(v_tcn, (0, 2, 3, 1, 4)).reshape(Bn, Lq, d_model)
    return pallas_linear(out, p["Wo"], p["bo"])


def multi_correlation(p, xq, xkv, cfg):
    # TODO(synk): official MultiCorrelation uses a hierarchical node_list tree;
    #             collapsed here to a single level (node_list == (node_num,)).
    out_t = auto_correlation_layer(p["auto"], xq, xkv, cfg["n_heads"], cfg["factor_temporal"])
    out_s = cross_correlation_layer(p["cross"], xq, xkv, cfg["node_num"],
                                    cfg["n_heads"], cfg["factor_spatial"])
    return out_t + out_s                                        # dropout == identity (eval)


# --------------------------------------------------------------------------
# Embedding / encoder / decoder
# --------------------------------------------------------------------------
def data_embedding(p, x, x_mark, node_num):
    # TODO(synk): original loads geo position encodings from root_path; replaced with a
    #             learnable per-node embedding (STID-style spatial encoding, per docstring).
    # TODO(synk): positional embedding omitted (Autoformer-family DataEmbedding_wo_pos).
    Bn, L, _ = x.shape
    batch = Bn // node_num
    d_model = p["Wtok"].shape[-1]
    node_emb_bn = jnp.tile(p["node_emb"], (batch, 1)).reshape(Bn, 1, d_model)
    return pl.pallas_call(
        _embed_kernel,
        out_shape=jax.ShapeDtypeStruct((Bn, L, d_model), jnp.float32),
    )(x.astype(jnp.float32), x_mark.astype(jnp.float32),
      p["Wtok"].astype(jnp.bfloat16), p["Wtime"].astype(jnp.bfloat16),
      node_emb_bn.astype(jnp.float32))


def encoder_layer(p, x, cfg):
    new_x = multi_correlation(p["mc"], x, x, cfg)
    x, _ = series_decomp(x, cfg["moving_avg"], add=new_x)       # residual add fused
    y = pallas_ffn(x, p["Wff1"], p["Wff2"], cfg["activation"])  # y = x + conv2(act(conv1(x)))
    res, _ = series_decomp(y, cfg["moving_avg"])
    return res


def encoder(p, x, cfg):
    for lp in p["layers"]:
        x = encoder_layer(lp, x, cfg)
    return my_layernorm(x, p["norm_g"], p["norm_b"])


def decoder_layer(p, x, cross, cfg):
    sa = multi_correlation(p["self_mc"], x, x, cfg)
    x, trend1 = series_decomp(x, cfg["moving_avg"], add=sa)     # residual add fused
    ca = multi_correlation(p["cross_mc"], x, cross, cfg)
    x, trend2 = series_decomp(x, cfg["moving_avg"], add=ca)     # residual add fused
    y = pallas_ffn(x, p["Wff1"], p["Wff2"], cfg["activation"])  # y = x + FFN(x)
    x, trend3 = series_decomp(y, cfg["moving_avg"])
    residual_trend = trend1 + trend2 + trend3
    residual_trend = circular_conv3(residual_trend, p["Wtrend"])   # d_model -> c_out
    return x, residual_trend


def decoder(p, x, cross, trend, cfg):
    for lp in p["layers"]:
        x, rt = decoder_layer(lp, x, cross, cfg)
        trend = trend + rt
    x = my_layernorm(x, p["norm_g"], p["norm_b"])
    x = pallas_linear(x, p["Wproj"], p["bproj"])                # Linear(d_model, c_out)
    return x, trend


# --------------------------------------------------------------------------
# BasicTS data transformation + top-level Corrformer forward
# --------------------------------------------------------------------------
def data_transformation_4_xformer(history_data, future_data, start_token_len):
    x_enc = history_data[..., 0]
    x_mark_enc = history_data[:, :, 0, 1:]
    x_dec = jnp.concatenate(
        [x_enc[:, -start_token_len:, :], jnp.zeros_like(future_data[..., 0])], axis=1)
    x_mark_dec = jnp.concatenate(
        [x_mark_enc[:, -start_token_len:, :], future_data[:, :, 0, 1:]], axis=1)
    return x_enc, x_mark_enc, x_dec, x_mark_dec


def corrformer_forward(params, history_data, future_data, cfg):
    node_num, label_len, pred_len = cfg["node_num"], cfg["label_len"], cfg["pred_len"]
    x_enc, x_mark_enc, x_dec, x_mark_dec = data_transformation_4_xformer(
        history_data, future_data, label_len)

    # instance normalization + affine
    means = jnp.mean(x_enc, axis=1, keepdims=True)
    x_enc = x_enc - means
    stdev = jnp.sqrt(jnp.var(x_enc, axis=1, keepdims=True) + 1e-5)
    x_enc = x_enc / stdev
    aw = jnp.tile(params["affine_weight"], (1, 1, node_num))
    ab = jnp.tile(params["affine_bias"], (1, 1, node_num))
    x_enc = x_enc * aw + ab

    mean = jnp.tile(jnp.mean(x_enc, axis=1, keepdims=True), (1, pred_len, 1))
    zeros = jnp.zeros((x_dec.shape[0], pred_len, x_dec.shape[2]), jnp.float32)
    seasonal_init, trend_init = series_decomp(x_enc, cfg["moving_avg"])
    trend_init = jnp.concatenate([trend_init[:, -label_len:, :], mean], axis=1)
    seasonal_init = jnp.concatenate([seasonal_init[:, -label_len:, :], zeros], axis=1)

    # encoder branch
    B, L, D = x_enc.shape
    C = x_mark_enc.shape[-1]
    x_enc_n = (x_enc.reshape(B, L, node_num, D // node_num)
               .transpose(0, 2, 1, 3).reshape(B * node_num, L, D // node_num))
    x_mark_enc_n = jnp.tile(x_mark_enc[:, None], (1, node_num, 1, 1)).reshape(B * node_num, L, C)
    enc_out = data_embedding(params["enc_emb"], x_enc_n, x_mark_enc_n, node_num)
    enc_out = encoder(params["encoder"], enc_out, cfg)

    # decoder branch
    B2, L2, D2 = seasonal_init.shape
    C2 = x_mark_dec.shape[-1]
    seasonal_n = (seasonal_init.reshape(B2, L2, node_num, D2 // node_num)
                  .transpose(0, 2, 1, 3).reshape(B2 * node_num, L2, D2 // node_num))
    trend_n = (trend_init.reshape(B2, L2, node_num, D2 // node_num)
               .transpose(0, 2, 1, 3).reshape(B2 * node_num, L2, D2 // node_num))
    x_mark_dec_n = jnp.tile(x_mark_dec[:, None], (1, node_num, 1, 1)).reshape(B2 * node_num, L2, C2)
    dec_out = data_embedding(params["dec_emb"], seasonal_n, x_mark_dec_n, node_num)
    seasonal_part, trend_part = decoder(params["decoder"], dec_out, enc_out, trend_n, cfg)

    dec_out = trend_part + seasonal_part
    dec_out = (dec_out[:, -pred_len:, :]
               .reshape(B2, node_num, pred_len, D2 // node_num)
               .transpose(0, 2, 1, 3).reshape(B2, pred_len, D2))

    # de-normalization
    dec_out = dec_out - ab
    dec_out = dec_out / (aw + 1e-10)
    dec_out = dec_out * jnp.tile(stdev[:, 0:1, :], (1, pred_len, 1))
    dec_out = dec_out + jnp.tile(means[:, 0:1, :], (1, pred_len, 1))
    return dec_out[..., None]


# --------------------------------------------------------------------------
# deterministic parameter initialization
# --------------------------------------------------------------------------
def init_params(key, cfg):
    d_model, n_heads = cfg["d_model"], cfg["n_heads"]
    hd = d_model // n_heads
    keys = iter(jax.random.split(key, 128))

    def w(shape, scale=0.02):
        return jax.random.normal(next(keys), shape, jnp.float32) * scale

    def attn_proj():
        # fused Q/K/V weight: columns [Wq | Wk | Wv]
        return {"Wqkv": w((d_model, 3 * d_model)),
                "bqkv": jnp.zeros((3 * d_model,), jnp.float32),
                "Wo": w((d_model, d_model)), "bo": jnp.zeros((d_model,), jnp.float32)}

    def tcn(channels):
        return {"W1": w((3 * channels, channels), 0.01), "b1": jnp.zeros((channels,), jnp.float32),
                "W2": w((3 * channels, channels), 0.01), "b2": jnp.zeros((channels,), jnp.float32)}

    def mc(tcn_channels):
        cross = attn_proj()
        cross["tcn"] = tcn(tcn_channels)
        return {"auto": attn_proj(), "cross": cross}

    def embedding(c_in):
        return {"Wtok": w((3 * c_in, d_model)),
                "Wtime": w((cfg["num_time_features"], d_model)),
                "node_emb": w((cfg["node_num"], d_model))}

    enc_tcn_ch = hd * cfg["seq_len"]
    dec_tcn_ch = hd * (cfg["label_len"] + cfg["pred_len"])
    return {
        "affine_weight": jnp.ones((1, 1, cfg["enc_in"]), jnp.float32),
        "affine_bias": jnp.zeros((1, 1, cfg["enc_in"]), jnp.float32),
        "enc_emb": embedding(cfg["enc_in"]),
        "dec_emb": embedding(cfg["dec_in"]),
        "encoder": {
            "layers": [{"mc": mc(enc_tcn_ch),
                        "Wff1": w((d_model, cfg["d_ff"])),
                        "Wff2": w((cfg["d_ff"], d_model))}
                       for _ in range(cfg["e_layers"])],
            "norm_g": jnp.ones((d_model,), jnp.float32),
            "norm_b": jnp.zeros((d_model,), jnp.float32)},
        "decoder": {
            "layers": [{"self_mc": mc(dec_tcn_ch),
                        "cross_mc": mc(dec_tcn_ch),
                        "Wff1": w((d_model, cfg["d_ff"])),
                        "Wff2": w((cfg["d_ff"], d_model)),
                        "Wtrend": w((3 * d_model, cfg["c_out"]))}
                       for _ in range(cfg["d_layers"])],
            "norm_g": jnp.ones((d_model,), jnp.float32),
            "norm_b": jnp.zeros((d_model,), jnp.float32),
            "Wproj": w((d_model, cfg["c_out"])),
            "bproj": jnp.zeros((cfg["c_out"],), jnp.float32)},
    }


# --------------------------------------------------------------------------
# main
# --------------------------------------------------------------------------
if __name__ == "__main__":
    key = jax.random.PRNGKey(0)
    kh, kf, kp = jax.random.split(key, 3)
    n_spatial = CFG["node_num"] * CFG["enc_in"]        # total series (BasicTS "N")
    c_total = 1 + CFG["num_time_features"]             # target + time features
    history = jax.random.normal(kh, (CFG["batch"], CFG["seq_len"], n_spatial, c_total),
                                jnp.float32)
    future = jax.random.normal(kf, (CFG["batch"], CFG["pred_len"], n_spatial, c_total),
                               jnp.float32)
    params = init_params(kp, CFG)

    fwd = jax.jit(functools.partial(corrformer_forward, cfg=CFG))
    out = jax.block_until_ready(fwd(params, history, future))

    assert out.shape == (CFG["batch"], CFG["pred_len"], n_spatial, 1), out.shape
    assert bool(jnp.all(jnp.isfinite(out)))
    print("KERNEL_OK")
</pallas_src>

<mosaic_0001>
module attributes {stable_mosaic.version = 11 : i64} {
  func.func @_decomp_kernel(%arg0: i32, %arg1: memref<12x16xf32, #tpu.memory_space<vmem>>, %arg2: memref<12x16xf32, #tpu.memory_space<vmem>>, %arg3: memref<12x16xf32, #tpu.memory_space<vmem>>) attributes {dimension_semantics = [#tpu.dimension_semantics<parallel>], iteration_bounds = array<i64: 1>, scalar_prefetch = 0 : i64, scratch_operands = 0 : i64, tpu.core_type = #tpu.core_type<tc>, window_params = [{transform_indices = @transform_0, window_bounds = array<i64: 12, 16>}, {transform_indices = @transform_1, window_bounds = array<i64: 12, 16>}, {transform_indices = @transform_2, window_bounds = array<i64: 12, 16>}]} {
    %c0 = arith.constant 0 : index
    %c0_0 = arith.constant 0 : index
    %0 = vector.load %arg1[%c0, %c0_0] : memref<12x16xf32, #tpu.memory_space<vmem>>, vector<12x16xf32>
    %1 = vector.extract_strided_slice %0 {offsets = [0, 0], sizes = [1, 16], strides = [1, 1]} : vector<12x16xf32> to vector<1x16xf32>
    %2 = vector.extract_strided_slice %0 {offsets = [11, 0], sizes = [1, 16], strides = [1, 1]} : vector<12x16xf32> to vector<1x16xf32>
    %3 = vector.extract_strided_slice %0 {offsets = [1, 0], sizes = [11, 16], strides = [1, 1]} : vector<12x16xf32> to vector<11x16xf32>
    %4 = tpu.concatenate %3, %2 in 0 : vector<11x16xf32>, vector<1x16xf32> -> vector<12x16xf32>
    %5 = vector.extract_strided_slice %0 {offsets = [0, 0], sizes = [11, 16], strides = [1, 1]} : vector<12x16xf32> to vector<11x16xf32>
    %6 = tpu.concatenate %1, %5 in 0 : vector<1x16xf32>, vector<11x16xf32> -> vector<12x16xf32>
    %7 = arith.addf %0, %4 : vector<12x16xf32>
    %8 = arith.addf %7, %6 : vector<12x16xf32>
    %9 = vector.extract_strided_slice %0 {offsets = [0, 0], sizes = [1, 16], strides = [1, 1]} : vector<12x16xf32> to vector<1x16xf32>
    %10 = vector.shape_cast %9 : vector<1x16xf32> to vector<1x16xf32>
    %11 = vector.broadcast %10 : vector<1x16xf32> to vector<2x16xf32>
    %12 = vector.extract_strided_slice %0 {offsets = [11, 0], sizes = [1, 16], strides = [1, 1]} : vector<12x16xf32> to vector<1x16xf32>
    %13 = vector.shape_cast %12 : vector<1x16xf32> to vector<1x16xf32>
    %14 = vector.broadcast %13 : vector<1x16xf32> to vector<2x16xf32>
    %15 = vector.extract_strided_slice %0 {offsets = [2, 0], sizes = [10, 16], strides = [1, 1]} : vector<12x16xf32> to vector<10x16xf32>
    %16 = tpu.concatenate %15, %14 in 0 : vector<10x16xf32>, vector<2x16xf32> -> vector<12x16xf32>
    %17 = vector.extract_strided_slice %0 {offsets = [0, 0], sizes = [10, 16], strides = [1, 1]} : vector<12x16xf32> to vector<10x16xf32>
    %18 = tpu.concatenate %11, %17 in 0 : vector<2x16xf32>, vector<10x16xf32> -> vector<12x16xf32>
    %19 = arith.addf %8, %16 : vector<12x16xf32>
    %20 = arith.addf %19, %18 : vector<12x16xf32>
    %cst = arith.constant 2.000000e-01 : f32
    %21 = vector.broadcast %cst : f32 to vector<12x16xf32>
    %22 = arith.mulf %20, %21 : vector<12x16xf32>
    %c0_1 = arith.constant 0 : index
    %c0_2 = arith.constant 0 : index
    %23 = vector.load %arg3[%c0_1, %c0_2] : memref<12x16xf32, #tpu.memory_space<vmem>>, vector<12x16xf32>
    tpu.vector_store %arg3[%c0_1, %c0_2], %22 {strides = array<i32>} : memref<12x16xf32, #tpu.memory_space<vmem>>, vector<12x16xf32>,
    %24 = arith.subf %0, %22 : vector<12x16xf32>
    %c0_3 = arith.constant 0 : index
    %c0_4 = arith.constant 0 : index
    %25 = vector.load %arg2[%c0_3, %c0_4] : memref<12x16xf32, #tpu.memory_space<vmem>>, vector<12x16xf32>
    tpu.vector_store %arg2[%c0_3, %c0_4], %24 {strides = array<i32>} : memref<12x16xf32, #tpu.memory_space<vmem>>, vector<12x16xf32>,
    return
  }
  func.func @transform_0(%arg0: i32) -> (i32, i32) {
    %c0_i32 = arith.constant 0 : i32
    %c0_i32_0 = arith.constant 0 : i32
    return %c0_i32, %arg0 : i32, i32
  }
  func.func @transform_1(%arg0: i32) -> (i32, i32) {
    %c0_i32 = arith.constant 0 : i32
    %c0_i32_0 = arith.constant 0 : i32
    return %c0_i32, %arg0 : i32, i32
  }
  func.func @transform_2(%arg0: i32) -> (i32, i32) {
    %c0_i32 = arith.constant 0 : i32
    %c0_i32_0 = arith.constant 0 : i32
    return %c0_i32, %arg0 : i32, i32
  }
}

module attributes {stable_mosaic.version = 11 : i64} {
  func.func @_embed_kernel(%arg0: memref<8x12x2xf32, #tpu.memory_space<vmem>>, %arg1: memref<8x12x2xf32, #tpu.memory_space<vmem>>, %arg2: memref<6x32xbf16, #tpu.memory_space<vmem>>, %arg3: memref<2x32xbf16, #tpu.memory_space<vmem>>, %arg4: memref<8x1x32xf32, #tpu.memory_space<vmem>>, %arg5: memref<8x12x32xf32, #tpu.memory_space<vmem>>) attributes {dimension_semantics = [], scalar_prefetch = 0 : i64, scratch_operands = 0 : i64, tpu.core_type = #tpu.core_type<tc>} {
    %c0 = arith.constant 0 : index
    %c0_0 = arith.constant 0 : index
    %c0_1 = arith.constant 0 : index
    %0 = vector.load %arg0[%c0, %c0_0, %c0_1] : memref<8x12x2xf32, #tpu.memory_space<vmem>>, vector<8x12x2xf32>
    %1 = vector.extract_strided_slice %0 {offsets = [0, 11, 0], sizes = [8, 1, 2], strides = [1, 1, 1]} : vector<8x12x2xf32> to vector<8x1x2xf32>
    %2 = vector.extract_strided_slice %0 {offsets = [0, 0, 0], sizes = [8, 11, 2], strides = [1, 1, 1]} : vector<8x12x2xf32> to vector<8x11x2xf32>
    %3 = tpu.concatenate %1, %2 in 1 : vector<8x1x2xf32>, vector<8x11x2xf32> -> vector<8x12x2xf32>
    %4 = vector.extract_strided_slice %0 {offsets = [0, 1, 0], sizes = [8, 11, 2], strides = [1, 1, 1]} : vector<8x12x2xf32> to vector<8x11x2xf32>
    %5 = vector.extract_strided_slice %0 {offsets = [0, 0, 0], sizes = [8, 1, 2], strides = [1, 1, 1]} : vector<8x12x2xf32> to vector<8x1x2xf32>
    %6 = tpu.concatenate %4, %5 in 1 : vector<8x11x2xf32>, vector<8x1x2xf32> -> vector<8x12x2xf32>
    %7 = tpu.concatenate %3, %0, %6 in 2 : vector<8x12x2xf32>, vector<8x12x2xf32>, vector<8x12x2xf32> -> vector<8x12x6xf32>
    %8 = vector.shape_cast %7 : vector<8x12x6xf32> to vector<96x6xf32>
    %9 = arith.truncf %8 : vector<96x6xf32> to vector<96x6xbf16>
    %c0_2 = arith.constant 0 : index
    %c0_3 = arith.constant 0 : index
    %10 = vector.load %arg2[%c0_2, %c0_3] : memref<6x32xbf16, #tpu.memory_space<vmem>>, vector<6x32xbf16>
    %cst = arith.constant dense<0.000000e+00> : vector<96x32xf32>
    %11 = tpu.matmul %9, %10, %cst {dimension_numbers = #tpu.dot_dimension_numbers<[1], [0], [0], [1], [0, 0, 1, 1], [], []>} : vector<96x6xbf16>, vector<6x32xbf16>, vector<96x32xf32> -> vector<96x32xf32>
    %c0_4 = arith.constant 0 : index
    %c0_5 = arith.constant 0 : index
    %c0_6 = arith.constant 0 : index
    %12 = vector.load %arg1[%c0_4, %c0_5, %c0_6] : memref<8x12x2xf32, #tpu.memory_space<vmem>>, vector<8x12x2xf32>
    %13 = vector.shape_cast %12 : vector<8x12x2xf32> to vector<96x2xf32>
    %14 = arith.truncf %13 : vector<96x2xf32> to vector<96x2xbf16>
    %c0_7 = arith.constant 0 : index
    %c0_8 = arith.constant 0 : index
    %15 = vector.load %arg3[%c0_7, %c0_8] : memref<2x32xbf16, #tpu.memory_space<vmem>>, vector<2x32xbf16>
    %cst_9 = arith.constant dense<0.000000e+00> : vector<96x32xf32>
    %16 = tpu.matmul %14, %15, %cst_9 {dimension_numbers = #tpu.dot_dimension_numbers<[1], [0], [0], [1], [0, 0, 1, 1], [], []>} : vector<96x2xbf16>, vector<2x32xbf16>, vector<96x32xf32> -> vector<96x32xf32>
    %17 = vector.shape_cast %11 : vector<96x32xf32> to vector<8x12x32xf32>
    %18 = vector.shape_cast %16 : vector<96x32xf32> to vector<8x12x32xf32>
    %19 = arith.addf %17, %18 : vector<8x12x32xf32>
    %c0_10 = arith.constant 0 : index
    %c0_11 = arith.constant 0 : index
    %c0_12 = arith.constant 0 : index
    %20 = vector.load %arg4[%c0_10, %c0_11, %c0_12] : memref<8x1x32xf32, #tpu.memory_space<vmem>>, vector<8x1x32xf32>
    %21 = vector.broadcast %20 : vector<8x1x32xf32> to vector<8x12x32xf32>
    %22 = arith.addf %19, %21 : vector<8x12x32xf32>
    %c0_13 = arith.constant 0 : index
    %c0_14 = arith.constant 0 : index
    %c0_15 = arith.constant 0 : index
    %23 = vector.load %arg5[%c0_13, %c0_14, %c0_15] : memref<8x12x32xf32, #tpu.memory_space<vmem>>, vector<8x12x32xf32>
    tpu.vector_store %arg5[%c0_13, %c0_14, %c0_15], %22 {strides = array<i32>} : memref<8x12x32xf32, #tpu.memory_space<vmem>>, vector<8x12x32xf32>,
    return
  }
}

module attributes {stable_mosaic.version = 11 : i64} {
  func.func @_linear_kernel(%arg0: i32, %arg1: memref<96x32xbf16, #tpu.memory_space<vmem>>, %arg2: memref<32x96xbf16, #tpu.memory_space<vmem>>, %arg3: memref<1x96xf32, #tpu.memory_space<vmem>>, %arg4: memref<96x96xf32, #tpu.memory_space<vmem>>) attributes {dimension_semantics = [#tpu.dimension_semantics<parallel>], iteration_bounds = array<i64: 1>, scalar_prefetch = 0 : i64, scratch_operands = 0 : i64, tpu.core_type = #tpu.core_type<tc>, window_params = [{transform_indices = @transform_0, window_bounds = array<i64: 96, 32>}, {pipeline_mode = #tpu.pipeline_mode<synchronous>, transform_indices = @transform_1, window_bounds = array<i64: 32, 96>}, {pipeline_mode = #tpu.pipeline_mode<synchronous>, transform_indices = @transform_2, window_bounds = array<i64: 1, 96>}, {transform_indices = @transform_3, window_bounds = array<i64: 96, 96>}]} {
    %c0 = arith.constant 0 : index
    %c0_0 = arith.constant 0 : index
    %0 = vector.load %arg1[%c0, %c0_0] : memref<96x32xbf16, #tpu.memory_space<vmem>>, vector<96x32xbf16>
    %c0_1 = arith.constant 0 : index
    %c0_2 = arith.constant 0 : index
    %1 = vector.load %arg2[%c0_1, %c0_2] : memref<32x96xbf16, #tpu.memory_space<vmem>>, vector<32x96xbf16>
    %cst = arith.constant dense<0.000000e+00> : vector<96x96xf32>
    %2 = tpu.matmul %0, %1, %cst {dimension_numbers = #tpu.dot_dimension_numbers<[1], [0], [0], [1], [0, 0, 1, 1], [], []>} : vector<96x32xbf16>, vector<32x96xbf16>, vector<96x96xf32> -> vector<96x96xf32>
    %c0_3 = arith.constant 0 : index
    %c0_4 = arith.constant 0 : index
    %3 = vector.load %arg3[%c0_3, %c0_4] : memref<1x96xf32, #tpu.memory_space<vmem>>, vector<1x96xf32>
    %4 = vector.broadcast %3 : vector<1x96xf32> to vector<96x96xf32>
    %5 = arith.addf %2, %4 : vector<96x96xf32>
    %c0_5 = arith.constant 0 : index
    %c0_6 = arith.constant 0 : index
    %6 = vector.load %arg4[%c0_5, %c0_6] : memref<96x96xf32, #tpu.memory_space<vmem>>, vector<96x96xf32>
    tpu.vector_store %arg4[%c0_5, %c0_6], %5 {strides = array<i32>} : memref<96x96xf32, #tpu.memory_space<vmem>>, vector<96x96xf32>,
    return
  }
  func.func @transform_0(%arg0: i32) -> (i32, i32) {
    %c0_i32 = arith.constant 0 : i32
    %c0_i32_0 = arith.constant 0 : i32
    return %arg0, %c0_i32 : i32, i32
  }
  func.func @transform_1(%arg0: i32) -> (i32, i32) {
    %c0_i32 = arith.constant 0 : i32
    %c0_i32_0 = arith.constant 0 : i32
    %c0_i32_1 = arith.constant 0 : i32
    return %c0_i32, %c0_i32_0 : i32, i32
  }
  func.func @transform_2(%arg0: i32) -> (i32, i32) {
    %c0_i32 = arith.constant 0 : i32
    %c0_i32_0 = arith.constant 0 : i32
    %c0_i32_1 = arith.constant 0 : i32
    return %c0_i32, %c0_i32_0 : i32, i32
  }
  func.func @transform_3(%arg0: i32) -> (i32, i32) {
    %c0_i32 = arith.constant 0 : i32
    %c0_i32_0 = arith.constant 0 : i32
    return %arg0, %c0_i32 : i32, i32
  }
}

module attributes {stable_mosaic.version = 11 : i64} {
  func.func @_circ_corr_kernel(%arg0: i32, %arg1: memref<12x128xf32, #tpu.memory_space<vmem>>, %arg2: memref<12x128xf32, #tpu.memory_space<vmem>>, %arg3: memref<12x128xf32, #tpu.memory_space<vmem>>) attributes {dimension_semantics = [#tpu.dimension_semantics<parallel>], iteration_bounds = array<i64: 2>, scalar_prefetch = 0 : i64, scratch_operands = 0 : i64, tpu.core_type = #tpu.core_type<tc>, window_params = [{transform_indices = @transform_0, window_bounds = array<i64: 12, 128>}, {transform_indices = @transform_1, window_bounds = array<i64: 12, 128>}, {transform_indices = @transform_2, window_bounds = array<i64: 12, 128>}]} {
    %c0 = arith.constant 0 : index
    %c0_0 = arith.constant 0 : index
    %0 = vector.load %arg1[%c0, %c0_0] : memref<12x128xf32, #tpu.memory_space<vmem>>, vector<12x128xf32>
    %c0_1 = arith.constant 0 : index
    %c0_2 = arith.constant 0 : index
    %1 = vector.load %arg2[%c0_1, %c0_2] : memref<12x128xf32, #tpu.memory_space<vmem>>, vector<12x128xf32>
    %2 = arith.mulf %0, %1 : vector<12x128xf32>
    %cst = arith.constant dense<0.000000e+00> : vector<128xf32>
    %3 = vector.multi_reduction <add>, %2, %cst [0] : vector<12x128xf32> to vector<128xf32>
    %4 = vector.shape_cast %3 : vector<128xf32> to vector<1x128xf32>
    %5 = vector.extract_strided_slice %1 {offsets = [11, 0], sizes = [1, 128], strides = [1, 1]} : vector<12x128xf32> to vector<1x128xf32>
    %6 = vector.extract_strided_slice %1 {offsets = [0, 0], sizes = [11, 128], strides = [1, 1]} : vector<12x128xf32> to vector<11x128xf32>
    %7 = tpu.concatenate %5, %6 in 0 : vector<1x128xf32>, vector<11x128xf32> -> vector<12x128xf32>
    %8 = arith.mulf %0, %7 : vector<12x128xf32>
    %cst_3 = arith.constant dense<0.000000e+00> : vector<128xf32>
    %9 = vector.multi_reduction <add>, %8, %cst_3 [0] : vector<12x128xf32> to vector<128xf32>
    %10 = vector.shape_cast %9 : vector<128xf32> to vector<1x128xf32>
    %11 = vector.extract_strided_slice %1 {offsets = [10, 0], sizes = [2, 128], strides = [1, 1]} : vector<12x128xf32> to vector<2x128xf32>
    %12 = vector.extract_strided_slice %1 {offsets = [0, 0], sizes = [10, 128], strides = [1, 1]} : vector<12x128xf32> to vector<10x128xf32>
    %13 = tpu.concatenate %11, %12 in 0 : vector<2x128xf32>, vector<10x128xf32> -> vector<12x128xf32>
    %14 = arith.mulf %0, %13 : vector<12x128xf32>
    %cst_4 = arith.constant dense<0.000000e+00> : vector<128xf32>
    %15 = vector.multi_reduction <add>, %14, %cst_4 [0] : vector<12x128xf32> to vector<128xf32>
    %16 = vector.shape_cast %15 : vector<128xf32> to vector<1x128xf32>
    %17 = vector.extract_strided_slice %1 {offsets = [9, 0], sizes = [3, 128], strides = [1, 1]} : vector<12x128xf32> to vector<3x128xf32>
    %18 = vector.extract_strided_slice %1 {offsets = [0, 0], sizes = [9, 128], strides = [1, 1]} : vector<12x128xf32> to vector<9x128xf32>
    %19 = tpu.concatenate %17, %18 in 0 : vector<3x128xf32>, vector<9x128xf32> -> vector<12x128xf32>
    %20 = arith.mulf %0, %19 : vector<12x128xf32>
    %cst_5 = arith.constant dense<0.000000e+00> : vector<128xf32>
    %21 = vector.multi_reduction <add>, %20, %cst_5 [0] : vector<12x128xf32> to vector<128xf32>
    %22 = vector.shape_cast %21 : vector<128xf32> to vector<1x128xf32>
    %23 = vector.extract_strided_slice %1 {offsets = [8, 0], sizes = [4, 128], strides = [1, 1]} : vector<12x128xf32> to vector<4x128xf32>
    %24 = vector.extract_strided_slice %1 {offsets = [0, 0], sizes = [8, 128], strides = [1, 1]} : vector<12x128xf32> to vector<8x128xf32>
    %25 = tpu.concatenate %23, %24 in 0 : vector<4x128xf32>, vector<8x128xf32> -> vector<12x128xf32>
    %26 = arith.mulf %0, %25 : vector<12x128xf32>
    %cst_6 = arith.constant dense<0.000000e+00> : vector<128xf32>
    %27 = vector.multi_reduction <add>, %26, %cst_6 [0] : vector<12x128xf32> to vector<128xf32>
    %28 = vector.shape_cast %27 : vector<128xf32> to vector<1x128xf32>
    %29 = vector.extract_strided_slice %1 {offsets = [7, 0], sizes = [5, 128], strides = [1, 1]} : vector<12x128xf32> to vector<5x128xf32>
    %30 = vector.extract_strided_slice %1 {offsets = [0, 0], sizes = [7, 128], strides = [1, 1]} : vector<12x128xf32> to vector<7x128xf32>
    %31 = tpu.concatenate %29, %30 in 0 : vector<5x128xf32>, vector<7x128xf32> -> vector<12x128xf32>
    %32 = arith.mulf %0, %31 : vector<12x128xf32>
    %cst_7 = arith.constant dense<0.000000e+00> : vector<128xf32>
    %33 = vector.multi_reduction <add>, %32, %cst_7 [0] : vector<12x128xf32> to vector<128xf32>
    %34 = vector.shape_cast %33 : vector<128xf32> to vector<1x128xf32>
    %35 = vector.extract_strided_slice %1 {offsets = [6, 0], sizes = [6, 128], strides = [1, 1]} : vector<12x128xf32> to vector<6x128xf32>
    %36 = vector.extract_strided_slice %1 {offsets = [0, 0], sizes = [6, 128], strides = [1, 1]} : vector<12x128xf32> to vector<6x128xf32>
    %37 = tpu.concatenate %35, %36 in 0 : vector<6x128xf32>, vector<6x128xf32> -> vector<12x128xf32>
    %38 = arith.mulf %0, %37 : vector<12x128xf32>
    %cst_8 = arith.constant dense<0.000000e+00> : vector<128xf32>
    %39 = vector.multi_reduction <add>, %38, %cst_8 [0] : vector<12x128xf32> to vector<128xf32>
    %40 = vector.shape_cast %39 : vector<128xf32> to vector<1x128xf32>
    %41 = vector.extract_strided_slice %1 {offsets = [5, 0], sizes = [7, 128], strides = [1, 1]} : vector<12x128xf32> to vector<7x128xf32>
    %42 = vector.extract_strided_slice %1 {offsets = [0, 0], sizes = [5, 128], strides = [1, 1]} : vector<12x128xf32> to vector<5x128xf32>
    %43 = tpu.concatenate %41, %42 in 0 : vector<7x128xf32>, vector<5x128xf32> -> vector<12x128xf32>
    %44 = arith.mulf %0, %43 : vector<12x128xf32>
    %cst_9 = arith.constant dense<0.000000e+00> : vector<128xf32>
    %45 = vector.multi_reduction <add>, %44, %cst_9 [0] : vector<12x128xf32> to vector<128xf32>
    %46 = vector.shape_cast %45 : vector<128xf32> to vector<1x128xf32>
    %47 = vector.extract_strided_slice %1 {offsets = [4, 0], sizes = [8, 128], strides = [1, 1]} : vector<12x128xf32> to vector<8x128xf32>
    %48 = vector.extract_strided_slice %1 {offsets = [0, 0], sizes = [4, 128], strides = [1, 1]} : vector<12x128xf32> to vector<4x128xf32>
    %49 = tpu.concatenate %47, %48 in 0 : vector<8x128xf32>, vector<4x128xf32> -> vector<12x128xf32>
    %50 = arith.mulf %0, %49 : vector<12x128xf32>
    %cst_10 = arith.constant dense<0.000000e+00> : vector<128xf32>
    %51 = vector.multi_reduction <add>, %50, %cst_10 [0] : vector<12x128xf32> to vector<128xf32>
    %52 = vector.shape_cast %51 : vector<128xf32> to vector<1x128xf32>
    %53 = vector.extract_strided_slice %1 {offsets = [3, 0], sizes = [9, 128], strides = [1, 1]} : vector<12x128xf32> to vector<9x128xf32>
    %54 = vector.extract_strided_slice %1 {offsets = [0, 0], sizes = [3, 128], strides = [1, 1]} : vector<12x128xf32> to vector<3x128xf32>
    %55 = tpu.concatenate %53, %54 in 0 : vector<9x128xf32>, vector<3x128xf32> -> vector<12x128xf32>
    %56 = arith.mulf %0, %55 : vector<12x128xf32>
    %cst_11 = arith.constant dense<0.000000e+00> : vector<128xf32>
    %57 = vector.multi_reduction <add>, %56, %cst_11 [0] : vector<12x128xf32> to vector<128xf32>
    %58 = vector.shape_cast %57 : vector<128xf32> to vector<1x128xf32>
    %59 = vector.extract_strided_slice %1 {offsets = [2, 0], sizes = [10, 128], strides = [1, 1]} : vector<12x128xf32> to vector<10x128xf32>
    %60 = vector.extract_strided_slice %1 {offsets = [0, 0], sizes = [2, 128], strides = [1, 1]} : vector<12x128xf32> to vector<2x128xf32>
    %61 = tpu.concatenate %59, %60 in 0 : vector<10x128xf32>, vector<2x128xf32> -> vector<12x128xf32>
    %62 = arith.mulf %0, %61 : vector<12x128xf32>
    %cst_12 = arith.constant dense<0.000000e+00> : vector<128xf32>
    %63 = vector.multi_reduction <add>, %62, %cst_12 [0] : vector<12x128xf32> to vector<128xf32>
    %64 = vector.shape_cast %63 : vector<128xf32> to vector<1x128xf32>
    %65 = vector.extract_strided_slice %1 {offsets = [1, 0], sizes = [11, 128], strides = [1, 1]} : vector<12x128xf32> to vector<11x128xf32>
    %66 = vector.extract_strided_slice %1 {offsets = [0, 0], sizes = [1, 128], strides = [1, 1]} : vector<12x128xf32> to vector<1x128xf32>
    %67 = tpu.concatenate %65, %66 in 0 : vector<11x128xf32>, vector<1x128xf32> -> vector<12x128xf32>
    %68 = arith.mulf %0, %67 : vector<12x128xf32>
    %cst_13 = arith.constant dense<0.000000e+00> : vector<128xf32>
    %69 = vector.multi_reduction <add>, %68, %cst_13 [0] : vector<12x128xf32> to vector<128xf32>
    %70 = vector.shape_cast %69 : vector<128xf32> to vector<1x128xf32>
    %71 = tpu.concatenate %4, %10, %16, %22, %28, %34, %40, %46, %52, %58, %64, %70 in 0 : vector<1x128xf32>, vector<1x128xf32>, vector<1x128xf32>, vector<1x128xf32>, vector<1x128xf32>, vector<1x128xf32>, vector<1x128xf32>, vector<1x128xf32>, vector<1x128xf32>, vector<1x128xf32>, vector<1x128xf32>, vector<1x128xf32> -> vector<12x128xf32>
    %c0_14 = arith.constant 0 : index
    %c0_15 = arith.constant 0 : index
    %72 = vector.load %arg3[%c0_14, %c0_15] : memref<12x128xf32, #tpu.memory_space<vmem>>, vector<12x128xf32>
    tpu.vector_store %arg3[%c0_14, %c0_15], %71 {strides = array<i32>} : memref<12x128xf32, #tpu.memory_space<vmem>>, vector<12x128xf32>,
    return
  }
  func.func @transform_0(%arg0: i32) -> (i32, i32) {
    %c0_i32 = arith.constant 0 : i32
    %c0_i32_0 = arith.constant 0 : i32
    return %c0_i32, %arg0 : i32, i32
  }
  func.func @transform_1(%arg0: i32) -> (i32, i32) {
    %c0_i32 = arith.constant 0 : i32
    %c0_i32_0 = arith.constant 0 : i32
    return %c0_i32, %arg0 : i32, i32
  }
  func.func @transform_2(%arg0: i32) -> (i32, i32) {
    %c0_i32 = arith.constant 0 : i32
    %c0_i32_0 = arith.constant 0 : i32
    return %c0_i32, %arg0 : i32, i32
  }
}

module attributes {stable_mosaic.version = 11 : i64} {
  func.func @_bmm_kernel(%arg0: memref<8x32x12xf32, #tpu.memory_space<vmem>>, %arg1: memref<8x12x12xf32, #tpu.memory_space<vmem>>, %arg2: memref<8x32x12xf32, #tpu.memory_space<vmem>>) attributes {dimension_semantics = [], scalar_prefetch = 0 : i64, scratch_operands = 0 : i64, tpu.core_type = #tpu.core_type<tc>} {
    %c0 = arith.constant 0 : index
    %c0_0 = arith.constant 0 : index
    %c0_1 = arith.constant 0 : index
    %0 = vector.load %arg0[%c0, %c0_0, %c0_1] : memref<8x32x12xf32, #tpu.memory_space<vmem>>, vector<8x32x12xf32>
    %c0_2 = arith.constant 0 : index
    %c0_3 = arith.constant 0 : index
    %c0_4 = arith.constant 0 : index
    %1 = vector.load %arg1[%c0_2, %c0_3, %c0_4] : memref<8x12x12xf32, #tpu.memory_space<vmem>>, vector<8x12x12xf32>
    "tpu.trace_start"() <{level = 10 : i32, message = "bmk,bkn->bmn"}> : () -> ()
    %cst = arith.constant dense<0.000000e+00> : vector<8x32x12xf32>
    %2 = tpu.matmul %0, %1, %cst {dimension_numbers = #tpu.dot_dimension_numbers<[2], [1], [1], [2], [0, 0, 0, 1, 1, 2], [0], [0]>} : vector<8x32x12xf32>, vector<8x12x12xf32>, vector<8x32x12xf32> -> vector<8x32x12xf32>
    "tpu.trace_stop"() : () -> ()
    %c0_5 = arith.constant 0 : index
    %c0_6 = arith.constant 0 : index
    %c0_7 = arith.constant 0 : index
    %3 = vector.load %arg2[%c0_5, %c0_6, %c0_7] : memref<8x32x12xf32, #tpu.memory_space<vmem>>, vector<8x32x12xf32>
    tpu.vector_store %arg2[%c0_5, %c0_6, %c0_7], %2 {strides = array<i32>} : memref<8x32x12xf32, #tpu.memory_space<vmem>>, vector<8x32x12xf32>,
    return
  }
}

module attributes {stable_mosaic.version = 11 : i64} {
  func.func @_linear_kernel(%arg0: i32, %arg1: memref<96x32xbf16, #tpu.memory_space<vmem>>, %arg2: memref<32x32xbf16, #tpu.memory_space<vmem>>, %arg3: memref<1x32xf32, #tpu.memory_space<vmem>>, %arg4: memref<96x32xf32, #tpu.memory_space<vmem>>) attributes {dimension_semantics = [#tpu.dimension_semantics<parallel>], iteration_bounds = array<i64: 1>, scalar_prefetch = 0 : i64, scratch_operands = 0 : i64, tpu.core_type = #tpu.core_type<tc>, window_params = [{transform_indices = @transform_0, window_bounds = array<i64: 96, 32>}, {pipeline_mode = #tpu.pipeline_mode<synchronous>, transform_indices = @transform_1, window_bounds = array<i64: 32, 32>}, {pipeline_mode = #tpu.pipeline_mode<synchronous>, transform_indices = @transform_2, window_bounds = array<i64: 1, 32>}, {transform_indices = @transform_3, window_bounds = array<i64: 96, 32>}]} {
    %c0 = arith.constant 0 : index
    %c0_0 = arith.constant 0 : index
    %0 = vector.load %arg1[%c0, %c0_0] : memref<96x32xbf16, #tpu.memory_space<vmem>>, vector<96x32xbf16>
    %c0_1 = arith.constant 0 : index
    %c0_2 = arith.constant 0 : index
    %1 = vector.load %arg2[%c0_1, %c0_2] : memref<32x32xbf16, #tpu.memory_space<vmem>>, vector<32x32xbf16>
    %cst = arith.constant dense<0.000000e+00> : vector<96x32xf32>
    %2 = tpu.matmul %0, %1, %cst {dimension_numbers = #tpu.dot_dimension_numbers<[1], [0], [0], [1], [0, 0, 1, 1], [], []>} : vector<96x32xbf16>, vector<32x32xbf16>, vector<96x32xf32> -> vector<96x32xf32>
    %c0_3 = arith.constant 0 : index
    %c0_4 = arith.constant 0 : index
    %3 = vector.load %arg3[%c0_3, %c0_4] : memref<1x32xf32, #tpu.memory_space<vmem>>, vector<1x32xf32>
    %4 = vector.broadcast %3 : vector<1x32xf32> to vector<96x32xf32>
    %5 = arith.addf %2, %4 : vector<96x32xf32>
    %c0_5 = arith.constant 0 : index
    %c0_6 = arith.constant 0 : index
    %6 = vector.load %arg4[%c0_5, %c0_6] : memref<96x32xf32, #tpu.memory_space<vmem>>, vector<96x32xf32>
    tpu.vector_store %arg4[%c0_5, %c0_6], %5 {strides = array<i32>} : memref<96x32xf32, #tpu.memory_space<vmem>>, vector<96x32xf32>,
    return
  }
  func.func @transform_0(%arg0: i32) -> (i32, i32) {
    %c0_i32 = arith.constant 0 : i32
    %c0_i32_0 = arith.constant 0 : i32
    return %arg0, %c0_i32 : i32, i32
  }
  func.func @transform_1(%arg0: i32) -> (i32, i32) {
    %c0_i32 = arith.constant 0 : i32
    %c0_i32_0 = arith.constant 0 : i32
    %c0_i32_1 = arith.constant 0 : i32
    return %c0_i32, %c0_i32_0 : i32, i32
  }
  func.func @transform_2(%arg0: i32) -> (i32, i32) {
    %c0_i32 = arith.constant 0 : i32
    %c0_i32_0 = arith.constant 0 : i32
    %c0_i32_1 = arith.constant 0 : i32
    return %c0_i32, %c0_i32_0 : i32, i32
  }
  func.func @transform_3(%arg0: i32) -> (i32, i32) {
    %c0_i32 = arith.constant 0 : i32
    %c0_i32_0 = arith.constant 0 : i32
    return %arg0, %c0_i32 : i32, i32
  }
}

module attributes {stable_mosaic.version = 11 : i64} {
  func.func @_circ_corr_kernel(%arg0: i32, %arg1: memref<4x128xf32, #tpu.memory_space<vmem>>, %arg2: memref<4x128xf32, #tpu.memory_space<vmem>>, %arg3: memref<4x128xf32, #tpu.memory_space<vmem>>) attributes {dimension_semantics = [#tpu.dimension_semantics<parallel>], iteration_bounds = array<i64: 6>, scalar_prefetch = 0 : i64, scratch_operands = 0 : i64, tpu.core_type = #tpu.core_type<tc>, window_params = [{transform_indices = @transform_0, window_bounds = array<i64: 4, 128>}, {transform_indices = @transform_1, window_bounds = array<i64: 4, 128>}, {transform_indices = @transform_2, window_bounds = array<i64: 4, 128>}]} {
    %c0 = arith.constant 0 : index
    %c0_0 = arith.constant 0 : index
    %0 = vector.load %arg1[%c0, %c0_0] : memref<4x128xf32, #tpu.memory_space<vmem>>, vector<4x128xf32>
    %c0_1 = arith.constant 0 : index
    %c0_2 = arith.constant 0 : index
    %1 = vector.load %arg2[%c0_1, %c0_2] : memref<4x128xf32, #tpu.memory_space<vmem>>, vector<4x128xf32>
    %2 = arith.mulf %0, %1 : vector<4x128xf32>
    %cst = arith.constant dense<0.000000e+00> : vector<128xf32>
    %3 = vector.multi_reduction <add>, %2, %cst [0] : vector<4x128xf32> to vector<128xf32>
    %4 = vector.shape_cast %3 : vector<128xf32> to vector<1x128xf32>
    %5 = vector.extract_strided_slice %1 {offsets = [3, 0], sizes = [1, 128], strides = [1, 1]} : vector<4x128xf32> to vector<1x128xf32>
    %6 = vector.extract_strided_slice %1 {offsets = [0, 0], sizes = [3, 128], strides = [1, 1]} : vector<4x128xf32> to vector<3x128xf32>
    %7 = tpu.concatenate %5, %6 in 0 : vector<1x128xf32>, vector<3x128xf32> -> vector<4x128xf32>
    %8 = arith.mulf %0, %7 : vector<4x128xf32>
    %cst_3 = arith.constant dense<0.000000e+00> : vector<128xf32>
    %9 = vector.multi_reduction <add>, %8, %cst_3 [0] : vector<4x128xf32> to vector<128xf32>
    %10 = vector.shape_cast %9 : vector<128xf32> to vector<1x128xf32>
    %11 = vector.extract_strided_slice %1 {offsets = [2, 0], sizes = [2, 128], strides = [1, 1]} : vector<4x128xf32> to vector<2x128xf32>
    %12 = vector.extract_strided_slice %1 {offsets = [0, 0], sizes = [2, 128], strides = [1, 1]} : vector<4x128xf32> to vector<2x128xf32>
    %13 = tpu.concatenate %11, %12 in 0 : vector<2x128xf32>, vector<2x128xf32> -> vector<4x128xf32>
    %14 = arith.mulf %0, %13 : vector<4x128xf32>
    %cst_4 = arith.constant dense<0.000000e+00> : vector<128xf32>
    %15 = vector.multi_reduction <add>, %14, %cst_4 [0] : vector<4x128xf32> to vector<128xf32>
    %16 = vector.shape_cast %15 : vector<128xf32> to vector<1x128xf32>
    %17 = vector.extract_strided_slice %1 {offsets = [1, 0], sizes = [3, 128], strides = [1, 1]} : vector<4x128xf32> to vector<3x128xf32>
    %18 = vector.extract_strided_slice %1 {offsets = [0, 0], sizes = [1, 128], strides = [1, 1]} : vector<4x128xf32> to vector<1x128xf32>
    %19 = tpu.concatenate %17, %18 in 0 : vector<3x128xf32>, vector<1x128xf32> -> vector<4x128xf32>
    %20 = arith.mulf %0, %19 : vector<4x128xf32>
    %cst_5 = arith.constant dense<0.000000e+00> : vector<128xf32>
    %21 = vector.multi_reduction <add>, %20, %cst_5 [0] : vector<4x128xf32> to vector<128xf32>
    %22 = vector.shape_cast %21 : vector<128xf32> to vector<1x128xf32>
    %23 = tpu.concatenate %4, %10, %16, %22 in 0 : vector<1x128xf32>, vector<1x128xf32>, vector<1x128xf32>, vector<1x128xf32> -> vector<4x128xf32>
    %c0_6 = arith.constant 0 : index
    %c0_7 = arith.constant 0 : index
    %24 = vector.load %arg3[%c0_6, %c0_7] : memref<4x128xf32, #tpu.memory_space<vmem>>, vector<4x128xf32>
    tpu.vector_store %arg3[%c0_6, %c0_7], %23 {strides = array<i32>} : memref<4x128xf32, #tpu.memory_space<vmem>>, vector<4x128xf32>,
    return
  }
  func.func @transform_0(%arg0: i32) -> (i32, i32) {
    %c0_i32 = arith.constant 0 : i32
    %c0_i32_0 = arith.constant 0 : i32
    return %c0_i32, %arg0 : i32, i32
  }
  func.func @transform_1(%arg0: i32) -> (i32, i32) {
    %c0_i32 = arith.constant 0 : i32
    %c0_i32_0 = arith.constant 0 : i32
    return %c0_i32, %arg0 : i32, i32
  }
  func.func @transform_2(%arg0: i32) -> (i32, i32) {
    %c0_i32 = arith.constant 0 : i32
    %c0_i32_0 = arith.constant 0 : i32
    return %c0_i32, %arg0 : i32, i32
  }
}

module attributes {stable_mosaic.version = 11 : i64} {
  func.func @_bmm_kernel(%arg0: memref<2x384x4xf32, #tpu.memory_space<vmem>>, %arg1: memref<2x4x4xf32, #tpu.memory_space<vmem>>, %arg2: memref<2x384x4xf32, #tpu.memory_space<vmem>>) attributes {dimension_semantics = [], scalar_prefetch = 0 : i64, scratch_operands = 0 : i64, tpu.core_type = #tpu.core_type<tc>} {
    %c0 = arith.constant 0 : index
    %c0_0 = arith.constant 0 : index
    %c0_1 = arith.constant 0 : index
    %0 = vector.load %arg0[%c0, %c0_0, %c0_1] : memref<2x384x4xf32, #tpu.memory_space<vmem>>, vector<2x384x4xf32>
    %c0_2 = arith.constant 0 : index
    %c0_3 = arith.constant 0 : index
    %c0_4 = arith.constant 0 : index
    %1 = vector.load %arg1[%c0_2, %c0_3, %c0_4] : memref<2x4x4xf32, #tpu.memory_space<vmem>>, vector<2x4x4xf32>
    "tpu.trace_start"() <{level = 10 : i32, message = "bmk,bkn->bmn"}> : () -> ()
    %cst = arith.constant dense<0.000000e+00> : vector<2x384x4xf32>
    %2 = tpu.matmul %0, %1, %cst {dimension_numbers = #tpu.dot_dimension_numbers<[2], [1], [1], [2], [0, 0, 0, 1, 1, 2], [0], [0]>} : vector<2x384x4xf32>, vector<2x4x4xf32>, vector<2x384x4xf32> -> vector<2x384x4xf32>
    "tpu.trace_stop"() : () -> ()
    %c0_5 = arith.constant 0 : index
    %c0_6 = arith.constant 0 : index
    %c0_7 = arith.constant 0 : index
    %3 = vector.load %arg2[%c0_5, %c0_6, %c0_7] : memref<2x384x4xf32, #tpu.memory_space<vmem>>, vector<2x384x4xf32>
    tpu.vector_store %arg2[%c0_5, %c0_6, %c0_7], %2 {strides = array<i32>} : memref<2x384x4xf32, #tpu.memory_space<vmem>>, vector<2x384x4xf32>,
    return
  }
}

module attributes {stable_mosaic.version = 11 : i64} {
  func.func @_tcn_kernel(%arg0: memref<4x4x192xf32, #tpu.memory_space<vmem>>, %arg1: memref<576x192xbf16, #tpu.memory_space<vmem>>, %arg2: memref<1x192xf32, #tpu.memory_space<vmem>>, %arg3: memref<576x192xbf16, #tpu.memory_space<vmem>>, %arg4: memref<1x192xf32, #tpu.memory_space<vmem>>, %arg5: memref<4x4x192xf32, #tpu.memory_space<vmem>>) attributes {dimension_semantics = [], scalar_prefetch = 0 : i64, scratch_operands = 0 : i64, tpu.core_type = #tpu.core_type<tc>} {
    %c0 = arith.constant 0 : index
    %c0_0 = arith.constant 0 : index
    %c0_1 = arith.constant 0 : index
    %0 = vector.load %arg0[%c0, %c0_0, %c0_1] : memref<4x4x192xf32, #tpu.memory_space<vmem>>, vector<4x4x192xf32>
    %cst = arith.constant 0.000000e+00 : f32
    %1 = vector.broadcast %cst : f32 to vector<4x2x192xf32>
    %2 = tpu.concatenate %1, %0 in 1 : vector<4x2x192xf32>, vector<4x4x192xf32> -> vector<4x6x192xf32>
    %3 = vector.extract_strided_slice %2 {offsets = [0, 0, 0], sizes = [4, 4, 192], strides = [1, 1, 1]} : vector<4x6x192xf32> to vector<4x4x192xf32>
    %4 = vector.extract_strided_slice %2 {offsets = [0, 1, 0], sizes = [4, 4, 192], strides = [1, 1, 1]} : vector<4x6x192xf32> to vector<4x4x192xf32>
    %5 = vector.extract_strided_slice %2 {offsets = [0, 2, 0], sizes = [4, 4, 192], strides = [1, 1, 1]} : vector<4x6x192xf32> to vector<4x4x192xf32>
    %6 = tpu.concatenate %3, %4, %5 in 2 : vector<4x4x192xf32>, vector<4x4x192xf32>, vector<4x4x192xf32> -> vector<4x4x576xf32>
    %7 = vector.shape_cast %6 : vector<4x4x576xf32> to vector<16x576xf32>
    %8 = arith.truncf %7 : vector<16x576xf32> to vector<16x576xbf16>
    %c0_2 = arith.constant 0 : index
    %c0_3 = arith.constant 0 : index
    %9 = vector.load %arg1[%c0_2, %c0_3] : memref<576x192xbf16, #tpu.memory_space<vmem>>, vector<576x192xbf16>
    %cst_4 = arith.constant dense<0.000000e+00> : vector<16x192xf32>
    %10 = tpu.matmul %8, %9, %cst_4 {dimension_numbers = #tpu.dot_dimension_numbers<[1], [0], [0], [1], [0, 0, 1, 1], [], []>} : vector<16x576xbf16>, vector<576x192xbf16>, vector<16x192xf32> -> vector<16x192xf32>
    %c0_5 = arith.constant 0 : index
    %c0_6 = arith.constant 0 : index
    %11 = vector.load %arg2[%c0_5, %c0_6] : memref<1x192xf32, #tpu.memory_space<vmem>>, vector<1x192xf32>
    %12 = vector.broadcast %11 : vector<1x192xf32> to vector<16x192xf32>
    %13 = arith.addf %10, %12 : vector<16x192xf32>
    %cst_7 = arith.constant 0.000000e+00 : f32
    %14 = vector.broadcast %cst_7 : f32 to vector<16x192xf32>
    %15 = arith.maximumf %13, %14 : vector<16x192xf32>
    %16 = vector.shape_cast %15 : vector<16x192xf32> to vector<4x4x192xf32>
    %cst_8 = arith.constant 0.000000e+00 : f32
    %17 = vector.broadcast %cst_8 : f32 to vector<4x2x192xf32>
    %18 = tpu.concatenate %17, %16 in 1 : vector<4x2x192xf32>, vector<4x4x192xf32> -> vector<4x6x192xf32>
    %19 = vector.extract_strided_slice %18 {offsets = [0, 0, 0], sizes = [4, 4, 192], strides = [1, 1, 1]} : vector<4x6x192xf32> to vector<4x4x192xf32>
    %20 = vector.extract_strided_slice %18 {offsets = [0, 1, 0], sizes = [4, 4, 192], strides = [1, 1, 1]} : vector<4x6x192xf32> to vector<4x4x192xf32>
    %21 = vector.extract_strided_slice %18 {offsets = [0, 2, 0], sizes = [4, 4, 192], strides = [1, 1, 1]} : vector<4x6x192xf32> to vector<4x4x192xf32>
    %22 = tpu.concatenate %19, %20, %21 in 2 : vector<4x4x192xf32>, vector<4x4x192xf32>, vector<4x4x192xf32> -> vector<4x4x576xf32>
    %23 = vector.shape_cast %22 : vector<4x4x576xf32> to vector<16x576xf32>
    %24 = arith.truncf %23 : vector<16x576xf32> to vector<16x576xbf16>
    %c0_9 = arith.constant 0 : index
    %c0_10 = arith.constant 0 : index
    %25 = vector.load %arg3[%c0_9, %c0_10] : memref<576x192xbf16, #tpu.memory_space<vmem>>, vector<576x192xbf16>
    %cst_11 = arith.constant dense<0.000000e+00> : vector<16x192xf32>
    %26 = tpu.matmul %24, %25, %cst_11 {dimension_numbers = #tpu.dot_dimension_numbers<[1], [0], [0], [1], [0, 0, 1, 1], [], []>} : vector<16x576xbf16>, vector<576x192xbf16>, vector<16x192xf32> -> vector<16x192xf32>
    %c0_12 = arith.constant 0 : index
    %c0_13 = arith.constant 0 : index
    %27 = vector.load %arg4[%c0_12, %c0_13] : memref<1x192xf32, #tpu.memory_space<vmem>>, vector<1x192xf32>
    %28 = vector.broadcast %27 : vector<1x192xf32> to vector<16x192xf32>
    %29 = arith.addf %26, %28 : vector<16x192xf32>
    %cst_14 = arith.constant 0.000000e+00 : f32
    %30 = vector.broadcast %cst_14 : f32 to vector<16x192xf32>
    %31 = arith.maximumf %29, %30 : vector<16x192xf32>
    %32 = vector.shape_cast %31 : vector<16x192xf32> to vector<4x4x192xf32>
    %33 = arith.addf %32, %0 : vector<4x4x192xf32>
    %cst_15 = arith.constant 0.000000e+00 : f32
    %34 = vector.broadcast %cst_15 : f32 to vector<4x4x192xf32>
    %35 = arith.maximumf %33, %34 : vector<4x4x192xf32>
    %c0_16 = arith.constant 0 : index
    %c0_17 = arith.constant 0 : index
    %c0_18 = arith.constant 0 : index
    %36 = vector.load %arg5[%c0_16, %c0_17, %c0_18] : memref<4x4x192xf32, #tpu.memory_space<vmem>>, vector<4x4x192xf32>
    tpu.vector_store %arg5[%c0_16, %c0_17, %c0_18], %35 {strides = array<i32>} : memref<4x4x192xf32, #tpu.memory_space<vmem>>, vector<4x4x192xf32>,
    return
  }
}

module attributes {stable_mosaic.version = 11 : i64} {
  func.func @_decomp_kernel(%arg0: i32, %arg1: memref<12x128xf32, #tpu.memory_space<vmem>>, %arg2: memref<12x128xf32, #tpu.memory_space<vmem>>, %arg3: memref<12x128xf32, #tpu.memory_space<vmem>>, %arg4: memref<12x128xf32, #tpu.memory_space<vmem>>) attributes {dimension_semantics = [#tpu.dimension_semantics<parallel>], iteration_bounds = array<i64: 2>, scalar_prefetch = 0 : i64, scratch_operands = 0 : i64, tpu.core_type = #tpu.core_type<tc>, window_params = [{transform_indices = @transform_0, window_bounds = array<i64: 12, 128>}, {transform_indices = @transform_1, window_bounds = array<i64: 12, 128>}, {transform_indices = @transform_2, window_bounds = array<i64: 12, 128>}, {transform_indices = @transform_3, window_bounds = array<i64: 12, 128>}]} {
    %c0 = arith.constant 0 : index
    %c0_0 = arith.constant 0 : index
    %0 = vector.load %arg1[%c0, %c0_0] : memref<12x128xf32, #tpu.memory_space<vmem>>, vector<12x128xf32>
    %c0_1 = arith.constant 0 : index
    %c0_2 = arith.constant 0 : index
    %1 = vector.load %arg2[%c0_1, %c0_2] : memref<12x128xf32, #tpu.memory_space<vmem>>, vector<12x128xf32>
    %2 = arith.addf %0, %1 : vector<12x128xf32>
    %3 = vector.extract_strided_slice %2 {offsets = [0, 0], sizes = [1, 128], strides = [1, 1]} : vector<12x128xf32> to vector<1x128xf32>
    %4 = vector.extract_strided_slice %2 {offsets = [11, 0], sizes = [1, 128], strides = [1, 1]} : vector<12x128xf32> to vector<1x128xf32>
    %5 = vector.extract_strided_slice %2 {offsets = [1, 0], sizes = [11, 128], strides = [1, 1]} : vector<12x128xf32> to vector<11x128xf32>
    %6 = tpu.concatenate %5, %4 in 0 : vector<11x128xf32>, vector<1x128xf32> -> vector<12x128xf32>
    %7 = vector.extract_strided_slice %2 {offsets = [0, 0], sizes = [11, 128], strides = [1, 1]} : vector<12x128xf32> to vector<11x128xf32>
    %8 = tpu.concatenate %3, %7 in 0 : vector<1x128xf32>, vector<11x128xf32> -> vector<12x128xf32>
    %9 = arith.addf %2, %6 : vector<12x128xf32>
    %10 = arith.addf %9, %8 : vector<12x128xf32>
    %11 = vector.extract_strided_slice %2 {offsets = [0, 0], sizes = [1, 128], strides = [1, 1]} : vector<12x128xf32> to vector<1x128xf32>
    %12 = vector.shape_cast %11 : vector<1x128xf32> to vector<1x128xf32>
    %13 = vector.broadcast %12 : vector<1x128xf32> to vector<2x128xf32>
    %14 = vector.extract_strided_slice %2 {offsets = [11, 0], sizes = [1, 128], strides = [1, 1]} : vector<12x128xf32> to vector<1x128xf32>
    %15 = vector.shape_cast %14 : vector<1x128xf32> to vector<1x128xf32>
    %16 = vector.broadcast %15 : vector<1x128xf32> to vector<2x128xf32>
    %17 = vector.extract_strided_slice %2 {offsets = [2, 0], sizes = [10, 128], strides = [1, 1]} : vector<12x128xf32> to vector<10x128xf32>
    %18 = tpu.concatenate %17, %16 in 0 : vector<10x128xf32>, vector<2x128xf32> -> vector<12x128xf32>
    %19 = vector.extract_strided_slice %2 {offsets = [0, 0], sizes = [10, 128], strides = [1, 1]} : vector<12x128xf32> to vector<10x128xf32>
    %20 = tpu.concatenate %13, %19 in 0 : vector<2x128xf32>, vector<10x128xf32> -> vector<12x128xf32>
    %21 = arith.addf %10, %18 : vector<12x128xf32>
    %22 = arith.addf %21, %20 : vector<12x128xf32>
    %cst = arith.constant 2.000000e-01 : f32
    %23 = vector.broadcast %cst : f32 to vector<12x128xf32>
    %24 = arith.mulf %22, %23 : vector<12x128xf32>
    %c0_3 = arith.constant 0 : index
    %c0_4 = arith.constant 0 : index
    %25 = vector.load %arg4[%c0_3, %c0_4] : memref<12x128xf32, #tpu.memory_space<vmem>>, vector<12x128xf32>
    tpu.vector_store %arg4[%c0_3, %c0_4], %24 {strides = array<i32>} : memref<12x128xf32, #tpu.memory_space<vmem>>, vector<12x128xf32>,
    %26 = arith.subf %2, %24 : vector<12x128xf32>
    %c0_5 = arith.constant 0 : index
    %c0_6 = arith.constant 0 : index
    %27 = vector.load %arg3[%c0_5, %c0_6] : memref<12x128xf32, #tpu.memory_space<vmem>>, vector<12x128xf32>
    tpu.vector_store %arg3[%c0_5, %c0_6], %26 {strides = array<i32>} : memref<12x128xf32, #tpu.memory_space<vmem>>, vector<12x128xf32>,
    return
  }
  func.func @transform_0(%arg0: i32) -> (i32, i32) {
    %c0_i32 = arith.constant 0 : i32
    %c0_i32_0 = arith.constant 0 : i32
    return %c0_i32, %arg0 : i32, i32
  }
  func.func @transform_1(%arg0: i32) -> (i32, i32) {
    %c0_i32 = arith.constant 0 : i32
    %c0_i32_0 = arith.constant 0 : i32
    return %c0_i32, %arg0 : i32, i32
  }
  func.func @transform_2(%arg0: i32) -> (i32, i32) {
    %c0_i32 = arith.constant 0 : i32
    %c0_i32_0 = arith.constant 0 : i32
    return %c0_i32, %arg0 : i32, i32
  }
  func.func @transform_3(%arg0: i32) -> (i32, i32) {
    %c0_i32 = arith.constant 0 : i32
    %c0_i32_0 = arith.constant 0 : i32
    return %c0_i32, %arg0 : i32, i32
  }
}

module attributes {stable_mosaic.version = 11 : i64} {
  func.func @_decomp_kernel(%arg0: i32, %arg1: memref<12x128xf32, #tpu.memory_space<vmem>>, %arg2: memref<12x128xf32, #tpu.memory_space<vmem>>, %arg3: memref<12x128xf32, #tpu.memory_space<vmem>>, %arg4: memref<12x128xf32, #tpu.memory_space<vmem>>) attributes {dimension_semantics = [#tpu.dimension_semantics<parallel>], iteration_bounds = array<i64: 2>, scalar_prefetch = 0 : i64, scratch_operands = 0 : i64, tpu.core_type = #tpu.core_type<tc>, window_params = [{transform_indices = @transform_0, window_bounds = array<i64: 12, 128>}, {transform_indices = @transform_1, window_bounds = array<i64: 12, 128>}, {transform_indices = @transform_2, window_bounds = array<i64: 12, 128>}, {transform_indices = @transform_3, window_bounds = array<i64: 12, 128>}]} {
    %c0 = arith.constant 0 : index
    %c0_0 = arith.constant 0 : index
    %0 = vector.load %arg1[%c0, %c0_0] : memref<12x128xf32, #tpu.memory_space<vmem>>, vector<12x128xf32>
    %c0_1 = arith.constant 0 : index
    %c0_2 = arith.constant 0 : index
    %1 = vector.load %arg2[%c0_1, %c0_2] : memref<12x128xf32, #tpu.memory_space<vmem>>, vector<12x128xf32>
    %2 = arith.addf %0, %1 : vector<12x128xf32>
    %3 = vector.extract_strided_slice %2 {offsets = [0, 0], sizes = [1, 128], strides = [1, 1]} : vector<12x128xf32> to vector<1x128xf32>
    %4 = vector.extract_strided_slice %2 {offsets = [11, 0], sizes = [1, 128], strides = [1, 1]} : vector<12x128xf32> to vector<1x128xf32>
    %5 = vector.extract_strided_slice %2 {offsets = [1, 0], sizes = [11, 128], strides = [1, 1]} : vector<12x128xf32> to vector<11x128xf32>
    %6 = tpu.concatenate %5, %4 in 0 : vector<11x128xf32>, vector<1x128xf32> -> vector<12x128xf32>
    %7 = vector.extract_strided_slice %2 {offsets = [0, 0], sizes = [11, 128], strides = [1, 1]} : vector<12x128xf32> to vector<11x128xf32>
    %8 = tpu.concatenate %3, %7 in 0 : vector<1x128xf32>, vector<11x128xf32> -> vector<12x128xf32>
    %9 = arith.addf %2, %6 : vector<12x128xf32>
    %10 = arith.addf %9, %8 : vector<12x128xf32>
    %11 = vector.extract_strided_slice %2 {offsets = [0, 0], sizes = [1, 128], strides = [1, 1]} : vector<12x128xf32> to vector<1x128xf32>
    %12 = vector.shape_cast %11 : vector<1x128xf32> to vector<1x128xf32>
    %13 = vector.broadcast %12 : vector<1x128xf32> to vector<2x128xf32>
    %14 = vector.extract_strided_slice %2 {offsets = [11, 0], sizes = [1, 128], strides = [1, 1]} : vector<12x128xf32> to vector<1x128xf32>
    %15 = vector.shape_cast %14 : vector<1x128xf32> to vector<1x128xf32>
    %16 = vector.broadcast %15 : vector<1x128xf32> to vector<2x128xf32>
    %17 = vector.extract_strided_slice %2 {offsets = [2, 0], sizes = [10, 128], strides = [1, 1]} : vector<12x128xf32> to vector<10x128xf32>
    %18 = tpu.concatenate %17, %16 in 0 : vector<10x128xf32>, vector<2x128xf32> -> vector<12x128xf32>
    %19 = vector.extract_strided_slice %2 {offsets = [0, 0], sizes = [10, 128], strides = [1, 1]} : vector<12x128xf32> to vector<10x128xf32>
    %20 = tpu.concatenate %13, %19 in 0 : vector<2x128xf32>, vector<10x128xf32> -> vector<12x128xf32>
    %21 = arith.addf %10, %18 : vector<12x128xf32>
    %22 = arith.addf %21, %20 : vector<12x128xf32>
    %cst = arith.constant 2.000000e-01 : f32
    %23 = vector.broadcast %cst : f32 to vector<12x128xf32>
    %24 = arith.mulf %22, %23 : vector<12x128xf32>
    %c0_3 = arith.constant 0 : index
    %c0_4 = arith.constant 0 : index
    %25 = vector.load %arg4[%c0_3, %c0_4] : memref<12x128xf32, #tpu.memory_space<vmem>>, vector<12x128xf32>
    tpu.vector_store %arg4[%c0_3, %c0_4], %24 {strides = array<i32>} : memref<12x128xf32, #tpu.memory_space<vmem>>, vector<12x128xf32>,
    %26 = arith.subf %2, %24 : vector<12x128xf32>
    %c0_5 = arith.constant 0 : index
    %c0_6 = arith.constant 0 : index
    %27 = vector.load %arg3[%c0_5, %c0_6] : memref<12x128xf32, #tpu.memory_space<vmem>>, vector<12x128xf32>
    tpu.vector_store %arg3[%c0_5, %c0_6], %26 {strides = array<i32>} : memref<12x128xf32, #tpu.memory_space<vmem>>, vector<12x128xf32>,
    return
  }
  func.func @transform_0(%arg0: i32) -> (i32, i32) {
    %c0_i32 = arith.constant 0 : i32
    %c0_i32_0 = arith.constant 0 : i32
    return %c0_i32, %arg0 : i32, i32
  }
  func.func @transform_1(%arg0: i32) -> (i32, i32) {
    %c0_i32 = arith.constant 0 : i32
    %c0_i32_0 = arith.constant 0 : i32
    return %c0_i32, %arg0 : i32, i32
  }
  func.func @transform_2(%arg0: i32) -> (i32, i32) {
    %c0_i32 = arith.constant 0 : i32
    %c0_i32_0 = arith.constant 0 : i32
    return %c0_i32, %arg0 : i32, i32
  }
  func.func @transform_3(%arg0: i32) -> (i32, i32) {
    %c0_i32 = arith.constant 0 : i32
    %c0_i32_0 = arith.constant 0 : i32
    return %c0_i32, %arg0 : i32, i32
  }
}

module attributes {stable_mosaic.version = 11 : i64} {
  func.func @_decomp_kernel(%arg0: i32, %arg1: memref<12x128xf32, #tpu.memory_space<vmem>>, %arg2: memref<12x128xf32, #tpu.memory_space<vmem>>, %arg3: memref<12x128xf32, #tpu.memory_space<vmem>>) attributes {dimension_semantics = [#tpu.dimension_semantics<parallel>], iteration_bounds = array<i64: 2>, scalar_prefetch = 0 : i64, scratch_operands = 0 : i64, tpu.core_type = #tpu.core_type<tc>, window_params = [{transform_indices = @transform_0, window_bounds = array<i64: 12, 128>}, {transform_indices = @transform_1, window_bounds = array<i64: 12, 128>}, {transform_indices = @transform_2, window_bounds = array<i64: 12, 128>}]} {
    %c0 = arith.constant 0 : index
    %c0_0 = arith.constant 0 : index
    %0 = vector.load %arg1[%c0, %c0_0] : memref<12x128xf32, #tpu.memory_space<vmem>>, vector<12x128xf32>
    %1 = vector.extract_strided_slice %0 {offsets = [0, 0], sizes = [1, 128], strides = [1, 1]} : vector<12x128xf32> to vector<1x128xf32>
    %2 = vector.extract_strided_slice %0 {offsets = [11, 0], sizes = [1, 128], strides = [1, 1]} : vector<12x128xf32> to vector<1x128xf32>
    %3 = vector.extract_strided_slice %0 {offsets = [1, 0], sizes = [11, 128], strides = [1, 1]} : vector<12x128xf32> to vector<11x128xf32>
    %4 = tpu.concatenate %3, %2 in 0 : vector<11x128xf32>, vector<1x128xf32> -> vector<12x128xf32>
    %5 = vector.extract_strided_slice %0 {offsets = [0, 0], sizes = [11, 128], strides = [1, 1]} : vector<12x128xf32> to vector<11x128xf32>
    %6 = tpu.concatenate %1, %5 in 0 : vector<1x128xf32>, vector<11x128xf32> -> vector<12x128xf32>
    %7 = arith.addf %0, %4 : vector<12x128xf32>
    %8 = arith.addf %7, %6 : vector<12x128xf32>
    %9 = vector.extract_strided_slice %0 {offsets = [0, 0], sizes = [1, 128], strides = [1, 1]} : vector<12x128xf32> to vector<1x128xf32>
    %10 = vector.shape_cast %9 : vector<1x128xf32> to vector<1x128xf32>
    %11 = vector.broadcast %10 : vector<1x128xf32> to vector<2x128xf32>
    %12 = vector.extract_strided_slice %0 {offsets = [11, 0], sizes = [1, 128], strides = [1, 1]} : vector<12x128xf32> to vector<1x128xf32>
    %13 = vector.shape_cast %12 : vector<1x128xf32> to vector<1x128xf32>
    %14 = vector.broadcast %13 : vector<1x128xf32> to vector<2x128xf32>
    %15 = vector.extract_strided_slice %0 {offsets = [2, 0], sizes = [10, 128], strides = [1, 1]} : vector<12x128xf32> to vector<10x128xf32>
    %16 = tpu.concatenate %15, %14 in 0 : vector<10x128xf32>, vector<2x128xf32> -> vector<12x128xf32>
    %17 = vector.extract_strided_slice %0 {offsets = [0, 0], sizes = [10, 128], strides = [1, 1]} : vector<12x128xf32> to vector<10x128xf32>
    %18 = tpu.concatenate %11, %17 in 0 : vector<2x128xf32>, vector<10x128xf32> -> vector<12x128xf32>
    %19 = arith.addf %8, %16 : vector<12x128xf32>
    %20 = arith.addf %19, %18 : vector<12x128xf32>
    %cst = arith.constant 2.000000e-01 : f32
    %21 = vector.broadcast %cst : f32 to vector<12x128xf32>
    %22 = arith.mulf %20, %21 : vector<12x128xf32>
    %c0_1 = arith.constant 0 : index
    %c0_2 = arith.constant 0 : index
    %23 = vector.load %arg3[%c0_1, %c0_2] : memref<12x128xf32, #tpu.memory_space<vmem>>, vector<12x128xf32>
    tpu.vector_store %arg3[%c0_1, %c0_2], %22 {strides = array<i32>} : memref<12x128xf32, #tpu.memory_space<vmem>>, vector<12x128xf32>,
    %24 = arith.subf %0, %22 : vector<12x128xf32>
    %c0_3 = arith.constant 0 : index
    %c0_4 = arith.constant 0 : index
    %25 = vector.load %arg2[%c0_3, %c0_4] : memref<12x128xf32, #tpu.memory_space<vmem>>, vector<12x128xf32>
    tpu.vector_store %arg2[%c0_3, %c0_4], %24 {strides = array<i32>} : memref<12x128xf32, #tpu.memory_space<vmem>>, vector<12x128xf32>,
    return
  }
  func.func @transform_0(%arg0: i32) -> (i32, i32) {
    %c0_i32 = arith.constant 0 : i32
    %c0_i32_0 = arith.constant 0 : i32
    return %c0_i32, %arg0 : i32, i32
  }
  func.func @transform_1(%arg0: i32) -> (i32, i32) {
    %c0_i32 = arith.constant 0 : i32
    %c0_i32_0 = arith.constant 0 : i32
    return %c0_i32, %arg0 : i32, i32
  }
  func.func @transform_2(%arg0: i32) -> (i32, i32) {
    %c0_i32 = arith.constant 0 : i32
    %c0_i32_0 = arith.constant 0 : i32
    return %c0_i32, %arg0 : i32, i32
  }
}

module attributes {stable_mosaic.version = 11 : i64} {
  func.func @_ffn_kernel(%arg0: i32, %arg1: memref<96x32xf32, #tpu.memory_space<vmem>>, %arg2: memref<32x64xbf16, #tpu.memory_space<vmem>>, %arg3: memref<64x32xbf16, #tpu.memory_space<vmem>>, %arg4: memref<96x32xf32, #tpu.memory_space<vmem>>) attributes {dimension_semantics = [#tpu.dimension_semantics<parallel>], iteration_bounds = array<i64: 1>, scalar_prefetch = 0 : i64, scratch_operands = 0 : i64, tpu.core_type = #tpu.core_type<tc>, window_params = [{transform_indices = @transform_0, window_bounds = array<i64: 96, 32>}, {pipeline_mode = #tpu.pipeline_mode<synchronous>, transform_indices = @transform_1, window_bounds = array<i64: 32, 64>}, {pipeline_mode = #tpu.pipeline_mode<synchronous>, transform_indices = @transform_2, window_bounds = array<i64: 64, 32>}, {transform_indices = @transform_3, window_bounds = array<i64: 96, 32>}]} {
    %c0 = arith.constant 0 : index
    %c0_0 = arith.constant 0 : index
    %0 = vector.load %arg1[%c0, %c0_0] : memref<96x32xf32, #tpu.memory_space<vmem>>, vector<96x32xf32>
    %1 = arith.truncf %0 : vector<96x32xf32> to vector<96x32xbf16>
    %c0_1 = arith.constant 0 : index
    %c0_2 = arith.constant 0 : index
    %2 = vector.load %arg2[%c0_1, %c0_2] : memref<32x64xbf16, #tpu.memory_space<vmem>>, vector<32x64xbf16>
    %cst = arith.constant dense<0.000000e+00> : vector<96x64xf32>
    %3 = tpu.matmul %1, %2, %cst {dimension_numbers = #tpu.dot_dimension_numbers<[1], [0], [0], [1], [0, 0, 1, 1], [], []>} : vector<96x32xbf16>, vector<32x64xbf16>, vector<96x64xf32> -> vector<96x64xf32>
    %4 = arith.mulf %3, %3 : vector<96x64xf32>
    %5 = arith.mulf %3, %4 : vector<96x64xf32>
    %cst_3 = arith.constant 4.471500e-02 : f32
    %6 = vector.broadcast %cst_3 : f32 to vector<96x64xf32>
    %7 = arith.mulf %6, %5 : vector<96x64xf32>
    %8 = arith.addf %3, %7 : vector<96x64xf32>
    %cst_4 = arith.constant 0.797884583 : f32
    %9 = vector.broadcast %cst_4 : f32 to vector<96x64xf32>
    %10 = arith.mulf %9, %8 : vector<96x64xf32>
    %11 = math.tanh %10 : vector<96x64xf32>
    %cst_5 = arith.constant 1.000000e+00 : f32
    %12 = vector.broadcast %cst_5 : f32 to vector<96x64xf32>
    %13 = arith.addf %12, %11 : vector<96x64xf32>
    %cst_6 = arith.constant 5.000000e-01 : f32
    %14 = vector.broadcast %cst_6 : f32 to vector<96x64xf32>
    %15 = arith.mulf %14, %13 : vector<96x64xf32>
    %16 = arith.mulf %3, %15 : vector<96x64xf32>
    %17 = arith.truncf %16 : vector<96x64xf32> to vector<96x64xbf16>
    %c0_7 = arith.constant 0 : index
    %c0_8 = arith.constant 0 : index
    %18 = vector.load %arg3[%c0_7, %c0_8] : memref<64x32xbf16, #tpu.memory_space<vmem>>, vector<64x32xbf16>
    %cst_9 = arith.constant dense<0.000000e+00> : vector<96x32xf32>
    %19 = tpu.matmul %17, %18, %cst_9 {dimension_numbers = #tpu.dot_dimension_numbers<[1], [0], [0], [1], [0, 0, 1, 1], [], []>} : vector<96x64xbf16>, vector<64x32xbf16>, vector<96x32xf32> -> vector<96x32xf32>
    %20 = arith.addf %0, %19 : vector<96x32xf32>
    %c0_10 = arith.constant 0 : index
    %c0_11 = arith.constant 0 : index
    %21 = vector.load %arg4[%c0_10, %c0_11] : memref<96x32xf32, #tpu.memory_space<vmem>>, vector<96x32xf32>
    tpu.vector_store %arg4[%c0_10, %c0_11], %20 {strides = array<i32>} : memref<96x32xf32, #tpu.memory_space<vmem>>, vector<96x32xf32>,
    return
  }
  func.func @transform_0(%arg0: i32) -> (i32, i32) {
    %c0_i32 = arith.constant 0 : i32
    %c0_i32_0 = arith.constant 0 : i32
    return %arg0, %c0_i32 : i32, i32
  }
  func.func @transform_1(%arg0: i32) -> (i32, i32) {
    %c0_i32 = arith.constant 0 : i32
    %c0_i32_0 = arith.constant 0 : i32
    %c0_i32_1 = arith.constant 0 : i32
    return %c0_i32, %c0_i32_0 : i32, i32
  }
  func.func @transform_2(%arg0: i32) -> (i32, i32) {
    %c0_i32 = arith.constant 0 : i32
    %c0_i32_0 = arith.constant 0 : i32
    %c0_i32_1 = arith.constant 0 : i32
    return %c0_i32, %c0_i32_0 : i32, i32
  }
  func.func @transform_3(%arg0: i32) -> (i32, i32) {
    %c0_i32 = arith.constant 0 : i32
    %c0_i32_0 = arith.constant 0 : i32
    return %arg0, %c0_i32 : i32, i32
  }
}

module attributes {stable_mosaic.version = 11 : i64} {
  func.func @_my_layernorm_kernel(%arg0: memref<8x12x32xf32, #tpu.memory_space<vmem>>, %arg1: memref<1x1x32xf32, #tpu.memory_space<vmem>>, %arg2: memref<1x1x32xf32, #tpu.memory_space<vmem>>, %arg3: memref<8x12x32xf32, #tpu.memory_space<vmem>>) attributes {dimension_semantics = [], scalar_prefetch = 0 : i64, scratch_operands = 0 : i64, tpu.core_type = #tpu.core_type<tc>} {
    %c0 = arith.constant 0 : index
    %c0_0 = arith.constant 0 : index
    %c0_1 = arith.constant 0 : index
    %0 = vector.load %arg0[%c0, %c0_0, %c0_1] : memref<8x12x32xf32, #tpu.memory_space<vmem>>, vector<8x12x32xf32>
    %cst = arith.constant dense<0.000000e+00> : vector<8x12xf32>
    %1 = vector.multi_reduction <add>, %0, %cst [2] : vector<8x12x32xf32> to vector<8x12xf32>
    %2 = vector.shape_cast %1 : vector<8x12xf32> to vector<8x12x1xf32>
    %cst_2 = arith.constant 3.200000e+01 : f32
    %3 = vector.broadcast %cst_2 : f32 to vector<8x12x1xf32>
    %4 = arith.divf %2, %3 : vector<8x12x1xf32>
    %5 = vector.broadcast %4 : vector<8x12x1xf32> to vector<8x12x32xf32>
    %6 = arith.subf %0, %5 : vector<8x12x32xf32>
    %7 = arith.mulf %6, %6 : vector<8x12x32xf32>
    %cst_3 = arith.constant dense<0.000000e+00> : vector<8x12xf32>
    %8 = vector.multi_reduction <add>, %7, %cst_3 [2] : vector<8x12x32xf32> to vector<8x12xf32>
    %9 = vector.shape_cast %8 : vector<8x12xf32> to vector<8x12x1xf32>
    %cst_4 = arith.constant 3.200000e+01 : f32
    %10 = vector.broadcast %cst_4 : f32 to vector<8x12x1xf32>
    %11 = arith.divf %9, %10 : vector<8x12x1xf32>
    %12 = vector.broadcast %4 : vector<8x12x1xf32> to vector<8x12x32xf32>
    %13 = arith.subf %0, %12 : vector<8x12x32xf32>
    %cst_5 = arith.constant 9.99999974E-6 : f32
    %14 = vector.broadcast %cst_5 : f32 to vector<8x12x1xf32>
    %15 = arith.addf %11, %14 : vector<8x12x1xf32>
    %16 = math.rsqrt %15 : vector<8x12x1xf32>
    %17 = vector.broadcast %16 : vector<8x12x1xf32> to vector<8x12x32xf32>
    %18 = arith.mulf %13, %17 : vector<8x12x32xf32>
    %c0_6 = arith.constant 0 : index
    %c0_7 = arith.constant 0 : index
    %c0_8 = arith.constant 0 : index
    %19 = vector.load %arg1[%c0_6, %c0_7, %c0_8] : memref<1x1x32xf32, #tpu.memory_space<vmem>>, vector<1x1x32xf32>
    %20 = vector.broadcast %19 : vector<1x1x32xf32> to vector<8x12x32xf32>
    %21 = arith.mulf %18, %20 : vector<8x12x32xf32>
    %c0_9 = arith.constant 0 : index
    %c0_10 = arith.constant 0 : index
    %c0_11 = arith.constant 0 : index
    %22 = vector.load %arg2[%c0_9, %c0_10, %c0_11] : memref<1x1x32xf32, #tpu.memory_space<vmem>>, vector<1x1x32xf32>
    %23 = vector.broadcast %22 : vector<1x1x32xf32> to vector<8x12x32xf32>
    %24 = arith.addf %21, %23 : vector<8x12x32xf32>
    %cst_12 = arith.constant dense<0.000000e+00> : vector<8x32xf32>
    %25 = vector.multi_reduction <add>, %24, %cst_12 [1] : vector<8x12x32xf32> to vector<8x32xf32>
    %26 = vector.shape_cast %25 : vector<8x32xf32> to vector<8x1x32xf32>
    %cst_13 = arith.constant 1.200000e+01 : f32
    %27 = vector.broadcast %cst_13 : f32 to vector<8x1x32xf32>
    %28 = arith.divf %26, %27 : vector<8x1x32xf32>
    %29 = vector.broadcast %28 : vector<8x1x32xf32> to vector<8x12x32xf32>
    %30 = arith.subf %24, %29 : vector<8x12x32xf32>
    %c0_14 = arith.constant 0 : index
    %c0_15 = arith.constant 0 : index
    %c0_16 = arith.constant 0 : index
    %31 = vector.load %arg3[%c0_14, %c0_15, %c0_16] : memref<8x12x32xf32, #tpu.memory_space<vmem>>, vector<8x12x32xf32>
    tpu.vector_store %arg3[%c0_14, %c0_15, %c0_16], %30 {strides = array<i32>} : memref<8x12x32xf32, #tpu.memory_space<vmem>>, vector<8x12x32xf32>,
    return
  }
}

module attributes {stable_mosaic.version = 11 : i64} {
  func.func @_linear_kernel(%arg0: i32, %arg1: memref<96x32xbf16, #tpu.memory_space<vmem>>, %arg2: memref<32x64xbf16, #tpu.memory_space<vmem>>, %arg3: memref<1x64xf32, #tpu.memory_space<vmem>>, %arg4: memref<96x64xf32, #tpu.memory_space<vmem>>) attributes {dimension_semantics = [#tpu.dimension_semantics<parallel>], iteration_bounds = array<i64: 1>, scalar_prefetch = 0 : i64, scratch_operands = 0 : i64, tpu.core_type = #tpu.core_type<tc>, window_params = [{transform_indices = @transform_0, window_bounds = array<i64: 96, 32>}, {pipeline_mode = #tpu.pipeline_mode<synchronous>, transform_indices = @transform_1, window_bounds = array<i64: 32, 64>}, {pipeline_mode = #tpu.pipeline_mode<synchronous>, transform_indices = @transform_2, window_bounds = array<i64: 1, 64>}, {transform_indices = @transform_3, window_bounds = array<i64: 96, 64>}]} {
    %c0 = arith.constant 0 : index
    %c0_0 = arith.constant 0 : index
    %0 = vector.load %arg1[%c0, %c0_0] : memref<96x32xbf16, #tpu.memory_space<vmem>>, vector<96x32xbf16>
    %c0_1 = arith.constant 0 : index
    %c0_2 = arith.constant 0 : index
    %1 = vector.load %arg2[%c0_1, %c0_2] : memref<32x64xbf16, #tpu.memory_space<vmem>>, vector<32x64xbf16>
    %cst = arith.constant dense<0.000000e+00> : vector<96x64xf32>
    %2 = tpu.matmul %0, %1, %cst {dimension_numbers = #tpu.dot_dimension_numbers<[1], [0], [0], [1], [0, 0, 1, 1], [], []>} : vector<96x32xbf16>, vector<32x64xbf16>, vector<96x64xf32> -> vector<96x64xf32>
    %c0_3 = arith.constant 0 : index
    %c0_4 = arith.constant 0 : index
    %3 = vector.load %arg3[%c0_3, %c0_4] : memref<1x64xf32, #tpu.memory_space<vmem>>, vector<1x64xf32>
    %4 = vector.broadcast %3 : vector<1x64xf32> to vector<96x64xf32>
    %5 = arith.addf %2, %4 : vector<96x64xf32>
    %c0_5 = arith.constant 0 : index
    %c0_6 = arith.constant 0 : index
    %6 = vector.load %arg4[%c0_5, %c0_6] : memref<96x64xf32, #tpu.memory_space<vmem>>, vector<96x64xf32>
    tpu.vector_store %arg4[%c0_5, %c0_6], %5 {strides = array<i32>} : memref<96x64xf32, #tpu.memory_space<vmem>>, vector<96x64xf32>,
    return
  }
  func.func @transform_0(%arg0: i32) -> (i32, i32) {
    %c0_i32 = arith.constant 0 : i32
    %c0_i32_0 = arith.constant 0 : i32
    return %arg0, %c0_i32 : i32, i32
  }
  func.func @transform_1(%arg0: i32) -> (i32, i32) {
    %c0_i32 = arith.constant 0 : i32
    %c0_i32_0 = arith.constant 0 : i32
    %c0_i32_1 = arith.constant 0 : i32
    return %c0_i32, %c0_i32_0 : i32, i32
  }
  func.func @transform_2(%arg0: i32) -> (i32, i32) {
    %c0_i32 = arith.constant 0 : i32
    %c0_i32_0 = arith.constant 0 : i32
    %c0_i32_1 = arith.constant 0 : i32
    return %c0_i32, %c0_i32_0 : i32, i32
  }
  func.func @transform_3(%arg0: i32) -> (i32, i32) {
    %c0_i32 = arith.constant 0 : i32
    %c0_i32_0 = arith.constant 0 : i32
    return %arg0, %c0_i32 : i32, i32
  }
}

module attributes {stable_mosaic.version = 11 : i64} {
  func.func @_decomp_kernel(%arg0: i32, %arg1: memref<12x128xf32, #tpu.memory_space<vmem>>, %arg2: memref<12x128xf32, #tpu.memory_space<vmem>>, %arg3: memref<12x128xf32, #tpu.memory_space<vmem>>) attributes {dimension_semantics = [#tpu.dimension_semantics<parallel>], iteration_bounds = array<i64: 2>, scalar_prefetch = 0 : i64, scratch_operands = 0 : i64, tpu.core_type = #tpu.core_type<tc>, window_params = [{transform_indices = @transform_0, window_bounds = array<i64: 12, 128>}, {transform_indices = @transform_1, window_bounds = array<i64: 12, 128>}, {transform_indices = @transform_2, window_bounds = array<i64: 12, 128>}]} {
    %c0 = arith.constant 0 : index
    %c0_0 = arith.constant 0 : index
    %0 = vector.load %arg1[%c0, %c0_0] : memref<12x128xf32, #tpu.memory_space<vmem>>, vector<12x128xf32>
    %1 = vector.extract_strided_slice %0 {offsets = [0, 0], sizes = [1, 128], strides = [1, 1]} : vector<12x128xf32> to vector<1x128xf32>
    %2 = vector.extract_strided_slice %0 {offsets = [11, 0], sizes = [1, 128], strides = [1, 1]} : vector<12x128xf32> to vector<1x128xf32>
    %3 = vector.extract_strided_slice %0 {offsets = [1, 0], sizes = [11, 128], strides = [1, 1]} : vector<12x128xf32> to vector<11x128xf32>
    %4 = tpu.concatenate %3, %2 in 0 : vector<11x128xf32>, vector<1x128xf32> -> vector<12x128xf32>
    %5 = vector.extract_strided_slice %0 {offsets = [0, 0], sizes = [11, 128], strides = [1, 1]} : vector<12x128xf32> to vector<11x128xf32>
    %6 = tpu.concatenate %1, %5 in 0 : vector<1x128xf32>, vector<11x128xf32> -> vector<12x128xf32>
    %7 = arith.addf %0, %4 : vector<12x128xf32>
    %8 = arith.addf %7, %6 : vector<12x128xf32>
    %9 = vector.extract_strided_slice %0 {offsets = [0, 0], sizes = [1, 128], strides = [1, 1]} : vector<12x128xf32> to vector<1x128xf32>
    %10 = vector.shape_cast %9 : vector<1x128xf32> to vector<1x128xf32>
    %11 = vector.broadcast %10 : vector<1x128xf32> to vector<2x128xf32>
    %12 = vector.extract_strided_slice %0 {offsets = [11, 0], sizes = [1, 128], strides = [1, 1]} : vector<12x128xf32> to vector<1x128xf32>
    %13 = vector.shape_cast %12 : vector<1x128xf32> to vector<1x128xf32>
    %14 = vector.broadcast %13 : vector<1x128xf32> to vector<2x128xf32>
    %15 = vector.extract_strided_slice %0 {offsets = [2, 0], sizes = [10, 128], strides = [1, 1]} : vector<12x128xf32> to vector<10x128xf32>
    %16 = tpu.concatenate %15, %14 in 0 : vector<10x128xf32>, vector<2x128xf32> -> vector<12x128xf32>
    %17 = vector.extract_strided_slice %0 {offsets = [0, 0], sizes = [10, 128], strides = [1, 1]} : vector<12x128xf32> to vector<10x128xf32>
    %18 = tpu.concatenate %11, %17 in 0 : vector<2x128xf32>, vector<10x128xf32> -> vector<12x128xf32>
    %19 = arith.addf %8, %16 : vector<12x128xf32>
    %20 = arith.addf %19, %18 : vector<12x128xf32>
    %cst = arith.constant 2.000000e-01 : f32
    %21 = vector.broadcast %cst : f32 to vector<12x128xf32>
    %22 = arith.mulf %20, %21 : vector<12x128xf32>
    %c0_1 = arith.constant 0 : index
    %c0_2 = arith.constant 0 : index
    %23 = vector.load %arg3[%c0_1, %c0_2] : memref<12x128xf32, #tpu.memory_space<vmem>>, vector<12x128xf32>
    tpu.vector_store %arg3[%c0_1, %c0_2], %22 {strides = array<i32>} : memref<12x128xf32, #tpu.memory_space<vmem>>, vector<12x128xf32>,
    %24 = arith.subf %0, %22 : vector<12x128xf32>
    %c0_3 = arith.constant 0 : index
    %c0_4 = arith.constant 0 : index
    %25 = vector.load %arg2[%c0_3, %c0_4] : memref<12x128xf32, #tpu.memory_space<vmem>>, vector<12x128xf32>
    tpu.vector_store %arg2[%c0_3, %c0_4], %24 {strides = array<i32>} : memref<12x128xf32, #tpu.memory_space<vmem>>, vector<12x128xf32>,
    return
  }
  func.func @transform_0(%arg0: i32) -> (i32, i32) {
    %c0_i32 = arith.constant 0 : i32
    %c0_i32_0 = arith.constant 0 : i32
    return %c0_i32, %arg0 : i32, i32
  }
  func.func @transform_1(%arg0: i32) -> (i32, i32) {
    %c0_i32 = arith.constant 0 : i32
    %c0_i32_0 = arith.constant 0 : i32
    return %c0_i32, %arg0 : i32, i32
  }
  func.func @transform_2(%arg0: i32) -> (i32, i32) {
    %c0_i32 = arith.constant 0 : i32
    %c0_i32_0 = arith.constant 0 : i32
    return %c0_i32, %arg0 : i32, i32
  }
}

module attributes {stable_mosaic.version = 11 : i64} {
  func.func @_linear_kernel(%arg0: i32, %arg1: memref<96x32xbf16, #tpu.memory_space<vmem>>, %arg2: memref<32x2xbf16, #tpu.memory_space<vmem>>, %arg3: memref<1x2xf32, #tpu.memory_space<vmem>>, %arg4: memref<96x2xf32, #tpu.memory_space<vmem>>) attributes {dimension_semantics = [#tpu.dimension_semantics<parallel>], iteration_bounds = array<i64: 1>, scalar_prefetch = 0 : i64, scratch_operands = 0 : i64, tpu.core_type = #tpu.core_type<tc>, window_params = [{transform_indices = @transform_0, window_bounds = array<i64: 96, 32>}, {pipeline_mode = #tpu.pipeline_mode<synchronous>, transform_indices = @transform_1, window_bounds = array<i64: 32, 2>}, {pipeline_mode = #tpu.pipeline_mode<synchronous>, transform_indices = @transform_2, window_bounds = array<i64: 1, 2>}, {transform_indices = @transform_3, window_bounds = array<i64: 96, 2>}]} {
    %c0 = arith.constant 0 : index
    %c0_0 = arith.constant 0 : index
    %0 = vector.load %arg1[%c0, %c0_0] : memref<96x32xbf16, #tpu.memory_space<vmem>>, vector<96x32xbf16>
    %c0_1 = arith.constant 0 : index
    %c0_2 = arith.constant 0 : index
    %1 = vector.load %arg2[%c0_1, %c0_2] : memref<32x2xbf16, #tpu.memory_space<vmem>>, vector<32x2xbf16>
    %cst = arith.constant dense<0.000000e+00> : vector<96x2xf32>
    %2 = tpu.matmul %0, %1, %cst {dimension_numbers = #tpu.dot_dimension_numbers<[1], [0], [0], [1], [0, 0, 1, 1], [], []>} : vector<96x32xbf16>, vector<32x2xbf16>, vector<96x2xf32> -> vector<96x2xf32>
    %c0_3 = arith.constant 0 : index
    %c0_4 = arith.constant 0 : index
    %3 = vector.load %arg3[%c0_3, %c0_4] : memref<1x2xf32, #tpu.memory_space<vmem>>, vector<1x2xf32>
    %4 = vector.broadcast %3 : vector<1x2xf32> to vector<96x2xf32>
    %5 = arith.addf %2, %4 : vector<96x2xf32>
    %c0_5 = arith.constant 0 : index
    %c0_6 = arith.constant 0 : index
    %6 = vector.load %arg4[%c0_5, %c0_6] : memref<96x2xf32, #tpu.memory_space<vmem>>, vector<96x2xf32>
    tpu.vector_store %arg4[%c0_5, %c0_6], %5 {strides = array<i32>} : memref<96x2xf32, #tpu.memory_space<vmem>>, vector<96x2xf32>,
    return
  }
  func.func @transform_0(%arg0: i32) -> (i32, i32) {
    %c0_i32 = arith.constant 0 : i32
    %c0_i32_0 = arith.constant 0 : i32
    return %arg0, %c0_i32 : i32, i32
  }
  func.func @transform_1(%arg0: i32) -> (i32, i32) {
    %c0_i32 = arith.constant 0 : i32
    %c0_i32_0 = arith.constant 0 : i32
    %c0_i32_1 = arith.constant 0 : i32
    return %c0_i32, %c0_i32_0 : i32, i32
  }
  func.func @transform_2(%arg0: i32) -> (i32, i32) {
    %c0_i32 = arith.constant 0 : i32
    %c0_i32_0 = arith.constant 0 : i32
    %c0_i32_1 = arith.constant 0 : i32
    return %c0_i32, %c0_i32_0 : i32, i32
  }
  func.func @transform_3(%arg0: i32) -> (i32, i32) {
    %c0_i32 = arith.constant 0 : i32
    %c0_i32_0 = arith.constant 0 : i32
    return %arg0, %c0_i32 : i32, i32
  }
}

module attributes {stable_mosaic.version = 11 : i64} {
  func.func @_circconv3_kernel(%arg0: memref<8x12x32xf32, #tpu.memory_space<vmem>>, %arg1: memref<96x2xbf16, #tpu.memory_space<vmem>>, %arg2: memref<8x12x2xf32, #tpu.memory_space<vmem>>) attributes {dimension_semantics = [], scalar_prefetch = 0 : i64, scratch_operands = 0 : i64, tpu.core_type = #tpu.core_type<tc>} {
    %c0 = arith.constant 0 : index
    %c0_0 = arith.constant 0 : index
    %c0_1 = arith.constant 0 : index
    %0 = vector.load %arg0[%c0, %c0_0, %c0_1] : memref<8x12x32xf32, #tpu.memory_space<vmem>>, vector<8x12x32xf32>
    %1 = vector.extract_strided_slice %0 {offsets = [0, 11, 0], sizes = [8, 1, 32], strides = [1, 1, 1]} : vector<8x12x32xf32> to vector<8x1x32xf32>
    %2 = vector.extract_strided_slice %0 {offsets = [0, 0, 0], sizes = [8, 11, 32], strides = [1, 1, 1]} : vector<8x12x32xf32> to vector<8x11x32xf32>
    %3 = tpu.concatenate %1, %2 in 1 : vector<8x1x32xf32>, vector<8x11x32xf32> -> vector<8x12x32xf32>
    %4 = vector.extract_strided_slice %0 {offsets = [0, 1, 0], sizes = [8, 11, 32], strides = [1, 1, 1]} : vector<8x12x32xf32> to vector<8x11x32xf32>
    %5 = vector.extract_strided_slice %0 {offsets = [0, 0, 0], sizes = [8, 1, 32], strides = [1, 1, 1]} : vector<8x12x32xf32> to vector<8x1x32xf32>
    %6 = tpu.concatenate %4, %5 in 1 : vector<8x11x32xf32>, vector<8x1x32xf32> -> vector<8x12x32xf32>
    %7 = tpu.concatenate %3, %0, %6 in 2 : vector<8x12x32xf32>, vector<8x12x32xf32>, vector<8x12x32xf32> -> vector<8x12x96xf32>
    %8 = vector.shape_cast %7 : vector<8x12x96xf32> to vector<96x96xf32>
    %9 = arith.truncf %8 : vector<96x96xf32> to vector<96x96xbf16>
    %c0_2 = arith.constant 0 : index
    %c0_3 = arith.constant 0 : index
    %10 = vector.load %arg1[%c0_2, %c0_3] : memref<96x2xbf16, #tpu.memory_space<vmem>>, vector<96x2xbf16>
    %cst = arith.constant dense<0.000000e+00> : vector<96x2xf32>
    %11 = tpu.matmul %9, %10, %cst {dimension_numbers = #tpu.dot_dimension_numbers<[1], [0], [0], [1], [0, 0, 1, 1], [], []>} : vector<96x96xbf16>, vector<96x2xbf16>, vector<96x2xf32> -> vector<96x2xf32>
    %12 = vector.shape_cast %11 : vector<96x2xf32> to vector<8x12x2xf32>
    %c0_4 = arith.constant 0 : index
    %c0_5 = arith.constant 0 : index
    %c0_6 = arith.constant 0 : index
    %13 = vector.load %arg2[%c0_4, %c0_5, %c0_6] : memref<8x12x2xf32, #tpu.memory_space<vmem>>, vector<8x12x2xf32>
    tpu.vector_store %arg2[%c0_4, %c0_5, %c0_6], %12 {strides = array<i32>} : memref<8x12x2xf32, #tpu.memory_space<vmem>>, vector<8x12x2xf32>,
    return
  }
}

</mosaic_0001>

<llo_original>
// kernel: corrformer_forward.43
$region0: #{corrformer_forward.43}
  #allocation0 [shape = 'u32[]', space=smem, size = 0x4, offset = 0x4, fixed_abs, tag = 'smem constant byte address 0x4 - core index']
  #allocation1 [shape = 'u32[144,128]{1,0:T(1,128)}', space=vmem, size = 0x12000, scoped, tag = 'internal scratch']
  %s0 = inlined_call_operand.vmem [shape: f32[12,16], index: 0, kind: input, shape index: {}]
  %s1 = inlined_call_operand.vmem [shape: f32[12,16], index: 1, kind: output, shape index: {0}]
  %s2 = inlined_call_operand.vmem [shape: f32[12,16], index: 2, kind: output, shape index: {1}]
  %3 = xla_tuple %s1, %s2
  %s4 = sld [smem:[#allocation0]]
  $region22: #{corrformer_forward.43} parent=0
    _
  %s6 = ssub.s32 1, %s4
  %s7 = scalar_select 0, %s6, %s4
  // Predicated region
  $region2: #{corrformer_forward.43} parent=0 // pred_check
    _
  $region3: #{corrformer_forward.43} parent=0 // pred_check_branch
    %9 = sbr.rel (0) target = $region5
  $region4: #{corrformer_forward.43} parent=0 // pred_region
    _
  $region5: #{corrformer_forward.43} parent=0 // pred_fallthru
    _
  %v10 = vld [vmem:[%s0] sm:$0xff]
  %v11 = vld [vmem:[%s0 + $0x8] sm:$0xf]
  %vm14 = vcmask 1046528
  %v15 = vrot.slane %v10, 1
  %v16 = vrot.slane %v11, 1
  %v17 = vsel %vm14, %v15, %v16
  %vm20 = vcmask 1042432
  %v21 = vsel %vm20, %v16, %v11
  %vm22 = vcmask 1040384
  %v23 = vrot.slane %v10, 7
  %v24 = vrot.slane %v11, 7
  %v25 = vsel %vm22, %v23, %v24
  %v28 = vsel %vm22, %v10, %v23
  %v29 = vadd.f32 %v10, %v17
  %v30 = vadd.f32 %v11, %v21
  %v31 = vadd.f32 %v29, %v28
  %v32 = vadd.f32 %v30, %v25
  %v33 = vlaneseq
  %v34 = vshrl.u32 %v33, 7
  %v35 = vsub.s32 0, %v34
  %v36 = vrot.slane %v10, %v35
  %v37 = vlaneseq
  %v38 = vshrl.u32 %v37, 7
  %v39 = vsub.s32 3, %v38
  %v40 = vrot.slane %v11, %v39
  %vm41 = vcmask 1045504
  %v42 = vrot.slane %v10, 2
  %v43 = vrot.slane %v11, 2
  %v44 = vsel %vm41, %v42, %v43
  %vm47 = vcmask 1041408
  %v48 = vsel %vm47, %v43, %v40
  %v49 = vrot.slane %v10, 6
  %v50 = vrot.slane %v11, 6
  %v51 = vsel %vm47, %v49, %v50
  %v54 = vsel %vm47, %v36, %v49
  %v55 = vadd.f32 %v31, %v44
  %v56 = vadd.f32 %v32, %v48
  %v57 = vadd.f32 %v55, %v54
  %v58 = vadd.f32 %v56, %v51
  %v59 = vmul.f32 %v57, 0.2
  %v60 = vmul.f32 %v58, 0.2
  %vm61 = vcmask 130048
  %62 = vst.msk [vmem:[%s2] sm:$0xff] %vm61, %v59
  %vm63 = vcmask 125952
  %64 = vst.msk [vmem:[%s2 + $0x8] sm:$0xf] %vm63, %v60
  %v65 = vsub.f32 %v10, %v59
  %v66 = vsub.f32 %v11, %v60
  %67 = vst.msk [vmem:[%s1] sm:$0xff] %vm61, %v65
  %68 = vst.msk [vmem:[%s1 + $0x8] sm:$0xf] %vm63, %v66
  // Predicated region
  $region6: #{corrformer_forward.43} parent=0 // pred_check
    _
  $region7: #{corrformer_forward.43} parent=0 // pred_check_branch
    %70 = sbr.rel (0) target = $region9
  $region8: #{corrformer_forward.43} parent=0 // pred_region
    _
  $region9: #{corrformer_forward.43} parent=0 // pred_fallthru
    _
  // Predicated region
  $region10: #{corrformer_forward.43} parent=0 // pred_check
    _
  $region11: #{corrformer_forward.43} parent=0 // pred_check_branch
    %72 = sbr.rel (0) target = $region13
  $region12: #{corrformer_forward.43} parent=0 // pred_region
    _
  $region13: #{corrformer_forward.43} parent=0 // pred_fallthru
    _
  // Predicated region
  $region14: #{corrformer_forward.43} parent=0 // pred_check
    _
  $region15: #{corrformer_forward.43} parent=0 // pred_check_branch
    %74 = sbr.rel (0) target = $region17
  $region16: #{corrformer_forward.43} parent=0 // pred_region
    _
  $region17: #{corrformer_forward.43} parent=0 // pred_fallthru
    _
  // Predicated region
  $region18: #{corrformer_forward.43} parent=0 // pred_check
    _
  $region19: #{corrformer_forward.43} parent=0 // pred_check_branch
    %76 = sbr.rel (0) target = $region21
  $region20: #{corrformer_forward.43} parent=0 // pred_region
    _
  $region21: #{corrformer_forward.43} parent=0 // pred_fallthru
    _

// kernel: corrformer_forward.59
$region0: #{corrformer_forward.59}
  #allocation0 [shape = 'u32[]', space=smem, size = 0x4, offset = 0x4, fixed_abs, tag = 'smem constant byte address 0x4 - core index']
  #allocation1 [shape = 'u32[144,128]{1,0:T(1,128)}', space=vmem, size = 0x12000, scoped, tag = 'internal scratch']
  %s0 = inlined_call_operand.vmem [shape: bf16[96,32], index: 0, kind: input, shape index: {}]
  %s1 = inlined_call_operand.vmem [shape: bf16[32,96], index: 1, kind: input, shape index: {}]
  %s2 = inlined_call_operand.vmem [shape: f32[1,96], index: 2, kind: input, shape index: {}]
  %s3 = inlined_call_operand.vmem [shape: f32[96,96], index: 3, kind: output, shape index: {}]
  %s4 = sld [smem:[#allocation0]]
  $region22: #{corrformer_forward.59} parent=0
    _
  %s6 = ssub.s32 1, %s4
  %s7 = scalar_select 0, %s6, %s4
  // Predicated region
  $region2: #{corrformer_forward.59} parent=0 // pred_check
    _
  $region3: #{corrformer_forward.59} parent=0 // pred_check_branch
    %9 = sbr.rel (0) target = $region5
  $region4: #{corrformer_forward.59} parent=0 // pred_region
    _
  $region5: #{corrformer_forward.59} parent=0 // pred_fallthru
    _
  // Predicated region
  $region6: #{corrformer_forward.59} parent=0 // pred_check
    _
  $region7: #{corrformer_forward.59} parent=0 // pred_check_branch
    %11 = sbr.rel (0) target = $region9
  $region8: #{corrformer_forward.59} parent=0 // pred_region
    _
  $region9: #{corrformer_forward.59} parent=0 // pred_fallthru
    _
  // Predicated region
  $region10: #{corrformer_forward.59} parent=0 // pred_check
    _
  $region11: #{corrformer_forward.59} parent=0 // pred_check_branch
    %13 = sbr.rel (0) target = $region13
  $region12: #{corrformer_forward.59} parent=0 // pred_region
    _
  $region13: #{corrformer_forward.59} parent=0 // pred_fallthru
    _
  %v15 = vld [vmem:[%s0] sm:$0xf]
  %v16 = vld [vmem:[%s0 + $0x4] sm:$0xf]
  %v17 = vld [vmem:[%s0 + $0x8] sm:$0xf]
  %v18 = vld [vmem:[%s0 + $0xc] sm:$0xf]
  %v19 = vld [vmem:[%s0 + $0x10] sm:$0xf]
  %v20 = vld [vmem:[%s0 + $0x14] sm:$0xf]
  %v21 = vld [vmem:[%s0 + $0x18] sm:$0xf]
  %v22 = vld [vmem:[%s0 + $0x1c] sm:$0xf]
  %v23 = vld [vmem:[%s0 + $0x20] sm:$0xf]
  %v24 = vld [vmem:[%s0 + $0x24] sm:$0xf]
  %v25 = vld [vmem:[%s0 + $0x28] sm:$0xf]
  %v26 = vld [vmem:[%s0 + $0x2c] sm:$0xf]
  %v27 = vld [vmem:[%s1] sm:$0xf]
  %v28 = vld [vmem:[%s1 + $0x4] sm:$0xf]
  %v29 = vld [vmem:[%s1 + $0x8] sm:$0xf]
  %v30 = vld [vmem:[%s1 + $0xc] sm:$0xf]
  %v31 = vld [vmem:[%s2] sm:$0x1]
  %v33 = vlaneseq
  %v34 = vshrl.u32 %v33, 7
  %v35 = vsub.s32 0, %v34
  %v36 = vrot.slane %v31, %v35
  %v50 = vunpack.c.l.b16 %v15
  %v51 = vunpack.c.l.b16 %v16
  %v52 = vunpack.c.l.b16 %v17
  %v53 = vunpack.c.l.b16 %v18
  %v54 = vunpack.c.l.b16 %v19
  %v55 = vunpack.c.l.b16 %v20
  %v56 = vunpack.c.l.b16 %v21
  %v57 = vunpack.c.l.b16 %v22
  %v58 = vunpack.c.l.b16 %v23
  %v59 = vunpack.c.l.b16 %v24
  %v60 = vunpack.c.l.b16 %v25
  %v61 = vunpack.c.l.b16 %v26
  %v62 = vpack.c.b16 %v51, %v50
  %v63 = vpack.c.b16 %v53, %v52
  %v64 = vpack.c.b16 %v55, %v54
  %v65 = vpack.c.b16 %v57, %v56
  %v66 = vpack.c.b16 %v59, %v58
  %v67 = vpack.c.b16 %v61, %v60
  %v72 = vunpack.c.l.b16 %v27
  %v73 = vunpack.c.l.b16 %v28
  %v74 = vunpack.c.l.b16 %v29
  %v75 = vunpack.c.l.b16 %v30
  %v76 = vpack.c.b16 %v73, %v72
  %v77 = vpack.c.b16 %v75, %v74
  %vm80 = vcmask 261120
  %v82 = vsel %vm80, %v62, 0
  %v85 = vsel %vm80, %v63, 0
  %v88 = vsel %vm80, %v64, 0
  %v91 = vsel %vm80, %v65, 0
  %v94 = vsel %vm80, %v66, 0
  %v97 = vsel %vm80, %v67, 0
  %99 = vmatprep.subr.bf16.mxu0 0
  %100 = vmatpush1.bf16.msra.mxu0 0
  %101 = vmatprep.subr.bf16.mxu0 0
  %102 = vmatpush1.bf16.msra.mxu0 0
  %103 = vmatprep.subr.bf16.mxu0 0
  %104 = vmatpush1.bf16.msra.mxu0 0
  %105 = vmatprep.subr.bf16.mxu0 0
  %106 = vmatpush1.bf16.msra.mxu0 0
  %107 = vmatprep.subr.bf16.mxu0 0
  %108 = vmatpush1.bf16.msra.mxu0 0
  %109 = vmatprep.subr.bf16.mxu0 0
  %110 = vmatpush1.bf16.msra.mxu0 0
  %111 = vmatprep.subr.bf16.mxu0 0
  %112 = vmatpush1.bf16.msra.mxu0 %v77
  %113 = vmatprep.subr.bf16.mxu0 0
  %114 = vmatpush1.bf16.msra.mxu0 %v76
  %115 = vmatprep.subr.bf16.mxu0 0
  %116 = vmatpush2.bf16.msra.mxu0 0
  %117 = vmatprep.subr.bf16.mxu0 0
  %118 = vmatpush2.bf16.msra.mxu0 0
  %119 = vmatprep.subr.bf16.mxu0 0
  %120 = vmatpush2.bf16.msra.mxu0 0
  %121 = vmatprep.subr.bf16.mxu0 0
  %122 = vmatpush2.bf16.msra.mxu0 0
  %123 = vmatprep.subr.bf16.mxu0 0
  %124 = vmatpush2.bf16.msra.mxu0 0
  %125 = vmatprep.subr.bf16.mxu0 0
  %126 = vmatpush2.bf16.msra.mxu0 0
  %127 = vmatprep.subr.bf16.mxu0 0
  %128 = vmatpush2.bf16.msra.mxu0 0
  %129 = vmatprep.subr.bf16.mxu0 0
  %130 = vmatpush2.bf16.msra.mxu0 0
  %131 = vmatprep.mubr.bf16.mxu0 0
  %132 = vmatmul.mubr.bf16.gmra.mxu0 %v82
  %v133 = vpop.f32.mrf.mxu0
  %v134 = vadd.f32 %v36, %v133
  %v135 = vpop.f32.mrf.mxu0
  %v136 = vpop.f32.mrf.mxu0
  %v137 = vadd.f32 %v36, %v136
  %v138 = vpop.f32.mrf.mxu0
  %139 = vmatprep.mubr.bf16.mxu0 0
  %140 = vmatmul.mubr.bf16.gmra.mxu0 %v85
  %v141 = vpop.f32.mrf.mxu0
  %v142 = vadd.f32 %v36, %v141
  %v143 = vpop.f32.mrf.mxu0
  %v144 = vpop.f32.mrf.mxu0
  %v145 = vadd.f32 %v36, %v144
  %v146 = vpop.f32.mrf.mxu0
  %147 = vmatprep.mubr.bf16.mxu0 0
  %148 = vmatmul.mubr.bf16.gmra.mxu0 %v88
  %v149 = vpop.f32.mrf.mxu0
  %v150 = vadd.f32 %v36, %v149
  %v151 = vpop.f32.mrf.mxu0
  %v152 = vpop.f32.mrf.mxu0
  %v153 = vadd.f32 %v36, %v152
  %v154 = vpop.f32.mrf.mxu0
  %155 = vmatprep.mubr.bf16.mxu0 0
  %156 = vmatmul.mubr.bf16.gmra.mxu0 %v91
  %v157 = vpop.f32.mrf.mxu0
  %v158 = vadd.f32 %v36, %v157
  %v159 = vpop.f32.mrf.mxu0
  %v160 = vpop.f32.mrf.mxu0
  %v161 = vadd.f32 %v36, %v160
  %v162 = vpop.f32.mrf.mxu0
  %163 = vmatprep.mubr.bf16.mxu0 0
  %164 = vmatmul.mubr.bf16.gmra.mxu0 %v94
  %v165 = vpop.f32.mrf.mxu0
  %v166 = vadd.f32 %v36, %v165
  %v167 = vpop.f32.mrf.mxu0
  %v168 = vpop.f32.mrf.mxu0
  %v169 = vadd.f32 %v36, %v168
  %v170 = vpop.f32.mrf.mxu0
  %171 = vmatprep.mubr.bf16.mxu0 0
  %172 = vmatmul.mubr.bf16.gmra.mxu0 %v97
  %v173 = vpop.f32.mrf.mxu0
  %v174 = vadd.f32 %v36, %v173
  %v175 = vpop.f32.mrf.mxu0
  %v176 = vpop.f32.mrf.mxu0
  %v177 = vadd.f32 %v36, %v176
  %v178 = vpop.f32.mrf.mxu0
  %179 = vdwg.mxu0
  %vm180 = vcmask 785408
  %181 = vst.msk [vmem:[%s3] sm:$0xff] %vm180, %v134
  %182 = vst.msk [vmem:[%s3 + $0x8] sm:$0xff] %vm180, %v137
  %183 = vst.msk [vmem:[%s3 + $0x10] sm:$0xff] %vm180, %v142
  %184 = vst.msk [vmem:[%s3 + $0x18] sm:$0xff] %vm180, %v145
  %185 = vst.msk [vmem:[%s3 + $0x20] sm:$0xff] %vm180, %v150
  %186 = vst.msk [vmem:[%s3 + $0x28] sm:$0xff] %vm180, %v153
  %187 = vst.msk [vmem:[%s3 + $0x30] sm:$0xff] %vm180, %v158
  %188 = vst.msk [vmem:[%s3 + $0x38] sm:$0xff] %vm180, %v161
  %189 = vst.msk [vmem:[%s3 + $0x40] sm:$0xff] %vm180, %v166
  %190 = vst.msk [vmem:[%s3 + $0x48] sm:$0xff] %vm180, %v169
  %191 = vst.msk [vmem:[%s3 + $0x50] sm:$0xff] %vm180, %v174
  %192 = vst.msk [vmem:[%s3 + $0x58] sm:$0xff] %vm180, %v177
  // Predicated region
  $region14: #{corrformer_forward.59} parent=0 // pred_check
    _
  $region15: #{corrformer_forward.59} parent=0 // pred_check_branch
    %194 = sbr.rel (0) target = $region17
  $region16: #{corrformer_forward.59} parent=0 // pred_region
    _
  $region17: #{corrformer_forward.59} parent=0 // pred_fallthru
    _
  // Predicated region
  $region18: #{corrformer_forward.59} parent=0 // pred_check
    _
  $region19: #{corrformer_forward.59} parent=0 // pred_check_branch
    %196 = sbr.rel (0) target = $region21
  $region20: #{corrformer_forward.59} parent=0 // pred_region
    _
  $region21: #{corrformer_forward.59} parent=0 // pred_fallthru
    _

// kernel: corrformer_forward.58
$region0: #{corrformer_forward.58}
  #allocation0 [shape = 'u32[]', space=smem, size = 0x4, offset = 0x4, fixed_abs, tag = 'smem constant byte address 0x4 - core index']
  #allocation1 [shape = 'u32[144,128]{1,0:T(1,128)}', space=vmem, size = 0x12000, scoped, tag = 'internal scratch']
  %s0 = inlined_call_operand.vmem [shape: f32[8,12,2], index: 0, kind: input, shape index: {}]
  %s1 = inlined_call_operand.vmem [shape: f32[8,12,2], index: 1, kind: input, shape index: {}]
  %s2 = inlined_call_operand.vmem [shape: bf16[6,32], index: 2, kind: input, shape index: {}]
  %s3 = inlined_call_operand.vmem [shape: bf16[2,32], index: 3, kind: input, shape index: {}]
  %s4 = inlined_call_operand.vmem [shape: f32[8,1,32], index: 4, kind: input, shape index: {}]
  %s5 = inlined_call_operand.vmem [shape: f32[8,12,32], index: 5, kind: output, shape index: {}]
  %s6 = sld [smem:[#allocation0]]
  $region30: #{corrformer_forward.58} parent=0
    _
  %s8 = ssub.s32 1, %s6
  %s9 = scalar_select 0, %s8, %s6
  // Predicated region
  $region2: #{corrformer_forward.58} parent=0 // pred_check
    _
  $region3: #{corrformer_forward.58} parent=0 // pred_check_branch
    %11 = sbr.rel (0) target = $region5
  $region4: #{corrformer_forward.58} parent=0 // pred_region
    _
  $region5: #{corrformer_forward.58} parent=0 // pred_fallthru
    _
  // Predicated region
  $region6: #{corrformer_forward.58} parent=0 // pred_check
    _
  $region7: #{corrformer_forward.58} parent=0 // pred_check_branch
    %13 = sbr.rel (0) target = $region9
  $region8: #{corrformer_forward.58} parent=0 // pred_region
    _
  $region9: #{corrformer_forward.58} parent=0 // pred_fallthru
    _
  // Predicated region
  $region10: #{corrformer_forward.58} parent=0 // pred_check
    _
  $region11: #{corrformer_forward.58} parent=0 // pred_check_branch
    %15 = sbr.rel (0) target = $region13
  $region12: #{corrformer_forward.58} parent=0 // pred_region
    _
  $region13: #{corrformer_forward.58} parent=0 // pred_fallthru
    _
  // Predicated region
  $region14: #{corrformer_forward.58} parent=0 // pred_check
    _
  $region15: #{corrformer_forward.58} parent=0 // pred_check_branch
    %17 = sbr.rel (0) target = $region17
  $region16: #{corrformer_forward.58} parent=0 // pred_region
    _
  $region17: #{corrformer_forward.58} parent=0 // pred_fallthru
    _
  // Predicated region
  $region18: #{corrformer_forward.58} parent=0 // pred_check
    _
  $region19: #{corrformer_forward.58} parent=0 // pred_check_branch
    %19 = sbr.rel (0) target = $region21
  $region20: #{corrformer_forward.58} parent=0 // pred_region
    _
  $region21: #{corrformer_forward.58} parent=0 // pred_fallthru
    _
  %v21 = vld [vmem:[%s0] sm:$0xff]
  %v22 = vld [vmem:[%s0 + $0x8] sm:$0xf]
  %v23 = vld [vmem:[%s0 + $0x10] sm:$0xff]
  %v24 = vld [vmem:[%s0 + $0x18] sm:$0xf]
  %v25 = vld [vmem:[%s0 + $0x20] sm:$0xff]
  %v26 = vld [vmem:[%s0 + $0x28] sm:$0xf]
  %v27 = vld [vmem:[%s0 + $0x30] sm:$0xff]
  %v28 = vld [vmem:[%s0 + $0x38] sm:$0xf]
  %v29 = vld [vmem:[%s0 + $0x40] sm:$0xff]
  %v30 = vld [vmem:[%s0 + $0x48] sm:$0xf]
  %v31 = vld [vmem:[%s0 + $0x50] sm:$0xff]
  %v32 = vld [vmem:[%s0 + $0x58] sm:$0xf]
  %v33 = vld [vmem:[%s0 + $0x60] sm:$0xff]
  %v34 = vld [vmem:[%s0 + $0x68] sm:$0xf]
  %v35 = vld [vmem:[%s0 + $0x70] sm:$0xff]
  %v36 = vld [vmem:[%s0 + $0x78] sm:$0xf]
  %v45 = vrot.slane %v22, 3
  %v46 = vrot.slane %v24, 3
  %v47 = vrot.slane %v26, 3
  %v48 = vrot.slane %v28, 3
  %v49 = vrot.slane %v30, 3
  %v50 = vrot.slane %v32, 3
  %v51 = vrot.slane %v34, 3
  %v52 = vrot.slane %v36, 3
  %vm69 = vcmask 1040384
  %v70 = vrot.slane %v21, 7
  %v71 = vrot.slane %v22, 7
  %v72 = vsel %vm69, %v70, %v71
  %v73 = vrot.slane %v23, 7
  %v74 = vrot.slane %v24, 7
  %v75 = vsel %vm69, %v73, %v74
  %v76 = vrot.slane %v25, 7
  %v77 = vrot.slane %v26, 7
  %v78 = vsel %vm69, %v76, %v77
  %v79 = vrot.slane %v27, 7
  %v80 = vrot.slane %v28, 7
  %v81 = vsel %vm69, %v79, %v80
  %v82 = vrot.slane %v29, 7
  %v83 = vrot.slane %v30, 7
  %v84 = vsel %vm69, %v82, %v83
  %v85 = vrot.slane %v31, 7
  %v86 = vrot.slane %v32, 7
  %v87 = vsel %vm69, %v85, %v86
  %v88 = vrot.slane %v33, 7
  %v89 = vrot.slane %v34, 7
  %v90 = vsel %vm69, %v88, %v89
  %v91 = vrot.slane %v35, 7
  %v92 = vrot.slane %v36, 7
  %v93 = vsel %vm69, %v91, %v92
  %v110 = vsel %vm69, %v45, %v70
  %v111 = vsel %vm69, %v46, %v73
  %v112 = vsel %vm69, %v47, %v76
  %v113 = vsel %vm69, %v48, %v79
  %v114 = vsel %vm69, %v49, %v82
  %v115 = vsel %vm69, %v50, %v85
  %v116 = vsel %vm69, %v51, %v88
  %v117 = vsel %vm69, %v52, %v91
  %vm118 = vcmask 1046528
  %v119 = vrot.slane %v21, 1
  %v120 = vrot.slane %v22, 1
  %v121 = vsel %vm118, %v119, %v120
  %v122 = vrot.slane %v23, 1
  %v123 = vrot.slane %v24, 1
  %v124 = vsel %vm118, %v122, %v123
  %v125 = vrot.slane %v25, 1
  %v126 = vrot.slane %v26, 1
  %v127 = vsel %vm118, %v125, %v126
  %v128 = vrot.slane %v27, 1
  %v129 = vrot.slane %v28, 1
  %v130 = vsel %vm118, %v128, %v129
  %v131 = vrot.slane %v29, 1
  %v132 = vrot.slane %v30, 1
  %v133 = vsel %vm118, %v131, %v132
  %v134 = vrot.slane %v31, 1
  %v135 = vrot.slane %v32, 1
  %v136 = vsel %vm118, %v134, %v135
  %v137 = vrot.slane %v33, 1
  %v138 = vrot.slane %v34, 1
  %v139 = vsel %vm118, %v137, %v138
  %v140 = vrot.slane %v35, 1
  %v141 = vrot.slane %v36, 1
  %v142 = vsel %vm118, %v140, %v141
  %v151 = vrot.slane %v21, 5
  %v152 = vrot.slane %v23, 5
  %v153 = vrot.slane %v25, 5
  %v154 = vrot.slane %v27, 5
  %v155 = vrot.slane %v29, 5
  %v156 = vrot.slane %v31, 5
  %v157 = vrot.slane %v33, 5
  %v158 = vrot.slane %v35, 5
  %vm167 = vcmask 1042432
  %v168 = vsel %vm167, %v120, %v151
  %v169 = vsel %vm167, %v123, %v152
  %v170 = vsel %vm167, %v126, %v153
  %v171 = vsel %vm167, %v129, %v154
  %v172 = vsel %vm167, %v132, %v155
  %v173 = vsel %vm167, %v135, %v156
  %v174 = vsel %vm167, %v138, %v157
  %v175 = vsel %vm167, %v141, %v158
  %176 = vrot.lane.b32.xlu0 %v21, 2
  %v177 = vpop.permute.xlu0 %176
  %178 = vrot.lane.b32.xlu0 %v22, 2
  %v179 = vpop.permute.xlu0 %178
  %180 = vrot.lane.b32.xlu0 %v23, 2
  %v181 = vpop.permute.xlu0 %180
  %182 = vrot.lane.b32.xlu0 %v24, 2
  %v183 = vpop.permute.xlu0 %182
  %184 = vrot.lane.b32.xlu0 %v25, 2
  %v185 = vpop.permute.xlu0 %184
  %186 = vrot.lane.b32.xlu0 %v26, 2
  %v187 = vpop.permute.xlu0 %186
  %188 = vrot.lane.b32.xlu0 %v27, 2
  %v189 = vpop.permute.xlu0 %188
  %190 = vrot.lane.b32.xlu0 %v28, 2
  %v191 = vpop.permute.xlu0 %190
  %192 = vrot.lane.b32.xlu0 %v29, 2
  %v193 = vpop.permute.xlu0 %192
  %194 = vrot.lane.b32.xlu0 %v30, 2
  %v195 = vpop.permute.xlu0 %194
  %196 = vrot.lane.b32.xlu0 %v31, 2
  %v197 = vpop.permute.xlu0 %196
  %198 = vrot.lane.b32.xlu0 %v32, 2
  %v199 = vpop.permute.xlu0 %198
  %200 = vrot.lane.b32.xlu0 %v33, 2
  %v201 = vpop.permute.xlu0 %200
  %202 = vrot.lane.b32.xlu0 %v34, 2
  %v203 = vpop.permute.xlu0 %202
  %204 = vrot.lane.b32.xlu0 %v35, 2
  %v205 = vpop.permute.xlu0 %204
  %206 = vrot.lane.b32.xlu0 %v36, 2
  %v207 = vpop.permute.xlu0 %206
  %232 = vrot.lane.b32.xlu0 %v121, 4
  %v233 = vpop.permute.xlu0 %232
  %234 = vrot.lane.b32.xlu0 %v168, 4
  %v235 = vpop.permute.xlu0 %234
  %236 = vrot.lane.b32.xlu0 %v124, 4
  %v237 = vpop.permute.xlu0 %236
  %238 = vrot.lane.b32.xlu0 %v169, 4
  %v239 = vpop.permute.xlu0 %238
  %240 = vrot.lane.b32.xlu0 %v127, 4
  %v241 = vpop.permute.xlu0 %240
  %242 = vrot.lane.b32.xlu0 %v170, 4
  %v243 = vpop.permute.xlu0 %242
  %244 = vrot.lane.b32.xlu0 %v130, 4
  %v245 = vpop.permute.xlu0 %244
  %246 = vrot.lane.b32.xlu0 %v171, 4
  %v247 = vpop.permute.xlu0 %246
  %248 = vrot.lane.b32.xlu0 %v133, 4
  %v249 = vpop.permute.xlu0 %248
  %250 = vrot.lane.b32.xlu0 %v172, 4
  %v251 = vpop.permute.xlu0 %250
  %252 = vrot.lane.b32.xlu0 %v136, 4
  %v253 = vpop.permute.xlu0 %252
  %254 = vrot.lane.b32.xlu0 %v173, 4
  %v255 = vpop.permute.xlu0 %254
  %256 = vrot.lane.b32.xlu0 %v139, 4
  %v257 = vpop.permute.xlu0 %256
  %258 = vrot.lane.b32.xlu0 %v174, 4
  %v259 = vpop.permute.xlu0 %258
  %260 = vrot.lane.b32.xlu0 %v142, 4
  %v261 = vpop.permute.xlu0 %260
  %262 = vrot.lane.b32.xlu0 %v175, 4
  %v263 = vpop.permute.xlu0 %262
  %vm280 = vcmask 15360
  %v281 = vsel %vm280, %v110, %v177
  %v282 = vsel %vm280, %v72, %v179
  %v283 = vsel %vm280, %v111, %v181
  %v284 = vsel %vm280, %v75, %v183
  %v285 = vsel %vm280, %v112, %v185
  %v286 = vsel %vm280, %v78, %v187
  %v287 = vsel %vm280, %v113, %v189
  %v288 = vsel %vm280, %v81, %v191
  %v289 = vsel %vm280, %v114, %v193
  %v290 = vsel %vm280, %v84, %v195
  %v291 = vsel %vm280, %v115, %v197
  %v292 = vsel %vm280, %v87, %v199
  %v293 = vsel %vm280, %v116, %v201
  %v294 = vsel %vm280, %v90, %v203
  %v295 = vsel %vm280, %v117, %v205
  %v296 = vsel %vm280, %v93, %v207
  %vm297 = vcmask 31744
  %v298 = vsel %vm297, %v281, %v233
  %v299 = vsel %vm297, %v282, %v235
  %v300 = vsel %vm297, %v283, %v237
  %v301 = vsel %vm297, %v284, %v239
  %v302 = vsel %vm297, %v285, %v241
  %v303 = vsel %vm297, %v286, %v243
  %v304 = vsel %vm297, %v287, %v245
  %v305 = vsel %vm297, %v288, %v247
  %v306 = vsel %vm297, %v289, %v249
  %v307 = vsel %vm297, %v290, %v251
  %v308 = vsel %vm297, %v291, %v253
  %v309 = vsel %vm297, %v292, %v255
  %v310 = vsel %vm297, %v293, %v257
  %v311 = vsel %vm297, %v294, %v259
  %v312 = vsel %vm297, %v295, %v261
  %v313 = vsel %vm297, %v296, %v263
  %v330 = vcombine.high %v298, %v298
  %v331 = vcombine.high %v300, %v300
  %v332 = vcombine.high %v302, %v302
  %v333 = vcombine.high %v304, %v304
  %v334 = vcombine.high %v306, %v306
  %v335 = vcombine.high %v308, %v308
  %v336 = vcombine.high %v310, %v310
  %v337 = vcombine.high %v312, %v312
  %v338 = vcombine.low %v298, %v330
  %v339 = vcombine.low %v299, %v300
  %v340 = vcombine.low %v331, %v301
  %v341 = vcombine.low %v302, %v332
  %v342 = vcombine.low %v303, %v304
  %v343 = vcombine.low %v333, %v305
  %v344 = vcombine.low %v306, %v334
  %v345 = vcombine.low %v307, %v308
  %v346 = vcombine.low %v335, %v309
  %v347 = vcombine.low %v310, %v336
  %v348 = vcombine.low %v311, %v312
  %v349 = vcombine.low %v337, %v313
  %v362 = vpack.c.bf16 %v339, %v338
  %v363 = vpack.c.bf16 %v341, %v340
  %v364 = vpack.c.bf16 %v343, %v342
  %v365 = vpack.c.bf16 %v345, %v344
  %v366 = vpack.c.bf16 %v347, %v346
  %v367 = vpack.c.bf16 %v349, %v348
  %v368 = vld [vmem:[%s2] sm:$0x7]
  %vm369 = vcmask 48128
  %v371 = vsel %vm369, %v362, 0
  %v374 = vsel %vm369, %v363, 0
  %v377 = vsel %vm369, %v364, 0
  %v380 = vsel %vm369, %v365, 0
  %v383 = vsel %vm369, %v366, 0
  %v386 = vsel %vm369, %v367, 0
  %v389 = vsel %vm167, %v368, 0
  %391 = vmatprep.subr.bf16.mxu0 0
  %392 = vmatpush1.bf16.msra.mxu0 0
  %393 = vmatprep.subr.bf16.mxu0 0
  %394 = vmatpush1.bf16.msra.mxu0 0
  %395 = vmatprep.subr.bf16.mxu0 0
  %396 = vmatpush1.bf16.msra.mxu0 0
  %397 = vmatprep.subr.bf16.mxu0 0
  %398 = vmatpush1.bf16.msra.mxu0 0
  %399 = vmatprep.subr.bf16.mxu0 0
  %400 = vmatpush1.bf16.msra.mxu0 0
  %401 = vmatprep.subr.bf16.mxu0 0
  %402 = vmatpush1.bf16.msra.mxu0 0
  %403 = vmatprep.subr.bf16.mxu0 0
  %404 = vmatpush1.bf16.msra.mxu0 0
  %405 = vmatprep.subr.bf16.mxu0 0
  %406 = vmatpush1.bf16.msra.mxu0 %v389
  %407 = vmatprep.subr.bf16.mxu0 0
  %408 = vmatpush2.bf16.msra.mxu0 0
  %409 = vmatprep.subr.bf16.mxu0 0
  %410 = vmatpush2.bf16.msra.mxu0 0
  %411 = vmatprep.subr.bf16.mxu0 0
  %412 = vmatpush2.bf16.msra.mxu0 0
  %413 = vmatprep.subr.bf16.mxu0 0
  %414 = vmatpush2.bf16.msra.mxu0 0
  %415 = vmatprep.subr.bf16.mxu0 0
  %416 = vmatpush2.bf16.msra.mxu0 0
  %417 = vmatprep.subr.bf16.mxu0 0
  %418 = vmatpush2.bf16.msra.mxu0 0
  %419 = vmatprep.subr.bf16.mxu0 0
  %420 = vmatpush2.bf16.msra.mxu0 0
  %421 = vmatprep.subr.bf16.mxu0 0
  %422 = vmatpush2.bf16.msra.mxu0 0
  %423 = vmatprep.mubr.bf16.mxu0 0
  %424 = vmatmul.mubr.bf16.gmra.mxu0 %v371
  %v425 = vpop.f32.mrf.mxu0
  %v426 = vadd.f32 0.0, %v425
  %v427 = vpop.f32.mrf.mxu0
  %v428 = vpop.f32.mrf.mxu0
  %v429 = vadd.f32 0.0, %v428
  %v430 = vpop.f32.mrf.mxu0
  %431 = vmatprep.mubr.bf16.mxu0 0
  %432 = vmatmul.mubr.bf16.gmra.mxu0 %v374
  %v433 = vpop.f32.mrf.mxu0
  %v434 = vadd.f32 0.0, %v433
  %v435 = vpop.f32.mrf.mxu0
  %v436 = vpop.f32.mrf.mxu0
  %v437 = vadd.f32 0.0, %v436
  %v438 = vpop.f32.mrf.mxu0
  %439 = vmatprep.mubr.bf16.mxu0 0
  %440 = vmatmul.mubr.bf16.gmra.mxu0 %v377
  %v441 = vpop.f32.mrf.mxu0
  %v442 = vadd.f32 0.0, %v441
  %v443 = vpop.f32.mrf.mxu0
  %v444 = vpop.f32.mrf.mxu0
  %v445 = vadd.f32 0.0, %v444
  %v446 = vpop.f32.mrf.mxu0
  %447 = vmatprep.mubr.bf16.mxu0 0
  %448 = vmatmul.mubr.bf16.gmra.mxu0 %v380
  %v449 = vpop.f32.mrf.mxu0
  %v450 = vadd.f32 0.0, %v449
  %v451 = vpop.f32.mrf.mxu0
  %v452 = vpop.f32.mrf.mxu0
  %v453 = vadd.f32 0.0, %v452
  %v454 = vpop.f32.mrf.mxu0
  %455 = vmatprep.mubr.bf16.mxu0 0
  %456 = vmatmul.mubr.bf16.gmra.mxu0 %v383
  %v457 = vpop.f32.mrf.mxu0
  %v458 = vadd.f32 0.0, %v457
  %v459 = vpop.f32.mrf.mxu0
  %v460 = vpop.f32.mrf.mxu0
  %v461 = vadd.f32 0.0, %v460
  %v462 = vpop.f32.mrf.mxu0
  %463 = vmatprep.mubr.bf16.mxu0 0
  %464 = vmatmul.mubr.bf16.gmra.mxu0 %v386
  %v465 = vpop.f32.mrf.mxu0
  %v466 = vadd.f32 0.0, %v465
  %v467 = vpop.f32.mrf.mxu0
  %v468 = vpop.f32.mrf.mxu0
  %v469 = vadd.f32 0.0, %v468
  %v470 = vpop.f32.mrf.mxu0
  %471 = vdwg.mxu0
  %v472 = vld [vmem:[%s1] sm:$0xff]
  %v473 = vld [vmem:[%s1 + $0x8] sm:$0xf]
  %v474 = vld [vmem:[%s1 + $0x10] sm:$0xff]
  %v475 = vld [vmem:[%s1 + $0x18] sm:$0xf]
  %v476 = vld [vmem:[%s1 + $0x20] sm:$0xff]
  %v477 = vld [vmem:[%s1 + $0x28] sm:$0xf]
  %v478 = vld [vmem:[%s1 + $0x30] sm:$0xff]
  %v479 = vld [vmem:[%s1 + $0x38] sm:$0xf]
  %v480 = vld [vmem:[%s1 + $0x40] sm:$0xff]
  %v481 = vld [vmem:[%s1 + $0x48] sm:$0xf]
  %v482 = vld [vmem:[%s1 + $0x50] sm:$0xff]
  %v483 = vld [vmem:[%s1 + $0x58] sm:$0xf]
  %v484 = vld [vmem:[%s1 + $0x60] sm:$0xff]
  %v485 = vld [vmem:[%s1 + $0x68] sm:$0xf]
  %v486 = vld [vmem:[%s1 + $0x70] sm:$0xff]
  %v487 = vld [vmem:[%s1 + $0x78] sm:$0xf]
  %v504 = vcombine.high %v472, %v472
  %v505 = vcombine.high %v474, %v474
  %v506 = vcombine.high %v476, %v476
  %v507 = vcombine.high %v478, %v478
  %v508 = vcombine.high %v480, %v480
  %v509 = vcombine.high %v482, %v482
  %v510 = vcombine.high %v484, %v484
  %v511 = vcombine.high %v486, %v486
  %v512 = vcombine.low %v472, %v504
  %v513 = vcombine.low %v473, %v474
  %v514 = vcombine.low %v505, %v475
  %v515 = vcombine.low %v476, %v506
  %v516 = vcombine.low %v477, %v478
  %v517 = vcombine.low %v507, %v479
  %v518 = vcombine.low %v480, %v508
  %v519 = vcombine.low %v481, %v482
  %v520 = vcombine.low %v509, %v483
  %v521 = vcombine.low %v484, %v510
  %v522 = vcombine.low %v485, %v486
  %v523 = vcombine.low %v511, %v487
  %v536 = vpack.c.bf16 %v513, %v512
  %v537 = vpack.c.bf16 %v515, %v514
  %v538 = vpack.c.bf16 %v517, %v516
  %v539 = vpack.c.bf16 %v519, %v518
  %v540 = vpack.c.bf16 %v521, %v520
  %v541 = vpack.c.bf16 %v523, %v522
  %v542 = vld [vmem:[%s3] sm:$0x1]
  %v544 = vsel %vm280, %v536, 0
  %v547 = vsel %vm280, %v537, 0
  %v550 = vsel %vm280, %v538, 0
  %v553 = vsel %vm280, %v539, 0
  %v556 = vsel %vm280, %v540, 0
  %v559 = vsel %vm280, %v541, 0
  %v562 = vsel %vm69, %v542, 0
  %564 = vmatprep.subr.bf16.mxu0 0
  %565 = vmatpush1.bf16.msra.mxu0 0
  %566 = vmatprep.subr.bf16.mxu0 0
  %567 = vmatpush1.bf16.msra.mxu0 0
  %568 = vmatprep.subr.bf16.mxu0 0
  %569 = vmatpush1.bf16.msra.mxu0 0
  %570 = vmatprep.subr.bf16.mxu0 0
  %571 = vmatpush1.bf16.msra.mxu0 0
  %572 = vmatprep.subr.bf16.mxu0 0
  %573 = vmatpush1.bf16.msra.mxu0 0
  %574 = vmatprep.subr.bf16.mxu0 0
  %575 = vmatpush1.bf16.msra.mxu0 0
  %576 = vmatprep.subr.bf16.mxu0 0
  %577 = vmatpush1.bf16.msra.mxu0 0
  %578 = vmatprep.subr.bf16.mxu0 0
  %579 = vmatpush1.bf16.msra.mxu0 %v562
  %580 = vmatprep.subr.bf16.mxu0 0
  %581 = vmatpush2.bf16.msra.mxu0 0
  %582 = vmatprep.subr.bf16.mxu0 0
  %583 = vmatpush2.bf16.msra.mxu0 0
  %584 = vmatprep.subr.bf16.mxu0 0
  %585 = vmatpush2.bf16.msra.mxu0 0
  %586 = vmatprep.subr.bf16.mxu0 0
  %587 = vmatpush2.bf16.msra.mxu0 0
  %588 = vmatprep.subr.bf16.mxu0 0
  %589 = vmatpush2.bf16.msra.mxu0 0
  %590 = vmatprep.subr.bf16.mxu0 0
  %591 = vmatpush2.bf16.msra.mxu0 0
  %592 = vmatprep.subr.bf16.mxu0 0
  %593 = vmatpush2.bf16.msra.mxu0 0
  %594 = vmatprep.subr.bf16.mxu0 0
  %595 = vmatpush2.bf16.msra.mxu0 0
  %596 = vmatprep.mubr.bf16.mxu0 0
  %597 = vmatmul.mubr.bf16.gmra.mxu0 %v544
  %v598 = vpop.f32.mrf.mxu0
  %v599 = vadd.f32 0.0, %v598
  %v600 = vpop.f32.mrf.mxu0
  %v601 = vpop.f32.mrf.mxu0
  %v602 = vadd.f32 0.0, %v601
  %v603 = vpop.f32.mrf.mxu0
  %604 = vmatprep.mubr.bf16.mxu0 0
  %605 = vmatmul.mubr.bf16.gmra.mxu0 %v547
  %v606 = vpop.f32.mrf.mxu0
  %v607 = vadd.f32 0.0, %v606
  %v608 = vpop.f32.mrf.mxu0
  %v609 = vpop.f32.mrf.mxu0
  %v610 = vadd.f32 0.0, %v609
  %v611 = vpop.f32.mrf.mxu0
  %612 = vmatprep.mubr.bf16.mxu0 0
  %613 = vmatmul.mubr.bf16.gmra.mxu0 %v550
  %v614 = vpop.f32.mrf.mxu0
  %v615 = vadd.f32 0.0, %v614
  %v616 = vpop.f32.mrf.mxu0
  %v617 = vpop.f32.mrf.mxu0
  %v618 = vadd.f32 0.0, %v617
  %v619 = vpop.f32.mrf.mxu0
  %620 = vmatprep.mubr.bf16.mxu0 0
  %621 = vmatmul.mubr.bf16.gmra.mxu0 %v553
  %v622 = vpop.f32.mrf.mxu0
  %v623 = vadd.f32 0.0, %v622
  %v624 = vpop.f32.mrf.mxu0
  %v625 = vpop.f32.mrf.mxu0
  %v626 = vadd.f32 0.0, %v625
  %v627 = vpop.f32.mrf.mxu0
  %628 = vmatprep.mubr.bf16.mxu0 0
  %629 = vmatmul.mubr.bf16.gmra.mxu0 %v556
  %v630 = vpop.f32.mrf.mxu0
  %v631 = vadd.f32 0.0, %v630
  %v632 = vpop.f32.mrf.mxu0
  %v633 = vpop.f32.mrf.mxu0
  %v634 = vadd.f32 0.0, %v633
  %v635 = vpop.f32.mrf.mxu0
  %636 = vmatprep.mubr.bf16.mxu0 0
  %637 = vmatmul.mubr.bf16.gmra.mxu0 %v559
  %v638 = vpop.f32.mrf.mxu0
  %v639 = vadd.f32 0.0, %v638
  %v640 = vpop.f32.mrf.mxu0
  %v641 = vpop.f32.mrf.mxu0
  %v642 = vadd.f32 0.0, %v641
  %v643 = vpop.f32.mrf.mxu0
  %644 = vdwg.mxu0
  %v657 = vcombine.high %v426, %v426
  %v658 = vcombine.high %v429, %v429
  %v659 = vcombine.high %v434, %v434
  %v660 = vcombine.high %v437, %v437
  %v661 = vcombine.high %v442, %v442
  %v662 = vcombine.high %v445, %v445
  %v663 = vcombine.high %v450, %v450
  %v664 = vcombine.high %v453, %v453
  %v665 = vcombine.high %v458, %v458
  %v666 = vcombine.high %v461, %v461
  %v667 = vcombine.high %v466, %v466
  %v668 = vcombine.high %v469, %v469
  %v693 = vcombine.high %v599, %v599
  %v694 = vcombine.high %v602, %v602
  %v695 = vcombine.high %v607, %v607
  %v696 = vcombine.high %v610, %v610
  %v697 = vcombine.high %v615, %v615
  %v698 = vcombine.high %v618, %v618
  %v699 = vcombine.high %v623, %v623
  %v700 = vcombine.high %v626, %v626
  %v701 = vcombine.high %v631, %v631
  %v702 = vcombine.high %v634, %v634
  %v703 = vcombine.high %v639, %v639
  %v704 = vcombine.high %v642, %v642
  %v717 = vadd.f32 %v426, %v599
  %v718 = vadd.f32 %v657, %v693
  %v719 = vadd.f32 %v429, %v602
  %v720 = vadd.f32 %v658, %v694
  %v721 = vadd.f32 %v434, %v607
  %v722 = vadd.f32 %v659, %v695
  %v723 = vadd.f32 %v437, %v610
  %v724 = vadd.f32 %v660, %v696
  %v725 = vadd.f32 %v442, %v615
  %v726 = vadd.f32 %v661, %v697
  %v727 = vadd.f32 %v445, %v618
  %v728 = vadd.f32 %v662, %v698
  %v729 = vadd.f32 %v450, %v623
  %v730 = vadd.f32 %v663, %v699
  %v731 = vadd.f32 %v453, %v626
  %v732 = vadd.f32 %v664, %v700
  %v733 = vadd.f32 %v458, %v631
  %v734 = vadd.f32 %v665, %v701
  %v735 = vadd.f32 %v461, %v634
  %v736 = vadd.f32 %v666, %v702
  %v737 = vadd.f32 %v466, %v639
  %v738 = vadd.f32 %v667, %v703
  %v739 = vadd.f32 %v469, %v642
  %v740 = vadd.f32 %v668, %v704
  %v741 = vld [vmem:[%s4] sm:$0x1]
  %v742 = vld [vmem:[%s4 + $0x1] sm:$0x1]
  %v743 = vld [vmem:[%s4 + $0x2] sm:$0x1]
  %v744 = vld [vmem:[%s4 + $0x3] sm:$0x1]
  %v745 = vld [vmem:[%s4 + $0x4] sm:$0x1]
  %v746 = vld [vmem:[%s4 + $0x5] sm:$0x1]
  %v747 = vld [vmem:[%s4 + $0x6] sm:$0x1]
  %v748 = vld [vmem:[%s4 + $0x7] sm:$0x1]
  %v757 = vlaneseq
  %v758 = vshrl.u32 %v757, 7
  %v759 = vsub.s32 0, %v758
  %v760 = vrot.slane %v741, %v759
  %v761 = vlaneseq
  %v762 = vshrl.u32 %v761, 7
  %v763 = vsub.s32 0, %v762
  %v764 = vrot.slane %v742, %v763
  %v765 = vlaneseq
  %v766 = vshrl.u32 %v765, 7
  %v767 = vsub.s32 0, %v766
  %v768 = vrot.slane %v743, %v767
  %v769 = vlaneseq
  %v770 = vshrl.u32 %v769, 7
  %v771 = vsub.s32 0, %v770
  %v772 = vrot.slane %v744, %v771
  %v773 = vlaneseq
  %v774 = vshrl.u32 %v773, 7
  %v775 = vsub.s32 0, %v774
  %v776 = vrot.slane %v745, %v775
  %v777 = vlaneseq
  %v778 = vshrl.u32 %v777, 7
  %v779 = vsub.s32 0, %v778
  %v780 = vrot.slane %v746, %v779
  %v781 = vlaneseq
  %v782 = vshrl.u32 %v781, 7
  %v783 = vsub.s32 0, %v782
  %v784 = vrot.slane %v747, %v783
  %v785 = vlaneseq
  %v786 = vshrl.u32 %v785, 7
  %v787 = vsub.s32 0, %v786
  %v788 = vrot.slane %v748, %v787
  %v797 = vcombine.high %v760, %v760
  %v798 = vcombine.high %v764, %v764
  %v799 = vcombine.high %v768, %v768
  %v800 = vcombine.high %v772, %v772
  %v801 = vcombine.high %v776, %v776
  %v802 = vcombine.high %v780, %v780
  %v803 = vcombine.high %v784, %v784
  %v804 = vcombine.high %v788, %v788
  %v813 = vadd.f32 %v717, %v760
  %v814 = vadd.f32 %v718, %v797
  %v815 = vadd.f32 %v719, %v760
  %v816 = vadd.f32 %v720, %v764
  %v817 = vadd.f32 %v721, %v798
  %v818 = vadd.f32 %v722, %v764
  %v819 = vadd.f32 %v723, %v768
  %v820 = vadd.f32 %v724, %v799
  %v821 = vadd.f32 %v725, %v768
  %v822 = vadd.f32 %v726, %v772
  %v823 = vadd.f32 %v727, %v800
  %v824 = vadd.f32 %v728, %v772
  %v825 = vadd.f32 %v729, %v776
  %v826 = vadd.f32 %v730, %v801
  %v827 = vadd.f32 %v731, %v776
  %v828 = vadd.f32 %v732, %v780
  %v829 = vadd.f32 %v733, %v802
  %v830 = vadd.f32 %v734, %v780
  %v831 = vadd.f32 %v735, %v784
  %v832 = vadd.f32 %v736, %v803
  %v833 = vadd.f32 %v737, %v784
  %v834 = vadd.f32 %v738, %v788
  %v835 = vadd.f32 %v739, %v804
  %v836 = vadd.f32 %v740, %v788
  %v853 = vcombine.low %v813, %v814
  %v854 = vcombine.low %v816, %v817
  %v855 = vcombine.low %v819, %v820
  %v856 = vcombine.low %v822, %v823
  %v857 = vcombine.low %v825, %v826
  %v858 = vcombine.low %v828, %v829
  %v859 = vcombine.low %v831, %v832
  %v860 = vcombine.low %v834, %v835
  %vm869 = vcmask 261120
  %870 = vst.msk [vmem:[%s5] sm:$0xff] %vm869, %v853
  %vm871 = vcmask 257024
  %872 = vst.msk [vmem:[%s5 + $0x8] sm:$0xf] %vm871, %v815
  %873 = vst.msk [vmem:[%s5 + $0x10] sm:$0xff] %vm869, %v854
  %874 = vst.msk [vmem:[%s5 + $0x18] sm:$0xf] %vm871, %v818
  %875 = vst.msk [vmem:[%s5 + $0x20] sm:$0xff] %vm869, %v855
  %876 = vst.msk [vmem:[%s5 + $0x28] sm:$0xf] %vm871, %v821
  %877 = vst.msk [vmem:[%s5 + $0x30] sm:$0xff] %vm869, %v856
  %878 = vst.msk [vmem:[%s5 + $0x38] sm:$0xf] %vm871, %v824
  %879 = vst.msk [vmem:[%s5 + $0x40] sm:$0xff] %vm869, %v857
  %880 = vst.msk [vmem:[%s5 + $0x48] sm:$0xf] %vm871, %v827
  %881 = vst.msk [vmem:[%s5 + $0x50] sm:$0xff] %vm869, %v858
  %882 = vst.msk [vmem:[%s5 + $0x58] sm:$0xf] %vm871, %v830
  %883 = vst.msk [vmem:[%s5 + $0x60] sm:$0xff] %vm869, %v859
  %884 = vst.msk [vmem:[%s5 + $0x68] sm:$0xf] %vm871, %v833
  %885 = vst.msk [vmem:[%s5 + $0x70] sm:$0xff] %vm869, %v860
  %886 = vst.msk [vmem:[%s5 + $0x78] sm:$0xf] %vm871, %v836
  // Predicated region
  $region22: #{corrformer_forward.58} parent=0 // pred_check
    _
  $region23: #{corrformer_forward.58} parent=0 // pred_check_branch
    %888 = sbr.rel (0) target = $region25
  $region24: #{corrformer_forward.58} parent=0 // pred_region
    _
  $region25: #{corrformer_forward.58} parent=0 // pred_fallthru
    _
  // Predicated region
  $region26: #{corrformer_forward.58} parent=0 // pred_check
    _
  $region27: #{corrformer_forward.58} parent=0 // pred_check_branch
    %890 = sbr.rel (0) target = $region29
  $region28: #{corrformer_forward.58} parent=0 // pred_region
    _
  $region29: #{corrformer_forward.58} parent=0 // pred_fallthru
    _

// kernel: corrformer_forward.60
$region0: #{corrformer_forward.60}
  #allocation0 [shape = 'u32[]', space=smem, size = 0x4, offset = 0x4, fixed_abs, tag = 'smem constant byte address 0x4 - core index']
  #allocation1 [shape = 'u32[144,128]{1,0:T(1,128)}', space=vmem, size = 0x12000, scoped, tag = 'internal scratch']
  %s0 = inlined_call_operand.vmem [shape: f32[12,256], index: 0, kind: input, shape index: {}]
  %s1 = inlined_call_operand.vmem [shape: f32[12,256], index: 1, kind: input, shape index: {}]
  %s2 = inlined_call_operand.vmem [shape: f32[12,256], index: 2, kind: output, shape index: {}]
  %s3 = sld [smem:[#allocation0]]
  $region151: #{corrformer_forward.60} parent=0
    _
  %s5 = ssub.s32 1, %s3
  %s6 = scalar_select 0, %s5, %s3
  $region1: #{corrformer_forward.60} parent=0
    #allocation2 [shape = 'u8[16384]{0}', space=vmem, size = 0x4000, scoped, tag = 'input window, operand 0']
    #allocation3 [shape = 'u8[16384]{0}', space=vmem, size = 0x4000, scoped, tag = 'input window, operand 1']
    #allocation4 [shape = 'u8[16384]{0}', space=vmem, size = 0x4000, scoped, tag = 'output window, operand 0']
    loop: start=0, step=1, limit=4
    $region2: #{corrformer_forward.60} parent=1 // loop_pre_header
      _
    $region3: #{corrformer_forward.60} parent=1 // loop_header
      %s8 = sphi 0, %s12
      %p9 = scmp.ge.s32.totalorder %s8, 4
      %s18 = sphi 0, %s20
      %s21 = sphi 0, %s18
      %s22 = sphi 0, %s21
      %s38 = sphi 0, %s22
      %s44 = sphi 0, %s46
      %s47 = sphi 0, %s44
      %s48 = sphi 0, %s47
      %s64 = sphi 0, %s48
      %s70 = sphi 0, %s72
      %s73 = sphi 0, %s70
      %s74 = sphi 0, %s73
      %s90 = sphi 0, %s74
    $region4: #{corrformer_forward.60} parent=1 // loop_header_branch
      %11 = sbr.rel (%p9) target = $region8
    $region5: #{corrformer_forward.60} parent=1 // loop_body
      %s13 = ssub.s32 %s8, 1
      %s14 = ssub.s32 %s8, 2
      %s15 = sadd.s32 %s8, 1
      %s16 = ssub.s32 %s8, %s15
      %p17 = scmp.eq.s32.totalorder %s16, 0
      %s19 = sadd.s32 %s18, 1
      %s20 = scalar_select %p17, %s18, %s19
      %p23 = pneg %p17
      %p24 = scmp.eq.s32.totalorder %s8, 1
      %p25 = por %p23, %p24
      %p26 = scmp.ne.s32.totalorder %s18, %s21
      %p27 = scmp.eq.s32.totalorder %s8, 0
      %p28 = por %p26, %p27
      %p29 = scmp.ne.s32.totalorder %s18, %s21
      %p30 = scmp.eq.s32.totalorder %s13, 1
      %p31 = por %p29, %p30
      %p32 = scmp.ne.s32.totalorder %s21, %s22
      %p33 = scmp.eq.s32.totalorder %s13, 0
      %p34 = por %p32, %p33
      %p35 = scmp.ne.s32.totalorder %s21, %s22
      %p36 = scmp.eq.s32.totalorder %s14, 1
      %p37 = por %p35, %p36
      %p39 = scmp.ne.s32.totalorder %s22, %s38
      %p40 = scmp.eq.s32.totalorder %s14, 0
      %p41 = por %p39, %p40
      %s42 = ssub.s32 %s8, %s15
      %p43 = scmp.eq.s32.totalorder %s42, 0
      %s45 = sadd.s32 %s44, 1
      %s46 = scalar_select %p43, %s44, %s45
      %p49 = pneg %p43
      %p50 = scmp.eq.s32.totalorder %s8, 1
      %p51 = por %p49, %p50
      %p52 = scmp.ne.s32.totalorder %s44, %s47
      %p53 = scmp.eq.s32.totalorder %s8, 0
      %p54 = por %p52, %p53
      %p55 = scmp.ne.s32.totalorder %s44, %s47
      %p56 = scmp.eq.s32.totalorder %s13, 1
      %p57 = por %p55, %p56
      %p58 = scmp.ne.s32.totalorder %s47, %s48
      %p59 = scmp.eq.s32.totalorder %s13, 0
      %p60 = por %p58, %p59
      %p61 = scmp.ne.s32.totalorder %s47, %s48
      %p62 = scmp.eq.s32.totalorder %s14, 1
      %p63 = por %p61, %p62
      %p65 = scmp.ne.s32.totalorder %s48, %s64
      %p66 = scmp.eq.s32.totalorder %s14, 0
      %p67 = por %p65, %p66
      %s68 = ssub.s32 %s8, %s15
      %p69 = scmp.eq.s32.totalorder %s68, 0
      %s71 = sadd.s32 %s70, 1
      %s72 = scalar_select %p69, %s70, %s71
      %p75 = pneg %p69
      %p76 = scmp.eq.s32.totalorder %s8, 1
      %p77 = por %p75, %p76
      %p78 = scmp.ne.s32.totalorder %s70, %s73
      %p79 = scmp.eq.s32.totalorder %s8, 0
      %p80 = por %p78, %p79
      %p81 = scmp.ne.s32.totalorder %s70, %s73
      %p82 = scmp.eq.s32.totalorder %s13, 1
      %p83 = por %p81, %p82
      %p84 = scmp.ne.s32.totalorder %s73, %s74
      %p85 = scmp.eq.s32.totalorder %s13, 0
      %p86 = por %p84, %p85
      %p87 = scmp.ne.s32.totalorder %s73, %s74
      %p88 = scmp.eq.s32.totalorder %s14, 1
      %p89 = por %p87, %p88
      %p91 = scmp.ne.s32.totalorder %s74, %s90
      %p92 = scmp.eq.s32.totalorder %s14, 0
      %p93 = por %p91, %p92
      %p94 = scmp.le.s32.totalorder 1, %s8
      %p95 = scmp.lt.s32.totalorder %s8, 3
      %p96 = pnand %p94, %p95
      %p97 = pneg %p96
      // Predicated region
      $region9: #{corrformer_forward.60} parent=5 // pred_check
        _
      $region10: #{corrformer_forward.60} parent=5 // pred_check_branch
        %99 = sbr.rel (%p96) target = $region12
      $region11: #{corrformer_forward.60} parent=5 // pred_region
        %s100 = ssub.s32 %s8, 1
      $region12: #{corrformer_forward.60} parent=5 // pred_fallthru
        _
      %p101 = scmp.lt.s32.totalorder %s8, 2
      // Predicated region
      $region13: #{corrformer_forward.60} parent=5 // pred_check
        %p102 = pneg %p101
      $region14: #{corrformer_forward.60} parent=5 // pred_check_branch
        %104 = sbr.rel (%p102) target = $region16
      $region15: #{corrformer_forward.60} parent=5 // pred_region
        // Predicated region
        $region17: #{corrformer_forward.60} parent=15 // pred_check
          %p105 = pneg %p28
        $region18: #{corrformer_forward.60} parent=15 // pred_check_branch
          %107 = sbr.rel (%p105) target = $region20
        $region19: #{corrformer_forward.60} parent=15 // pred_region
          %s108 = sand.u32 %s18, 1
          %s109 = sand.u32 %s18, 1
          %s110 = smul.addr %s109, 16
          %s111 = scalar_lea.vmem [#allocation2], %s110
          %s112 = smul.addr %s8, 8
          %s113 = scalar_lea.vmem %s0, %s112
          // Predicated region
          $region21: #{corrformer_forward.60} parent=19 // pred_check
            _
          $region22: #{corrformer_forward.60} parent=19 // pred_check_branch
            %115 = sbr.rel (0) target = $region24
          $region23: #{corrformer_forward.60} parent=19 // pred_region
            // Predicated region
            $region25: #{corrformer_forward.60} parent=23 // pred_check
              _
            $region26: #{corrformer_forward.60} parent=23 // pred_check_branch
              %117 = sbr.rel (0) target = $region28
            $region27: #{corrformer_forward.60} parent=23 // pred_region
              // Predicated region
              $region40: #{corrformer_forward.60} parent=27 // pred_check
                _
              $region41: #{corrformer_forward.60} parent=27 // pred_check_branch
                %135 = sbr.rel (0) target = $region43
              $region42: #{corrformer_forward.60} parent=27 // pred_region
                loop: start=0, step=1, limit=1
                $region44: #{corrformer_forward.60} parent=42 // loop_pre_header
                  _
                $region45: #{corrformer_forward.60} parent=42 // loop_header
                  %s137 = sphi 0, %s141
                  %p138 = scmp.ge.s32.totalorder %s137, 1
                  %s142 = sphi %s113, %s113
                  %s143 = sphi %s111, %s111
                $region46: #{corrformer_forward.60} parent=42 // loop_header_branch
                  %140 = sbr.rel (%p138) target = $region50
                $region47: #{corrformer_forward.60} parent=42 // loop_body
                  %v144 = vld [vmem:[%s142] sm:$0xff]
                  %145 = vst [vmem:[%s143] sm:$0xff] %v144
                  %v146 = vld [vmem:[%s142 + $0x10] sm:$0xff]
                  %147 = vst [vmem:[%s143 + $0x8] sm:$0xff] %v146
                $region48: #{corrformer_forward.60} parent=42 // loop_footer
                  %s141 = sadd.s32 1, %s137
                $region49: #{corrformer_forward.60} parent=42 // loop_footer_branch
                  %136 = sbr.rel target = $region45
                $region50: #{corrformer_forward.60} parent=42 // loop_exit
                  _
              $region43: #{corrformer_forward.60} parent=27 // pred_fallthru
                _
              // Predicated region
              $region51: #{corrformer_forward.60} parent=27 // pred_check
                _
              $region52: #{corrformer_forward.60} parent=27 // pred_check_branch
                %149 = sbr.rel target = $region54
              $region53: #{corrformer_forward.60} parent=27 // pred_region
                _
              $region54: #{corrformer_forward.60} parent=27 // pred_fallthru
                _
            $region28: #{corrformer_forward.60} parent=23 // pred_fallthru
              _
            // Predicated region
            $region29: #{corrformer_forward.60} parent=23 // pred_check
              _
            $region30: #{corrformer_forward.60} parent=23 // pred_check_branch
              %119 = sbr.rel target = $region32
            $region31: #{corrformer_forward.60} parent=23 // pred_region
              %s121 = ssub.s32 256, 1
              loop: start=0, step=1, limit=1
              $region33: #{corrformer_forward.60} parent=31 // loop_pre_header
                _
              $region34: #{corrformer_forward.60} parent=31 // loop_header
                %s123 = sphi 0, %s127
                %p124 = scmp.ge.s32.totalorder %s123, 1
                %s128 = sphi %s113, %s113
                %s129 = sphi %s111, %s111
              $region35: #{corrformer_forward.60} parent=31 // loop_header_branch
                %126 = sbr.rel (%p124) target = $region39
              $region36: #{corrformer_forward.60} parent=31 // loop_body
                %v130 = vld [vmem:[%s128] sm:%s121]
                %131 = vst [vmem:[%s129] sm:%s121] %v130
                %v132 = vld [vmem:[%s128 + $0x10] sm:%s121]
                %133 = vst [vmem:[%s129 + $0x8] sm:%s121] %v132
              $region37: #{corrformer_forward.60} parent=31 // loop_footer
                %s127 = sadd.s32 1, %s123
              $region38: #{corrformer_forward.60} parent=31 // loop_footer_branch
                %122 = sbr.rel target = $region34
              $region39: #{corrformer_forward.60} parent=31 // loop_exit
                _
            $region32: #{corrformer_forward.60} parent=23 // pred_fallthru
              _
          $region24: #{corrformer_forward.60} parent=19 // pred_fallthru
            _
          %150 = vnop
        $region20: #{corrformer_forward.60} parent=15 // pred_fallthru
          _
        // Predicated region
        $region55: #{corrformer_forward.60} parent=15 // pred_check
          %p151 = pneg %p54
        $region56: #{corrformer_forward.60} parent=15 // pred_check_branch
          %153 = sbr.rel (%p151) target = $region58
        $region57: #{corrformer_forward.60} parent=15 // pred_region
          %s154 = sand.u32 %s44, 1
          %s155 = sand.u32 %s44, 1
          %s156 = smul.addr %s155, 16
          %s157 = scalar_lea.vmem [#allocation3], %s156
          %s158 = smul.addr %s8, 8
          %s159 = scalar_lea.vmem %s1, %s158
          // Predicated region
          $region59: #{corrformer_forward.60} parent=57 // pred_check
            _
          $region60: #{corrformer_forward.60} parent=57 // pred_check_branch
            %161 = sbr.rel (0) target = $region62
          $region61: #{corrformer_forward.60} parent=57 // pred_region
            // Predicated region
            $region63: #{corrformer_forward.60} parent=61 // pred_check
              _
            $region64: #{corrformer_forward.60} parent=61 // pred_check_branch
              %163 = sbr.rel (0) target = $region66
            $region65: #{corrformer_forward.60} parent=61 // pred_region
              // Predicated region
              $region78: #{corrformer_forward.60} parent=65 // pred_check
                _
              $region79: #{corrformer_forward.60} parent=65 // pred_check_branch
                %181 = sbr.rel (0) target = $region81
              $region80: #{corrformer_forward.60} parent=65 // pred_region
                loop: start=0, step=1, limit=1
                $region82: #{corrformer_forward.60} parent=80 // loop_pre_header
                  _
                $region83: #{corrformer_forward.60} parent=80 // loop_header
                  %s183 = sphi 0, %s187
                  %p184 = scmp.ge.s32.totalorder %s183, 1
                  %s188 = sphi %s159, %s159
                  %s189 = sphi %s157, %s157
                $region84: #{corrformer_forward.60} parent=80 // loop_header_branch
                  %186 = sbr.rel (%p184) target = $region88
                $region85: #{corrformer_forward.60} parent=80 // loop_body
                  %v190 = vld [vmem:[%s188] sm:$0xff]
                  %191 = vst [vmem:[%s189] sm:$0xff] %v190
                  %v192 = vld [vmem:[%s188 + $0x10] sm:$0xff]
                  %193 = vst [vmem:[%s189 + $0x8] sm:$0xff] %v192
                $region86: #{corrformer_forward.60} parent=80 // loop_footer
                  %s187 = sadd.s32 1, %s183
                $region87: #{corrformer_forward.60} parent=80 // loop_footer_branch
                  %182 = sbr.rel target = $region83
                $region88: #{corrformer_forward.60} parent=80 // loop_exit
                  _
              $region81: #{corrformer_forward.60} parent=65 // pred_fallthru
                _
              // Predicated region
              $region89: #{corrformer_forward.60} parent=65 // pred_check
                _
              $region90: #{corrformer_forward.60} parent=65 // pred_check_branch
                %195 = sbr.rel target = $region92
              $region91: #{corrformer_forward.60} parent=65 // pred_region
                _
              $region92: #{corrformer_forward.60} parent=65 // pred_fallthru
                _
            $region66: #{corrformer_forward.60} parent=61 // pred_fallthru
              _
            // Predicated region
            $region67: #{corrformer_forward.60} parent=61 // pred_check
              _
            $region68: #{corrformer_forward.60} parent=61 // pred_check_branch
              %165 = sbr.rel target = $region70
            $region69: #{corrformer_forward.60} parent=61 // pred_region
              %s167 = ssub.s32 256, 1
              loop: start=0, step=1, limit=1
              $region71: #{corrformer_forward.60} parent=69 // loop_pre_header
                _
              $region72: #{corrformer_forward.60} parent=69 // loop_header
                %s169 = sphi 0, %s173
                %p170 = scmp.ge.s32.totalorder %s169, 1
                %s174 = sphi %s159, %s159
                %s175 = sphi %s157, %s157
              $region73: #{corrformer_forward.60} parent=69 // loop_header_branch
                %172 = sbr.rel (%p170) target = $region77
              $region74: #{corrformer_forward.60} parent=69 // loop_body
                %v176 = vld [vmem:[%s174] sm:%s167]
                %177 = vst [vmem:[%s175] sm:%s167] %v176
                %v178 = vld [vmem:[%s174 + $0x10] sm:%s167]
                %179 = vst [vmem:[%s175 + $0x8] sm:%s167] %v178
              $region75: #{corrformer_forward.60} parent=69 // loop_footer
                %s173 = sadd.s32 1, %s169
              $region76: #{corrformer_forward.60} parent=69 // loop_footer_branch
                %168 = sbr.rel target = $region72
              $region77: #{corrformer_forward.60} parent=69 // loop_exit
                _
            $region70: #{corrformer_forward.60} parent=61 // pred_fallthru
              _
          $region62: #{corrformer_forward.60} parent=57 // pred_fallthru
            _
          %196 = vnop
        $region58: #{corrformer_forward.60} parent=15 // pred_fallthru
          _
      $region16: #{corrformer_forward.60} parent=5 // pred_fallthru
        _
      %p197 = scmp.le.s32.totalorder 1, %s8
      %p198 = scmp.lt.s32.totalorder %s8, 3
      %p199 = pnand %p197, %p198
      %p200 = pneg %p199
      // Predicated region
      $region93: #{corrformer_forward.60} parent=5 // pred_check
        _
      $region94: #{corrformer_forward.60} parent=5 // pred_check_branch
        %202 = sbr.rel (%p199) target = $region96
      $region95: #{corrformer_forward.60} parent=5 // pred_region
        %s203 = ssub.s32 %s8, 1
        %s204 = sand.u32 %s21, 1
        %s205 = sand.u32 %s21, 1
        %s206 = smul.addr %s205, 16
        %s207 = scalar_lea.vmem [#allocation2], %s206
        // Predicated region
        $region97: #{corrformer_forward.60} parent=95 // pred_check
          %p208 = pneg %p34
        $region98: #{corrformer_forward.60} parent=95 // pred_check_branch
          %210 = sbr.rel (%p208) target = $region100
        $region99: #{corrformer_forward.60} parent=95 // pred_region
          _
        $region100: #{corrformer_forward.60} parent=95 // pred_fallthru
          _
        %s211 = sand.u32 %s47, 1
        %s212 = sand.u32 %s47, 1
        %s213 = smul.addr %s212, 16
        %s214 = scalar_lea.vmem [#allocation3], %s213
        // Predicated region
        $region101: #{corrformer_forward.60} parent=95 // pred_check
          %p215 = pneg %p60
        $region102: #{corrformer_forward.60} parent=95 // pred_check_branch
          %217 = sbr.rel (%p215) target = $region104
        $region103: #{corrformer_forward.60} parent=95 // pred_region
          _
        $region104: #{corrformer_forward.60} parent=95 // pred_fallthru
          _
        %s218 = sand.u32 %s21, 1
        %s219 = sand.u32 %s21, 1
        %s220 = smul.addr %s219, 16
        %s221 = scalar_lea.vmem [#allocation2], %s220
        %p222 = pneg %p34
        %p223 = pneg %p31
        %s224 = sand.u32 %s47, 1
        %s225 = sand.u32 %s47, 1
        %s226 = smul.addr %s225, 16
        %s227 = scalar_lea.vmem [#allocation3], %s226
        %p228 = pneg %p60
        %p229 = pneg %p57
        %p230 = pneg %p86
        %p231 = pneg %p83
        %s232 = sand.u32 %s73, 1
        %s233 = sand.u32 %s73, 1
        %s234 = smul.addr %s233, 16
        %s235 = scalar_lea.vmem [#allocation4], %s234
        %v236 = vld [vmem:[%s207] sm:$0xff]
        %v237 = vld [vmem:[%s207 + $0x8] sm:$0xf]
        %v238 = vld [vmem:[%s214] sm:$0xff]
        %v239 = vld [vmem:[%s214 + $0x8] sm:$0xf]
        %v240 = vmul.f32 %v236, %v238
        %v241 = vmul.f32 %v237, %v239
        %vm242 = vcmask 1043456
        %v243 = vsel %vm242, %v241, 0.0
        %v244 = vadd.f32 %v240, %v243
        %v245 = vrot.slane %v244, 4
        %v246 = vadd.f32 %v244, %v245
        %v247 = vrot.slane %v246, 2
        %v248 = vadd.f32 %v246, %v247
        %v249 = vrot.slane %v248, 1
        %v250 = vadd.f32 %v248, %v249
        %v252 = vrot.slane %v239, 3
        %vm255 = vcmask 1040384
        %v256 = vrot.slane %v238, 7
        %v257 = vrot.slane %v239, 7
        %v258 = vsel %vm255, %v256, %v257
        %v261 = vsel %vm255, %v252, %v256
        %v262 = vmul.f32 %v236, %v261
        %v263 = vmul.f32 %v237, %v258
        %v264 = vsel %vm242, %v263, 0.0
        %v265 = vadd.f32 %v262, %v264
        %v266 = vrot.slane %v265, 4
        %v267 = vadd.f32 %v265, %v266
        %v268 = vrot.slane %v267, 2
        %v269 = vadd.f32 %v267, %v268
        %v270 = vrot.slane %v269, 1
        %v271 = vadd.f32 %v269, %v270
        %v272 = vrot.slane %v239, 2
        %vm274 = vcmask 1041408
        %v275 = vrot.slane %v238, 6
        %v276 = vrot.slane %v239, 6
        %v277 = vsel %vm274, %v275, %v276
        %v280 = vsel %vm274, %v272, %v275
        %v281 = vmul.f32 %v236, %v280
        %v282 = vmul.f32 %v237, %v277
        %v283 = vsel %vm242, %v282, 0.0
        %v284 = vadd.f32 %v281, %v283
        %v285 = vrot.slane %v284, 4
        %v286 = vadd.f32 %v284, %v285
        %v287 = vrot.slane %v286, 2
        %v288 = vadd.f32 %v286, %v287
        %v289 = vrot.slane %v288, 1
        %v290 = vadd.f32 %v288, %v289
        %v291 = vrot.slane %v239, 1
        %vm293 = vcmask 1042432
        %v294 = vrot.slane %v238, 5
        %v295 = vrot.slane %v239, 5
        %v296 = vsel %vm293, %v294, %v295
        %v299 = vsel %vm293, %v291, %v294
        %v300 = vmul.f32 %v236, %v299
        %v301 = vmul.f32 %v237, %v296
        %v302 = vsel %vm242, %v301, 0.0
        %v303 = vadd.f32 %v300, %v302
        %v304 = vrot.slane %v303, 4
        %v305 = vadd.f32 %v303, %v304
        %v306 = vrot.slane %v305, 2
        %v307 = vadd.f32 %v305, %v306
        %v308 = vrot.slane %v307, 1
        %v309 = vadd.f32 %v307, %v308
        %v310 = vrot.slane %v238, 4
        %v312 = vsel %vm242, %v239, %v310
        %v313 = vmul.f32 %v236, %v312
        %v314 = vmul.f32 %v237, %v310
        %v315 = vsel %vm242, %v314, 0.0
        %v316 = vadd.f32 %v313, %v315
        %v317 = vrot.slane %v316, 4
        %v318 = vadd.f32 %v316, %v317
        %v319 = vrot.slane %v318, 2
        %v320 = vadd.f32 %v318, %v319
        %v321 = vrot.slane %v320, 1
        %v322 = vadd.f32 %v320, %v321
        %v323 = vrot.slane %v238, 3
        %vm325 = vcmask 1044480
        %v326 = vsel %vm325, %v258, %v323
        %v327 = vmul.f32 %v236, %v326
        %v328 = vmul.f32 %v237, %v323
        %v329 = vsel %vm242, %v328, 0.0
        %v330 = vadd.f32 %v327, %v329
        %v331 = vrot.slane %v330, 4
        %v332 = vadd.f32 %v330, %v331
        %v333 = vrot.slane %v332, 2
        %v334 = vadd.f32 %v332, %v333
        %v335 = vrot.slane %v334, 1
        %v336 = vadd.f32 %v334, %v335
        %v337 = vrot.slane %v238, 2
        %vm339 = vcmask 1045504
        %v340 = vsel %vm339, %v277, %v337
        %v341 = vmul.f32 %v236, %v340
        %v342 = vmul.f32 %v237, %v337
        %v343 = vsel %vm242, %v342, 0.0
        %v344 = vadd.f32 %v341, %v343
        %v345 = vrot.slane %v344, 4
        %v346 = vadd.f32 %v344, %v345
        %v347 = vrot.slane %v346, 2
        %v348 = vadd.f32 %v346, %v347
        %v349 = vrot.slane %v348, 1
        %v350 = vadd.f32 %v348, %v349
        %v351 = vrot.slane %v238, 1
        %vm353 = vcmask 1046528
        %v354 = vsel %vm353, %v296, %v351
        %v355 = vmul.f32 %v236, %v354
        %v356 = vmul.f32 %v237, %v351
        %v357 = vsel %vm242, %v356, 0.0
        %v358 = vadd.f32 %v355, %v357
        %v359 = vrot.slane %v358, 4
        %v360 = vadd.f32 %v358, %v359
        %v361 = vrot.slane %v360, 2
        %v362 = vadd.f32 %v360, %v361
        %v363 = vrot.slane %v362, 1
        %v364 = vadd.f32 %v362, %v363
        %v365 = vrot.slane %v239, 4
        %v366 = vsel %vm242, %v310, %v365
        %v368 = vmul.f32 %v236, %v366
        %v369 = vmul.f32 %v237, %v238
        %v370 = vsel %vm242, %v369, 0.0
        %v371 = vadd.f32 %v368, %v370
        %v372 = vrot.slane %v371, 4
        %v373 = vadd.f32 %v371, %v372
        %v374 = vrot.slane %v373, 2
        %v375 = vadd.f32 %v373, %v374
        %v376 = vrot.slane %v375, 1
        %v377 = vadd.f32 %v375, %v376
        %v378 = vsel %vm325, %v323, %v252
        %v380 = vmul.f32 %v236, %v378
        %v381 = vmul.f32 %v237, %v261
        %v382 = vsel %vm242, %v381, 0.0
        %v383 = vadd.f32 %v380, %v382
        %v384 = vrot.slane %v383, 4
        %v385 = vadd.f32 %v383, %v384
        %v386 = vrot.slane %v385, 2
        %v387 = vadd.f32 %v385, %v386
        %v388 = vrot.slane %v387, 1
        %v389 = vadd.f32 %v387, %v388
        %v390 = vsel %vm339, %v337, %v272
        %v392 = vmul.f32 %v236, %v390
        %v393 = vmul.f32 %v237, %v280
        %v394 = vsel %vm242, %v393, 0.0
        %v395 = vadd.f32 %v392, %v394
        %v396 = vrot.slane %v395, 4
        %v397 = vadd.f32 %v395, %v396
        %v398 = vrot.slane %v397, 2
        %v399 = vadd.f32 %v397, %v398
        %v400 = vrot.slane %v399, 1
        %v401 = vadd.f32 %v399, %v400
        %v402 = vsel %vm353, %v351, %v291
        %v404 = vmul.f32 %v236, %v402
        %v405 = vmul.f32 %v237, %v299
        %v406 = vsel %vm242, %v405, 0.0
        %v407 = vadd.f32 %v404, %v406
        %v408 = vrot.slane %v407, 4
        %v409 = vadd.f32 %v407, %v408
        %v410 = vrot.slane %v409, 2
        %v411 = vadd.f32 %v409, %v410
        %v412 = vrot.slane %v411, 1
        %v413 = vadd.f32 %v411, %v412
        %v414 = vsel %vm255, %v250, %v271
        %v415 = vsel %vm274, %v414, %v290
        %v416 = vsel %vm293, %v415, %v309
        %v417 = vsel %vm242, %v416, %v322
        %v418 = vsel %vm325, %v417, %v336
        %v419 = vsel %vm339, %v418, %v350
        %v420 = vsel %vm353, %v419, %v364
        %v421 = vsel %vm255, %v377, %v389
        %v422 = vsel %vm274, %v421, %v401
        %v423 = vsel %vm293, %v422, %v413
        %424 = vst [vmem:[%s235] sm:$0xff] %v420
        %425 = vst [vmem:[%s235 + $0x8] sm:$0xf] %v423
        %s426 = sand.u32 %s73, 1
        %s427 = sand.u32 %s73, 1
        %s428 = smul.addr %s427, 16
        %s429 = scalar_lea.vmem [#allocation4], %s428
        // Predicated region
        $region105: #{corrformer_forward.60} parent=95 // pred_check
          %p430 = pneg %p83
        $region106: #{corrformer_forward.60} parent=95 // pred_check_branch
          %432 = sbr.rel (%p430) target = $region108
        $region107: #{corrformer_forward.60} parent=95 // pred_region
          %s433 = smul.addr %s13, 8
          %s434 = scalar_lea.vmem %s2, %s433
          // Predicated region
          $region109: #{corrformer_forward.60} parent=107 // pred_check
            _
          $region110: #{corrformer_forward.60} parent=107 // pred_check_branch
            %436 = sbr.rel (0) target = $region112
          $region111: #{corrformer_forward.60} parent=107 // pred_region
            // Predicated region
            $region113: #{corrformer_forward.60} parent=111 // pred_check
              _
            $region114: #{corrformer_forward.60} parent=111 // pred_check_branch
              %438 = sbr.rel (0) target = $region116
            $region115: #{corrformer_forward.60} parent=111 // pred_region
              // Predicated region
              $region128: #{corrformer_forward.60} parent=115 // pred_check
                _
              $region129: #{corrformer_forward.60} parent=115 // pred_check_branch
                %456 = sbr.rel (0) target = $region131
              $region130: #{corrformer_forward.60} parent=115 // pred_region
                loop: start=0, step=1, limit=1
                $region132: #{corrformer_forward.60} parent=130 // loop_pre_header
                  _
                $region133: #{corrformer_forward.60} parent=130 // loop_header
                  %s458 = sphi 0, %s462
                  %p459 = scmp.ge.s32.totalorder %s458, 1
                  %s463 = sphi %s429, %s429
                  %s464 = sphi %s434, %s434
                $region134: #{corrformer_forward.60} parent=130 // loop_header_branch
                  %461 = sbr.rel (%p459) target = $region138
                $region135: #{corrformer_forward.60} parent=130 // loop_body
                  %v465 = vld [vmem:[%s463] sm:$0xff]
                  %466 = vst [vmem:[%s464] sm:$0xff] %v465
                  %v467 = vld [vmem:[%s463 + $0x8] sm:$0xff]
                  %468 = vst [vmem:[%s464 + $0x10] sm:$0xff] %v467
                $region136: #{corrformer_forward.60} parent=130 // loop_footer
                  %s462 = sadd.s32 1, %s458
                $region137: #{corrformer_forward.60} parent=130 // loop_footer_branch
                  %457 = sbr.rel target = $region133
                $region138: #{corrformer_forward.60} parent=130 // loop_exit
                  _
              $region131: #{corrformer_forward.60} parent=115 // pred_fallthru
                _
              // Predicated region
              $region139: #{corrformer_forward.60} parent=115 // pred_check
                _
              $region140: #{corrformer_forward.60} parent=115 // pred_check_branch
                %470 = sbr.rel target = $region142
              $region141: #{corrformer_forward.60} parent=115 // pred_region
                _
              $region142: #{corrformer_forward.60} parent=115 // pred_fallthru
                _
            $region116: #{corrformer_forward.60} parent=111 // pred_fallthru
              _
            // Predicated region
            $region117: #{corrformer_forward.60} parent=111 // pred_check
              _
            $region118: #{corrformer_forward.60} parent=111 // pred_check_branch
              %440 = sbr.rel target = $region120
            $region119: #{corrformer_forward.60} parent=111 // pred_region
              %s442 = ssub.s32 256, 1
              loop: start=0, step=1, limit=1
              $region121: #{corrformer_forward.60} parent=119 // loop_pre_header
                _
              $region122: #{corrformer_forward.60} parent=119 // loop_header
                %s444 = sphi 0, %s448
                %p445 = scmp.ge.s32.totalorder %s444, 1
                %s449 = sphi %s429, %s429
                %s450 = sphi %s434, %s434
              $region123: #{corrformer_forward.60} parent=119 // loop_header_branch
                %447 = sbr.rel (%p445) target = $region127
              $region124: #{corrformer_forward.60} parent=119 // loop_body
                %v451 = vld [vmem:[%s449] sm:%s442]
                %452 = vst [vmem:[%s450] sm:%s442] %v451
                %v453 = vld [vmem:[%s449 + $0x8] sm:%s442]
                %454 = vst [vmem:[%s450 + $0x10] sm:%s442] %v453
              $region125: #{corrformer_forward.60} parent=119 // loop_footer
                %s448 = sadd.s32 1, %s444
              $region126: #{corrformer_forward.60} parent=119 // loop_footer_branch
                %443 = sbr.rel target = $region122
              $region127: #{corrformer_forward.60} parent=119 // loop_exit
                _
            $region120: #{corrformer_forward.60} parent=111 // pred_fallthru
              _
          $region112: #{corrformer_forward.60} parent=107 // pred_fallthru
            _
          %471 = vnop
        $region108: #{corrformer_forward.60} parent=95 // pred_fallthru
          _
      $region96: #{corrformer_forward.60} parent=5 // pred_fallthru
        _
      %p472 = scmp.le.s32.totalorder 2, %s8
      // Predicated region
      $region143: #{corrformer_forward.60} parent=5 // pred_check
        %p473 = pneg %p472
      $region144: #{corrformer_forward.60} parent=5 // pred_check_branch
        %475 = sbr.rel (%p473) target = $region146
      $region145: #{corrformer_forward.60} parent=5 // pred_region
        %s476 = ssub.s32 %s8, 2
        // Predicated region
        $region147: #{corrformer_forward.60} parent=145 // pred_check
          %p477 = pneg %p89
        $region148: #{corrformer_forward.60} parent=145 // pred_check_branch
          %479 = sbr.rel (%p477) target = $region150
        $region149: #{corrformer_forward.60} parent=145 // pred_region
          %s480 = sand.u32 %s74, 1
          %s481 = sand.u32 %s74, 1
          %s482 = smul.addr %s481, 16
          %s483 = scalar_lea.vmem [#allocation4], %s482
        $region150: #{corrformer_forward.60} parent=145 // pred_fallthru
          _
      $region146: #{corrformer_forward.60} parent=5 // pred_fallthru
        _
    $region6: #{corrformer_forward.60} parent=1 // loop_footer
      %s12 = sadd.s32 1, %s8
    $region7: #{corrformer_forward.60} parent=1 // loop_footer_branch
      %7 = sbr.rel target = $region3
    $region8: #{corrformer_forward.60} parent=1 // loop_exit
      _

// kernel: corrformer_forward.61
$region0: #{corrformer_forward.61}
  #allocation0 [shape = 'u32[]', space=smem, size = 0x4, offset = 0x4, fixed_abs, tag = 'smem constant byte address 0x4 - core index']
  #allocation1 [shape = 'u32[144,128]{1,0:T(1,128)}', space=vmem, size = 0x12000, scoped, tag = 'internal scratch']
  %s0 = inlined_call_operand.vmem [shape: f32[8,32,12], index: 0, kind: input, shape index: {}]
  %s1 = inlined_call_operand.vmem [shape: f32[8,12,12], index: 1, kind: input, shape index: {}]
  %s2 = inlined_call_operand.vmem [shape: f32[8,32,12], index: 2, kind: output, shape index: {}]
  %s3 = sld [smem:[#allocation0]]
  $region18: #{corrformer_forward.61} parent=0
    _
  %s5 = ssub.s32 1, %s3
  %s6 = scalar_select 0, %s5, %s3
  // Predicated region
  $region2: #{corrformer_forward.61} parent=0 // pred_check
    _
  $region3: #{corrformer_forward.61} parent=0 // pred_check_branch
    %8 = sbr.rel (0) target = $region5
  $region4: #{corrformer_forward.61} parent=0 // pred_region
    _
  $region5: #{corrformer_forward.61} parent=0 // pred_fallthru
    _
  // Predicated region
  $region6: #{corrformer_forward.61} parent=0 // pred_check
    _
  $region7: #{corrformer_forward.61} parent=0 // pred_check_branch
    %10 = sbr.rel (0) target = $region9
  $region8: #{corrformer_forward.61} parent=0 // pred_region
    _
  $region9: #{corrformer_forward.61} parent=0 // pred_fallthru
    _
  %v11 = vld [vmem:[%s0] sm:$0xff]
  %v12 = vld [vmem:[%s0 + $0x8] sm:$0xff]
  %v13 = vld [vmem:[%s0 + $0x10] sm:$0xff]
  %v14 = vld [vmem:[%s0 + $0x18] sm:$0xff]
  %v15 = vld [vmem:[%s0 + $0x20] sm:$0xff]
  %v16 = vld [vmem:[%s0 + $0x28] sm:$0xff]
  %v17 = vld [vmem:[%s0 + $0x30] sm:$0xff]
  %v18 = vld [vmem:[%s0 + $0x38] sm:$0xff]
  %v19 = vld [vmem:[%s0 + $0x40] sm:$0xff]
  %v20 = vld [vmem:[%s0 + $0x48] sm:$0xff]
  %v21 = vld [vmem:[%s0 + $0x50] sm:$0xff]
  %v22 = vld [vmem:[%s0 + $0x58] sm:$0xff]
  %v23 = vld [vmem:[%s0 + $0x60] sm:$0xff]
  %v24 = vld [vmem:[%s0 + $0x68] sm:$0xff]
  %v25 = vld [vmem:[%s0 + $0x70] sm:$0xff]
  %v26 = vld [vmem:[%s0 + $0x78] sm:$0xff]
  %v27 = vld [vmem:[%s0 + $0x80] sm:$0xff]
  %v28 = vld [vmem:[%s0 + $0x88] sm:$0xff]
  %v29 = vld [vmem:[%s0 + $0x90] sm:$0xff]
  %v30 = vld [vmem:[%s0 + $0x98] sm:$0xff]
  %v31 = vld [vmem:[%s0 + $0xa0] sm:$0xff]
  %v32 = vld [vmem:[%s0 + $0xa8] sm:$0xff]
  %v33 = vld [vmem:[%s0 + $0xb0] sm:$0xff]
  %v34 = vld [vmem:[%s0 + $0xb8] sm:$0xff]
  %v35 = vld [vmem:[%s0 + $0xc0] sm:$0xff]
  %v36 = vld [vmem:[%s0 + $0xc8] sm:$0xff]
  %v37 = vld [vmem:[%s0 + $0xd0] sm:$0xff]
  %v38 = vld [vmem:[%s0 + $0xd8] sm:$0xff]
  %v39 = vld [vmem:[%s0 + $0xe0] sm:$0xff]
  %v40 = vld [vmem:[%s0 + $0xe8] sm:$0xff]
  %v41 = vld [vmem:[%s0 + $0xf0] sm:$0xff]
  %v42 = vld [vmem:[%s0 + $0xf8] sm:$0xff]
  %v43 = vld [vmem:[%s1] sm:$0xff]
  %v44 = vld [vmem:[%s1 + $0x8] sm:$0xf]
  %v45 = vld [vmem:[%s1 + $0x10] sm:$0xff]
  %v46 = vld [vmem:[%s1 + $0x18] sm:$0xf]
  %v47 = vld [vmem:[%s1 + $0x20] sm:$0xff]
  %v48 = vld [vmem:[%s1 + $0x28] sm:$0xf]
  %v49 = vld [vmem:[%s1 + $0x30] sm:$0xff]
  %v50 = vld [vmem:[%s1 + $0x38] sm:$0xf]
  %v51 = vld [vmem:[%s1 + $0x40] sm:$0xff]
  %v52 = vld [vmem:[%s1 + $0x48] sm:$0xf]
  %v53 = vld [vmem:[%s1 + $0x50] sm:$0xff]
  %v54 = vld [vmem:[%s1 + $0x58] sm:$0xf]
  %v55 = vld [vmem:[%s1 + $0x60] sm:$0xff]
  %v56 = vld [vmem:[%s1 + $0x68] sm:$0xf]
  %v57 = vld [vmem:[%s1 + $0x70] sm:$0xff]
  %v58 = vld [vmem:[%s1 + $0x78] sm:$0xf]
  %vm59 = vcmask 97280
  %v61 = vsel %vm59, %v11, 0
  %v64 = vsel %vm59, %v12, 0
  %v67 = vsel %vm59, %v13, 0
  %v70 = vsel %vm59, %v14, 0
  %vm72 = vcmask 1043456
  %v74 = vsel %vm72, %v44, 0
  %76 = vmatprep.subr.mxu0 0.0
  %77 = vmatpush1.msra.mxu0 0.0
  %78 = vmatprep.subr.mxu0 0.0
  %79 = vmatpush1.msra.mxu0 0.0
  %80 = vmatprep.subr.mxu0 0.0
  %81 = vmatpush1.msra.mxu0 0.0
  %82 = vmatprep.subr.mxu0 0.0
  %83 = vmatpush1.msra.mxu0 0.0
  %84 = vmatprep.subr.mxu0 0.0
  %85 = vmatpush1.msra.mxu0 0.0
  %86 = vmatprep.subr.mxu0 0.0
  %87 = vmatpush1.msra.mxu0 0.0
  %88 = vmatprep.subr.mxu0 0.0
  %89 = vmatpush1.msra.mxu0 0.0
  %90 = vmatprep.subr.mxu0 0.0
  %91 = vmatpush1.msra.mxu0 0.0
  %92 = vmatprep.subr.mxu0 0.0
  %93 = vmatpush1.msra.mxu0 0.0
  %94 = vmatprep.subr.mxu0 0.0
  %95 = vmatpush1.msra.mxu0 0.0
  %96 = vmatprep.subr.mxu0 0.0
  %97 = vmatpush1.msra.mxu0 0.0
  %98 = vmatprep.subr.mxu0 0.0
  %99 = vmatpush1.msra.mxu0 0.0
  %100 = vmatprep.subr.mxu0 0.0
  %101 = vmatpush1.msra.mxu0 0.0
  %102 = vmatprep.subr.mxu0 0.0
  %103 = vmatpush1.msra.mxu0 0.0
  %104 = vmatprep.subr.mxu0 0.0
  %105 = vmatpush1.msra.mxu0 %v74
  %106 = vmatprep.subr.mxu0 0.0
  %107 = vmatpush1.msra.mxu0 %v43
  %108 = vmatprep.subr.mxu0 0.0
  %109 = vmatpush2.msra.mxu0 0.0
  %110 = vmatprep.subr.mxu0 0.0
  %111 = vmatpush2.msra.mxu0 0.0
  %112 = vmatprep.subr.mxu0 0.0
  %113 = vmatpush2.msra.mxu0 0.0
  %114 = vmatprep.subr.mxu0 0.0
  %115 = vmatpush2.msra.mxu0 0.0
  %116 = vmatprep.subr.mxu0 0.0
  %117 = vmatpush2.msra.mxu0 0.0
  %118 = vmatprep.subr.mxu0 0.0
  %119 = vmatpush2.msra.mxu0 0.0
  %120 = vmatprep.subr.mxu0 0.0
  %121 = vmatpush2.msra.mxu0 0.0
  %122 = vmatprep.subr.mxu0 0.0
  %123 = vmatpush2.msra.mxu0 0.0
  %124 = vmatprep.subr.mxu0 0.0
  %125 = vmatpush2.msra.mxu0 0.0
  %126 = vmatprep.subr.mxu0 0.0
  %127 = vmatpush2.msra.mxu0 0.0
  %128 = vmatprep.subr.mxu0 0.0
  %129 = vmatpush2.msra.mxu0 0.0
  %130 = vmatprep.subr.mxu0 0.0
  %131 = vmatpush2.msra.mxu0 0.0
  %132 = vmatprep.subr.mxu0 0.0
  %133 = vmatpush2.msra.mxu0 0.0
  %134 = vmatprep.subr.mxu0 0.0
  %135 = vmatpush2.msra.mxu0 0.0
  %136 = vmatprep.subr.mxu0 0.0
  %137 = vmatpush2.msra.mxu0 0.0
  %138 = vmatprep.subr.mxu0 0.0
  %139 = vmatpush2.msra.mxu0 0.0
  %140 = vmatprep.mubr.f32.mxu0 0.0
  %141 = vmatmul.mubr.f32.gmra.mxu0 %v61
  %v142 = vpop.f32.mrf.mxu0
  %v143 = vadd.f32 0.0, %v142
  %v144 = vpop.f32.mrf.mxu0
  %145 = vmatprep.mubr.f32.mxu0 0.0
  %146 = vmatmul.mubr.f32.gmra.mxu0 %v64
  %v147 = vpop.f32.mrf.mxu0
  %v148 = vadd.f32 0.0, %v147
  %v149 = vpop.f32.mrf.mxu0
  %150 = vmatprep.mubr.f32.mxu0 0.0
  %151 = vmatmul.mubr.f32.gmra.mxu0 %v67
  %v152 = vpop.f32.mrf.mxu0
  %v153 = vadd.f32 0.0, %v152
  %v154 = vpop.f32.mrf.mxu0
  %155 = vmatprep.mubr.f32.mxu0 0.0
  %156 = vmatmul.mubr.f32.gmra.mxu0 %v70
  %v157 = vpop.f32.mrf.mxu0
  %v158 = vadd.f32 0.0, %v157
  %v159 = vpop.f32.mrf.mxu0
  %160 = vdwg.mxu0
  %v162 = vsel %vm59, %v15, 0
  %v165 = vsel %vm59, %v16, 0
  %v168 = vsel %vm59, %v17, 0
  %v171 = vsel %vm59, %v18, 0
  %v174 = vsel %vm72, %v46, 0
  %176 = vmatprep.subr.mxu0 0.0
  %177 = vmatpush1.msra.mxu0 0.0
  %178 = vmatprep.subr.mxu0 0.0
  %179 = vmatpush1.msra.mxu0 0.0
  %180 = vmatprep.subr.mxu0 0.0
  %181 = vmatpush1.msra.mxu0 0.0
  %182 = vmatprep.subr.mxu0 0.0
  %183 = vmatpush1.msra.mxu0 0.0
  %184 = vmatprep.subr.mxu0 0.0
  %185 = vmatpush1.msra.mxu0 0.0
  %186 = vmatprep.subr.mxu0 0.0
  %187 = vmatpush1.msra.mxu0 0.0
  %188 = vmatprep.subr.mxu0 0.0
  %189 = vmatpush1.msra.mxu0 0.0
  %190 = vmatprep.subr.mxu0 0.0
  %191 = vmatpush1.msra.mxu0 0.0
  %192 = vmatprep.subr.mxu0 0.0
  %193 = vmatpush1.msra.mxu0 0.0
  %194 = vmatprep.subr.mxu0 0.0
  %195 = vmatpush1.msra.mxu0 0.0
  %196 = vmatprep.subr.mxu0 0.0
  %197 = vmatpush1.msra.mxu0 0.0
  %198 = vmatprep.subr.mxu0 0.0
  %199 = vmatpush1.msra.mxu0 0.0
  %200 = vmatprep.subr.mxu0 0.0
  %201 = vmatpush1.msra.mxu0 0.0
  %202 = vmatprep.subr.mxu0 0.0
  %203 = vmatpush1.msra.mxu0 0.0
  %204 = vmatprep.subr.mxu0 0.0
  %205 = vmatpush1.msra.mxu0 %v174
  %206 = vmatprep.subr.mxu0 0.0
  %207 = vmatpush1.msra.mxu0 %v45
  %208 = vmatprep.subr.mxu0 0.0
  %209 = vmatpush2.msra.mxu0 0.0
  %210 = vmatprep.subr.mxu0 0.0
  %211 = vmatpush2.msra.mxu0 0.0
  %212 = vmatprep.subr.mxu0 0.0
  %213 = vmatpush2.msra.mxu0 0.0
  %214 = vmatprep.subr.mxu0 0.0
  %215 = vmatpush2.msra.mxu0 0.0
  %216 = vmatprep.subr.mxu0 0.0
  %217 = vmatpush2.msra.mxu0 0.0
  %218 = vmatprep.subr.mxu0 0.0
  %219 = vmatpush2.msra.mxu0 0.0
  %220 = vmatprep.subr.mxu0 0.0
  %221 = vmatpush2.msra.mxu0 0.0
  %222 = vmatprep.subr.mxu0 0.0
  %223 = vmatpush2.msra.mxu0 0.0
  %224 = vmatprep.subr.mxu0 0.0
  %225 = vmatpush2.msra.mxu0 0.0
  %226 = vmatprep.subr.mxu0 0.0
  %227 = vmatpush2.msra.mxu0 0.0
  %228 = vmatprep.subr.mxu0 0.0
  %229 = vmatpush2.msra.mxu0 0.0
  %230 = vmatprep.subr.mxu0 0.0
  %231 = vmatpush2.msra.mxu0 0.0
  %232 = vmatprep.subr.mxu0 0.0
  %233 = vmatpush2.msra.mxu0 0.0
  %234 = vmatprep.subr.mxu0 0.0
  %235 = vmatpush2.msra.mxu0 0.0
  %236 = vmatprep.subr.mxu0 0.0
  %237 = vmatpush2.msra.mxu0 0.0
  %238 = vmatprep.subr.mxu0 0.0
  %239 = vmatpush2.msra.mxu0 0.0
  %240 = vmatprep.mubr.f32.mxu0 0.0
  %241 = vmatmul.mubr.f32.gmra.mxu0 %v162
  %v242 = vpop.f32.mrf.mxu0
  %v243 = vadd.f32 0.0, %v242
  %v244 = vpop.f32.mrf.mxu0
  %245 = vmatprep.mubr.f32.mxu0 0.0
  %246 = vmatmul.mubr.f32.gmra.mxu0 %v165
  %v247 = vpop.f32.mrf.mxu0
  %v248 = vadd.f32 0.0, %v247
  %v249 = vpop.f32.mrf.mxu0
  %250 = vmatprep.mubr.f32.mxu0 0.0
  %251 = vmatmul.mubr.f32.gmra.mxu0 %v168
  %v252 = vpop.f32.mrf.mxu0
  %v253 = vadd.f32 0.0, %v252
  %v254 = vpop.f32.mrf.mxu0
  %255 = vmatprep.mubr.f32.mxu0 0.0
  %256 = vmatmul.mubr.f32.gmra.mxu0 %v171
  %v257 = vpop.f32.mrf.mxu0
  %v258 = vadd.f32 0.0, %v257
  %v259 = vpop.f32.mrf.mxu0
  %260 = vdwg.mxu0
  %v262 = vsel %vm59, %v19, 0
  %v265 = vsel %vm59, %v20, 0
  %v268 = vsel %vm59, %v21, 0
  %v271 = vsel %vm59, %v22, 0
  %v274 = vsel %vm72, %v48, 0
  %276 = vmatprep.subr.mxu0 0.0
  %277 = vmatpush1.msra.mxu0 0.0
  %278 = vmatprep.subr.mxu0 0.0
  %279 = vmatpush1.msra.mxu0 0.0
  %280 = vmatprep.subr.mxu0 0.0
  %281 = vmatpush1.msra.mxu0 0.0
  %282 = vmatprep.subr.mxu0 0.0
  %283 = vmatpush1.msra.mxu0 0.0
  %284 = vmatprep.subr.mxu0 0.0
  %285 = vmatpush1.msra.mxu0 0.0
  %286 = vmatprep.subr.mxu0 0.0
  %287 = vmatpush1.msra.mxu0 0.0
  %288 = vmatprep.subr.mxu0 0.0
  %289 = vmatpush1.msra.mxu0 0.0
  %290 = vmatprep.subr.mxu0 0.0
  %291 = vmatpush1.msra.mxu0 0.0
  %292 = vmatprep.subr.mxu0 0.0
  %293 = vmatpush1.msra.mxu0 0.0
  %294 = vmatprep.subr.mxu0 0.0
  %295 = vmatpush1.msra.mxu0 0.0
  %296 = vmatprep.subr.mxu0 0.0
  %297 = vmatpush1.msra.mxu0 0.0
  %298 = vmatprep.subr.mxu0 0.0
  %299 = vmatpush1.msra.mxu0 0.0
  %300 = vmatprep.subr.mxu0 0.0
  %301 = vmatpush1.msra.mxu0 0.0
  %302 = vmatprep.subr.mxu0 0.0
  %303 = vmatpush1.msra.mxu0 0.0
  %304 = vmatprep.subr.mxu0 0.0
  %305 = vmatpush1.msra.mxu0 %v274
  %306 = vmatprep.subr.mxu0 0.0
  %307 = vmatpush1.msra.mxu0 %v47
  %308 = vmatprep.subr.mxu0 0.0
  %309 = vmatpush2.msra.mxu0 0.0
  %310 = vmatprep.subr.mxu0 0.0
  %311 = vmatpush2.msra.mxu0 0.0
  %312 = vmatprep.subr.mxu0 0.0
  %313 = vmatpush2.msra.mxu0 0.0
  %314 = vmatprep.subr.mxu0 0.0
  %315 = vmatpush2.msra.mxu0 0.0
  %316 = vmatprep.subr.mxu0 0.0
  %317 = vmatpush2.msra.mxu0 0.0
  %318 = vmatprep.subr.mxu0 0.0
  %319 = vmatpush2.msra.mxu0 0.0
  %320 = vmatprep.subr.mxu0 0.0
  %321 = vmatpush2.msra.mxu0 0.0
  %322 = vmatprep.subr.mxu0 0.0
  %323 = vmatpush2.msra.mxu0 0.0
  %324 = vmatprep.subr.mxu0 0.0
  %325 = vmatpush2.msra.mxu0 0.0
  %326 = vmatprep.subr.mxu0 0.0
  %327 = vmatpush2.msra.mxu0 0.0
  %328 = vmatprep.subr.mxu0 0.0
  %329 = vmatpush2.msra.mxu0 0.0
  %330 = vmatprep.subr.mxu0 0.0
  %331 = vmatpush2.msra.mxu0 0.0
  %332 = vmatprep.subr.mxu0 0.0
  %333 = vmatpush2.msra.mxu0 0.0
  %334 = vmatprep.subr.mxu0 0.0
  %335 = vmatpush2.msra.mxu0 0.0
  %336 = vmatprep.subr.mxu0 0.0
  %337 = vmatpush2.msra.mxu0 0.0
  %338 = vmatprep.subr.mxu0 0.0
  %339 = vmatpush2.msra.mxu0 0.0
  %340 = vmatprep.mubr.f32.mxu0 0.0
  %341 = vmatmul.mubr.f32.gmra.mxu0 %v262
  %v342 = vpop.f32.mrf.mxu0
  %v343 = vadd.f32 0.0, %v342
  %v344 = vpop.f32.mrf.mxu0
  %345 = vmatprep.mubr.f32.mxu0 0.0
  %346 = vmatmul.mubr.f32.gmra.mxu0 %v265
  %v347 = vpop.f32.mrf.mxu0
  %v348 = vadd.f32 0.0, %v347
  %v349 = vpop.f32.mrf.mxu0
  %350 = vmatprep.mubr.f32.mxu0 0.0
  %351 = vmatmul.mubr.f32.gmra.mxu0 %v268
  %v352 = vpop.f32.mrf.mxu0
  %v353 = vadd.f32 0.0, %v352
  %v354 = vpop.f32.mrf.mxu0
  %355 = vmatprep.mubr.f32.mxu0 0.0
  %356 = vmatmul.mubr.f32.gmra.mxu0 %v271
  %v357 = vpop.f32.mrf.mxu0
  %v358 = vadd.f32 0.0, %v357
  %v359 = vpop.f32.mrf.mxu0
  %360 = vdwg.mxu0
  %v362 = vsel %vm59, %v23, 0
  %v365 = vsel %vm59, %v24, 0
  %v368 = vsel %vm59, %v25, 0
  %v371 = vsel %vm59, %v26, 0
  %v374 = vsel %vm72, %v50, 0
  %376 = vmatprep.subr.mxu0 0.0
  %377 = vmatpush1.msra.mxu0 0.0
  %378 = vmatprep.subr.mxu0 0.0
  %379 = vmatpush1.msra.mxu0 0.0
  %380 = vmatprep.subr.mxu0 0.0
  %381 = vmatpush1.msra.mxu0 0.0
  %382 = vmatprep.subr.mxu0 0.0
  %383 = vmatpush1.msra.mxu0 0.0
  %384 = vmatprep.subr.mxu0 0.0
  %385 = vmatpush1.msra.mxu0 0.0
  %386 = vmatprep.subr.mxu0 0.0
  %387 = vmatpush1.msra.mxu0 0.0
  %388 = vmatprep.subr.mxu0 0.0
  %389 = vmatpush1.msra.mxu0 0.0
  %390 = vmatprep.subr.mxu0 0.0
  %391 = vmatpush1.msra.mxu0 0.0
  %392 = vmatprep.subr.mxu0 0.0
  %393 = vmatpush1.msra.mxu0 0.0
  %394 = vmatprep.subr.mxu0 0.0
  %395 = vmatpush1.msra.mxu0 0.0
  %396 = vmatprep.subr.mxu0 0.0
  %397 = vmatpush1.msra.mxu0 0.0
  %398 = vmatprep.subr.mxu0 0.0
  %399 = vmatpush1.msra.mxu0 0.0
  %400 = vmatprep.subr.mxu0 0.0
  %401 = vmatpush1.msra.mxu0 0.0
  %402 = vmatprep.subr.mxu0 0.0
  %403 = vmatpush1.msra.mxu0 0.0
  %404 = vmatprep.subr.mxu0 0.0
  %405 = vmatpush1.msra.mxu0 %v374
  %406 = vmatprep.subr.mxu0 0.0
  %407 = vmatpush1.msra.mxu0 %v49
  %408 = vmatprep.subr.mxu0 0.0
  %409 = vmatpush2.msra.mxu0 0.0
  %410 = vmatprep.subr.mxu0 0.0
  %411 = vmatpush2.msra.mxu0 0.0
  %412 = vmatprep.subr.mxu0 0.0
  %413 = vmatpush2.msra.mxu0 0.0
  %414 = vmatprep.subr.mxu0 0.0
  %415 = vmatpush2.msra.mxu0 0.0
  %416 = vmatprep.subr.mxu0 0.0
  %417 = vmatpush2.msra.mxu0 0.0
  %418 = vmatprep.subr.mxu0 0.0
  %419 = vmatpush2.msra.mxu0 0.0
  %420 = vmatprep.subr.mxu0 0.0
  %421 = vmatpush2.msra.mxu0 0.0
  %422 = vmatprep.subr.mxu0 0.0
  %423 = vmatpush2.msra.mxu0 0.0
  %424 = vmatprep.subr.mxu0 0.0
  %425 = vmatpush2.msra.mxu0 0.0
  %426 = vmatprep.subr.mxu0 0.0
  %427 = vmatpush2.msra.mxu0 0.0
  %428 = vmatprep.subr.mxu0 0.0
  %429 = vmatpush2.msra.mxu0 0.0
  %430 = vmatprep.subr.mxu0 0.0
  %431 = vmatpush2.msra.mxu0 0.0
  %432 = vmatprep.subr.mxu0 0.0
  %433 = vmatpush2.msra.mxu0 0.0
  %434 = vmatprep.subr.mxu0 0.0
  %435 = vmatpush2.msra.mxu0 0.0
  %436 = vmatprep.subr.mxu0 0.0
  %437 = vmatpush2.msra.mxu0 0.0
  %438 = vmatprep.subr.mxu0 0.0
  %439 = vmatpush2.msra.mxu0 0.0
  %440 = vmatprep.mubr.f32.mxu0 0.0
  %441 = vmatmul.mubr.f32.gmra.mxu0 %v362
  %v442 = vpop.f32.mrf.mxu0
  %v443 = vadd.f32 0.0, %v442
  %v444 = vpop.f32.mrf.mxu0
  %445 = vmatprep.mubr.f32.mxu0 0.0
  %446 = vmatmul.mubr.f32.gmra.mxu0 %v365
  %v447 = vpop.f32.mrf.mxu0
  %v448 = vadd.f32 0.0, %v447
  %v449 = vpop.f32.mrf.mxu0
  %450 = vmatprep.mubr.f32.mxu0 0.0
  %451 = vmatmul.mubr.f32.gmra.mxu0 %v368
  %v452 = vpop.f32.mrf.mxu0
  %v453 = vadd.f32 0.0, %v452
  %v454 = vpop.f32.mrf.mxu0
  %455 = vmatprep.mubr.f32.mxu0 0.0
  %456 = vmatmul.mubr.f32.gmra.mxu0 %v371
  %v457 = vpop.f32.mrf.mxu0
  %v458 = vadd.f32 0.0, %v457
  %v459 = vpop.f32.mrf.mxu0
  %460 = vdwg.mxu0
  %v462 = vsel %vm59, %v27, 0
  %v465 = vsel %vm59, %v28, 0
  %v468 = vsel %vm59, %v29, 0
  %v471 = vsel %vm59, %v30, 0
  %v474 = vsel %vm72, %v52, 0
  %476 = vmatprep.subr.mxu0 0.0
  %477 = vmatpush1.msra.mxu0 0.0
  %478 = vmatprep.subr.mxu0 0.0
  %479 = vmatpush1.msra.mxu0 0.0
  %480 = vmatprep.subr.mxu0 0.0
  %481 = vmatpush1.msra.mxu0 0.0
  %482 = vmatprep.subr.mxu0 0.0
  %483 = vmatpush1.msra.mxu0 0.0
  %484 = vmatprep.subr.mxu0 0.0
  %485 = vmatpush1.msra.mxu0 0.0
  %486 = vmatprep.subr.mxu0 0.0
  %487 = vmatpush1.msra.mxu0 0.0
  %488 = vmatprep.subr.mxu0 0.0
  %489 = vmatpush1.msra.mxu0 0.0
  %490 = vmatprep.subr.mxu0 0.0
  %491 = vmatpush1.msra.mxu0 0.0
  %492 = vmatprep.subr.mxu0 0.0
  %493 = vmatpush1.msra.mxu0 0.0
  %494 = vmatprep.subr.mxu0 0.0
  %495 = vmatpush1.msra.mxu0 0.0
  %496 = vmatprep.subr.mxu0 0.0
  %497 = vmatpush1.msra.mxu0 0.0
  %498 = vmatprep.subr.mxu0 0.0
  %499 = vmatpush1.msra.mxu0 0.0
  %500 = vmatprep.subr.mxu0 0.0
  %501 = vmatpush1.msra.mxu0 0.0
  %502 = vmatprep.subr.mxu0 0.0
  %503 = vmatpush1.msra.mxu0 0.0
  %504 = vmatprep.subr.mxu0 0.0
  %505 = vmatpush1.msra.mxu0 %v474
  %506 = vmatprep.subr.mxu0 0.0
  %507 = vmatpush1.msra.mxu0 %v51
  %508 = vmatprep.subr.mxu0 0.0
  %509 = vmatpush2.msra.mxu0 0.0
  %510 = vmatprep.subr.mxu0 0.0
  %511 = vmatpush2.msra.mxu0 0.0
  %512 = vmatprep.subr.mxu0 0.0
  %513 = vmatpush2.msra.mxu0 0.0
  %514 = vmatprep.subr.mxu0 0.0
  %515 = vmatpush2.msra.mxu0 0.0
  %516 = vmatprep.subr.mxu0 0.0
  %517 = vmatpush2.msra.mxu0 0.0
  %518 = vmatprep.subr.mxu0 0.0
  %519 = vmatpush2.msra.mxu0 0.0
  %520 = vmatprep.subr.mxu0 0.0
  %521 = vmatpush2.msra.mxu0 0.0
  %522 = vmatprep.subr.mxu0 0.0
  %523 = vmatpush2.msra.mxu0 0.0
  %524 = vmatprep.subr.mxu0 0.0
  %525 = vmatpush2.msra.mxu0 0.0
  %526 = vmatprep.subr.mxu0 0.0
  %527 = vmatpush2.msra.mxu0 0.0
  %528 = vmatprep.subr.mxu0 0.0
  %529 = vmatpush2.msra.mxu0 0.0
  %530 = vmatprep.subr.mxu0 0.0
  %531 = vmatpush2.msra.mxu0 0.0
  %532 = vmatprep.subr.mxu0 0.0
  %533 = vmatpush2.msra.mxu0 0.0
  %534 = vmatprep.subr.mxu0 0.0
  %535 = vmatpush2.msra.mxu0 0.0
  %536 = vmatprep.subr.mxu0 0.0
  %537 = vmatpush2.msra.mxu0 0.0
  %538 = vmatprep.subr.mxu0 0.0
  %539 = vmatpush2.msra.mxu0 0.0
  %540 = vmatprep.mubr.f32.mxu0 0.0
  %541 = vmatmul.mubr.f32.gmra.mxu0 %v462
  %v542 = vpop.f32.mrf.mxu0
  %v543 = vadd.f32 0.0, %v542
  %v544 = vpop.f32.mrf.mxu0
  %545 = vmatprep.mubr.f32.mxu0 0.0
  %546 = vmatmul.mubr.f32.gmra.mxu0 %v465
  %v547 = vpop.f32.mrf.mxu0
  %v548 = vadd.f32 0.0, %v547
  %v549 = vpop.f32.mrf.mxu0
  %550 = vmatprep.mubr.f32.mxu0 0.0
  %551 = vmatmul.mubr.f32.gmra.mxu0 %v468
  %v552 = vpop.f32.mrf.mxu0
  %v553 = vadd.f32 0.0, %v552
  %v554 = vpop.f32.mrf.mxu0
  %555 = vmatprep.mubr.f32.mxu0 0.0
  %556 = vmatmul.mubr.f32.gmra.mxu0 %v471
  %v557 = vpop.f32.mrf.mxu0
  %v558 = vadd.f32 0.0, %v557
  %v559 = vpop.f32.mrf.mxu0
  %560 = vdwg.mxu0
  %v562 = vsel %vm59, %v31, 0
  %v565 = vsel %vm59, %v32, 0
  %v568 = vsel %vm59, %v33, 0
  %v571 = vsel %vm59, %v34, 0
  %v574 = vsel %vm72, %v54, 0
  %576 = vmatprep.subr.mxu0 0.0
  %577 = vmatpush1.msra.mxu0 0.0
  %578 = vmatprep.subr.mxu0 0.0
  %579 = vmatpush1.msra.mxu0 0.0
  %580 = vmatprep.subr.mxu0 0.0
  %581 = vmatpush1.msra.mxu0 0.0
  %582 = vmatprep.subr.mxu0 0.0
  %583 = vmatpush1.msra.mxu0 0.0
  %584 = vmatprep.subr.mxu0 0.0
  %585 = vmatpush1.msra.mxu0 0.0
  %586 = vmatprep.subr.mxu0 0.0
  %587 = vmatpush1.msra.mxu0 0.0
  %588 = vmatprep.subr.mxu0 0.0
  %589 = vmatpush1.msra.mxu0 0.0
  %590 = vmatprep.subr.mxu0 0.0
  %591 = vmatpush1.msra.mxu0 0.0
  %592 = vmatprep.subr.mxu0 0.0
  %593 = vmatpush1.msra.mxu0 0.0
  %594 = vmatprep.subr.mxu0 0.0
  %595 = vmatpush1.msra.mxu0 0.0
  %596 = vmatprep.subr.mxu0 0.0
  %597 = vmatpush1.msra.mxu0 0.0
  %598 = vmatprep.subr.mxu0 0.0
  %599 = vmatpush1.msra.mxu0 0.0
  %600 = vmatprep.subr.mxu0 0.0
  %601 = vmatpush1.msra.mxu0 0.0
  %602 = vmatprep.subr.mxu0 0.0
  %603 = vmatpush1.msra.mxu0 0.0
  %604 = vmatprep.subr.mxu0 0.0
  %605 = vmatpush1.msra.mxu0 %v574
  %606 = vmatprep.subr.mxu0 0.0
  %607 = vmatpush1.msra.mxu0 %v53
  %608 = vmatprep.subr.mxu0 0.0
  %609 = vmatpush2.msra.mxu0 0.0
  %610 = vmatprep.subr.mxu0 0.0
  %611 = vmatpush2.msra.mxu0 0.0
  %612 = vmatprep.subr.mxu0 0.0
  %613 = vmatpush2.msra.mxu0 0.0
  %614 = vmatprep.subr.mxu0 0.0
  %615 = vmatpush2.msra.mxu0 0.0
  %616 = vmatprep.subr.mxu0 0.0
  %617 = vmatpush2.msra.mxu0 0.0
  %618 = vmatprep.subr.mxu0 0.0
  %619 = vmatpush2.msra.mxu0 0.0
  %620 = vmatprep.subr.mxu0 0.0
  %621 = vmatpush2.msra.mxu0 0.0
  %622 = vmatprep.subr.mxu0 0.0
  %623 = vmatpush2.msra.mxu0 0.0
  %624 = vmatprep.subr.mxu0 0.0
  %625 = vmatpush2.msra.mxu0 0.0
  %626 = vmatprep.subr.mxu0 0.0
  %627 = vmatpush2.msra.mxu0 0.0
  %628 = vmatprep.subr.mxu0 0.0
  %629 = vmatpush2.msra.mxu0 0.0
  %630 = vmatprep.subr.mxu0 0.0
  %631 = vmatpush2.msra.mxu0 0.0
  %632 = vmatprep.subr.mxu0 0.0
  %633 = vmatpush2.msra.mxu0 0.0
  %634 = vmatprep.subr.mxu0 0.0
  %635 = vmatpush2.msra.mxu0 0.0
  %636 = vmatprep.subr.mxu0 0.0
  %637 = vmatpush2.msra.mxu0 0.0
  %638 = vmatprep.subr.mxu0 0.0
  %639 = vmatpush2.msra.mxu0 0.0
  %640 = vmatprep.mubr.f32.mxu0 0.0
  %641 = vmatmul.mubr.f32.gmra.mxu0 %v562
  %v642 = vpop.f32.mrf.mxu0
  %v643 = vadd.f32 0.0, %v642
  %v644 = vpop.f32.mrf.mxu0
  %645 = vmatprep.mubr.f32.mxu0 0.0
  %646 = vmatmul.mubr.f32.gmra.mxu0 %v565
  %v647 = vpop.f32.mrf.mxu0
  %v648 = vadd.f32 0.0, %v647
  %v649 = vpop.f32.mrf.mxu0
  %650 = vmatprep.mubr.f32.mxu0 0.0
  %651 = vmatmul.mubr.f32.gmra.mxu0 %v568
  %v652 = vpop.f32.mrf.mxu0
  %v653 = vadd.f32 0.0, %v652
  %v654 = vpop.f32.mrf.mxu0
  %655 = vmatprep.mubr.f32.mxu0 0.0
  %656 = vmatmul.mubr.f32.gmra.mxu0 %v571
  %v657 = vpop.f32.mrf.mxu0
  %v658 = vadd.f32 0.0, %v657
  %v659 = vpop.f32.mrf.mxu0
  %660 = vdwg.mxu0
  %v662 = vsel %vm59, %v35, 0
  %v665 = vsel %vm59, %v36, 0
  %v668 = vsel %vm59, %v37, 0
  %v671 = vsel %vm59, %v38, 0
  %v674 = vsel %vm72, %v56, 0
  %676 = vmatprep.subr.mxu0 0.0
  %677 = vmatpush1.msra.mxu0 0.0
  %678 = vmatprep.subr.mxu0 0.0
  %679 = vmatpush1.msra.mxu0 0.0
  %680 = vmatprep.subr.mxu0 0.0
  %681 = vmatpush1.msra.mxu0 0.0
  %682 = vmatprep.subr.mxu0 0.0
  %683 = vmatpush1.msra.mxu0 0.0
  %684 = vmatprep.subr.mxu0 0.0
  %685 = vmatpush1.msra.mxu0 0.0
  %686 = vmatprep.subr.mxu0 0.0
  %687 = vmatpush1.msra.mxu0 0.0
  %688 = vmatprep.subr.mxu0 0.0
  %689 = vmatpush1.msra.mxu0 0.0
  %690 = vmatprep.subr.mxu0 0.0
  %691 = vmatpush1.msra.mxu0 0.0
  %692 = vmatprep.subr.mxu0 0.0
  %693 = vmatpush1.msra.mxu0 0.0
  %694 = vmatprep.subr.mxu0 0.0
  %695 = vmatpush1.msra.mxu0 0.0
  %696 = vmatprep.subr.mxu0 0.0
  %697 = vmatpush1.msra.mxu0 0.0
  %698 = vmatprep.subr.mxu0 0.0
  %699 = vmatpush1.msra.mxu0 0.0
  %700 = vmatprep.subr.mxu0 0.0
  %701 = vmatpush1.msra.mxu0 0.0
  %702 = vmatprep.subr.mxu0 0.0
  %703 = vmatpush1.msra.mxu0 0.0
  %704 = vmatprep.subr.mxu0 0.0
  %705 = vmatpush1.msra.mxu0 %v674
  %706 = vmatprep.subr.mxu0 0.0
  %707 = vmatpush1.msra.mxu0 %v55
  %708 = vmatprep.subr.mxu0 0.0
  %709 = vmatpush2.msra.mxu0 0.0
  %710 = vmatprep.subr.mxu0 0.0
  %711 = vmatpush2.msra.mxu0 0.0
  %712 = vmatprep.subr.mxu0 0.0
  %713 = vmatpush2.msra.mxu0 0.0
  %714 = vmatprep.subr.mxu0 0.0
  %715 = vmatpush2.msra.mxu0 0.0
  %716 = vmatprep.subr.mxu0 0.0
  %717 = vmatpush2.msra.mxu0 0.0
  %718 = vmatprep.subr.mxu0 0.0
  %719 = vmatpush2.msra.mxu0 0.0
  %720 = vmatprep.subr.mxu0 0.0
  %721 = vmatpush2.msra.mxu0 0.0
  %722 = vmatprep.subr.mxu0 0.0
  %723 = vmatpush2.msra.mxu0 0.0
  %724 = vmatprep.subr.mxu0 0.0
  %725 = vmatpush2.msra.mxu0 0.0
  %726 = vmatprep.subr.mxu0 0.0
  %727 = vmatpush2.msra.mxu0 0.0
  %728 = vmatprep.subr.mxu0 0.0
  %729 = vmatpush2.msra.mxu0 0.0
  %730 = vmatprep.subr.mxu0 0.0
  %731 = vmatpush2.msra.mxu0 0.0
  %732 = vmatprep.subr.mxu0 0.0
  %733 = vmatpush2.msra.mxu0 0.0
  %734 = vmatprep.subr.mxu0 0.0
  %735 = vmatpush2.msra.mxu0 0.0
  %736 = vmatprep.subr.mxu0 0.0
  %737 = vmatpush2.msra.mxu0 0.0
  %738 = vmatprep.subr.mxu0 0.0
  %739 = vmatpush2.msra.mxu0 0.0
  %740 = vmatprep.mubr.f32.mxu0 0.0
  %741 = vmatmul.mubr.f32.gmra.mxu0 %v662
  %v742 = vpop.f32.mrf.mxu0
  %v743 = vadd.f32 0.0, %v742
  %v744 = vpop.f32.mrf.mxu0
  %745 = vmatprep.mubr.f32.mxu0 0.0
  %746 = vmatmul.mubr.f32.gmra.mxu0 %v665
  %v747 = vpop.f32.mrf.mxu0
  %v748 = vadd.f32 0.0, %v747
  %v749 = vpop.f32.mrf.mxu0
  %750 = vmatprep.mubr.f32.mxu0 0.0
  %751 = vmatmul.mubr.f32.gmra.mxu0 %v668
  %v752 = vpop.f32.mrf.mxu0
  %v753 = vadd.f32 0.0, %v752
  %v754 = vpop.f32.mrf.mxu0
  %755 = vmatprep.mubr.f32.mxu0 0.0
  %756 = vmatmul.mubr.f32.gmra.mxu0 %v671
  %v757 = vpop.f32.mrf.mxu0
  %v758 = vadd.f32 0.0, %v757
  %v759 = vpop.f32.mrf.mxu0
  %760 = vdwg.mxu0
  %v762 = vsel %vm59, %v39, 0
  %v765 = vsel %vm59, %v40, 0
  %v768 = vsel %vm59, %v41, 0
  %v771 = vsel %vm59, %v42, 0
  %v774 = vsel %vm72, %v58, 0
  %776 = vmatprep.subr.mxu0 0.0
  %777 = vmatpush1.msra.mxu0 0.0
  %778 = vmatprep.subr.mxu0 0.0
  %779 = vmatpush1.msra.mxu0 0.0
  %780 = vmatprep.subr.mxu0 0.0
  %781 = vmatpush1.msra.mxu0 0.0
  %782 = vmatprep.subr.mxu0 0.0
  %783 = vmatpush1.msra.mxu0 0.0
  %784 = vmatprep.subr.mxu0 0.0
  %785 = vmatpush1.msra.mxu0 0.0
  %786 = vmatprep.subr.mxu0 0.0
  %787 = vmatpush1.msra.mxu0 0.0
  %788 = vmatprep.subr.mxu0 0.0
  %789 = vmatpush1.msra.mxu0 0.0
  %790 = vmatprep.subr.mxu0 0.0
  %791 = vmatpush1.msra.mxu0 0.0
  %792 = vmatprep.subr.mxu0 0.0
  %793 = vmatpush1.msra.mxu0 0.0
  %794 = vmatprep.subr.mxu0 0.0
  %795 = vmatpush1.msra.mxu0 0.0
  %796 = vmatprep.subr.mxu0 0.0
  %797 = vmatpush1.msra.mxu0 0.0
  %798 = vmatprep.subr.mxu0 0.0
  %799 = vmatpush1.msra.mxu0 0.0
  %800 = vmatprep.subr.mxu0 0.0
  %801 = vmatpush1.msra.mxu0 0.0
  %802 = vmatprep.subr.mxu0 0.0
  %803 = vmatpush1.msra.mxu0 0.0
  %804 = vmatprep.subr.mxu0 0.0
  %805 = vmatpush1.msra.mxu0 %v774
  %806 = vmatprep.subr.mxu0 0.0
  %807 = vmatpush1.msra.mxu0 %v57
  %808 = vmatprep.subr.mxu0 0.0
  %809 = vmatpush2.msra.mxu0 0.0
  %810 = vmatprep.subr.mxu0 0.0
  %811 = vmatpush2.msra.mxu0 0.0
  %812 = vmatprep.subr.mxu0 0.0
  %813 = vmatpush2.msra.mxu0 0.0
  %814 = vmatprep.subr.mxu0 0.0
  %815 = vmatpush2.msra.mxu0 0.0
  %816 = vmatprep.subr.mxu0 0.0
  %817 = vmatpush2.msra.mxu0 0.0
  %818 = vmatprep.subr.mxu0 0.0
  %819 = vmatpush2.msra.mxu0 0.0
  %820 = vmatprep.subr.mxu0 0.0
  %821 = vmatpush2.msra.mxu0 0.0
  %822 = vmatprep.subr.mxu0 0.0
  %823 = vmatpush2.msra.mxu0 0.0
  %824 = vmatprep.subr.mxu0 0.0
  %825 = vmatpush2.msra.mxu0 0.0
  %826 = vmatprep.subr.mxu0 0.0
  %827 = vmatpush2.msra.mxu0 0.0
  %828 = vmatprep.subr.mxu0 0.0
  %829 = vmatpush2.msra.mxu0 0.0
  %830 = vmatprep.subr.mxu0 0.0
  %831 = vmatpush2.msra.mxu0 0.0
  %832 = vmatprep.subr.mxu0 0.0
  %833 = vmatpush2.msra.mxu0 0.0
  %834 = vmatprep.subr.mxu0 0.0
  %835 = vmatpush2.msra.mxu0 0.0
  %836 = vmatprep.subr.mxu0 0.0
  %837 = vmatpush2.msra.mxu0 0.0
  %838 = vmatprep.subr.mxu0 0.0
  %839 = vmatpush2.msra.mxu0 0.0
  %840 = vmatprep.mubr.f32.mxu0 0.0
  %841 = vmatmul.mubr.f32.gmra.mxu0 %v762
  %v842 = vpop.f32.mrf.mxu0
  %v843 = vadd.f32 0.0, %v842
  %v844 = vpop.f32.mrf.mxu0
  %845 = vmatprep.mubr.f32.mxu0 0.0
  %846 = vmatmul.mubr.f32.gmra.mxu0 %v765
  %v847 = vpop.f32.mrf.mxu0
  %v848 = vadd.f32 0.0, %v847
  %v849 = vpop.f32.mrf.mxu0
  %850 = vmatprep.mubr.f32.mxu0 0.0
  %851 = vmatmul.mubr.f32.gmra.mxu0 %v768
  %v852 = vpop.f32.mrf.mxu0
  %v853 = vadd.f32 0.0, %v852
  %v854 = vpop.f32.mrf.mxu0
  %855 = vmatprep.mubr.f32.mxu0 0.0
  %856 = vmatmul.mubr.f32.gmra.mxu0 %v771
  %v857 = vpop.f32.mrf.mxu0
  %v858 = vadd.f32 0.0, %v857
  %v859 = vpop.f32.mrf.mxu0
  %860 = vdwg.mxu0
  %861 = vst.msk [vmem:[%s2] sm:$0xff] %vm59, %v143
  %862 = vst.msk [vmem:[%s2 + $0x8] sm:$0xff] %vm59, %v148
  %863 = vst.msk [vmem:[%s2 + $0x10] sm:$0xff] %vm59, %v153
  %864 = vst.msk [vmem:[%s2 + $0x18] sm:$0xff] %vm59, %v158
  %865 = vst.msk [vmem:[%s2 + $0x20] sm:$0xff] %vm59, %v243
  %866 = vst.msk [vmem:[%s2 + $0x28] sm:$0xff] %vm59, %v248
  %867 = vst.msk [vmem:[%s2 + $0x30] sm:$0xff] %vm59, %v253
  %868 = vst.msk [vmem:[%s2 + $0x38] sm:$0xff] %vm59, %v258
  %869 = vst.msk [vmem:[%s2 + $0x40] sm:$0xff] %vm59, %v343
  %870 = vst.msk [vmem:[%s2 + $0x48] sm:$0xff] %vm59, %v348
  %871 = vst.msk [vmem:[%s2 + $0x50] sm:$0xff] %vm59, %v353
  %872 = vst.msk [vmem:[%s2 + $0x58] sm:$0xff] %vm59, %v358
  %873 = vst.msk [vmem:[%s2 + $0x60] sm:$0xff] %vm59, %v443
  %874 = vst.msk [vmem:[%s2 + $0x68] sm:$0xff] %vm59, %v448
  %875 = vst.msk [vmem:[%s2 + $0x70] sm:$0xff] %vm59, %v453
  %876 = vst.msk [vmem:[%s2 + $0x78] sm:$0xff] %vm59, %v458
  %877 = vst.msk [vmem:[%s2 + $0x80] sm:$0xff] %vm59, %v543
  %878 = vst.msk [vmem:[%s2 + $0x88] sm:$0xff] %vm59, %v548
  %879 = vst.msk [vmem:[%s2 + $0x90] sm:$0xff] %vm59, %v553
  %880 = vst.msk [vmem:[%s2 + $0x98] sm:$0xff] %vm59, %v558
  %881 = vst.msk [vmem:[%s2 + $0xa0] sm:$0xff] %vm59, %v643
  %882 = vst.msk [vmem:[%s2 + $0xa8] sm:$0xff] %vm59, %v648
  %883 = vst.msk [vmem:[%s2 + $0xb0] sm:$0xff] %vm59, %v653
  %884 = vst.msk [vmem:[%s2 + $0xb8] sm:$0xff] %vm59, %v658
  %885 = vst.msk [vmem:[%s2 + $0xc0] sm:$0xff] %vm59, %v743
  %886 = vst.msk [vmem:[%s2 + $0xc8] sm:$0xff] %vm59, %v748
  %887 = vst.msk [vmem:[%s2 + $0xd0] sm:$0xff] %vm59, %v753
  %888 = vst.msk [vmem:[%s2 + $0xd8] sm:$0xff] %vm59, %v758
  %889 = vst.msk [vmem:[%s2 + $0xe0] sm:$0xff] %vm59, %v843
  %890 = vst.msk [vmem:[%s2 + $0xe8] sm:$0xff] %vm59, %v848
  %891 = vst.msk [vmem:[%s2 + $0xf0] sm:$0xff] %vm59, %v853
  %892 = vst.msk [vmem:[%s2 + $0xf8] sm:$0xff] %vm59, %v858
  // Predicated region
  $region10: #{corrformer_forward.61} parent=0 // pred_check
    _
  $region11: #{corrformer_forward.61} parent=0 // pred_check_branch
    %894 = sbr.rel (0) target = $region13
  $region12: #{corrformer_forward.61} parent=0 // pred_region
    _
  $region13: #{corrformer_forward.61} parent=0 // pred_fallthru
    _
  // Predicated region
  $region14: #{corrformer_forward.61} parent=0 // pred_check
    _
  $region15: #{corrformer_forward.61} parent=0 // pred_check_branch
    %896 = sbr.rel (0) target = $region17
  $region16: #{corrformer_forward.61} parent=0 // pred_region
    _
  $region17: #{corrformer_forward.61} parent=0 // pred_fallthru
    _

// kernel: corrformer_forward.62
$region0: #{corrformer_forward.62}
  #allocation0 [shape = 'u32[]', space=smem, size = 0x4, offset = 0x4, fixed_abs, tag = 'smem constant byte address 0x4 - core index']
  #allocation1 [shape = 'u32[144,128]{1,0:T(1,128)}', space=vmem, size = 0x12000, scoped, tag = 'internal scratch']
  %s0 = inlined_call_operand.vmem [shape: bf16[96,32], index: 0, kind: input, shape index: {}]
  %s1 = inlined_call_operand.vmem [shape: bf16[32,32], index: 1, kind: input, shape index: {}]
  %s2 = inlined_call_operand.vmem [shape: f32[1,32], index: 2, kind: input, shape index: {}]
  %s3 = inlined_call_operand.vmem [shape: f32[96,32], index: 3, kind: output, shape index: {}]
  %s4 = sld [smem:[#allocation0]]
  $region22: #{corrformer_forward.62} parent=0
    _
  %s6 = ssub.s32 1, %s4
  %s7 = scalar_select 0, %s6, %s4
  // Predicated region
  $region2: #{corrformer_forward.62} parent=0 // pred_check
    _
  $region3: #{corrformer_forward.62} parent=0 // pred_check_branch
    %9 = sbr.rel (0) target = $region5
  $region4: #{corrformer_forward.62} parent=0 // pred_region
    _
  $region5: #{corrformer_forward.62} parent=0 // pred_fallthru
    _
  // Predicated region
  $region6: #{corrformer_forward.62} parent=0 // pred_check
    _
  $region7: #{corrformer_forward.62} parent=0 // pred_check_branch
    %11 = sbr.rel (0) target = $region9
  $region8: #{corrformer_forward.62} parent=0 // pred_region
    _
  $region9: #{corrformer_forward.62} parent=0 // pred_fallthru
    _
  // Predicated region
  $region10: #{corrformer_forward.62} parent=0 // pred_check
    _
  $region11: #{corrformer_forward.62} parent=0 // pred_check_branch
    %13 = sbr.rel (0) target = $region13
  $region12: #{corrformer_forward.62} parent=0 // pred_region
    _
  $region13: #{corrformer_forward.62} parent=0 // pred_fallthru
    _
  %v15 = vld [vmem:[%s0] sm:$0xf]
  %v16 = vld [vmem:[%s0 + $0x4] sm:$0xf]
  %v17 = vld [vmem:[%s0 + $0x8] sm:$0xf]
  %v18 = vld [vmem:[%s0 + $0xc] sm:$0xf]
  %v19 = vld [vmem:[%s0 + $0x10] sm:$0xf]
  %v20 = vld [vmem:[%s0 + $0x14] sm:$0xf]
  %v21 = vld [vmem:[%s0 + $0x18] sm:$0xf]
  %v22 = vld [vmem:[%s0 + $0x1c] sm:$0xf]
  %v23 = vld [vmem:[%s0 + $0x20] sm:$0xf]
  %v24 = vld [vmem:[%s0 + $0x24] sm:$0xf]
  %v25 = vld [vmem:[%s0 + $0x28] sm:$0xf]
  %v26 = vld [vmem:[%s0 + $0x2c] sm:$0xf]
  %v27 = vld [vmem:[%s1] sm:$0xf]
  %v28 = vld [vmem:[%s1 + $0x4] sm:$0xf]
  %v29 = vld [vmem:[%s1 + $0x8] sm:$0xf]
  %v30 = vld [vmem:[%s1 + $0xc] sm:$0xf]
  %v31 = vld [vmem:[%s2] sm:$0x1]
  %v33 = vlaneseq
  %v34 = vshrl.u32 %v33, 7
  %v35 = vsub.s32 0, %v34
  %v36 = vrot.slane %v31, %v35
  %v50 = vunpack.c.l.b16 %v15
  %v51 = vunpack.c.l.b16 %v16
  %v52 = vunpack.c.l.b16 %v17
  %v53 = vunpack.c.l.b16 %v18
  %v54 = vunpack.c.l.b16 %v19
  %v55 = vunpack.c.l.b16 %v20
  %v56 = vunpack.c.l.b16 %v21
  %v57 = vunpack.c.l.b16 %v22
  %v58 = vunpack.c.l.b16 %v23
  %v59 = vunpack.c.l.b16 %v24
  %v60 = vunpack.c.l.b16 %v25
  %v61 = vunpack.c.l.b16 %v26
  %v62 = vpack.c.b16 %v51, %v50
  %v63 = vpack.c.b16 %v53, %v52
  %v64 = vpack.c.b16 %v55, %v54
  %v65 = vpack.c.b16 %v57, %v56
  %v66 = vpack.c.b16 %v59, %v58
  %v67 = vpack.c.b16 %v61, %v60
  %v72 = vunpack.c.l.b16 %v27
  %v73 = vunpack.c.l.b16 %v28
  %v74 = vunpack.c.l.b16 %v29
  %v75 = vunpack.c.l.b16 %v30
  %v76 = vpack.c.b16 %v73, %v72
  %v77 = vpack.c.b16 %v75, %v74
  %vm80 = vcmask 261120
  %v82 = vsel %vm80, %v62, 0
  %v85 = vsel %vm80, %v63, 0
  %v88 = vsel %vm80, %v64, 0
  %v91 = vsel %vm80, %v65, 0
  %v94 = vsel %vm80, %v66, 0
  %v97 = vsel %vm80, %v67, 0
  %99 = vmatprep.subr.bf16.mxu0 0
  %100 = vmatpush1.bf16.msra.mxu0 0
  %101 = vmatprep.subr.bf16.mxu0 0
  %102 = vmatpush1.bf16.msra.mxu0 0
  %103 = vmatprep.subr.bf16.mxu0 0
  %104 = vmatpush1.bf16.msra.mxu0 0
  %105 = vmatprep.subr.bf16.mxu0 0
  %106 = vmatpush1.bf16.msra.mxu0 0
  %107 = vmatprep.subr.bf16.mxu0 0
  %108 = vmatpush1.bf16.msra.mxu0 0
  %109 = vmatprep.subr.bf16.mxu0 0
  %110 = vmatpush1.bf16.msra.mxu0 0
  %111 = vmatprep.subr.bf16.mxu0 0
  %112 = vmatpush1.bf16.msra.mxu0 %v77
  %113 = vmatprep.subr.bf16.mxu0 0
  %114 = vmatpush1.bf16.msra.mxu0 %v76
  %115 = vmatprep.subr.bf16.mxu0 0
  %116 = vmatpush2.bf16.msra.mxu0 0
  %117 = vmatprep.subr.bf16.mxu0 0
  %118 = vmatpush2.bf16.msra.mxu0 0
  %119 = vmatprep.subr.bf16.mxu0 0
  %120 = vmatpush2.bf16.msra.mxu0 0
  %121 = vmatprep.subr.bf16.mxu0 0
  %122 = vmatpush2.bf16.msra.mxu0 0
  %123 = vmatprep.subr.bf16.mxu0 0
  %124 = vmatpush2.bf16.msra.mxu0 0
  %125 = vmatprep.subr.bf16.mxu0 0
  %126 = vmatpush2.bf16.msra.mxu0 0
  %127 = vmatprep.subr.bf16.mxu0 0
  %128 = vmatpush2.bf16.msra.mxu0 0
  %129 = vmatprep.subr.bf16.mxu0 0
  %130 = vmatpush2.bf16.msra.mxu0 0
  %131 = vmatprep.mubr.bf16.mxu0 0
  %132 = vmatmul.mubr.bf16.gmra.mxu0 %v82
  %v133 = vpop.f32.mrf.mxu0
  %v134 = vadd.f32 %v36, %v133
  %v135 = vpop.f32.mrf.mxu0
  %v136 = vpop.f32.mrf.mxu0
  %v137 = vadd.f32 %v36, %v136
  %v138 = vpop.f32.mrf.mxu0
  %139 = vmatprep.mubr.bf16.mxu0 0
  %140 = vmatmul.mubr.bf16.gmra.mxu0 %v85
  %v141 = vpop.f32.mrf.mxu0
  %v142 = vadd.f32 %v36, %v141
  %v143 = vpop.f32.mrf.mxu0
  %v144 = vpop.f32.mrf.mxu0
  %v145 = vadd.f32 %v36, %v144
  %v146 = vpop.f32.mrf.mxu0
  %147 = vmatprep.mubr.bf16.mxu0 0
  %148 = vmatmul.mubr.bf16.gmra.mxu0 %v88
  %v149 = vpop.f32.mrf.mxu0
  %v150 = vadd.f32 %v36, %v149
  %v151 = vpop.f32.mrf.mxu0
  %v152 = vpop.f32.mrf.mxu0
  %v153 = vadd.f32 %v36, %v152
  %v154 = vpop.f32.mrf.mxu0
  %155 = vmatprep.mubr.bf16.mxu0 0
  %156 = vmatmul.mubr.bf16.gmra.mxu0 %v91
  %v157 = vpop.f32.mrf.mxu0
  %v158 = vadd.f32 %v36, %v157
  %v159 = vpop.f32.mrf.mxu0
  %v160 = vpop.f32.mrf.mxu0
  %v161 = vadd.f32 %v36, %v160
  %v162 = vpop.f32.mrf.mxu0
  %163 = vmatprep.mubr.bf16.mxu0 0
  %164 = vmatmul.mubr.bf16.gmra.mxu0 %v94
  %v165 = vpop.f32.mrf.mxu0
  %v166 = vadd.f32 %v36, %v165
  %v167 = vpop.f32.mrf.mxu0
  %v168 = vpop.f32.mrf.mxu0
  %v169 = vadd.f32 %v36, %v168
  %v170 = vpop.f32.mrf.mxu0
  %171 = vmatprep.mubr.bf16.mxu0 0
  %172 = vmatmul.mubr.bf16.gmra.mxu0 %v97
  %v173 = vpop.f32.mrf.mxu0
  %v174 = vadd.f32 %v36, %v173
  %v175 = vpop.f32.mrf.mxu0
  %v176 = vpop.f32.mrf.mxu0
  %v177 = vadd.f32 %v36, %v176
  %v178 = vpop.f32.mrf.mxu0
  %179 = vdwg.mxu0
  %180 = vst.msk [vmem:[%s3] sm:$0xff] %vm80, %v134
  %181 = vst.msk [vmem:[%s3 + $0x8] sm:$0xff] %vm80, %v137
  %182 = vst.msk [vmem:[%s3 + $0x10] sm:$0xff] %vm80, %v142
  %183 = vst.msk [vmem:[%s3 + $0x18] sm:$0xff] %vm80, %v145
  %184 = vst.msk [vmem:[%s3 + $0x20] sm:$0xff] %vm80, %v150
  %185 = vst.msk [vmem:[%s3 + $0x28] sm:$0xff] %vm80, %v153
  %186 = vst.msk [vmem:[%s3 + $0x30] sm:$0xff] %vm80, %v158
  %187 = vst.msk [vmem:[%s3 + $0x38] sm:$0xff] %vm80, %v161
  %188 = vst.msk [vmem:[%s3 + $0x40] sm:$0xff] %vm80, %v166
  %189 = vst.msk [vmem:[%s3 + $0x48] sm:$0xff] %vm80, %v169
  %190 = vst.msk [vmem:[%s3 + $0x50] sm:$0xff] %vm80, %v174
  %191 = vst.msk [vmem:[%s3 + $0x58] sm:$0xff] %vm80, %v177
  // Predicated region
  $region14: #{corrformer_forward.62} parent=0 // pred_check
    _
  $region15: #{corrformer_forward.62} parent=0 // pred_check_branch
    %193 = sbr.rel (0) target = $region17
  $region16: #{corrformer_forward.62} parent=0 // pred_region
    _
  $region17: #{corrformer_forward.62} parent=0 // pred_fallthru
    _
  // Predicated region
  $region18: #{corrformer_forward.62} parent=0 // pred_check
    _
  $region19: #{corrformer_forward.62} parent=0 // pred_check_branch
    %195 = sbr.rel (0) target = $region21
  $region20: #{corrformer_forward.62} parent=0 // pred_region
    _
  $region21: #{corrformer_forward.62} parent=0 // pred_fallthru
    _

// kernel: corrformer_forward.64
$region0: #{corrformer_forward.64}
  #allocation0 [shape = 'u32[]', space=smem, size = 0x4, offset = 0x4, fixed_abs, tag = 'smem constant byte address 0x4 - core index']
  #allocation1 [shape = 'u32[144,128]{1,0:T(1,128)}', space=vmem, size = 0x12000, scoped, tag = 'internal scratch']
  %s0 = inlined_call_operand.vmem [shape: f32[4,768], index: 0, kind: input, shape index: {}]
  %s1 = inlined_call_operand.vmem [shape: f32[4,768], index: 1, kind: input, shape index: {}]
  %s2 = inlined_call_operand.vmem [shape: f32[4,768], index: 2, kind: output, shape index: {}]
  %s3 = sld [smem:[#allocation0]]
  $region41: #{corrformer_forward.64} parent=0
    _
  %s5 = ssub.s32 1, %s3
  %s6 = scalar_select 0, %s5, %s3
  loop: start=0, step=1, limit=8
  $region2: #{corrformer_forward.64} parent=0 // loop_pre_header
    _
  $region3: #{corrformer_forward.64} parent=0 // loop_header
    %s8 = sphi 0, %s12
    %p9 = scmp.ge.s32.totalorder %s8, 8
    %s18 = sphi 0, %s20
    %s21 = sphi 0, %s18
    %s22 = sphi 0, %s21
    %s38 = sphi 0, %s22
    %s44 = sphi 0, %s46
    %s47 = sphi 0, %s44
    %s48 = sphi 0, %s47
    %s64 = sphi 0, %s48
    %s70 = sphi 0, %s72
    %s73 = sphi 0, %s70
    %s74 = sphi 0, %s73
    %s90 = sphi 0, %s74
  $region4: #{corrformer_forward.64} parent=0 // loop_header_branch
    %11 = sbr.rel (%p9) target = $region8
  $region5: #{corrformer_forward.64} parent=0 // loop_body
    %s13 = ssub.s32 %s8, 1
    %s14 = ssub.s32 %s8, 2
    %s15 = sadd.s32 %s8, 1
    %s16 = ssub.s32 %s8, %s15
    %p17 = scmp.eq.s32.totalorder %s16, 0
    %s19 = sadd.s32 %s18, 1
    %s20 = scalar_select %p17, %s18, %s19
    %p23 = pneg %p17
    %p24 = scmp.eq.s32.totalorder %s8, 5
    %p25 = por %p23, %p24
    %p26 = scmp.ne.s32.totalorder %s18, %s21
    %p27 = scmp.eq.s32.totalorder %s8, 0
    %p28 = por %p26, %p27
    %p29 = scmp.ne.s32.totalorder %s18, %s21
    %p30 = scmp.eq.s32.totalorder %s13, 5
    %p31 = por %p29, %p30
    %p32 = scmp.ne.s32.totalorder %s21, %s22
    %p33 = scmp.eq.s32.totalorder %s13, 0
    %p34 = por %p32, %p33
    %p35 = scmp.ne.s32.totalorder %s21, %s22
    %p36 = scmp.eq.s32.totalorder %s14, 5
    %p37 = por %p35, %p36
    %p39 = scmp.ne.s32.totalorder %s22, %s38
    %p40 = scmp.eq.s32.totalorder %s14, 0
    %p41 = por %p39, %p40
    %s42 = ssub.s32 %s8, %s15
    %p43 = scmp.eq.s32.totalorder %s42, 0
    %s45 = sadd.s32 %s44, 1
    %s46 = scalar_select %p43, %s44, %s45
    %p49 = pneg %p43
    %p50 = scmp.eq.s32.totalorder %s8, 5
    %p51 = por %p49, %p50
    %p52 = scmp.ne.s32.totalorder %s44, %s47
    %p53 = scmp.eq.s32.totalorder %s8, 0
    %p54 = por %p52, %p53
    %p55 = scmp.ne.s32.totalorder %s44, %s47
    %p56 = scmp.eq.s32.totalorder %s13, 5
    %p57 = por %p55, %p56
    %p58 = scmp.ne.s32.totalorder %s47, %s48
    %p59 = scmp.eq.s32.totalorder %s13, 0
    %p60 = por %p58, %p59
    %p61 = scmp.ne.s32.totalorder %s47, %s48
    %p62 = scmp.eq.s32.totalorder %s14, 5
    %p63 = por %p61, %p62
    %p65 = scmp.ne.s32.totalorder %s48, %s64
    %p66 = scmp.eq.s32.totalorder %s14, 0
    %p67 = por %p65, %p66
    %s68 = ssub.s32 %s8, %s15
    %p69 = scmp.eq.s32.totalorder %s68, 0
    %s71 = sadd.s32 %s70, 1
    %s72 = scalar_select %p69, %s70, %s71
    %p75 = pneg %p69
    %p76 = scmp.eq.s32.totalorder %s8, 5
    %p77 = por %p75, %p76
    %p78 = scmp.ne.s32.totalorder %s70, %s73
    %p79 = scmp.eq.s32.totalorder %s8, 0
    %p80 = por %p78, %p79
    %p81 = scmp.ne.s32.totalorder %s70, %s73
    %p82 = scmp.eq.s32.totalorder %s13, 5
    %p83 = por %p81, %p82
    %p84 = scmp.ne.s32.totalorder %s73, %s74
    %p85 = scmp.eq.s32.totalorder %s13, 0
    %p86 = por %p84, %p85
    %p87 = scmp.ne.s32.totalorder %s73, %s74
    %p88 = scmp.eq.s32.totalorder %s14, 5
    %p89 = por %p87, %p88
    %p91 = scmp.ne.s32.totalorder %s74, %s90
    %p92 = scmp.eq.s32.totalorder %s14, 0
    %p93 = por %p91, %p92
    %p94 = scmp.le.s32.totalorder 1, %s8
    %p95 = scmp.lt.s32.totalorder %s8, 7
    %p96 = pnand %p94, %p95
    %p97 = pneg %p96
    // Predicated region
    $region9: #{corrformer_forward.64} parent=5 // pred_check
      _
    $region10: #{corrformer_forward.64} parent=5 // pred_check_branch
      %99 = sbr.rel (%p96) target = $region12
    $region11: #{corrformer_forward.64} parent=5 // pred_region
      %s100 = ssub.s32 %s8, 1
    $region12: #{corrformer_forward.64} parent=5 // pred_fallthru
      _
    %p101 = scmp.lt.s32.totalorder %s8, 6
    // Predicated region
    $region13: #{corrformer_forward.64} parent=5 // pred_check
      %p102 = pneg %p101
    $region14: #{corrformer_forward.64} parent=5 // pred_check_branch
      %104 = sbr.rel (%p102) target = $region16
    $region15: #{corrformer_forward.64} parent=5 // pred_region
      // Predicated region
      $region17: #{corrformer_forward.64} parent=15 // pred_check
        %p105 = pneg %p28
      $region18: #{corrformer_forward.64} parent=15 // pred_check_branch
        %107 = sbr.rel (%p105) target = $region20
      $region19: #{corrformer_forward.64} parent=15 // pred_region
        %p108 = scmp.lt.s32.totalorder %s8, 5
        %s109 = scalar_select %p108, %s8, 5
        %s110 = smul.addr %s109, 4
        %s111 = scalar_lea.vmem %s0, %s110
      $region20: #{corrformer_forward.64} parent=15 // pred_fallthru
        _
      // Predicated region
      $region21: #{corrformer_forward.64} parent=15 // pred_check
        %p112 = pneg %p54
      $region22: #{corrformer_forward.64} parent=15 // pred_check_branch
        %114 = sbr.rel (%p112) target = $region24
      $region23: #{corrformer_forward.64} parent=15 // pred_region
        %p115 = scmp.lt.s32.totalorder %s8, 5
        %s116 = scalar_select %p115, %s8, 5
        %s117 = smul.addr %s116, 4
        %s118 = scalar_lea.vmem %s1, %s117
      $region24: #{corrformer_forward.64} parent=15 // pred_fallthru
        _
    $region16: #{corrformer_forward.64} parent=5 // pred_fallthru
      _
    %p119 = scmp.le.s32.totalorder 1, %s8
    %p120 = scmp.lt.s32.totalorder %s8, 7
    %p121 = pnand %p119, %p120
    %p122 = pneg %p121
    // Predicated region
    $region25: #{corrformer_forward.64} parent=5 // pred_check
      _
    $region26: #{corrformer_forward.64} parent=5 // pred_check_branch
      %124 = sbr.rel (%p121) target = $region28
    $region27: #{corrformer_forward.64} parent=5 // pred_region
      %s125 = ssub.s32 %s8, 1
      %p126 = scmp.lt.s32.totalorder %s13, 5
      %s127 = scalar_select %p126, %s13, 5
      %s128 = smul.addr %s127, 4
      %s129 = scalar_lea.vmem %s0, %s128
      %p130 = pneg %p34
      %p131 = pneg %p31
      %p132 = scmp.lt.s32.totalorder %s13, 5
      %s133 = scalar_select %p132, %s13, 5
      %s134 = smul.addr %s133, 4
      %s135 = scalar_lea.vmem %s1, %s134
      %p136 = pneg %p60
      %p137 = pneg %p57
      %p138 = pneg %p86
      %p139 = pneg %p83
      %p140 = scmp.lt.s32.totalorder %s13, 5
      %s141 = scalar_select %p140, %s13, 5
      %s142 = smul.addr %s141, 4
      %s143 = scalar_lea.vmem %s2, %s142
      %p144 = scmp.lt.s32.totalorder %s13, 5
      %s145 = scalar_select %p144, %s13, 5
      %s146 = smul.addr %s145, 4
      %s147 = scalar_lea.vmem %s0, %s146
      %p148 = scmp.lt.s32.totalorder %s13, 5
      %s149 = scalar_select %p148, %s13, 5
      %s150 = smul.addr %s149, 4
      %s151 = scalar_lea.vmem %s1, %s150
      %p152 = scmp.lt.s32.totalorder %s13, 5
      %s153 = scalar_select %p152, %s13, 5
      %s154 = smul.addr %s153, 4
      %s155 = scalar_lea.vmem %s2, %s154
      %v156 = vld [vmem:[%s147] sm:$0xf]
      %v157 = vld [vmem:[%s151] sm:$0xf]
      %v158 = vmul.f32 %v156, %v157
      %vm159 = vcmask 1043456
      %v160 = vsel %vm159, %v158, 0.0
      %v161 = vrot.slane %v160, 4
      %v162 = vadd.f32 %v160, %v161
      %v163 = vrot.slane %v162, 2
      %v164 = vadd.f32 %v162, %v163
      %v165 = vrot.slane %v164, 1
      %v166 = vadd.f32 %v164, %v165
      %v168 = vrot.slane %v157, 3
      %v170 = vrot.slane %v157, 7
      %vm172 = vcmask 1040384
      %v173 = vsel %vm172, %v168, %v170
      %v174 = vmul.f32 %v156, %v173
      %v175 = vsel %vm159, %v174, 0.0
      %v176 = vrot.slane %v175, 4
      %v177 = vadd.f32 %v175, %v176
      %v178 = vrot.slane %v177, 2
      %v179 = vadd.f32 %v177, %v178
      %v180 = vrot.slane %v179, 1
      %v181 = vadd.f32 %v179, %v180
      %v182 = vrot.slane %v157, 2
      %v184 = vrot.slane %v157, 6
      %vm186 = vcmask 1041408
      %v187 = vsel %vm186, %v182, %v184
      %v188 = vmul.f32 %v156, %v187
      %v189 = vsel %vm159, %v188, 0.0
      %v190 = vrot.slane %v189, 4
      %v191 = vadd.f32 %v189, %v190
      %v192 = vrot.slane %v191, 2
      %v193 = vadd.f32 %v191, %v192
      %v194 = vrot.slane %v193, 1
      %v195 = vadd.f32 %v193, %v194
      %v196 = vrot.slane %v157, 1
      %v198 = vrot.slane %v157, 5
      %vm200 = vcmask 1042432
      %v201 = vsel %vm200, %v196, %v198
      %v202 = vmul.f32 %v156, %v201
      %v203 = vsel %vm159, %v202, 0.0
      %v204 = vrot.slane %v203, 4
      %v205 = vadd.f32 %v203, %v204
      %v206 = vrot.slane %v205, 2
      %v207 = vadd.f32 %v205, %v206
      %v208 = vrot.slane %v207, 1
      %v209 = vadd.f32 %v207, %v208
      %v210 = vsel %vm172, %v166, %v181
      %v211 = vsel %vm186, %v210, %v195
      %v212 = vsel %vm200, %v211, %v209
      %213 = vst [vmem:[%s155] sm:$0xf] %v212
      %p214 = scmp.lt.s32.totalorder %s13, 5
      %s215 = scalar_select %p214, %s13, 5
      %s216 = smul.addr %s215, 4
      %s217 = scalar_lea.vmem %s2, %s216
      // Predicated region
      $region29: #{corrformer_forward.64} parent=27 // pred_check
        %p218 = pneg %p83
      $region30: #{corrformer_forward.64} parent=27 // pred_check_branch
        %220 = sbr.rel (%p218) target = $region32
      $region31: #{corrformer_forward.64} parent=27 // pred_region
        _
      $region32: #{corrformer_forward.64} parent=27 // pred_fallthru
        _
    $region28: #{corrformer_forward.64} parent=5 // pred_fallthru
      _
    %p221 = scmp.le.s32.totalorder 2, %s8
    // Predicated region
    $region33: #{corrformer_forward.64} parent=5 // pred_check
      %p222 = pneg %p221
    $region34: #{corrformer_forward.64} parent=5 // pred_check_branch
      %224 = sbr.rel (%p222) target = $region36
    $region35: #{corrformer_forward.64} parent=5 // pred_region
      %s225 = ssub.s32 %s8, 2
      // Predicated region
      $region37: #{corrformer_forward.64} parent=35 // pred_check
        %p226 = pneg %p89
      $region38: #{corrformer_forward.64} parent=35 // pred_check_branch
        %228 = sbr.rel (%p226) target = $region40
      $region39: #{corrformer_forward.64} parent=35 // pred_region
        %p229 = scmp.lt.s32.totalorder %s14, 5
        %s230 = scalar_select %p229, %s14, 5
        %s231 = smul.addr %s230, 4
        %s232 = scalar_lea.vmem %s2, %s231
      $region40: #{corrformer_forward.64} parent=35 // pred_fallthru
        _
    $region36: #{corrformer_forward.64} parent=5 // pred_fallthru
      _
  $region6: #{corrformer_forward.64} parent=0 // loop_footer
    %s12 = sadd.s32 1, %s8
  $region7: #{corrformer_forward.64} parent=0 // loop_footer_branch
    %7 = sbr.rel target = $region3
  $region8: #{corrformer_forward.64} parent=0 // loop_exit
    _

// kernel: corrformer_forward.65
$region0: #{corrformer_forward.65}
  #allocation0 [shape = 'u32[]', space=smem, size = 0x4, offset = 0x4, fixed_abs, tag = 'smem constant byte address 0x4 - core index']
  #allocation1 [shape = 'u32[144,128]{1,0:T(1,128)}', space=vmem, size = 0x12000, scoped, tag = 'internal scratch']
  %s0 = inlined_call_operand.vmem [shape: f32[2,384,4], index: 0, kind: input, shape index: {}]
  %s1 = inlined_call_operand.vmem [shape: f32[2,4,4], index: 1, kind: input, shape index: {}]
  %s2 = inlined_call_operand.vmem [shape: f32[2,384,4], index: 2, kind: output, shape index: {}]
  %s3 = sld [smem:[#allocation0]]
  $region18: #{corrformer_forward.65} parent=0
    _
  %s5 = ssub.s32 1, %s3
  %s6 = scalar_select 0, %s5, %s3
  // Predicated region
  $region2: #{corrformer_forward.65} parent=0 // pred_check
    _
  $region3: #{corrformer_forward.65} parent=0 // pred_check_branch
    %8 = sbr.rel (0) target = $region5
  $region4: #{corrformer_forward.65} parent=0 // pred_region
    _
  $region5: #{corrformer_forward.65} parent=0 // pred_fallthru
    _
  // Predicated region
  $region6: #{corrformer_forward.65} parent=0 // pred_check
    _
  $region7: #{corrformer_forward.65} parent=0 // pred_check_branch
    %10 = sbr.rel (0) target = $region9
  $region8: #{corrformer_forward.65} parent=0 // pred_region
    _
  $region9: #{corrformer_forward.65} parent=0 // pred_fallthru
    _
  %v11 = vld [vmem:[%s0] sm:$0xff]
  %v12 = vld [vmem:[%s0 + $0x8] sm:$0xff]
  %v13 = vld [vmem:[%s0 + $0x10] sm:$0xff]
  %v14 = vld [vmem:[%s0 + $0x18] sm:$0xff]
  %v15 = vld [vmem:[%s0 + $0x20] sm:$0xff]
  %v16 = vld [vmem:[%s0 + $0x28] sm:$0xff]
  %v17 = vld [vmem:[%s0 + $0x30] sm:$0xff]
  %v18 = vld [vmem:[%s0 + $0x38] sm:$0xff]
  %v19 = vld [vmem:[%s0 + $0x40] sm:$0xff]
  %v20 = vld [vmem:[%s0 + $0x48] sm:$0xff]
  %v21 = vld [vmem:[%s0 + $0x50] sm:$0xff]
  %v22 = vld [vmem:[%s0 + $0x58] sm:$0xff]
  %v23 = vld [vmem:[%s0 + $0x60] sm:$0xff]
  %v24 = vld [vmem:[%s0 + $0x68] sm:$0xff]
  %v25 = vld [vmem:[%s0 + $0x70] sm:$0xff]
  %v26 = vld [vmem:[%s0 + $0x78] sm:$0xff]
  %v27 = vld [vmem:[%s0 + $0x80] sm:$0xff]
  %v28 = vld [vmem:[%s0 + $0x88] sm:$0xff]
  %v29 = vld [vmem:[%s0 + $0x90] sm:$0xff]
  %v30 = vld [vmem:[%s0 + $0x98] sm:$0xff]
  %v31 = vld [vmem:[%s0 + $0xa0] sm:$0xff]
  %v32 = vld [vmem:[%s0 + $0xa8] sm:$0xff]
  %v33 = vld [vmem:[%s0 + $0xb0] sm:$0xff]
  %v34 = vld [vmem:[%s0 + $0xb8] sm:$0xff]
  %v35 = vld [vmem:[%s0 + $0xc0] sm:$0xff]
  %v36 = vld [vmem:[%s0 + $0xc8] sm:$0xff]
  %v37 = vld [vmem:[%s0 + $0xd0] sm:$0xff]
  %v38 = vld [vmem:[%s0 + $0xd8] sm:$0xff]
  %v39 = vld [vmem:[%s0 + $0xe0] sm:$0xff]
  %v40 = vld [vmem:[%s0 + $0xe8] sm:$0xff]
  %v41 = vld [vmem:[%s0 + $0xf0] sm:$0xff]
  %v42 = vld [vmem:[%s0 + $0xf8] sm:$0xff]
  %v43 = vld [vmem:[%s0 + $0x100] sm:$0xff]
  %v44 = vld [vmem:[%s0 + $0x108] sm:$0xff]
  %v45 = vld [vmem:[%s0 + $0x110] sm:$0xff]
  %v46 = vld [vmem:[%s0 + $0x118] sm:$0xff]
  %v47 = vld [vmem:[%s0 + $0x120] sm:$0xff]
  %v48 = vld [vmem:[%s0 + $0x128] sm:$0xff]
  %v49 = vld [vmem:[%s0 + $0x130] sm:$0xff]
  %v50 = vld [vmem:[%s0 + $0x138] sm:$0xff]
  %v51 = vld [vmem:[%s0 + $0x140] sm:$0xff]
  %v52 = vld [vmem:[%s0 + $0x148] sm:$0xff]
  %v53 = vld [vmem:[%s0 + $0x150] sm:$0xff]
  %v54 = vld [vmem:[%s0 + $0x158] sm:$0xff]
  %v55 = vld [vmem:[%s0 + $0x160] sm:$0xff]
  %v56 = vld [vmem:[%s0 + $0x168] sm:$0xff]
  %v57 = vld [vmem:[%s0 + $0x170] sm:$0xff]
  %v58 = vld [vmem:[%s0 + $0x178] sm:$0xff]
  %v59 = vld [vmem:[%s0 + $0x180] sm:$0xff]
  %v60 = vld [vmem:[%s0 + $0x188] sm:$0xff]
  %v61 = vld [vmem:[%s0 + $0x190] sm:$0xff]
  %v62 = vld [vmem:[%s0 + $0x198] sm:$0xff]
  %v63 = vld [vmem:[%s0 + $0x1a0] sm:$0xff]
  %v64 = vld [vmem:[%s0 + $0x1a8] sm:$0xff]
  %v65 = vld [vmem:[%s0 + $0x1b0] sm:$0xff]
  %v66 = vld [vmem:[%s0 + $0x1b8] sm:$0xff]
  %v67 = vld [vmem:[%s0 + $0x1c0] sm:$0xff]
  %v68 = vld [vmem:[%s0 + $0x1c8] sm:$0xff]
  %v69 = vld [vmem:[%s0 + $0x1d0] sm:$0xff]
  %v70 = vld [vmem:[%s0 + $0x1d8] sm:$0xff]
  %v71 = vld [vmem:[%s0 + $0x1e0] sm:$0xff]
  %v72 = vld [vmem:[%s0 + $0x1e8] sm:$0xff]
  %v73 = vld [vmem:[%s0 + $0x1f0] sm:$0xff]
  %v74 = vld [vmem:[%s0 + $0x1f8] sm:$0xff]
  %v75 = vld [vmem:[%s0 + $0x200] sm:$0xff]
  %v76 = vld [vmem:[%s0 + $0x208] sm:$0xff]
  %v77 = vld [vmem:[%s0 + $0x210] sm:$0xff]
  %v78 = vld [vmem:[%s0 + $0x218] sm:$0xff]
  %v79 = vld [vmem:[%s0 + $0x220] sm:$0xff]
  %v80 = vld [vmem:[%s0 + $0x228] sm:$0xff]
  %v81 = vld [vmem:[%s0 + $0x230] sm:$0xff]
  %v82 = vld [vmem:[%s0 + $0x238] sm:$0xff]
  %v83 = vld [vmem:[%s0 + $0x240] sm:$0xff]
  %v84 = vld [vmem:[%s0 + $0x248] sm:$0xff]
  %v85 = vld [vmem:[%s0 + $0x250] sm:$0xff]
  %v86 = vld [vmem:[%s0 + $0x258] sm:$0xff]
  %v87 = vld [vmem:[%s0 + $0x260] sm:$0xff]
  %v88 = vld [vmem:[%s0 + $0x268] sm:$0xff]
  %v89 = vld [vmem:[%s0 + $0x270] sm:$0xff]
  %v90 = vld [vmem:[%s0 + $0x278] sm:$0xff]
  %v91 = vld [vmem:[%s0 + $0x280] sm:$0xff]
  %v92 = vld [vmem:[%s0 + $0x288] sm:$0xff]
  %v93 = vld [vmem:[%s0 + $0x290] sm:$0xff]
  %v94 = vld [vmem:[%s0 + $0x298] sm:$0xff]
  %v95 = vld [vmem:[%s0 + $0x2a0] sm:$0xff]
  %v96 = vld [vmem:[%s0 + $0x2a8] sm:$0xff]
  %v97 = vld [vmem:[%s0 + $0x2b0] sm:$0xff]
  %v98 = vld [vmem:[%s0 + $0x2b8] sm:$0xff]
  %v99 = vld [vmem:[%s0 + $0x2c0] sm:$0xff]
  %v100 = vld [vmem:[%s0 + $0x2c8] sm:$0xff]
  %v101 = vld [vmem:[%s0 + $0x2d0] sm:$0xff]
  %v102 = vld [vmem:[%s0 + $0x2d8] sm:$0xff]
  %v103 = vld [vmem:[%s0 + $0x2e0] sm:$0xff]
  %v104 = vld [vmem:[%s0 + $0x2e8] sm:$0xff]
  %v105 = vld [vmem:[%s0 + $0x2f0] sm:$0xff]
  %v106 = vld [vmem:[%s0 + $0x2f8] sm:$0xff]
  %v107 = vld [vmem:[%s1] sm:$0xf]
  %v108 = vld [vmem:[%s1 + $0x4] sm:$0xf]
  %vm109 = vcmask 31744
  %v111 = vsel %vm109, %v11, 0
  %v114 = vsel %vm109, %v12, 0
  %v117 = vsel %vm109, %v13, 0
  %v120 = vsel %vm109, %v14, 0
  %v123 = vsel %vm109, %v15, 0
  %v126 = vsel %vm109, %v16, 0
  %v129 = vsel %vm109, %v17, 0
  %v132 = vsel %vm109, %v18, 0
  %v135 = vsel %vm109, %v19, 0
  %v138 = vsel %vm109, %v20, 0
  %v141 = vsel %vm109, %v21, 0
  %v144 = vsel %vm109, %v22, 0
  %v147 = vsel %vm109, %v23, 0
  %v150 = vsel %vm109, %v24, 0
  %v153 = vsel %vm109, %v25, 0
  %v156 = vsel %vm109, %v26, 0
  %v159 = vsel %vm109, %v27, 0
  %v162 = vsel %vm109, %v28, 0
  %v165 = vsel %vm109, %v29, 0
  %v168 = vsel %vm109, %v30, 0
  %v171 = vsel %vm109, %v31, 0
  %v174 = vsel %vm109, %v32, 0
  %v177 = vsel %vm109, %v33, 0
  %v180 = vsel %vm109, %v34, 0
  %v183 = vsel %vm109, %v35, 0
  %v186 = vsel %vm109, %v36, 0
  %v189 = vsel %vm109, %v37, 0
  %v192 = vsel %vm109, %v38, 0
  %v195 = vsel %vm109, %v39, 0
  %v198 = vsel %vm109, %v40, 0
  %v201 = vsel %vm109, %v41, 0
  %v204 = vsel %vm109, %v42, 0
  %v207 = vsel %vm109, %v43, 0
  %v210 = vsel %vm109, %v44, 0
  %v213 = vsel %vm109, %v45, 0
  %v216 = vsel %vm109, %v46, 0
  %v219 = vsel %vm109, %v47, 0
  %v222 = vsel %vm109, %v48, 0
  %v225 = vsel %vm109, %v49, 0
  %v228 = vsel %vm109, %v50, 0
  %v231 = vsel %vm109, %v51, 0
  %v234 = vsel %vm109, %v52, 0
  %v237 = vsel %vm109, %v53, 0
  %v240 = vsel %vm109, %v54, 0
  %v243 = vsel %vm109, %v55, 0
  %v246 = vsel %vm109, %v56, 0
  %v249 = vsel %vm109, %v57, 0
  %v252 = vsel %vm109, %v58, 0
  %vm254 = vcmask 1043456
  %v256 = vsel %vm254, %v107, 0
  %258 = vmatprep.subr.mxu0 0.0
  %259 = vmatpush1.msra.mxu0 0.0
  %260 = vmatprep.subr.mxu0 0.0
  %261 = vmatpush1.msra.mxu0 0.0
  %262 = vmatprep.subr.mxu0 0.0
  %263 = vmatpush1.msra.mxu0 0.0
  %264 = vmatprep.subr.mxu0 0.0
  %265 = vmatpush1.msra.mxu0 0.0
  %266 = vmatprep.subr.mxu0 0.0
  %267 = vmatpush1.msra.mxu0 0.0
  %268 = vmatprep.subr.mxu0 0.0
  %269 = vmatpush1.msra.mxu0 0.0
  %270 = vmatprep.subr.mxu0 0.0
  %271 = vmatpush1.msra.mxu0 0.0
  %272 = vmatprep.subr.mxu0 0.0
  %273 = vmatpush1.msra.mxu0 0.0
  %274 = vmatprep.subr.mxu0 0.0
  %275 = vmatpush1.msra.mxu0 0.0
  %276 = vmatprep.subr.mxu0 0.0
  %277 = vmatpush1.msra.mxu0 0.0
  %278 = vmatprep.subr.mxu0 0.0
  %279 = vmatpush1.msra.mxu0 0.0
  %280 = vmatprep.subr.mxu0 0.0
  %281 = vmatpush1.msra.mxu0 0.0
  %282 = vmatprep.subr.mxu0 0.0
  %283 = vmatpush1.msra.mxu0 0.0
  %284 = vmatprep.subr.mxu0 0.0
  %285 = vmatpush1.msra.mxu0 0.0
  %286 = vmatprep.subr.mxu0 0.0
  %287 = vmatpush1.msra.mxu0 0.0
  %288 = vmatprep.subr.mxu0 0.0
  %289 = vmatpush1.msra.mxu0 %v256
  %290 = vmatprep.subr.mxu0 0.0
  %291 = vmatpush2.msra.mxu0 0.0
  %292 = vmatprep.subr.mxu0 0.0
  %293 = vmatpush2.msra.mxu0 0.0
  %294 = vmatprep.subr.mxu0 0.0
  %295 = vmatpush2.msra.mxu0 0.0
  %296 = vmatprep.subr.mxu0 0.0
  %297 = vmatpush2.msra.mxu0 0.0
  %298 = vmatprep.subr.mxu0 0.0
  %299 = vmatpush2.msra.mxu0 0.0
  %300 = vmatprep.subr.mxu0 0.0
  %301 = vmatpush2.msra.mxu0 0.0
  %302 = vmatprep.subr.mxu0 0.0
  %303 = vmatpush2.msra.mxu0 0.0
  %304 = vmatprep.subr.mxu0 0.0
  %305 = vmatpush2.msra.mxu0 0.0
  %306 = vmatprep.subr.mxu0 0.0
  %307 = vmatpush2.msra.mxu0 0.0
  %308 = vmatprep.subr.mxu0 0.0
  %309 = vmatpush2.msra.mxu0 0.0
  %310 = vmatprep.subr.mxu0 0.0
  %311 = vmatpush2.msra.mxu0 0.0
  %312 = vmatprep.subr.mxu0 0.0
  %313 = vmatpush2.msra.mxu0 0.0
  %314 = vmatprep.subr.mxu0 0.0
  %315 = vmatpush2.msra.mxu0 0.0
  %316 = vmatprep.subr.mxu0 0.0
  %317 = vmatpush2.msra.mxu0 0.0
  %318 = vmatprep.subr.mxu0 0.0
  %319 = vmatpush2.msra.mxu0 0.0
  %320 = vmatprep.subr.mxu0 0.0
  %321 = vmatpush2.msra.mxu0 0.0
  %322 = vmatprep.mubr.f32.mxu0 0.0
  %323 = vmatmul.mubr.f32.gmra.mxu0 %v111
  %v324 = vpop.f32.mrf.mxu0
  %v325 = vadd.f32 0.0, %v324
  %v326 = vpop.f32.mrf.mxu0
  %327 = vmatprep.mubr.f32.mxu0 0.0
  %328 = vmatmul.mubr.f32.gmra.mxu0 %v114
  %v329 = vpop.f32.mrf.mxu0
  %v330 = vadd.f32 0.0, %v329
  %v331 = vpop.f32.mrf.mxu0
  %332 = vmatprep.mubr.f32.mxu0 0.0
  %333 = vmatmul.mubr.f32.gmra.mxu0 %v117
  %v334 = vpop.f32.mrf.mxu0
  %v335 = vadd.f32 0.0, %v334
  %v336 = vpop.f32.mrf.mxu0
  %337 = vmatprep.mubr.f32.mxu0 0.0
  %338 = vmatmul.mubr.f32.gmra.mxu0 %v120
  %v339 = vpop.f32.mrf.mxu0
  %v340 = vadd.f32 0.0, %v339
  %v341 = vpop.f32.mrf.mxu0
  %342 = vmatprep.mubr.f32.mxu0 0.0
  %343 = vmatmul.mubr.f32.gmra.mxu0 %v123
  %v344 = vpop.f32.mrf.mxu0
  %v345 = vadd.f32 0.0, %v344
  %v346 = vpop.f32.mrf.mxu0
  %347 = vmatprep.mubr.f32.mxu0 0.0
  %348 = vmatmul.mubr.f32.gmra.mxu0 %v126
  %v349 = vpop.f32.mrf.mxu0
  %v350 = vadd.f32 0.0, %v349
  %v351 = vpop.f32.mrf.mxu0
  %352 = vmatprep.mubr.f32.mxu0 0.0
  %353 = vmatmul.mubr.f32.gmra.mxu0 %v129
  %v354 = vpop.f32.mrf.mxu0
  %v355 = vadd.f32 0.0, %v354
  %v356 = vpop.f32.mrf.mxu0
  %357 = vmatprep.mubr.f32.mxu0 0.0
  %358 = vmatmul.mubr.f32.gmra.mxu0 %v132
  %v359 = vpop.f32.mrf.mxu0
  %v360 = vadd.f32 0.0, %v359
  %v361 = vpop.f32.mrf.mxu0
  %362 = vmatprep.mubr.f32.mxu0 0.0
  %363 = vmatmul.mubr.f32.gmra.mxu0 %v135
  %v364 = vpop.f32.mrf.mxu0
  %v365 = vadd.f32 0.0, %v364
  %v366 = vpop.f32.mrf.mxu0
  %367 = vmatprep.mubr.f32.mxu0 0.0
  %368 = vmatmul.mubr.f32.gmra.mxu0 %v138
  %v369 = vpop.f32.mrf.mxu0
  %v370 = vadd.f32 0.0, %v369
  %v371 = vpop.f32.mrf.mxu0
  %372 = vmatprep.mubr.f32.mxu0 0.0
  %373 = vmatmul.mubr.f32.gmra.mxu0 %v141
  %v374 = vpop.f32.mrf.mxu0
  %v375 = vadd.f32 0.0, %v374
  %v376 = vpop.f32.mrf.mxu0
  %377 = vmatprep.mubr.f32.mxu0 0.0
  %378 = vmatmul.mubr.f32.gmra.mxu0 %v144
  %v379 = vpop.f32.mrf.mxu0
  %v380 = vadd.f32 0.0, %v379
  %v381 = vpop.f32.mrf.mxu0
  %382 = vmatprep.mubr.f32.mxu0 0.0
  %383 = vmatmul.mubr.f32.gmra.mxu0 %v147
  %v384 = vpop.f32.mrf.mxu0
  %v385 = vadd.f32 0.0, %v384
  %v386 = vpop.f32.mrf.mxu0
  %387 = vmatprep.mubr.f32.mxu0 0.0
  %388 = vmatmul.mubr.f32.gmra.mxu0 %v150
  %v389 = vpop.f32.mrf.mxu0
  %v390 = vadd.f32 0.0, %v389
  %v391 = vpop.f32.mrf.mxu0
  %392 = vmatprep.mubr.f32.mxu0 0.0
  %393 = vmatmul.mubr.f32.gmra.mxu0 %v153
  %v394 = vpop.f32.mrf.mxu0
  %v395 = vadd.f32 0.0, %v394
  %v396 = vpop.f32.mrf.mxu0
  %397 = vmatprep.mubr.f32.mxu0 0.0
  %398 = vmatmul.mubr.f32.gmra.mxu0 %v156
  %v399 = vpop.f32.mrf.mxu0
  %v400 = vadd.f32 0.0, %v399
  %v401 = vpop.f32.mrf.mxu0
  %402 = vmatprep.mubr.f32.mxu0 0.0
  %403 = vmatmul.mubr.f32.gmra.mxu0 %v159
  %v404 = vpop.f32.mrf.mxu0
  %v405 = vadd.f32 0.0, %v404
  %v406 = vpop.f32.mrf.mxu0
  %407 = vmatprep.mubr.f32.mxu0 0.0
  %408 = vmatmul.mubr.f32.gmra.mxu0 %v162
  %v409 = vpop.f32.mrf.mxu0
  %v410 = vadd.f32 0.0, %v409
  %v411 = vpop.f32.mrf.mxu0
  %412 = vmatprep.mubr.f32.mxu0 0.0
  %413 = vmatmul.mubr.f32.gmra.mxu0 %v165
  %v414 = vpop.f32.mrf.mxu0
  %v415 = vadd.f32 0.0, %v414
  %v416 = vpop.f32.mrf.mxu0
  %417 = vmatprep.mubr.f32.mxu0 0.0
  %418 = vmatmul.mubr.f32.gmra.mxu0 %v168
  %v419 = vpop.f32.mrf.mxu0
  %v420 = vadd.f32 0.0, %v419
  %v421 = vpop.f32.mrf.mxu0
  %422 = vmatprep.mubr.f32.mxu0 0.0
  %423 = vmatmul.mubr.f32.gmra.mxu0 %v171
  %v424 = vpop.f32.mrf.mxu0
  %v425 = vadd.f32 0.0, %v424
  %v426 = vpop.f32.mrf.mxu0
  %427 = vmatprep.mubr.f32.mxu0 0.0
  %428 = vmatmul.mubr.f32.gmra.mxu0 %v174
  %v429 = vpop.f32.mrf.mxu0
  %v430 = vadd.f32 0.0, %v429
  %v431 = vpop.f32.mrf.mxu0
  %432 = vmatprep.mubr.f32.mxu0 0.0
  %433 = vmatmul.mubr.f32.gmra.mxu0 %v177
  %v434 = vpop.f32.mrf.mxu0
  %v435 = vadd.f32 0.0, %v434
  %v436 = vpop.f32.mrf.mxu0
  %437 = vmatprep.mubr.f32.mxu0 0.0
  %438 = vmatmul.mubr.f32.gmra.mxu0 %v180
  %v439 = vpop.f32.mrf.mxu0
  %v440 = vadd.f32 0.0, %v439
  %v441 = vpop.f32.mrf.mxu0
  %442 = vmatprep.mubr.f32.mxu0 0.0
  %443 = vmatmul.mubr.f32.gmra.mxu0 %v183
  %v444 = vpop.f32.mrf.mxu0
  %v445 = vadd.f32 0.0, %v444
  %v446 = vpop.f32.mrf.mxu0
  %447 = vmatprep.mubr.f32.mxu0 0.0
  %448 = vmatmul.mubr.f32.gmra.mxu0 %v186
  %v449 = vpop.f32.mrf.mxu0
  %v450 = vadd.f32 0.0, %v449
  %v451 = vpop.f32.mrf.mxu0
  %452 = vmatprep.mubr.f32.mxu0 0.0
  %453 = vmatmul.mubr.f32.gmra.mxu0 %v189
  %v454 = vpop.f32.mrf.mxu0
  %v455 = vadd.f32 0.0, %v454
  %v456 = vpop.f32.mrf.mxu0
  %457 = vmatprep.mubr.f32.mxu0 0.0
  %458 = vmatmul.mubr.f32.gmra.mxu0 %v192
  %v459 = vpop.f32.mrf.mxu0
  %v460 = vadd.f32 0.0, %v459
  %v461 = vpop.f32.mrf.mxu0
  %462 = vmatprep.mubr.f32.mxu0 0.0
  %463 = vmatmul.mubr.f32.gmra.mxu0 %v195
  %v464 = vpop.f32.mrf.mxu0
  %v465 = vadd.f32 0.0, %v464
  %v466 = vpop.f32.mrf.mxu0
  %467 = vmatprep.mubr.f32.mxu0 0.0
  %468 = vmatmul.mubr.f32.gmra.mxu0 %v198
  %v469 = vpop.f32.mrf.mxu0
  %v470 = vadd.f32 0.0, %v469
  %v471 = vpop.f32.mrf.mxu0
  %472 = vmatprep.mubr.f32.mxu0 0.0
  %473 = vmatmul.mubr.f32.gmra.mxu0 %v201
  %v474 = vpop.f32.mrf.mxu0
  %v475 = vadd.f32 0.0, %v474
  %v476 = vpop.f32.mrf.mxu0
  %477 = vmatprep.mubr.f32.mxu0 0.0
  %478 = vmatmul.mubr.f32.gmra.mxu0 %v204
  %v479 = vpop.f32.mrf.mxu0
  %v480 = vadd.f32 0.0, %v479
  %v481 = vpop.f32.mrf.mxu0
  %482 = vmatprep.mubr.f32.mxu0 0.0
  %483 = vmatmul.mubr.f32.gmra.mxu0 %v207
  %v484 = vpop.f32.mrf.mxu0
  %v485 = vadd.f32 0.0, %v484
  %v486 = vpop.f32.mrf.mxu0
  %487 = vmatprep.mubr.f32.mxu0 0.0
  %488 = vmatmul.mubr.f32.gmra.mxu0 %v210
  %v489 = vpop.f32.mrf.mxu0
  %v490 = vadd.f32 0.0, %v489
  %v491 = vpop.f32.mrf.mxu0
  %492 = vmatprep.mubr.f32.mxu0 0.0
  %493 = vmatmul.mubr.f32.gmra.mxu0 %v213
  %v494 = vpop.f32.mrf.mxu0
  %v495 = vadd.f32 0.0, %v494
  %v496 = vpop.f32.mrf.mxu0
  %497 = vmatprep.mubr.f32.mxu0 0.0
  %498 = vmatmul.mubr.f32.gmra.mxu0 %v216
  %v499 = vpop.f32.mrf.mxu0
  %v500 = vadd.f32 0.0, %v499
  %v501 = vpop.f32.mrf.mxu0
  %502 = vmatprep.mubr.f32.mxu0 0.0
  %503 = vmatmul.mubr.f32.gmra.mxu0 %v219
  %v504 = vpop.f32.mrf.mxu0
  %v505 = vadd.f32 0.0, %v504
  %v506 = vpop.f32.mrf.mxu0
  %507 = vmatprep.mubr.f32.mxu0 0.0
  %508 = vmatmul.mubr.f32.gmra.mxu0 %v222
  %v509 = vpop.f32.mrf.mxu0
  %v510 = vadd.f32 0.0, %v509
  %v511 = vpop.f32.mrf.mxu0
  %512 = vmatprep.mubr.f32.mxu0 0.0
  %513 = vmatmul.mubr.f32.gmra.mxu0 %v225
  %v514 = vpop.f32.mrf.mxu0
  %v515 = vadd.f32 0.0, %v514
  %v516 = vpop.f32.mrf.mxu0
  %517 = vmatprep.mubr.f32.mxu0 0.0
  %518 = vmatmul.mubr.f32.gmra.mxu0 %v228
  %v519 = vpop.f32.mrf.mxu0
  %v520 = vadd.f32 0.0, %v519
  %v521 = vpop.f32.mrf.mxu0
  %522 = vmatprep.mubr.f32.mxu0 0.0
  %523 = vmatmul.mubr.f32.gmra.mxu0 %v231
  %v524 = vpop.f32.mrf.mxu0
  %v525 = vadd.f32 0.0, %v524
  %v526 = vpop.f32.mrf.mxu0
  %527 = vmatprep.mubr.f32.mxu0 0.0
  %528 = vmatmul.mubr.f32.gmra.mxu0 %v234
  %v529 = vpop.f32.mrf.mxu0
  %v530 = vadd.f32 0.0, %v529
  %v531 = vpop.f32.mrf.mxu0
  %532 = vmatprep.mubr.f32.mxu0 0.0
  %533 = vmatmul.mubr.f32.gmra.mxu0 %v237
  %v534 = vpop.f32.mrf.mxu0
  %v535 = vadd.f32 0.0, %v534
  %v536 = vpop.f32.mrf.mxu0
  %537 = vmatprep.mubr.f32.mxu0 0.0
  %538 = vmatmul.mubr.f32.gmra.mxu0 %v240
  %v539 = vpop.f32.mrf.mxu0
  %v540 = vadd.f32 0.0, %v539
  %v541 = vpop.f32.mrf.mxu0
  %542 = vmatprep.mubr.f32.mxu0 0.0
  %543 = vmatmul.mubr.f32.gmra.mxu0 %v243
  %v544 = vpop.f32.mrf.mxu0
  %v545 = vadd.f32 0.0, %v544
  %v546 = vpop.f32.mrf.mxu0
  %547 = vmatprep.mubr.f32.mxu0 0.0
  %548 = vmatmul.mubr.f32.gmra.mxu0 %v246
  %v549 = vpop.f32.mrf.mxu0
  %v550 = vadd.f32 0.0, %v549
  %v551 = vpop.f32.mrf.mxu0
  %552 = vmatprep.mubr.f32.mxu0 0.0
  %553 = vmatmul.mubr.f32.gmra.mxu0 %v249
  %v554 = vpop.f32.mrf.mxu0
  %v555 = vadd.f32 0.0, %v554
  %v556 = vpop.f32.mrf.mxu0
  %557 = vmatprep.mubr.f32.mxu0 0.0
  %558 = vmatmul.mubr.f32.gmra.mxu0 %v252
  %v559 = vpop.f32.mrf.mxu0
  %v560 = vadd.f32 0.0, %v559
  %v561 = vpop.f32.mrf.mxu0
  %562 = vdwg.mxu0
  %v564 = vsel %vm109, %v59, 0
  %v567 = vsel %vm109, %v60, 0
  %v570 = vsel %vm109, %v61, 0
  %v573 = vsel %vm109, %v62, 0
  %v576 = vsel %vm109, %v63, 0
  %v579 = vsel %vm109, %v64, 0
  %v582 = vsel %vm109, %v65, 0
  %v585 = vsel %vm109, %v66, 0
  %v588 = vsel %vm109, %v67, 0
  %v591 = vsel %vm109, %v68, 0
  %v594 = vsel %vm109, %v69, 0
  %v597 = vsel %vm109, %v70, 0
  %v600 = vsel %vm109, %v71, 0
  %v603 = vsel %vm109, %v72, 0
  %v606 = vsel %vm109, %v73, 0
  %v609 = vsel %vm109, %v74, 0
  %v612 = vsel %vm109, %v75, 0
  %v615 = vsel %vm109, %v76, 0
  %v618 = vsel %vm109, %v77, 0
  %v621 = vsel %vm109, %v78, 0
  %v624 = vsel %vm109, %v79, 0
  %v627 = vsel %vm109, %v80, 0
  %v630 = vsel %vm109, %v81, 0
  %v633 = vsel %vm109, %v82, 0
  %v636 = vsel %vm109, %v83, 0
  %v639 = vsel %vm109, %v84, 0
  %v642 = vsel %vm109, %v85, 0
  %v645 = vsel %vm109, %v86, 0
  %v648 = vsel %vm109, %v87, 0
  %v651 = vsel %vm109, %v88, 0
  %v654 = vsel %vm109, %v89, 0
  %v657 = vsel %vm109, %v90, 0
  %v660 = vsel %vm109, %v91, 0
  %v663 = vsel %vm109, %v92, 0
  %v666 = vsel %vm109, %v93, 0
  %v669 = vsel %vm109, %v94, 0
  %v672 = vsel %vm109, %v95, 0
  %v675 = vsel %vm109, %v96, 0
  %v678 = vsel %vm109, %v97, 0
  %v681 = vsel %vm109, %v98, 0
  %v684 = vsel %vm109, %v99, 0
  %v687 = vsel %vm109, %v100, 0
  %v690 = vsel %vm109, %v101, 0
  %v693 = vsel %vm109, %v102, 0
  %v696 = vsel %vm109, %v103, 0
  %v699 = vsel %vm109, %v104, 0
  %v702 = vsel %vm109, %v105, 0
  %v705 = vsel %vm109, %v106, 0
  %v708 = vsel %vm254, %v108, 0
  %710 = vmatprep.subr.mxu0 0.0
  %711 = vmatpush1.msra.mxu0 0.0
  %712 = vmatprep.subr.mxu0 0.0
  %713 = vmatpush1.msra.mxu0 0.0
  %714 = vmatprep.subr.mxu0 0.0
  %715 = vmatpush1.msra.mxu0 0.0
  %716 = vmatprep.subr.mxu0 0.0
  %717 = vmatpush1.msra.mxu0 0.0
  %718 = vmatprep.subr.mxu0 0.0
  %719 = vmatpush1.msra.mxu0 0.0
  %720 = vmatprep.subr.mxu0 0.0
  %721 = vmatpush1.msra.mxu0 0.0
  %722 = vmatprep.subr.mxu0 0.0
  %723 = vmatpush1.msra.mxu0 0.0
  %724 = vmatprep.subr.mxu0 0.0
  %725 = vmatpush1.msra.mxu0 0.0
  %726 = vmatprep.subr.mxu0 0.0
  %727 = vmatpush1.msra.mxu0 0.0
  %728 = vmatprep.subr.mxu0 0.0
  %729 = vmatpush1.msra.mxu0 0.0
  %730 = vmatprep.subr.mxu0 0.0
  %731 = vmatpush1.msra.mxu0 0.0
  %732 = vmatprep.subr.mxu0 0.0
  %733 = vmatpush1.msra.mxu0 0.0
  %734 = vmatprep.subr.mxu0 0.0
  %735 = vmatpush1.msra.mxu0 0.0
  %736 = vmatprep.subr.mxu0 0.0
  %737 = vmatpush1.msra.mxu0 0.0
  %738 = vmatprep.subr.mxu0 0.0
  %739 = vmatpush1.msra.mxu0 0.0
  %740 = vmatprep.subr.mxu0 0.0
  %741 = vmatpush1.msra.mxu0 %v708
  %742 = vmatprep.subr.mxu0 0.0
  %743 = vmatpush2.msra.mxu0 0.0
  %744 = vmatprep.subr.mxu0 0.0
  %745 = vmatpush2.msra.mxu0 0.0
  %746 = vmatprep.subr.mxu0 0.0
  %747 = vmatpush2.msra.mxu0 0.0
  %748 = vmatprep.subr.mxu0 0.0
  %749 = vmatpush2.msra.mxu0 0.0
  %750 = vmatprep.subr.mxu0 0.0
  %751 = vmatpush2.msra.mxu0 0.0
  %752 = vmatprep.subr.mxu0 0.0
  %753 = vmatpush2.msra.mxu0 0.0
  %754 = vmatprep.subr.mxu0 0.0
  %755 = vmatpush2.msra.mxu0 0.0
  %756 = vmatprep.subr.mxu0 0.0
  %757 = vmatpush2.msra.mxu0 0.0
  %758 = vmatprep.subr.mxu0 0.0
  %759 = vmatpush2.msra.mxu0 0.0
  %760 = vmatprep.subr.mxu0 0.0
  %761 = vmatpush2.msra.mxu0 0.0
  %762 = vmatprep.subr.mxu0 0.0
  %763 = vmatpush2.msra.mxu0 0.0
  %764 = vmatprep.subr.mxu0 0.0
  %765 = vmatpush2.msra.mxu0 0.0
  %766 = vmatprep.subr.mxu0 0.0
  %767 = vmatpush2.msra.mxu0 0.0
  %768 = vmatprep.subr.mxu0 0.0
  %769 = vmatpush2.msra.mxu0 0.0
  %770 = vmatprep.subr.mxu0 0.0
  %771 = vmatpush2.msra.mxu0 0.0
  %772 = vmatprep.subr.mxu0 0.0
  %773 = vmatpush2.msra.mxu0 0.0
  %774 = vmatprep.mubr.f32.mxu0 0.0
  %775 = vmatmul.mubr.f32.gmra.mxu0 %v564
  %v776 = vpop.f32.mrf.mxu0
  %v777 = vadd.f32 0.0, %v776
  %v778 = vpop.f32.mrf.mxu0
  %779 = vmatprep.mubr.f32.mxu0 0.0
  %780 = vmatmul.mubr.f32.gmra.mxu0 %v567
  %v781 = vpop.f32.mrf.mxu0
  %v782 = vadd.f32 0.0, %v781
  %v783 = vpop.f32.mrf.mxu0
  %784 = vmatprep.mubr.f32.mxu0 0.0
  %785 = vmatmul.mubr.f32.gmra.mxu0 %v570
  %v786 = vpop.f32.mrf.mxu0
  %v787 = vadd.f32 0.0, %v786
  %v788 = vpop.f32.mrf.mxu0
  %789 = vmatprep.mubr.f32.mxu0 0.0
  %790 = vmatmul.mubr.f32.gmra.mxu0 %v573
  %v791 = vpop.f32.mrf.mxu0
  %v792 = vadd.f32 0.0, %v791
  %v793 = vpop.f32.mrf.mxu0
  %794 = vmatprep.mubr.f32.mxu0 0.0
  %795 = vmatmul.mubr.f32.gmra.mxu0 %v576
  %v796 = vpop.f32.mrf.mxu0
  %v797 = vadd.f32 0.0, %v796
  %v798 = vpop.f32.mrf.mxu0
  %799 = vmatprep.mubr.f32.mxu0 0.0
  %800 = vmatmul.mubr.f32.gmra.mxu0 %v579
  %v801 = vpop.f32.mrf.mxu0
  %v802 = vadd.f32 0.0, %v801
  %v803 = vpop.f32.mrf.mxu0
  %804 = vmatprep.mubr.f32.mxu0 0.0
  %805 = vmatmul.mubr.f32.gmra.mxu0 %v582
  %v806 = vpop.f32.mrf.mxu0
  %v807 = vadd.f32 0.0, %v806
  %v808 = vpop.f32.mrf.mxu0
  %809 = vmatprep.mubr.f32.mxu0 0.0
  %810 = vmatmul.mubr.f32.gmra.mxu0 %v585
  %v811 = vpop.f32.mrf.mxu0
  %v812 = vadd.f32 0.0, %v811
  %v813 = vpop.f32.mrf.mxu0
  %814 = vmatprep.mubr.f32.mxu0 0.0
  %815 = vmatmul.mubr.f32.gmra.mxu0 %v588
  %v816 = vpop.f32.mrf.mxu0
  %v817 = vadd.f32 0.0, %v816
  %v818 = vpop.f32.mrf.mxu0
  %819 = vmatprep.mubr.f32.mxu0 0.0
  %820 = vmatmul.mubr.f32.gmra.mxu0 %v591
  %v821 = vpop.f32.mrf.mxu0
  %v822 = vadd.f32 0.0, %v821
  %v823 = vpop.f32.mrf.mxu0
  %824 = vmatprep.mubr.f32.mxu0 0.0
  %825 = vmatmul.mubr.f32.gmra.mxu0 %v594
  %v826 = vpop.f32.mrf.mxu0
  %v827 = vadd.f32 0.0, %v826
  %v828 = vpop.f32.mrf.mxu0
  %829 = vmatprep.mubr.f32.mxu0 0.0
  %830 = vmatmul.mubr.f32.gmra.mxu0 %v597
  %v831 = vpop.f32.mrf.mxu0
  %v832 = vadd.f32 0.0, %v831
  %v833 = vpop.f32.mrf.mxu0
  %834 = vmatprep.mubr.f32.mxu0 0.0
  %835 = vmatmul.mubr.f32.gmra.mxu0 %v600
  %v836 = vpop.f32.mrf.mxu0
  %v837 = vadd.f32 0.0, %v836
  %v838 = vpop.f32.mrf.mxu0
  %839 = vmatprep.mubr.f32.mxu0 0.0
  %840 = vmatmul.mubr.f32.gmra.mxu0 %v603
  %v841 = vpop.f32.mrf.mxu0
  %v842 = vadd.f32 0.0, %v841
  %v843 = vpop.f32.mrf.mxu0
  %844 = vmatprep.mubr.f32.mxu0 0.0
  %845 = vmatmul.mubr.f32.gmra.mxu0 %v606
  %v846 = vpop.f32.mrf.mxu0
  %v847 = vadd.f32 0.0, %v846
  %v848 = vpop.f32.mrf.mxu0
  %849 = vmatprep.mubr.f32.mxu0 0.0
  %850 = vmatmul.mubr.f32.gmra.mxu0 %v609
  %v851 = vpop.f32.mrf.mxu0
  %v852 = vadd.f32 0.0, %v851
  %v853 = vpop.f32.mrf.mxu0
  %854 = vmatprep.mubr.f32.mxu0 0.0
  %855 = vmatmul.mubr.f32.gmra.mxu0 %v612
  %v856 = vpop.f32.mrf.mxu0
  %v857 = vadd.f32 0.0, %v856
  %v858 = vpop.f32.mrf.mxu0
  %859 = vmatprep.mubr.f32.mxu0 0.0
  %860 = vmatmul.mubr.f32.gmra.mxu0 %v615
  %v861 = vpop.f32.mrf.mxu0
  %v862 = vadd.f32 0.0, %v861
  %v863 = vpop.f32.mrf.mxu0
  %864 = vmatprep.mubr.f32.mxu0 0.0
  %865 = vmatmul.mubr.f32.gmra.mxu0 %v618
  %v866 = vpop.f32.mrf.mxu0
  %v867 = vadd.f32 0.0, %v866
  %v868 = vpop.f32.mrf.mxu0
  %869 = vmatprep.mubr.f32.mxu0 0.0
  %870 = vmatmul.mubr.f32.gmra.mxu0 %v621
  %v871 = vpop.f32.mrf.mxu0
  %v872 = vadd.f32 0.0, %v871
  %v873 = vpop.f32.mrf.mxu0
  %874 = vmatprep.mubr.f32.mxu0 0.0
  %875 = vmatmul.mubr.f32.gmra.mxu0 %v624
  %v876 = vpop.f32.mrf.mxu0
  %v877 = vadd.f32 0.0, %v876
  %v878 = vpop.f32.mrf.mxu0
  %879 = vmatprep.mubr.f32.mxu0 0.0
  %880 = vmatmul.mubr.f32.gmra.mxu0 %v627
  %v881 = vpop.f32.mrf.mxu0
  %v882 = vadd.f32 0.0, %v881
  %v883 = vpop.f32.mrf.mxu0
  %884 = vmatprep.mubr.f32.mxu0 0.0
  %885 = vmatmul.mubr.f32.gmra.mxu0 %v630
  %v886 = vpop.f32.mrf.mxu0
  %v887 = vadd.f32 0.0, %v886
  %v888 = vpop.f32.mrf.mxu0
  %889 = vmatprep.mubr.f32.mxu0 0.0
  %890 = vmatmul.mubr.f32.gmra.mxu0 %v633
  %v891 = vpop.f32.mrf.mxu0
  %v892 = vadd.f32 0.0, %v891
  %v893 = vpop.f32.mrf.mxu0
  %894 = vmatprep.mubr.f32.mxu0 0.0
  %895 = vmatmul.mubr.f32.gmra.mxu0 %v636
  %v896 = vpop.f32.mrf.mxu0
  %v897 = vadd.f32 0.0, %v896
  %v898 = vpop.f32.mrf.mxu0
  %899 = vmatprep.mubr.f32.mxu0 0.0
  %900 = vmatmul.mubr.f32.gmra.mxu0 %v639
  %v901 = vpop.f32.mrf.mxu0
  %v902 = vadd.f32 0.0, %v901
  %v903 = vpop.f32.mrf.mxu0
  %904 = vmatprep.mubr.f32.mxu0 0.0
  %905 = vmatmul.mubr.f32.gmra.mxu0 %v642
  %v906 = vpop.f32.mrf.mxu0
  %v907 = vadd.f32 0.0, %v906
  %v908 = vpop.f32.mrf.mxu0
  %909 = vmatprep.mubr.f32.mxu0 0.0
  %910 = vmatmul.mubr.f32.gmra.mxu0 %v645
  %v911 = vpop.f32.mrf.mxu0
  %v912 = vadd.f32 0.0, %v911
  %v913 = vpop.f32.mrf.mxu0
  %914 = vmatprep.mubr.f32.mxu0 0.0
  %915 = vmatmul.mubr.f32.gmra.mxu0 %v648
  %v916 = vpop.f32.mrf.mxu0
  %v917 = vadd.f32 0.0, %v916
  %v918 = vpop.f32.mrf.mxu0
  %919 = vmatprep.mubr.f32.mxu0 0.0
  %920 = vmatmul.mubr.f32.gmra.mxu0 %v651
  %v921 = vpop.f32.mrf.mxu0
  %v922 = vadd.f32 0.0, %v921
  %v923 = vpop.f32.mrf.mxu0
  %924 = vmatprep.mubr.f32.mxu0 0.0
  %925 = vmatmul.mubr.f32.gmra.mxu0 %v654
  %v926 = vpop.f32.mrf.mxu0
  %v927 = vadd.f32 0.0, %v926
  %v928 = vpop.f32.mrf.mxu0
  %929 = vmatprep.mubr.f32.mxu0 0.0
  %930 = vmatmul.mubr.f32.gmra.mxu0 %v657
  %v931 = vpop.f32.mrf.mxu0
  %v932 = vadd.f32 0.0, %v931
  %v933 = vpop.f32.mrf.mxu0
  %934 = vmatprep.mubr.f32.mxu0 0.0
  %935 = vmatmul.mubr.f32.gmra.mxu0 %v660
  %v936 = vpop.f32.mrf.mxu0
  %v937 = vadd.f32 0.0, %v936
  %v938 = vpop.f32.mrf.mxu0
  %939 = vmatprep.mubr.f32.mxu0 0.0
  %940 = vmatmul.mubr.f32.gmra.mxu0 %v663
  %v941 = vpop.f32.mrf.mxu0
  %v942 = vadd.f32 0.0, %v941
  %v943 = vpop.f32.mrf.mxu0
  %944 = vmatprep.mubr.f32.mxu0 0.0
  %945 = vmatmul.mubr.f32.gmra.mxu0 %v666
  %v946 = vpop.f32.mrf.mxu0
  %v947 = vadd.f32 0.0, %v946
  %v948 = vpop.f32.mrf.mxu0
  %949 = vmatprep.mubr.f32.mxu0 0.0
  %950 = vmatmul.mubr.f32.gmra.mxu0 %v669
  %v951 = vpop.f32.mrf.mxu0
  %v952 = vadd.f32 0.0, %v951
  %v953 = vpop.f32.mrf.mxu0
  %954 = vmatprep.mubr.f32.mxu0 0.0
  %955 = vmatmul.mubr.f32.gmra.mxu0 %v672
  %v956 = vpop.f32.mrf.mxu0
  %v957 = vadd.f32 0.0, %v956
  %v958 = vpop.f32.mrf.mxu0
  %959 = vmatprep.mubr.f32.mxu0 0.0
  %960 = vmatmul.mubr.f32.gmra.mxu0 %v675
  %v961 = vpop.f32.mrf.mxu0
  %v962 = vadd.f32 0.0, %v961
  %v963 = vpop.f32.mrf.mxu0
  %964 = vmatprep.mubr.f32.mxu0 0.0
  %965 = vmatmul.mubr.f32.gmra.mxu0 %v678
  %v966 = vpop.f32.mrf.mxu0
  %v967 = vadd.f32 0.0, %v966
  %v968 = vpop.f32.mrf.mxu0
  %969 = vmatprep.mubr.f32.mxu0 0.0
  %970 = vmatmul.mubr.f32.gmra.mxu0 %v681
  %v971 = vpop.f32.mrf.mxu0
  %v972 = vadd.f32 0.0, %v971
  %v973 = vpop.f32.mrf.mxu0
  %974 = vmatprep.mubr.f32.mxu0 0.0
  %975 = vmatmul.mubr.f32.gmra.mxu0 %v684
  %v976 = vpop.f32.mrf.mxu0
  %v977 = vadd.f32 0.0, %v976
  %v978 = vpop.f32.mrf.mxu0
  %979 = vmatprep.mubr.f32.mxu0 0.0
  %980 = vmatmul.mubr.f32.gmra.mxu0 %v687
  %v981 = vpop.f32.mrf.mxu0
  %v982 = vadd.f32 0.0, %v981
  %v983 = vpop.f32.mrf.mxu0
  %984 = vmatprep.mubr.f32.mxu0 0.0
  %985 = vmatmul.mubr.f32.gmra.mxu0 %v690
  %v986 = vpop.f32.mrf.mxu0
  %v987 = vadd.f32 0.0, %v986
  %v988 = vpop.f32.mrf.mxu0
  %989 = vmatprep.mubr.f32.mxu0 0.0
  %990 = vmatmul.mubr.f32.gmra.mxu0 %v693
  %v991 = vpop.f32.mrf.mxu0
  %v992 = vadd.f32 0.0, %v991
  %v993 = vpop.f32.mrf.mxu0
  %994 = vmatprep.mubr.f32.mxu0 0.0
  %995 = vmatmul.mubr.f32.gmra.mxu0 %v696
  %v996 = vpop.f32.mrf.mxu0
  %v997 = vadd.f32 0.0, %v996
  %v998 = vpop.f32.mrf.mxu0
  %999 = vmatprep.mubr.f32.mxu0 0.0
  %1000 = vmatmul.mubr.f32.gmra.mxu0 %v699
  %v1001 = vpop.f32.mrf.mxu0
  %v1002 = vadd.f32 0.0, %v1001
  %v1003 = vpop.f32.mrf.mxu0
  %1004 = vmatprep.mubr.f32.mxu0 0.0
  %1005 = vmatmul.mubr.f32.gmra.mxu0 %v702
  %v1006 = vpop.f32.mrf.mxu0
  %v1007 = vadd.f32 0.0, %v1006
  %v1008 = vpop.f32.mrf.mxu0
  %1009 = vmatprep.mubr.f32.mxu0 0.0
  %1010 = vmatmul.mubr.f32.gmra.mxu0 %v705
  %v1011 = vpop.f32.mrf.mxu0
  %v1012 = vadd.f32 0.0, %v1011
  %v1013 = vpop.f32.mrf.mxu0
  %1014 = vdwg.mxu0
  %1015 = vst.msk [vmem:[%s2] sm:$0xff] %vm109, %v325
  %1016 = vst.msk [vmem:[%s2 + $0x8] sm:$0xff] %vm109, %v330
  %1017 = vst.msk [vmem:[%s2 + $0x10] sm:$0xff] %vm109, %v335
  %1018 = vst.msk [vmem:[%s2 + $0x18] sm:$0xff] %vm109, %v340
  %1019 = vst.msk [vmem:[%s2 + $0x20] sm:$0xff] %vm109, %v345
  %1020 = vst.msk [vmem:[%s2 + $0x28] sm:$0xff] %vm109, %v350
  %1021 = vst.msk [vmem:[%s2 + $0x30] sm:$0xff] %vm109, %v355
  %1022 = vst.msk [vmem:[%s2 + $0x38] sm:$0xff] %vm109, %v360
  %1023 = vst.msk [vmem:[%s2 + $0x40] sm:$0xff] %vm109, %v365
  %1024 = vst.msk [vmem:[%s2 + $0x48] sm:$0xff] %vm109, %v370
  %1025 = vst.msk [vmem:[%s2 + $0x50] sm:$0xff] %vm109, %v375
  %1026 = vst.msk [vmem:[%s2 + $0x58] sm:$0xff] %vm109, %v380
  %1027 = vst.msk [vmem:[%s2 + $0x60] sm:$0xff] %vm109, %v385
  %1028 = vst.msk [vmem:[%s2 + $0x68] sm:$0xff] %vm109, %v390
  %1029 = vst.msk [vmem:[%s2 + $0x70] sm:$0xff] %vm109, %v395
  %1030 = vst.msk [vmem:[%s2 + $0x78] sm:$0xff] %vm109, %v400
  %1031 = vst.msk [vmem:[%s2 + $0x80] sm:$0xff] %vm109, %v405
  %1032 = vst.msk [vmem:[%s2 + $0x88] sm:$0xff] %vm109, %v410
  %1033 = vst.msk [vmem:[%s2 + $0x90] sm:$0xff] %vm109, %v415
  %1034 = vst.msk [vmem:[%s2 + $0x98] sm:$0xff] %vm109, %v420
  %1035 = vst.msk [vmem:[%s2 + $0xa0] sm:$0xff] %vm109, %v425
  %1036 = vst.msk [vmem:[%s2 + $0xa8] sm:$0xff] %vm109, %v430
  %1037 = vst.msk [vmem:[%s2 + $0xb0] sm:$0xff] %vm109, %v435
  %1038 = vst.msk [vmem:[%s2 + $0xb8] sm:$0xff] %vm109, %v440
  %1039 = vst.msk [vmem:[%s2 + $0xc0] sm:$0xff] %vm109, %v445
  %1040 = vst.msk [vmem:[%s2 + $0xc8] sm:$0xff] %vm109, %v450
  %1041 = vst.msk [vmem:[%s2 + $0xd0] sm:$0xff] %vm109, %v455
  %1042 = vst.msk [vmem:[%s2 + $0xd8] sm:$0xff] %vm109, %v460
  %1043 = vst.msk [vmem:[%s2 + $0xe0] sm:$0xff] %vm109, %v465
  %1044 = vst.msk [vmem:[%s2 + $0xe8] sm:$0xff] %vm109, %v470
  %1045 = vst.msk [vmem:[%s2 + $0xf0] sm:$0xff] %vm109, %v475
  %1046 = vst.msk [vmem:[%s2 + $0xf8] sm:$0xff] %vm109, %v480
  %1047 = vst.msk [vmem:[%s2 + $0x100] sm:$0xff] %vm109, %v485
  %1048 = vst.msk [vmem:[%s2 + $0x108] sm:$0xff] %vm109, %v490
  %1049 = vst.msk [vmem:[%s2 + $0x110] sm:$0xff] %vm109, %v495
  %1050 = vst.msk [vmem:[%s2 + $0x118] sm:$0xff] %vm109, %v500
  %1051 = vst.msk [vmem:[%s2 + $0x120] sm:$0xff] %vm109, %v505
  %1052 = vst.msk [vmem:[%s2 + $0x128] sm:$0xff] %vm109, %v510
  %1053 = vst.msk [vmem:[%s2 + $0x130] sm:$0xff] %vm109, %v515
  %1054 = vst.msk [vmem:[%s2 + $0x138] sm:$0xff] %vm109, %v520
  %1055 = vst.msk [vmem:[%s2 + $0x140] sm:$0xff] %vm109, %v525
  %1056 = vst.msk [vmem:[%s2 + $0x148] sm:$0xff] %vm109, %v530
  %1057 = vst.msk [vmem:[%s2 + $0x150] sm:$0xff] %vm109, %v535
  %1058 = vst.msk [vmem:[%s2 + $0x158] sm:$0xff] %vm109, %v540
  %1059 = vst.msk [vmem:[%s2 + $0x160] sm:$0xff] %vm109, %v545
  %1060 = vst.msk [vmem:[%s2 + $0x168] sm:$0xff] %vm109, %v550
  %1061 = vst.msk [vmem:[%s2 + $0x170] sm:$0xff] %vm109, %v555
  %1062 = vst.msk [vmem:[%s2 + $0x178] sm:$0xff] %vm109, %v560
  %1063 = vst.msk [vmem:[%s2 + $0x180] sm:$0xff] %vm109, %v777
  %1064 = vst.msk [vmem:[%s2 + $0x188] sm:$0xff] %vm109, %v782
  %1065 = vst.msk [vmem:[%s2 + $0x190] sm:$0xff] %vm109, %v787
  %1066 = vst.msk [vmem:[%s2 + $0x198] sm:$0xff] %vm109, %v792
  %1067 = vst.msk [vmem:[%s2 + $0x1a0] sm:$0xff] %vm109, %v797
  %1068 = vst.msk [vmem:[%s2 + $0x1a8] sm:$0xff] %vm109, %v802
  %1069 = vst.msk [vmem:[%s2 + $0x1b0] sm:$0xff] %vm109, %v807
  %1070 = vst.msk [vmem:[%s2 + $0x1b8] sm:$0xff] %vm109, %v812
  %1071 = vst.msk [vmem:[%s2 + $0x1c0] sm:$0xff] %vm109, %v817
  %1072 = vst.msk [vmem:[%s2 + $0x1c8] sm:$0xff] %vm109, %v822
  %1073 = vst.msk [vmem:[%s2 + $0x1d0] sm:$0xff] %vm109, %v827
  %1074 = vst.msk [vmem:[%s2 + $0x1d8] sm:$0xff] %vm109, %v832
  %1075 = vst.msk [vmem:[%s2 + $0x1e0] sm:$0xff] %vm109, %v837
  %1076 = vst.msk [vmem:[%s2 + $0x1e8] sm:$0xff] %vm109, %v842
  %1077 = vst.msk [vmem:[%s2 + $0x1f0] sm:$0xff] %vm109, %v847
  %1078 = vst.msk [vmem:[%s2 + $0x1f8] sm:$0xff] %vm109, %v852
  %1079 = vst.msk [vmem:[%s2 + $0x200] sm:$0xff] %vm109, %v857
  %1080 = vst.msk [vmem:[%s2 + $0x208] sm:$0xff] %vm109, %v862
  %1081 = vst.msk [vmem:[%s2 + $0x210] sm:$0xff] %vm109, %v867
  %1082 = vst.msk [vmem:[%s2 + $0x218] sm:$0xff] %vm109, %v872
  %1083 = vst.msk [vmem:[%s2 + $0x220] sm:$0xff] %vm109, %v877
  %1084 = vst.msk [vmem:[%s2 + $0x228] sm:$0xff] %vm109, %v882
  %1085 = vst.msk [vmem:[%s2 + $0x230] sm:$0xff] %vm109, %v887
  %1086 = vst.msk [vmem:[%s2 + $0x238] sm:$0xff] %vm109, %v892
  %1087 = vst.msk [vmem:[%s2 + $0x240] sm:$0xff] %vm109, %v897
  %1088 = vst.msk [vmem:[%s2 + $0x248] sm:$0xff] %vm109, %v902
  %1089 = vst.msk [vmem:[%s2 + $0x250] sm:$0xff] %vm109, %v907
  %1090 = vst.msk [vmem:[%s2 + $0x258] sm:$0xff] %vm109, %v912
  %1091 = vst.msk [vmem:[%s2 + $0x260] sm:$0xff] %vm109, %v917
  %1092 = vst.msk [vmem:[%s2 + $0x268] sm:$0xff] %vm109, %v922
  %1093 = vst.msk [vmem:[%s2 + $0x270] sm:$0xff] %vm109, %v927
  %1094 = vst.msk [vmem:[%s2 + $0x278] sm:$0xff] %vm109, %v932
  %1095 = vst.msk [vmem:[%s2 + $0x280] sm:$0xff] %vm109, %v937
  %1096 = vst.msk [vmem:[%s2 + $0x288] sm:$0xff] %vm109, %v942
  %1097 = vst.msk [vmem:[%s2 + $0x290] sm:$0xff] %vm109, %v947
  %1098 = vst.msk [vmem:[%s2 + $0x298] sm:$0xff] %vm109, %v952
  %1099 = vst.msk [vmem:[%s2 + $0x2a0] sm:$0xff] %vm109, %v957
  %1100 = vst.msk [vmem:[%s2 + $0x2a8] sm:$0xff] %vm109, %v962
  %1101 = vst.msk [vmem:[%s2 + $0x2b0] sm:$0xff] %vm109, %v967
  %1102 = vst.msk [vmem:[%s2 + $0x2b8] sm:$0xff] %vm109, %v972
  %1103 = vst.msk [vmem:[%s2 + $0x2c0] sm:$0xff] %vm109, %v977
  %1104 = vst.msk [vmem:[%s2 + $0x2c8] sm:$0xff] %vm109, %v982
  %1105 = vst.msk [vmem:[%s2 + $0x2d0] sm:$0xff] %vm109, %v987
  %1106 = vst.msk [vmem:[%s2 + $0x2d8] sm:$0xff] %vm109, %v992
  %1107 = vst.msk [vmem:[%s2 + $0x2e0] sm:$0xff] %vm109, %v997
  %1108 = vst.msk [vmem:[%s2 + $0x2e8] sm:$0xff] %vm109, %v1002
  %1109 = vst.msk [vmem:[%s2 + $0x2f0] sm:$0xff] %vm109, %v1007
  %1110 = vst.msk [vmem:[%s2 + $0x2f8] sm:$0xff] %vm109, %v1012
  // Predicated region
  $region10: #{corrformer_forward.65} parent=0 // pred_check
    _
  $region11: #{corrformer_forward.65} parent=0 // pred_check_branch
    %1112 = sbr.rel (0) target = $region13
  $region12: #{corrformer_forward.65} parent=0 // pred_region
    _
  $region13: #{corrformer_forward.65} parent=0 // pred_fallthru
    _
  // Predicated region
  $region14: #{corrformer_forward.65} parent=0 // pred_check
    _
  $region15: #{corrformer_forward.65} parent=0 // pred_check_branch
    %1114 = sbr.rel (0) target = $region17
  $region16: #{corrformer_forward.65} parent=0 // pred_region
    _
  $region17: #{corrformer_forward.65} parent=0 // pred_fallthru
    _

// kernel: corrformer_forward.66
$region0: #{corrformer_forward.66}
  #allocation0 [shape = 'u32[]', space=smem, size = 0x4, offset = 0x4, fixed_abs, tag = 'smem constant byte address 0x4 - core index']
  #allocation1 [shape = 'u32[144,128]{1,0:T(1,128)}', space=vmem, size = 0x12000, scoped, tag = 'internal scratch']
  %s0 = inlined_call_operand.vmem [shape: f32[4,4,192], index: 0, kind: input, shape index: {}]
  %s1 = inlined_call_operand.vmem [shape: bf16[576,192], index: 1, kind: input, shape index: {}]
  %s2 = inlined_call_operand.vmem [shape: f32[1,192], index: 2, kind: input, shape index: {}]
  %s3 = inlined_call_operand.vmem [shape: bf16[576,192], index: 3, kind: input, shape index: {}]
  %s4 = inlined_call_operand.vmem [shape: f32[1,192], index: 4, kind: input, shape index: {}]
  %s5 = inlined_call_operand.vmem [shape: f32[4,4,192], index: 5, kind: output, shape index: {}]
  %s6 = sld [smem:[#allocation0]]
  $region30: #{corrformer_forward.66} parent=0
    _
  %s8 = ssub.s32 1, %s6
  %s9 = scalar_select 0, %s8, %s6
  // Predicated region
  $region2: #{corrformer_forward.66} parent=0 // pred_check
    _
  $region3: #{corrformer_forward.66} parent=0 // pred_check_branch
    %11 = sbr.rel (0) target = $region5
  $region4: #{corrformer_forward.66} parent=0 // pred_region
    _
  $region5: #{corrformer_forward.66} parent=0 // pred_fallthru
    _
  // Predicated region
  $region6: #{corrformer_forward.66} parent=0 // pred_check
    _
  $region7: #{corrformer_forward.66} parent=0 // pred_check_branch
    %13 = sbr.rel (0) target = $region9
  $region8: #{corrformer_forward.66} parent=0 // pred_region
    _
  $region9: #{corrformer_forward.66} parent=0 // pred_fallthru
    _
  // Predicated region
  $region10: #{corrformer_forward.66} parent=0 // pred_check
    _
  $region11: #{corrformer_forward.66} parent=0 // pred_check_branch
    %15 = sbr.rel (0) target = $region13
  $region12: #{corrformer_forward.66} parent=0 // pred_region
    _
  $region13: #{corrformer_forward.66} parent=0 // pred_fallthru
    _
  // Predicated region
  $region14: #{corrformer_forward.66} parent=0 // pred_check
    _
  $region15: #{corrformer_forward.66} parent=0 // pred_check_branch
    %17 = sbr.rel (0) target = $region17
  $region16: #{corrformer_forward.66} parent=0 // pred_region
    _
  $region17: #{corrformer_forward.66} parent=0 // pred_fallthru
    _
  // Predicated region
  $region18: #{corrformer_forward.66} parent=0 // pred_check
    _
  $region19: #{corrformer_forward.66} parent=0 // pred_check_branch
    %19 = sbr.rel (0) target = $region21
  $region20: #{corrformer_forward.66} parent=0 // pred_region
    _
  $region21: #{corrformer_forward.66} parent=0 // pred_fallthru
    _
  %v21 = vld [vmem:[%s0] sm:$0xff]
  %v22 = vld [vmem:[%s0 + $0x8] sm:$0xff]
  %v23 = vld [vmem:[%s0 + $0x10] sm:$0xff]
  %v24 = vld [vmem:[%s0 + $0x18] sm:$0xff]
  %v29 = vcombine.high %v21, %v21
  %v30 = vcombine.high %v22, %v22
  %v31 = vcombine.high %v23, %v23
  %v32 = vcombine.high %v24, %v24
  %v33 = vrot.slane %v21, 6
  %v34 = vrot.slane %v29, 6
  %v35 = vrot.slane %v22, 6
  %v36 = vrot.slane %v30, 6
  %v37 = vrot.slane %v23, 6
  %v38 = vrot.slane %v31, 6
  %v39 = vrot.slane %v24, 6
  %v40 = vrot.slane %v32, 6
  %vm49 = vcmask 1041408
  %v50 = vsel %vm49, 0.0, %v33
  %v51 = vsel %vm49, 0.0, %v34
  %v52 = vsel %vm49, 0.0, %v35
  %v53 = vsel %vm49, 0.0, %v36
  %v54 = vsel %vm49, 0.0, %v37
  %v55 = vsel %vm49, 0.0, %v38
  %v56 = vsel %vm49, 0.0, %v39
  %v57 = vsel %vm49, 0.0, %v40
  %v66 = vrot.slane %v50, 1
  %v67 = vrot.slane %v51, 1
  %v68 = vrot.slane %v52, 1
  %v69 = vrot.slane %v53, 1
  %v70 = vrot.slane %v54, 1
  %v71 = vrot.slane %v55, 1
  %v72 = vrot.slane %v56, 1
  %v73 = vrot.slane %v57, 1
  %74 = vrot.lane.b32.xlu0 %v66, 64
  %v75 = vpop.permute.xlu0 %74
  %76 = vrot.lane.b32.xlu0 %v67, 64
  %v77 = vpop.permute.xlu0 %76
  %78 = vrot.lane.b32.xlu0 %v68, 64
  %v79 = vpop.permute.xlu0 %78
  %80 = vrot.lane.b32.xlu0 %v69, 64
  %v81 = vpop.permute.xlu0 %80
  %82 = vrot.lane.b32.xlu0 %v70, 64
  %v83 = vpop.permute.xlu0 %82
  %84 = vrot.lane.b32.xlu0 %v71, 64
  %v85 = vpop.permute.xlu0 %84
  %86 = vrot.lane.b32.xlu0 %v72, 64
  %v87 = vpop.permute.xlu0 %86
  %88 = vrot.lane.b32.xlu0 %v73, 64
  %v89 = vpop.permute.xlu0 %88
  %vm90 = vcmask 523264
  %v91 = vsel %vm90, %v75, %v77
  %v92 = vsel %vm90, %v79, %v81
  %v93 = vsel %vm90, %v83, %v85
  %v94 = vsel %vm90, %v87, %v89
  %v99 = vrot.slane %v50, 2
  %v100 = vrot.slane %v51, 2
  %v101 = vrot.slane %v52, 2
  %v102 = vrot.slane %v53, 2
  %v103 = vrot.slane %v54, 2
  %v104 = vrot.slane %v55, 2
  %v105 = vrot.slane %v56, 2
  %v106 = vrot.slane %v57, 2
  %v107 = vsel %vm90, %v51, %v75
  %v108 = vsel %vm90, %v53, %v79
  %v109 = vsel %vm90, %v55, %v83
  %v110 = vsel %vm90, %v57, %v87
  %v115 = vcombine.low %v50, %v107
  %v116 = vcombine.low %v91, %v99
  %v117 = vcombine.low %v52, %v108
  %v118 = vcombine.low %v92, %v101
  %v119 = vcombine.low %v54, %v109
  %v120 = vcombine.low %v93, %v103
  %v121 = vcombine.low %v56, %v110
  %v122 = vcombine.low %v94, %v105
  %v123 = vcombine.low %v115, %v117
  %v124 = vcombine.high %v115, %v117
  %v125 = vcombine.low %v116, %v118
  %v126 = vcombine.high %v116, %v118
  %v127 = vcombine.low %v100, %v102
  %v128 = vcombine.low %v119, %v121
  %v129 = vcombine.high %v119, %v121
  %v130 = vcombine.low %v120, %v122
  %v131 = vcombine.high %v120, %v122
  %v132 = vcombine.low %v104, %v106
  %v143 = vpack.c.bf16 %v128, %v123
  %v144 = vpack.c.bf16 %v129, %v124
  %v145 = vpack.c.bf16 %v130, %v125
  %v146 = vpack.c.bf16 %v131, %v126
  %v147 = vpack.c.bf16 %v132, %v127
  %v148 = vld [vmem:[%s1] sm:$0xff]
  %v149 = vld [vmem:[%s1 + $0x8] sm:$0xff]
  %v150 = vld [vmem:[%s1 + $0x10] sm:$0xff]
  %v151 = vld [vmem:[%s1 + $0x18] sm:$0xff]
  %v152 = vld [vmem:[%s1 + $0x20] sm:$0xff]
  %v153 = vld [vmem:[%s1 + $0x28] sm:$0xff]
  %v154 = vld [vmem:[%s1 + $0x30] sm:$0xff]
  %v155 = vld [vmem:[%s1 + $0x38] sm:$0xff]
  %v156 = vld [vmem:[%s1 + $0x40] sm:$0xff]
  %v157 = vld [vmem:[%s1 + $0x48] sm:$0xff]
  %v158 = vld [vmem:[%s1 + $0x50] sm:$0xff]
  %v159 = vld [vmem:[%s1 + $0x58] sm:$0xff]
  %v160 = vld [vmem:[%s1 + $0x60] sm:$0xff]
  %v161 = vld [vmem:[%s1 + $0x68] sm:$0xff]
  %v162 = vld [vmem:[%s1 + $0x70] sm:$0xff]
  %v163 = vld [vmem:[%s1 + $0x78] sm:$0xff]
  %v164 = vld [vmem:[%s1 + $0x80] sm:$0xff]
  %v165 = vld [vmem:[%s1 + $0x88] sm:$0xff]
  %v166 = vld [vmem:[%s1 + $0x90] sm:$0xff]
  %v167 = vld [vmem:[%s1 + $0x98] sm:$0xff]
  %v168 = vld [vmem:[%s1 + $0xa0] sm:$0xff]
  %v169 = vld [vmem:[%s1 + $0xa8] sm:$0xff]
  %v170 = vld [vmem:[%s1 + $0xb0] sm:$0xff]
  %v171 = vld [vmem:[%s1 + $0xb8] sm:$0xff]
  %v172 = vld [vmem:[%s1 + $0xc0] sm:$0xff]
  %v173 = vld [vmem:[%s1 + $0xc8] sm:$0xff]
  %v174 = vld [vmem:[%s1 + $0xd0] sm:$0xff]
  %v175 = vld [vmem:[%s1 + $0xd8] sm:$0xff]
  %v176 = vld [vmem:[%s1 + $0xe0] sm:$0xff]
  %v177 = vld [vmem:[%s1 + $0xe8] sm:$0xff]
  %v178 = vld [vmem:[%s1 + $0xf0] sm:$0xff]
  %v179 = vld [vmem:[%s1 + $0xf8] sm:$0xff]
  %v180 = vld [vmem:[%s1 + $0x100] sm:$0xff]
  %v181 = vld [vmem:[%s1 + $0x108] sm:$0xff]
  %v182 = vld [vmem:[%s1 + $0x110] sm:$0xff]
  %v183 = vld [vmem:[%s1 + $0x118] sm:$0xff]
  %v184 = vld [vmem:[%s1 + $0x120] sm:$0xff]
  %v185 = vld [vmem:[%s1 + $0x128] sm:$0xff]
  %v186 = vld [vmem:[%s1 + $0x130] sm:$0xff]
  %v187 = vld [vmem:[%s1 + $0x138] sm:$0xff]
  %v188 = vld [vmem:[%s1 + $0x140] sm:$0xff]
  %v189 = vld [vmem:[%s1 + $0x148] sm:$0xff]
  %v190 = vld [vmem:[%s1 + $0x150] sm:$0xff]
  %v191 = vld [vmem:[%s1 + $0x158] sm:$0xff]
  %v192 = vld [vmem:[%s1 + $0x160] sm:$0xff]
  %v193 = vld [vmem:[%s1 + $0x168] sm:$0xff]
  %v194 = vld [vmem:[%s1 + $0x170] sm:$0xff]
  %v195 = vld [vmem:[%s1 + $0x178] sm:$0xff]
  %v196 = vld [vmem:[%s1 + $0x180] sm:$0xff]
  %v197 = vld [vmem:[%s1 + $0x188] sm:$0xff]
  %v198 = vld [vmem:[%s1 + $0x190] sm:$0xff]
  %v199 = vld [vmem:[%s1 + $0x198] sm:$0xff]
  %v200 = vld [vmem:[%s1 + $0x1a0] sm:$0xff]
  %v201 = vld [vmem:[%s1 + $0x1a8] sm:$0xff]
  %v202 = vld [vmem:[%s1 + $0x1b0] sm:$0xff]
  %v203 = vld [vmem:[%s1 + $0x1b8] sm:$0xff]
  %v204 = vld [vmem:[%s1 + $0x1c0] sm:$0xff]
  %v205 = vld [vmem:[%s1 + $0x1c8] sm:$0xff]
  %v206 = vld [vmem:[%s1 + $0x1d0] sm:$0xff]
  %v207 = vld [vmem:[%s1 + $0x1d8] sm:$0xff]
  %v208 = vld [vmem:[%s1 + $0x1e0] sm:$0xff]
  %v209 = vld [vmem:[%s1 + $0x1e8] sm:$0xff]
  %v210 = vld [vmem:[%s1 + $0x1f0] sm:$0xff]
  %v211 = vld [vmem:[%s1 + $0x1f8] sm:$0xff]
  %v212 = vld [vmem:[%s1 + $0x200] sm:$0xff]
  %v213 = vld [vmem:[%s1 + $0x208] sm:$0xff]
  %v214 = vld [vmem:[%s1 + $0x210] sm:$0xff]
  %v215 = vld [vmem:[%s1 + $0x218] sm:$0xff]
  %v216 = vld [vmem:[%s1 + $0x220] sm:$0xff]
  %v217 = vld [vmem:[%s1 + $0x228] sm:$0xff]
  %v218 = vld [vmem:[%s1 + $0x230] sm:$0xff]
  %v219 = vld [vmem:[%s1 + $0x238] sm:$0xff]
  %v220 = vld [vmem:[%s2] sm:$0x3]
  %v222 = vlaneseq
  %v223 = vshrl.u32 %v222, 7
  %v224 = vsub.s32 0, %v223
  %v225 = vrot.slane %v220, %v224
  %v226 = vlaneseq
  %v227 = vshrl.u32 %v226, 7
  %v228 = vsub.s32 1, %v227
  %v229 = vrot.slane %v220, %v228
  %v304 = vunpack.c.l.b16 %v148
  %v305 = vunpack.c.h.b16 %v148
  %v306 = vunpack.c.l.b16 %v149
  %v307 = vunpack.c.h.b16 %v149
  %v308 = vunpack.c.l.b16 %v150
  %v309 = vunpack.c.h.b16 %v150
  %v310 = vunpack.c.l.b16 %v151
  %v311 = vunpack.c.h.b16 %v151
  %v312 = vunpack.c.l.b16 %v152
  %v313 = vunpack.c.h.b16 %v152
  %v314 = vunpack.c.l.b16 %v153
  %v315 = vunpack.c.h.b16 %v153
  %v316 = vunpack.c.l.b16 %v154
  %v317 = vunpack.c.h.b16 %v154
  %v318 = vunpack.c.l.b16 %v155
  %v319 = vunpack.c.h.b16 %v155
  %v320 = vunpack.c.l.b16 %v156
  %v321 = vunpack.c.h.b16 %v156
  %v322 = vunpack.c.l.b16 %v157
  %v323 = vunpack.c.h.b16 %v157
  %v324 = vunpack.c.l.b16 %v158
  %v325 = vunpack.c.h.b16 %v158
  %v326 = vunpack.c.l.b16 %v159
  %v327 = vunpack.c.h.b16 %v159
  %v328 = vunpack.c.l.b16 %v160
  %v329 = vunpack.c.h.b16 %v160
  %v330 = vunpack.c.l.b16 %v161
  %v331 = vunpack.c.h.b16 %v161
  %v332 = vunpack.c.l.b16 %v162
  %v333 = vunpack.c.h.b16 %v162
  %v334 = vunpack.c.l.b16 %v163
  %v335 = vunpack.c.h.b16 %v163
  %v336 = vunpack.c.l.b16 %v164
  %v337 = vunpack.c.h.b16 %v164
  %v338 = vunpack.c.l.b16 %v165
  %v339 = vunpack.c.h.b16 %v165
  %v340 = vunpack.c.l.b16 %v166
  %v341 = vunpack.c.h.b16 %v166
  %v342 = vunpack.c.l.b16 %v167
  %v343 = vunpack.c.h.b16 %v167
  %v344 = vunpack.c.l.b16 %v168
  %v345 = vunpack.c.h.b16 %v168
  %v346 = vunpack.c.l.b16 %v169
  %v347 = vunpack.c.h.b16 %v169
  %v348 = vunpack.c.l.b16 %v170
  %v349 = vunpack.c.h.b16 %v170
  %v350 = vunpack.c.l.b16 %v171
  %v351 = vunpack.c.h.b16 %v171
  %v352 = vunpack.c.l.b16 %v172
  %v353 = vunpack.c.h.b16 %v172
  %v354 = vunpack.c.l.b16 %v173
  %v355 = vunpack.c.h.b16 %v173
  %v356 = vunpack.c.l.b16 %v174
  %v357 = vunpack.c.h.b16 %v174
  %v358 = vunpack.c.l.b16 %v175
  %v359 = vunpack.c.h.b16 %v175
  %v360 = vunpack.c.l.b16 %v176
  %v361 = vunpack.c.h.b16 %v176
  %v362 = vunpack.c.l.b16 %v177
  %v363 = vunpack.c.h.b16 %v177
  %v364 = vunpack.c.l.b16 %v178
  %v365 = vunpack.c.h.b16 %v178
  %v366 = vunpack.c.l.b16 %v179
  %v367 = vunpack.c.h.b16 %v179
  %v368 = vunpack.c.l.b16 %v180
  %v369 = vunpack.c.h.b16 %v180
  %v370 = vunpack.c.l.b16 %v181
  %v371 = vunpack.c.h.b16 %v181
  %v372 = vunpack.c.l.b16 %v182
  %v373 = vunpack.c.h.b16 %v182
  %v374 = vunpack.c.l.b16 %v183
  %v375 = vunpack.c.h.b16 %v183
  %v376 = vunpack.c.l.b16 %v184
  %v377 = vunpack.c.h.b16 %v184
  %v378 = vunpack.c.l.b16 %v185
  %v379 = vunpack.c.h.b16 %v185
  %v380 = vunpack.c.l.b16 %v186
  %v381 = vunpack.c.h.b16 %v186
  %v382 = vunpack.c.l.b16 %v187
  %v383 = vunpack.c.h.b16 %v187
  %v384 = vunpack.c.l.b16 %v188
  %v385 = vunpack.c.h.b16 %v188
  %v386 = vunpack.c.l.b16 %v189
  %v387 = vunpack.c.h.b16 %v189
  %v388 = vunpack.c.l.b16 %v190
  %v389 = vunpack.c.h.b16 %v190
  %v390 = vunpack.c.l.b16 %v191
  %v391 = vunpack.c.h.b16 %v191
  %v392 = vunpack.c.l.b16 %v192
  %v393 = vunpack.c.h.b16 %v192
  %v394 = vunpack.c.l.b16 %v193
  %v395 = vunpack.c.h.b16 %v193
  %v396 = vunpack.c.l.b16 %v194
  %v397 = vunpack.c.h.b16 %v194
  %v398 = vunpack.c.l.b16 %v195
  %v399 = vunpack.c.h.b16 %v195
  %v400 = vunpack.c.l.b16 %v196
  %v401 = vunpack.c.h.b16 %v196
  %v402 = vunpack.c.l.b16 %v197
  %v403 = vunpack.c.h.b16 %v197
  %v404 = vunpack.c.l.b16 %v198
  %v405 = vunpack.c.h.b16 %v198
  %v406 = vunpack.c.l.b16 %v199
  %v407 = vunpack.c.h.b16 %v199
  %v408 = vunpack.c.l.b16 %v200
  %v409 = vunpack.c.h.b16 %v200
  %v410 = vunpack.c.l.b16 %v201
  %v411 = vunpack.c.h.b16 %v201
  %v412 = vunpack.c.l.b16 %v202
  %v413 = vunpack.c.h.b16 %v202
  %v414 = vunpack.c.l.b16 %v203
  %v415 = vunpack.c.h.b16 %v203
  %v416 = vunpack.c.l.b16 %v204
  %v417 = vunpack.c.h.b16 %v204
  %v418 = vunpack.c.l.b16 %v205
  %v419 = vunpack.c.h.b16 %v205
  %v420 = vunpack.c.l.b16 %v206
  %v421 = vunpack.c.h.b16 %v206
  %v422 = vunpack.c.l.b16 %v207
  %v423 = vunpack.c.h.b16 %v207
  %v424 = vunpack.c.l.b16 %v208
  %v425 = vunpack.c.h.b16 %v208
  %v426 = vunpack.c.l.b16 %v209
  %v427 = vunpack.c.h.b16 %v209
  %v428 = vunpack.c.l.b16 %v210
  %v429 = vunpack.c.h.b16 %v210
  %v430 = vunpack.c.l.b16 %v211
  %v431 = vunpack.c.h.b16 %v211
  %v432 = vunpack.c.l.b16 %v212
  %v433 = vunpack.c.h.b16 %v212
  %v434 = vunpack.c.l.b16 %v213
  %v435 = vunpack.c.h.b16 %v213
  %v436 = vunpack.c.l.b16 %v214
  %v437 = vunpack.c.h.b16 %v214
  %v438 = vunpack.c.l.b16 %v215
  %v439 = vunpack.c.h.b16 %v215
  %v440 = vunpack.c.l.b16 %v216
  %v441 = vunpack.c.h.b16 %v216
  %v442 = vunpack.c.l.b16 %v217
  %v443 = vunpack.c.h.b16 %v217
  %v444 = vunpack.c.l.b16 %v218
  %v445 = vunpack.c.h.b16 %v218
  %v446 = vunpack.c.l.b16 %v219
  %v447 = vunpack.c.h.b16 %v219
  %v448 = vpack.c.b16 %v306, %v304
  %v449 = vpack.c.b16 %v307, %v305
  %v450 = vpack.c.b16 %v310, %v308
  %v451 = vpack.c.b16 %v311, %v309
  %v452 = vpack.c.b16 %v314, %v312
  %v453 = vpack.c.b16 %v315, %v313
  %v454 = vpack.c.b16 %v318, %v316
  %v455 = vpack.c.b16 %v319, %v317
  %v456 = vpack.c.b16 %v322, %v320
  %v457 = vpack.c.b16 %v323, %v321
  %v458 = vpack.c.b16 %v326, %v324
  %v459 = vpack.c.b16 %v327, %v325
  %v460 = vpack.c.b16 %v330, %v328
  %v461 = vpack.c.b16 %v331, %v329
  %v462 = vpack.c.b16 %v334, %v332
  %v463 = vpack.c.b16 %v335, %v333
  %v464 = vpack.c.b16 %v338, %v336
  %v465 = vpack.c.b16 %v339, %v337
  %v466 = vpack.c.b16 %v342, %v340
  %v467 = vpack.c.b16 %v343, %v341
  %v468 = vpack.c.b16 %v346, %v344
  %v469 = vpack.c.b16 %v347, %v345
  %v470 = vpack.c.b16 %v350, %v348
  %v471 = vpack.c.b16 %v351, %v349
  %v472 = vpack.c.b16 %v354, %v352
  %v473 = vpack.c.b16 %v355, %v353
  %v474 = vpack.c.b16 %v358, %v356
  %v475 = vpack.c.b16 %v359, %v357
  %v476 = vpack.c.b16 %v362, %v360
  %v477 = vpack.c.b16 %v363, %v361
  %v478 = vpack.c.b16 %v366, %v364
  %v479 = vpack.c.b16 %v367, %v365
  %v480 = vpack.c.b16 %v370, %v368
  %v481 = vpack.c.b16 %v371, %v369
  %v482 = vpack.c.b16 %v374, %v372
  %v483 = vpack.c.b16 %v375, %v373
  %v484 = vpack.c.b16 %v378, %v376
  %v485 = vpack.c.b16 %v379, %v377
  %v486 = vpack.c.b16 %v382, %v380
  %v487 = vpack.c.b16 %v383, %v381
  %v488 = vpack.c.b16 %v386, %v384
  %v489 = vpack.c.b16 %v387, %v385
  %v490 = vpack.c.b16 %v390, %v388
  %v491 = vpack.c.b16 %v391, %v389
  %v492 = vpack.c.b16 %v394, %v392
  %v493 = vpack.c.b16 %v395, %v393
  %v494 = vpack.c.b16 %v398, %v396
  %v495 = vpack.c.b16 %v399, %v397
  %v496 = vpack.c.b16 %v402, %v400
  %v497 = vpack.c.b16 %v403, %v401
  %v498 = vpack.c.b16 %v406, %v404
  %v499 = vpack.c.b16 %v407, %v405
  %v500 = vpack.c.b16 %v410, %v408
  %v501 = vpack.c.b16 %v411, %v409
  %v502 = vpack.c.b16 %v414, %v412
  %v503 = vpack.c.b16 %v415, %v413
  %v504 = vpack.c.b16 %v418, %v416
  %v505 = vpack.c.b16 %v419, %v417
  %v506 = vpack.c.b16 %v422, %v420
  %v507 = vpack.c.b16 %v423, %v421
  %v508 = vpack.c.b16 %v426, %v424
  %v509 = vpack.c.b16 %v427, %v425
  %v510 = vpack.c.b16 %v430, %v428
  %v511 = vpack.c.b16 %v431, %v429
  %v512 = vpack.c.b16 %v434, %v432
  %v513 = vpack.c.b16 %v435, %v433
  %v514 = vpack.c.b16 %v438, %v436
  %v515 = vpack.c.b16 %v439, %v437
  %v516 = vpack.c.b16 %v442, %v440
  %v517 = vpack.c.b16 %v443, %v441
  %v518 = vpack.c.b16 %v446, %v444
  %v519 = vpack.c.b16 %v447, %v445
  %v593 = vsel %vm90, %v147, 0
  %595 = vmatprep.subr.bf16.mxu0 %v463
  %596 = vmatpush1.bf16.msra.mxu0 %v462
  %597 = vmatprep.subr.bf16.mxu0 %v461
  %598 = vmatpush1.bf16.msra.mxu0 %v460
  %599 = vmatprep.subr.bf16.mxu0 %v459
  %600 = vmatpush1.bf16.msra.mxu0 %v458
  %601 = vmatprep.subr.bf16.mxu0 %v457
  %602 = vmatpush1.bf16.msra.mxu0 %v456
  %603 = vmatprep.subr.bf16.mxu0 %v455
  %604 = vmatpush1.bf16.msra.mxu0 %v454
  %605 = vmatprep.subr.bf16.mxu0 %v453
  %606 = vmatpush1.bf16.msra.mxu0 %v452
  %607 = vmatprep.subr.bf16.mxu0 %v451
  %608 = vmatpush1.bf16.msra.mxu0 %v450
  %609 = vmatprep.subr.bf16.mxu0 %v449
  %610 = vmatpush1.bf16.msra.mxu0 %v448
  %611 = vmatprep.subr.bf16.mxu0 %v479
  %612 = vmatpush2.bf16.msra.mxu0 %v478
  %613 = vmatprep.subr.bf16.mxu0 %v477
  %614 = vmatpush2.bf16.msra.mxu0 %v476
  %615 = vmatprep.subr.bf16.mxu0 %v475
  %616 = vmatpush2.bf16.msra.mxu0 %v474
  %617 = vmatprep.subr.bf16.mxu0 %v473
  %618 = vmatpush2.bf16.msra.mxu0 %v472
  %619 = vmatprep.subr.bf16.mxu0 %v471
  %620 = vmatpush2.bf16.msra.mxu0 %v470
  %621 = vmatprep.subr.bf16.mxu0 %v469
  %622 = vmatpush2.bf16.msra.mxu0 %v468
  %623 = vmatprep.subr.bf16.mxu0 %v467
  %624 = vmatpush2.bf16.msra.mxu0 %v466
  %625 = vmatprep.subr.bf16.mxu0 %v465
  %626 = vmatpush2.bf16.msra.mxu0 %v464
  %627 = vmatprep.mubr.bf16.mxu0 %v144
  %628 = vmatmul.mubr.bf16.gmra.mxu0 %v143
  %v629 = vpop.f32.mrf.mxu0
  %v630 = vadd.f32 %v225, %v629
  %v631 = vpop.f32.mrf.mxu0
  %v632 = vadd.f32 %v229, %v631
  %v633 = vpop.f32.mrf.mxu0
  %v634 = vadd.f32 %v225, %v633
  %v635 = vpop.f32.mrf.mxu0
  %v636 = vadd.f32 %v229, %v635
  %637 = vdwg.mxu0
  %638 = vmatprep.subr.bf16.mxu0 %v495
  %639 = vmatpush1.bf16.msra.mxu0 %v494
  %640 = vmatprep.subr.bf16.mxu0 %v493
  %641 = vmatpush1.bf16.msra.mxu0 %v492
  %642 = vmatprep.subr.bf16.mxu0 %v491
  %643 = vmatpush1.bf16.msra.mxu0 %v490
  %644 = vmatprep.subr.bf16.mxu0 %v489
  %645 = vmatpush1.bf16.msra.mxu0 %v488
  %646 = vmatprep.subr.bf16.mxu0 %v487
  %647 = vmatpush1.bf16.msra.mxu0 %v486
  %648 = vmatprep.subr.bf16.mxu0 %v485
  %649 = vmatpush1.bf16.msra.mxu0 %v484
  %650 = vmatprep.subr.bf16.mxu0 %v483
  %651 = vmatpush1.bf16.msra.mxu0 %v482
  %652 = vmatprep.subr.bf16.mxu0 %v481
  %653 = vmatpush1.bf16.msra.mxu0 %v480
  %654 = vmatprep.subr.bf16.mxu0 %v511
  %655 = vmatpush2.bf16.msra.mxu0 %v510
  %656 = vmatprep.subr.bf16.mxu0 %v509
  %657 = vmatpush2.bf16.msra.mxu0 %v508
  %658 = vmatprep.subr.bf16.mxu0 %v507
  %659 = vmatpush2.bf16.msra.mxu0 %v506
  %660 = vmatprep.subr.bf16.mxu0 %v505
  %661 = vmatpush2.bf16.msra.mxu0 %v504
  %662 = vmatprep.subr.bf16.mxu0 %v503
  %663 = vmatpush2.bf16.msra.mxu0 %v502
  %664 = vmatprep.subr.bf16.mxu0 %v501
  %665 = vmatpush2.bf16.msra.mxu0 %v500
  %666 = vmatprep.subr.bf16.mxu0 %v499
  %667 = vmatpush2.bf16.msra.mxu0 %v498
  %668 = vmatprep.subr.bf16.mxu0 %v497
  %669 = vmatpush2.bf16.msra.mxu0 %v496
  %670 = vmatprep.mubr.bf16.mxu0 %v146
  %671 = vmatmul.mubr.bf16.gmra.mxu0 %v145
  %v672 = vpop.f32.mrf.mxu0
  %v673 = vadd.f32 %v630, %v672
  %v674 = vpop.f32.mrf.mxu0
  %v675 = vadd.f32 %v632, %v674
  %v676 = vpop.f32.mrf.mxu0
  %v677 = vadd.f32 %v634, %v676
  %v678 = vpop.f32.mrf.mxu0
  %v679 = vadd.f32 %v636, %v678
  %680 = vdwg.mxu0
  %681 = vmatprep.subr.bf16.mxu0 0
  %682 = vmatpush1.bf16.msra.mxu0 0
  %683 = vmatprep.subr.bf16.mxu0 0
  %684 = vmatpush1.bf16.msra.mxu0 0
  %685 = vmatprep.subr.bf16.mxu0 0
  %686 = vmatpush1.bf16.msra.mxu0 0
  %687 = vmatprep.subr.bf16.mxu0 0
  %688 = vmatpush1.bf16.msra.mxu0 0
  %689 = vmatprep.subr.bf16.mxu0 %v519
  %690 = vmatpush1.bf16.msra.mxu0 %v518
  %691 = vmatprep.subr.bf16.mxu0 %v517
  %692 = vmatpush1.bf16.msra.mxu0 %v516
  %693 = vmatprep.subr.bf16.mxu0 %v515
  %694 = vmatpush1.bf16.msra.mxu0 %v514
  %695 = vmatprep.subr.bf16.mxu0 %v513
  %696 = vmatpush1.bf16.msra.mxu0 %v512
  %697 = vmatprep.subr.bf16.mxu0 0
  %698 = vmatpush2.bf16.msra.mxu0 0
  %699 = vmatprep.subr.bf16.mxu0 0
  %700 = vmatpush2.bf16.msra.mxu0 0
  %701 = vmatprep.subr.bf16.mxu0 0
  %702 = vmatpush2.bf16.msra.mxu0 0
  %703 = vmatprep.subr.bf16.mxu0 0
  %704 = vmatpush2.bf16.msra.mxu0 0
  %705 = vmatprep.subr.bf16.mxu0 0
  %706 = vmatpush2.bf16.msra.mxu0 0
  %707 = vmatprep.subr.bf16.mxu0 0
  %708 = vmatpush2.bf16.msra.mxu0 0
  %709 = vmatprep.subr.bf16.mxu0 0
  %710 = vmatpush2.bf16.msra.mxu0 0
  %711 = vmatprep.subr.bf16.mxu0 0
  %712 = vmatpush2.bf16.msra.mxu0 0
  %713 = vmatprep.mubr.bf16.mxu0 0
  %714 = vmatmul.mubr.bf16.gmra.mxu0 %v593
  %v715 = vpop.f32.mrf.mxu0
  %v716 = vadd.f32 %v673, %v715
  %v717 = vpop.f32.mrf.mxu0
  %v718 = vadd.f32 %v675, %v717
  %v719 = vpop.f32.mrf.mxu0
  %v720 = vadd.f32 %v677, %v719
  %v721 = vpop.f32.mrf.mxu0
  %v722 = vadd.f32 %v679, %v721
  %723 = vdwg.mxu0
  %v724 = vmax.f32 %v716, 0.0
  %v725 = vmax.f32 %v718, 0.0
  %v726 = vmax.f32 %v720, 0.0
  %v727 = vmax.f32 %v722, 0.0
  %v732 = vcombine.low %v724, %v725
  %v733 = vcombine.high %v724, %v725
  %v734 = vcombine.low %v726, %v727
  %v735 = vcombine.high %v726, %v727
  %v736 = vcombine.high %v732, %v732
  %v737 = vcombine.high %v733, %v733
  %v738 = vcombine.high %v734, %v734
  %v739 = vcombine.high %v735, %v735
  %v740 = vrot.slane %v732, 6
  %v741 = vrot.slane %v736, 6
  %v742 = vrot.slane %v733, 6
  %v743 = vrot.slane %v737, 6
  %v744 = vrot.slane %v734, 6
  %v745 = vrot.slane %v738, 6
  %v746 = vrot.slane %v735, 6
  %v747 = vrot.slane %v739, 6
  %v756 = vsel %vm49, 0.0, %v740
  %v757 = vsel %vm49, 0.0, %v741
  %v758 = vsel %vm49, 0.0, %v742
  %v759 = vsel %vm49, 0.0, %v743
  %v760 = vsel %vm49, 0.0, %v744
  %v761 = vsel %vm49, 0.0, %v745
  %v762 = vsel %vm49, 0.0, %v746
  %v763 = vsel %vm49, 0.0, %v747
  %v772 = vrot.slane %v756, 1
  %v773 = vrot.slane %v757, 1
  %v774 = vrot.slane %v758, 1
  %v775 = vrot.slane %v759, 1
  %v776 = vrot.slane %v760, 1
  %v777 = vrot.slane %v761, 1
  %v778 = vrot.slane %v762, 1
  %v779 = vrot.slane %v763, 1
  %780 = vrot.lane.b32.xlu0 %v772, 64
  %v781 = vpop.permute.xlu0 %780
  %782 = vrot.lane.b32.xlu0 %v773, 64
  %v783 = vpop.permute.xlu0 %782
  %784 = vrot.lane.b32.xlu0 %v774, 64
  %v785 = vpop.permute.xlu0 %784
  %786 = vrot.lane.b32.xlu0 %v775, 64
  %v787 = vpop.permute.xlu0 %786
  %788 = vrot.lane.b32.xlu0 %v776, 64
  %v789 = vpop.permute.xlu0 %788
  %790 = vrot.lane.b32.xlu0 %v777, 64
  %v791 = vpop.permute.xlu0 %790
  %792 = vrot.lane.b32.xlu0 %v778, 64
  %v793 = vpop.permute.xlu0 %792
  %794 = vrot.lane.b32.xlu0 %v779, 64
  %v795 = vpop.permute.xlu0 %794
  %v796 = vsel %vm90, %v781, %v783
  %v797 = vsel %vm90, %v785, %v787
  %v798 = vsel %vm90, %v789, %v791
  %v799 = vsel %vm90, %v793, %v795
  %v804 = vrot.slane %v756, 2
  %v805 = vrot.slane %v757, 2
  %v806 = vrot.slane %v758, 2
  %v807 = vrot.slane %v759, 2
  %v808 = vrot.slane %v760, 2
  %v809 = vrot.slane %v761, 2
  %v810 = vrot.slane %v762, 2
  %v811 = vrot.slane %v763, 2
  %v812 = vsel %vm90, %v757, %v781
  %v813 = vsel %vm90, %v759, %v785
  %v814 = vsel %vm90, %v761, %v789
  %v815 = vsel %vm90, %v763, %v793
  %v820 = vcombine.low %v756, %v812
  %v821 = vcombine.low %v796, %v804
  %v822 = vcombine.low %v758, %v813
  %v823 = vcombine.low %v797, %v806
  %v824 = vcombine.low %v760, %v814
  %v825 = vcombine.low %v798, %v808
  %v826 = vcombine.low %v762, %v815
  %v827 = vcombine.low %v799, %v810
  %v828 = vcombine.low %v820, %v822
  %v829 = vcombine.high %v820, %v822
  %v830 = vcombine.low %v821, %v823
  %v831 = vcombine.high %v821, %v823
  %v832 = vcombine.low %v805, %v807
  %v833 = vcombine.low %v824, %v826
  %v834 = vcombine.high %v824, %v826
  %v835 = vcombine.low %v825, %v827
  %v836 = vcombine.high %v825, %v827
  %v837 = vcombine.low %v809, %v811
  %v848 = vpack.c.bf16 %v833, %v828
  %v849 = vpack.c.bf16 %v834, %v829
  %v850 = vpack.c.bf16 %v835, %v830
  %v851 = vpack.c.bf16 %v836, %v831
  %v852 = vpack.c.bf16 %v837, %v832
  %v853 = vld [vmem:[%s3] sm:$0xff]
  %v854 = vld [vmem:[%s3 + $0x8] sm:$0xff]
  %v855 = vld [vmem:[%s3 + $0x10] sm:$0xff]
  %v856 = vld [vmem:[%s3 + $0x18] sm:$0xff]
  %v857 = vld [vmem:[%s3 + $0x20] sm:$0xff]
  %v858 = vld [vmem:[%s3 + $0x28] sm:$0xff]
  %v859 = vld [vmem:[%s3 + $0x30] sm:$0xff]
  %v860 = vld [vmem:[%s3 + $0x38] sm:$0xff]
  %v861 = vld [vmem:[%s3 + $0x40] sm:$0xff]
  %v862 = vld [vmem:[%s3 + $0x48] sm:$0xff]
  %v863 = vld [vmem:[%s3 + $0x50] sm:$0xff]
  %v864 = vld [vmem:[%s3 + $0x58] sm:$0xff]
  %v865 = vld [vmem:[%s3 + $0x60] sm:$0xff]
  %v866 = vld [vmem:[%s3 + $0x68] sm:$0xff]
  %v867 = vld [vmem:[%s3 + $0x70] sm:$0xff]
  %v868 = vld [vmem:[%s3 + $0x78] sm:$0xff]
  %v869 = vld [vmem:[%s3 + $0x80] sm:$0xff]
  %v870 = vld [vmem:[%s3 + $0x88] sm:$0xff]
  %v871 = vld [vmem:[%s3 + $0x90] sm:$0xff]
  %v872 = vld [vmem:[%s3 + $0x98] sm:$0xff]
  %v873 = vld [vmem:[%s3 + $0xa0] sm:$0xff]
  %v874 = vld [vmem:[%s3 + $0xa8] sm:$0xff]
  %v875 = vld [vmem:[%s3 + $0xb0] sm:$0xff]
  %v876 = vld [vmem:[%s3 + $0xb8] sm:$0xff]
  %v877 = vld [vmem:[%s3 + $0xc0] sm:$0xff]
  %v878 = vld [vmem:[%s3 + $0xc8] sm:$0xff]
  %v879 = vld [vmem:[%s3 + $0xd0] sm:$0xff]
  %v880 = vld [vmem:[%s3 + $0xd8] sm:$0xff]
  %v881 = vld [vmem:[%s3 + $0xe0] sm:$0xff]
  %v882 = vld [vmem:[%s3 + $0xe8] sm:$0xff]
  %v883 = vld [vmem:[%s3 + $0xf0] sm:$0xff]
  %v884 = vld [vmem:[%s3 + $0xf8] sm:$0xff]
  %v885 = vld [vmem:[%s3 + $0x100] sm:$0xff]
  %v886 = vld [vmem:[%s3 + $0x108] sm:$0xff]
  %v887 = vld [vmem:[%s3 + $0x110] sm:$0xff]
  %v888 = vld [vmem:[%s3 + $0x118] sm:$0xff]
  %v889 = vld [vmem:[%s3 + $0x120] sm:$0xff]
  %v890 = vld [vmem:[%s3 + $0x128] sm:$0xff]
  %v891 = vld [vmem:[%s3 + $0x130] sm:$0xff]
  %v892 = vld [vmem:[%s3 + $0x138] sm:$0xff]
  %v893 = vld [vmem:[%s3 + $0x140] sm:$0xff]
  %v894 = vld [vmem:[%s3 + $0x148] sm:$0xff]
  %v895 = vld [vmem:[%s3 + $0x150] sm:$0xff]
  %v896 = vld [vmem:[%s3 + $0x158] sm:$0xff]
  %v897 = vld [vmem:[%s3 + $0x160] sm:$0xff]
  %v898 = vld [vmem:[%s3 + $0x168] sm:$0xff]
  %v899 = vld [vmem:[%s3 + $0x170] sm:$0xff]
  %v900 = vld [vmem:[%s3 + $0x178] sm:$0xff]
  %v901 = vld [vmem:[%s3 + $0x180] sm:$0xff]
  %v902 = vld [vmem:[%s3 + $0x188] sm:$0xff]
  %v903 = vld [vmem:[%s3 + $0x190] sm:$0xff]
  %v904 = vld [vmem:[%s3 + $0x198] sm:$0xff]
  %v905 = vld [vmem:[%s3 + $0x1a0] sm:$0xff]
  %v906 = vld [vmem:[%s3 + $0x1a8] sm:$0xff]
  %v907 = vld [vmem:[%s3 + $0x1b0] sm:$0xff]
  %v908 = vld [vmem:[%s3 + $0x1b8] sm:$0xff]
  %v909 = vld [vmem:[%s3 + $0x1c0] sm:$0xff]
  %v910 = vld [vmem:[%s3 + $0x1c8] sm:$0xff]
  %v911 = vld [vmem:[%s3 + $0x1d0] sm:$0xff]
  %v912 = vld [vmem:[%s3 + $0x1d8] sm:$0xff]
  %v913 = vld [vmem:[%s3 + $0x1e0] sm:$0xff]
  %v914 = vld [vmem:[%s3 + $0x1e8] sm:$0xff]
  %v915 = vld [vmem:[%s3 + $0x1f0] sm:$0xff]
  %v916 = vld [vmem:[%s3 + $0x1f8] sm:$0xff]
  %v917 = vld [vmem:[%s3 + $0x200] sm:$0xff]
  %v918 = vld [vmem:[%s3 + $0x208] sm:$0xff]
  %v919 = vld [vmem:[%s3 + $0x210] sm:$0xff]
  %v920 = vld [vmem:[%s3 + $0x218] sm:$0xff]
  %v921 = vld [vmem:[%s3 + $0x220] sm:$0xff]
  %v922 = vld [vmem:[%s3 + $0x228] sm:$0xff]
  %v923 = vld [vmem:[%s3 + $0x230] sm:$0xff]
  %v924 = vld [vmem:[%s3 + $0x238] sm:$0xff]
  %v925 = vld [vmem:[%s4] sm:$0x3]
  %v927 = vlaneseq
  %v928 = vshrl.u32 %v927, 7
  %v929 = vsub.s32 0, %v928
  %v930 = vrot.slane %v925, %v929
  %v931 = vlaneseq
  %v932 = vshrl.u32 %v931, 7
  %v933 = vsub.s32 1, %v932
  %v934 = vrot.slane %v925, %v933
  %v1009 = vunpack.c.l.b16 %v853
  %v1010 = vunpack.c.h.b16 %v853
  %v1011 = vunpack.c.l.b16 %v854
  %v1012 = vunpack.c.h.b16 %v854
  %v1013 = vunpack.c.l.b16 %v855
  %v1014 = vunpack.c.h.b16 %v855
  %v1015 = vunpack.c.l.b16 %v856
  %v1016 = vunpack.c.h.b16 %v856
  %v1017 = vunpack.c.l.b16 %v857
  %v1018 = vunpack.c.h.b16 %v857
  %v1019 = vunpack.c.l.b16 %v858
  %v1020 = vunpack.c.h.b16 %v858
  %v1021 = vunpack.c.l.b16 %v859
  %v1022 = vunpack.c.h.b16 %v859
  %v1023 = vunpack.c.l.b16 %v860
  %v1024 = vunpack.c.h.b16 %v860
  %v1025 = vunpack.c.l.b16 %v861
  %v1026 = vunpack.c.h.b16 %v861
  %v1027 = vunpack.c.l.b16 %v862
  %v1028 = vunpack.c.h.b16 %v862
  %v1029 = vunpack.c.l.b16 %v863
  %v1030 = vunpack.c.h.b16 %v863
  %v1031 = vunpack.c.l.b16 %v864
  %v1032 = vunpack.c.h.b16 %v864
  %v1033 = vunpack.c.l.b16 %v865
  %v1034 = vunpack.c.h.b16 %v865
  %v1035 = vunpack.c.l.b16 %v866
  %v1036 = vunpack.c.h.b16 %v866
  %v1037 = vunpack.c.l.b16 %v867
  %v1038 = vunpack.c.h.b16 %v867
  %v1039 = vunpack.c.l.b16 %v868
  %v1040 = vunpack.c.h.b16 %v868
  %v1041 = vunpack.c.l.b16 %v869
  %v1042 = vunpack.c.h.b16 %v869
  %v1043 = vunpack.c.l.b16 %v870
  %v1044 = vunpack.c.h.b16 %v870
  %v1045 = vunpack.c.l.b16 %v871
  %v1046 = vunpack.c.h.b16 %v871
  %v1047 = vunpack.c.l.b16 %v872
  %v1048 = vunpack.c.h.b16 %v872
  %v1049 = vunpack.c.l.b16 %v873
  %v1050 = vunpack.c.h.b16 %v873
  %v1051 = vunpack.c.l.b16 %v874
  %v1052 = vunpack.c.h.b16 %v874
  %v1053 = vunpack.c.l.b16 %v875
  %v1054 = vunpack.c.h.b16 %v875
  %v1055 = vunpack.c.l.b16 %v876
  %v1056 = vunpack.c.h.b16 %v876
  %v1057 = vunpack.c.l.b16 %v877
  %v1058 = vunpack.c.h.b16 %v877
  %v1059 = vunpack.c.l.b16 %v878
  %v1060 = vunpack.c.h.b16 %v878
  %v1061 = vunpack.c.l.b16 %v879
  %v1062 = vunpack.c.h.b16 %v879
  %v1063 = vunpack.c.l.b16 %v880
  %v1064 = vunpack.c.h.b16 %v880
  %v1065 = vunpack.c.l.b16 %v881
  %v1066 = vunpack.c.h.b16 %v881
  %v1067 = vunpack.c.l.b16 %v882
  %v1068 = vunpack.c.h.b16 %v882
  %v1069 = vunpack.c.l.b16 %v883
  %v1070 = vunpack.c.h.b16 %v883
  %v1071 = vunpack.c.l.b16 %v884
  %v1072 = vunpack.c.h.b16 %v884
  %v1073 = vunpack.c.l.b16 %v885
  %v1074 = vunpack.c.h.b16 %v885
  %v1075 = vunpack.c.l.b16 %v886
  %v1076 = vunpack.c.h.b16 %v886
  %v1077 = vunpack.c.l.b16 %v887
  %v1078 = vunpack.c.h.b16 %v887
  %v1079 = vunpack.c.l.b16 %v888
  %v1080 = vunpack.c.h.b16 %v888
  %v1081 = vunpack.c.l.b16 %v889
  %v1082 = vunpack.c.h.b16 %v889
  %v1083 = vunpack.c.l.b16 %v890
  %v1084 = vunpack.c.h.b16 %v890
  %v1085 = vunpack.c.l.b16 %v891
  %v1086 = vunpack.c.h.b16 %v891
  %v1087 = vunpack.c.l.b16 %v892
  %v1088 = vunpack.c.h.b16 %v892
  %v1089 = vunpack.c.l.b16 %v893
  %v1090 = vunpack.c.h.b16 %v893
  %v1091 = vunpack.c.l.b16 %v894
  %v1092 = vunpack.c.h.b16 %v894
  %v1093 = vunpack.c.l.b16 %v895
  %v1094 = vunpack.c.h.b16 %v895
  %v1095 = vunpack.c.l.b16 %v896
  %v1096 = vunpack.c.h.b16 %v896
  %v1097 = vunpack.c.l.b16 %v897
  %v1098 = vunpack.c.h.b16 %v897
  %v1099 = vunpack.c.l.b16 %v898
  %v1100 = vunpack.c.h.b16 %v898
  %v1101 = vunpack.c.l.b16 %v899
  %v1102 = vunpack.c.h.b16 %v899
  %v1103 = vunpack.c.l.b16 %v900
  %v1104 = vunpack.c.h.b16 %v900
  %v1105 = vunpack.c.l.b16 %v901
  %v1106 = vunpack.c.h.b16 %v901
  %v1107 = vunpack.c.l.b16 %v902
  %v1108 = vunpack.c.h.b16 %v902
  %v1109 = vunpack.c.l.b16 %v903
  %v1110 = vunpack.c.h.b16 %v903
  %v1111 = vunpack.c.l.b16 %v904
  %v1112 = vunpack.c.h.b16 %v904
  %v1113 = vunpack.c.l.b16 %v905
  %v1114 = vunpack.c.h.b16 %v905
  %v1115 = vunpack.c.l.b16 %v906
  %v1116 = vunpack.c.h.b16 %v906
  %v1117 = vunpack.c.l.b16 %v907
  %v1118 = vunpack.c.h.b16 %v907
  %v1119 = vunpack.c.l.b16 %v908
  %v1120 = vunpack.c.h.b16 %v908
  %v1121 = vunpack.c.l.b16 %v909
  %v1122 = vunpack.c.h.b16 %v909
  %v1123 = vunpack.c.l.b16 %v910
  %v1124 = vunpack.c.h.b16 %v910
  %v1125 = vunpack.c.l.b16 %v911
  %v1126 = vunpack.c.h.b16 %v911
  %v1127 = vunpack.c.l.b16 %v912
  %v1128 = vunpack.c.h.b16 %v912
  %v1129 = vunpack.c.l.b16 %v913
  %v1130 = vunpack.c.h.b16 %v913
  %v1131 = vunpack.c.l.b16 %v914
  %v1132 = vunpack.c.h.b16 %v914
  %v1133 = vunpack.c.l.b16 %v915
  %v1134 = vunpack.c.h.b16 %v915
  %v1135 = vunpack.c.l.b16 %v916
  %v1136 = vunpack.c.h.b16 %v916
  %v1137 = vunpack.c.l.b16 %v917
  %v1138 = vunpack.c.h.b16 %v917
  %v1139 = vunpack.c.l.b16 %v918
  %v1140 = vunpack.c.h.b16 %v918
  %v1141 = vunpack.c.l.b16 %v919
  %v1142 = vunpack.c.h.b16 %v919
  %v1143 = vunpack.c.l.b16 %v920
  %v1144 = vunpack.c.h.b16 %v920
  %v1145 = vunpack.c.l.b16 %v921
  %v1146 = vunpack.c.h.b16 %v921
  %v1147 = vunpack.c.l.b16 %v922
  %v1148 = vunpack.c.h.b16 %v922
  %v1149 = vunpack.c.l.b16 %v923
  %v1150 = vunpack.c.h.b16 %v923
  %v1151 = vunpack.c.l.b16 %v924
  %v1152 = vunpack.c.h.b16 %v924
  %v1153 = vpack.c.b16 %v1011, %v1009
  %v1154 = vpack.c.b16 %v1012, %v1010
  %v1155 = vpack.c.b16 %v1015, %v1013
  %v1156 = vpack.c.b16 %v1016, %v1014
  %v1157 = vpack.c.b16 %v1019, %v1017
  %v1158 = vpack.c.b16 %v1020, %v1018
  %v1159 = vpack.c.b16 %v1023, %v1021
  %v1160 = vpack.c.b16 %v1024, %v1022
  %v1161 = vpack.c.b16 %v1027, %v1025
  %v1162 = vpack.c.b16 %v1028, %v1026
  %v1163 = vpack.c.b16 %v1031, %v1029
  %v1164 = vpack.c.b16 %v1032, %v1030
  %v1165 = vpack.c.b16 %v1035, %v1033
  %v1166 = vpack.c.b16 %v1036, %v1034
  %v1167 = vpack.c.b16 %v1039, %v1037
  %v1168 = vpack.c.b16 %v1040, %v1038
  %v1169 = vpack.c.b16 %v1043, %v1041
  %v1170 = vpack.c.b16 %v1044, %v1042
  %v1171 = vpack.c.b16 %v1047, %v1045
  %v1172 = vpack.c.b16 %v1048, %v1046
  %v1173 = vpack.c.b16 %v1051, %v1049
  %v1174 = vpack.c.b16 %v1052, %v1050
  %v1175 = vpack.c.b16 %v1055, %v1053
  %v1176 = vpack.c.b16 %v1056, %v1054
  %v1177 = vpack.c.b16 %v1059, %v1057
  %v1178 = vpack.c.b16 %v1060, %v1058
  %v1179 = vpack.c.b16 %v1063, %v1061
  %v1180 = vpack.c.b16 %v1064, %v1062
  %v1181 = vpack.c.b16 %v1067, %v1065
  %v1182 = vpack.c.b16 %v1068, %v1066
  %v1183 = vpack.c.b16 %v1071, %v1069
  %v1184 = vpack.c.b16 %v1072, %v1070
  %v1185 = vpack.c.b16 %v1075, %v1073
  %v1186 = vpack.c.b16 %v1076, %v1074
  %v1187 = vpack.c.b16 %v1079, %v1077
  %v1188 = vpack.c.b16 %v1080, %v1078
  %v1189 = vpack.c.b16 %v1083, %v1081
  %v1190 = vpack.c.b16 %v1084, %v1082
  %v1191 = vpack.c.b16 %v1087, %v1085
  %v1192 = vpack.c.b16 %v1088, %v1086
  %v1193 = vpack.c.b16 %v1091, %v1089
  %v1194 = vpack.c.b16 %v1092, %v1090
  %v1195 = vpack.c.b16 %v1095, %v1093
  %v1196 = vpack.c.b16 %v1096, %v1094
  %v1197 = vpack.c.b16 %v1099, %v1097
  %v1198 = vpack.c.b16 %v1100, %v1098
  %v1199 = vpack.c.b16 %v1103, %v1101
  %v1200 = vpack.c.b16 %v1104, %v1102
  %v1201 = vpack.c.b16 %v1107, %v1105
  %v1202 = vpack.c.b16 %v1108, %v1106
  %v1203 = vpack.c.b16 %v1111, %v1109
  %v1204 = vpack.c.b16 %v1112, %v1110
  %v1205 = vpack.c.b16 %v1115, %v1113
  %v1206 = vpack.c.b16 %v1116, %v1114
  %v1207 = vpack.c.b16 %v1119, %v1117
  %v1208 = vpack.c.b16 %v1120, %v1118
  %v1209 = vpack.c.b16 %v1123, %v1121
  %v1210 = vpack.c.b16 %v1124, %v1122
  %v1211 = vpack.c.b16 %v1127, %v1125
  %v1212 = vpack.c.b16 %v1128, %v1126
  %v1213 = vpack.c.b16 %v1131, %v1129
  %v1214 = vpack.c.b16 %v1132, %v1130
  %v1215 = vpack.c.b16 %v1135, %v1133
  %v1216 = vpack.c.b16 %v1136, %v1134
  %v1217 = vpack.c.b16 %v1139, %v1137
  %v1218 = vpack.c.b16 %v1140, %v1138
  %v1219 = vpack.c.b16 %v1143, %v1141
  %v1220 = vpack.c.b16 %v1144, %v1142
  %v1221 = vpack.c.b16 %v1147, %v1145
  %v1222 = vpack.c.b16 %v1148, %v1146
  %v1223 = vpack.c.b16 %v1151, %v1149
  %v1224 = vpack.c.b16 %v1152, %v1150
  %v1298 = vsel %vm90, %v852, 0
  %1300 = vmatprep.subr.bf16.mxu0 %v1168
  %1301 = vmatpush1.bf16.msra.mxu0 %v1167
  %1302 = vmatprep.subr.bf16.mxu0 %v1166
  %1303 = vmatpush1.bf16.msra.mxu0 %v1165
  %1304 = vmatprep.subr.bf16.mxu0 %v1164
  %1305 = vmatpush1.bf16.msra.mxu0 %v1163
  %1306 = vmatprep.subr.bf16.mxu0 %v1162
  %1307 = vmatpush1.bf16.msra.mxu0 %v1161
  %1308 = vmatprep.subr.bf16.mxu0 %v1160
  %1309 = vmatpush1.bf16.msra.mxu0 %v1159
  %1310 = vmatprep.subr.bf16.mxu0 %v1158
  %1311 = vmatpush1.bf16.msra.mxu0 %v1157
  %1312 = vmatprep.subr.bf16.mxu0 %v1156
  %1313 = vmatpush1.bf16.msra.mxu0 %v1155
  %1314 = vmatprep.subr.bf16.mxu0 %v1154
  %1315 = vmatpush1.bf16.msra.mxu0 %v1153
  %1316 = vmatprep.subr.bf16.mxu0 %v1184
  %1317 = vmatpush2.bf16.msra.mxu0 %v1183
  %1318 = vmatprep.subr.bf16.mxu0 %v1182
  %1319 = vmatpush2.bf16.msra.mxu0 %v1181
  %1320 = vmatprep.subr.bf16.mxu0 %v1180
  %1321 = vmatpush2.bf16.msra.mxu0 %v1179
  %1322 = vmatprep.subr.bf16.mxu0 %v1178
  %1323 = vmatpush2.bf16.msra.mxu0 %v1177
  %1324 = vmatprep.subr.bf16.mxu0 %v1176
  %1325 = vmatpush2.bf16.msra.mxu0 %v1175
  %1326 = vmatprep.subr.bf16.mxu0 %v1174
  %1327 = vmatpush2.bf16.msra.mxu0 %v1173
  %1328 = vmatprep.subr.bf16.mxu0 %v1172
  %1329 = vmatpush2.bf16.msra.mxu0 %v1171
  %1330 = vmatprep.subr.bf16.mxu0 %v1170
  %1331 = vmatpush2.bf16.msra.mxu0 %v1169
  %1332 = vmatprep.mubr.bf16.mxu0 %v849
  %1333 = vmatmul.mubr.bf16.gmra.mxu0 %v848
  %v1334 = vpop.f32.mrf.mxu0
  %v1335 = vadd.f32 %v930, %v1334
  %v1336 = vpop.f32.mrf.mxu0
  %v1337 = vadd.f32 %v934, %v1336
  %v1338 = vpop.f32.mrf.mxu0
  %v1339 = vadd.f32 %v930, %v1338
  %v1340 = vpop.f32.mrf.mxu0
  %v1341 = vadd.f32 %v934, %v1340
  %1342 = vdwg.mxu0
  %1343 = vmatprep.subr.bf16.mxu0 %v1200
  %1344 = vmatpush1.bf16.msra.mxu0 %v1199
  %1345 = vmatprep.subr.bf16.mxu0 %v1198
  %1346 = vmatpush1.bf16.msra.mxu0 %v1197
  %1347 = vmatprep.subr.bf16.mxu0 %v1196
  %1348 = vmatpush1.bf16.msra.mxu0 %v1195
  %1349 = vmatprep.subr.bf16.mxu0 %v1194
  %1350 = vmatpush1.bf16.msra.mxu0 %v1193
  %1351 = vmatprep.subr.bf16.mxu0 %v1192
  %1352 = vmatpush1.bf16.msra.mxu0 %v1191
  %1353 = vmatprep.subr.bf16.mxu0 %v1190
  %1354 = vmatpush1.bf16.msra.mxu0 %v1189
  %1355 = vmatprep.subr.bf16.mxu0 %v1188
  %1356 = vmatpush1.bf16.msra.mxu0 %v1187
  %1357 = vmatprep.subr.bf16.mxu0 %v1186
  %1358 = vmatpush1.bf16.msra.mxu0 %v1185
  %1359 = vmatprep.subr.bf16.mxu0 %v1216
  %1360 = vmatpush2.bf16.msra.mxu0 %v1215
  %1361 = vmatprep.subr.bf16.mxu0 %v1214
  %1362 = vmatpush2.bf16.msra.mxu0 %v1213
  %1363 = vmatprep.subr.bf16.mxu0 %v1212
  %1364 = vmatpush2.bf16.msra.mxu0 %v1211
  %1365 = vmatprep.subr.bf16.mxu0 %v1210
  %1366 = vmatpush2.bf16.msra.mxu0 %v1209
  %1367 = vmatprep.subr.bf16.mxu0 %v1208
  %1368 = vmatpush2.bf16.msra.mxu0 %v1207
  %1369 = vmatprep.subr.bf16.mxu0 %v1206
  %1370 = vmatpush2.bf16.msra.mxu0 %v1205
  %1371 = vmatprep.subr.bf16.mxu0 %v1204
  %1372 = vmatpush2.bf16.msra.mxu0 %v1203
  %1373 = vmatprep.subr.bf16.mxu0 %v1202
  %1374 = vmatpush2.bf16.msra.mxu0 %v1201
  %1375 = vmatprep.mubr.bf16.mxu0 %v851
  %1376 = vmatmul.mubr.bf16.gmra.mxu0 %v850
  %v1377 = vpop.f32.mrf.mxu0
  %v1378 = vadd.f32 %v1335, %v1377
  %v1379 = vpop.f32.mrf.mxu0
  %v1380 = vadd.f32 %v1337, %v1379
  %v1381 = vpop.f32.mrf.mxu0
  %v1382 = vadd.f32 %v1339, %v1381
  %v1383 = vpop.f32.mrf.mxu0
  %v1384 = vadd.f32 %v1341, %v1383
  %1385 = vdwg.mxu0
  %1386 = vmatprep.subr.bf16.mxu0 0
  %1387 = vmatpush1.bf16.msra.mxu0 0
  %1388 = vmatprep.subr.bf16.mxu0 0
  %1389 = vmatpush1.bf16.msra.mxu0 0
  %1390 = vmatprep.subr.bf16.mxu0 0
  %1391 = vmatpush1.bf16.msra.mxu0 0
  %1392 = vmatprep.subr.bf16.mxu0 0
  %1393 = vmatpush1.bf16.msra.mxu0 0
  %1394 = vmatprep.subr.bf16.mxu0 %v1224
  %1395 = vmatpush1.bf16.msra.mxu0 %v1223
  %1396 = vmatprep.subr.bf16.mxu0 %v1222
  %1397 = vmatpush1.bf16.msra.mxu0 %v1221
  %1398 = vmatprep.subr.bf16.mxu0 %v1220
  %1399 = vmatpush1.bf16.msra.mxu0 %v1219
  %1400 = vmatprep.subr.bf16.mxu0 %v1218
  %1401 = vmatpush1.bf16.msra.mxu0 %v1217
  %1402 = vmatprep.subr.bf16.mxu0 0
  %1403 = vmatpush2.bf16.msra.mxu0 0
  %1404 = vmatprep.subr.bf16.mxu0 0
  %1405 = vmatpush2.bf16.msra.mxu0 0
  %1406 = vmatprep.subr.bf16.mxu0 0
  %1407 = vmatpush2.bf16.msra.mxu0 0
  %1408 = vmatprep.subr.bf16.mxu0 0
  %1409 = vmatpush2.bf16.msra.mxu0 0
  %1410 = vmatprep.subr.bf16.mxu0 0
  %1411 = vmatpush2.bf16.msra.mxu0 0
  %1412 = vmatprep.subr.bf16.mxu0 0
  %1413 = vmatpush2.bf16.msra.mxu0 0
  %1414 = vmatprep.subr.bf16.mxu0 0
  %1415 = vmatpush2.bf16.msra.mxu0 0
  %1416 = vmatprep.subr.bf16.mxu0 0
  %1417 = vmatpush2.bf16.msra.mxu0 0
  %1418 = vmatprep.mubr.bf16.mxu0 0
  %1419 = vmatmul.mubr.bf16.gmra.mxu0 %v1298
  %v1420 = vpop.f32.mrf.mxu0
  %v1421 = vadd.f32 %v1378, %v1420
  %v1422 = vpop.f32.mrf.mxu0
  %v1423 = vadd.f32 %v1380, %v1422
  %v1424 = vpop.f32.mrf.mxu0
  %v1425 = vadd.f32 %v1382, %v1424
  %v1426 = vpop.f32.mrf.mxu0
  %v1427 = vadd.f32 %v1384, %v1426
  %1428 = vdwg.mxu0
  %v1429 = vmax.f32 %v1421, 0.0
  %v1430 = vmax.f32 %v1423, 0.0
  %v1431 = vmax.f32 %v1425, 0.0
  %v1432 = vmax.f32 %v1427, 0.0
  %v1437 = vcombine.low %v1429, %v1430
  %v1438 = vcombine.high %v1429, %v1430
  %v1439 = vcombine.low %v1431, %v1432
  %v1440 = vcombine.high %v1431, %v1432
  %v1445 = vadd.f32 %v1437, %v21
  %v1446 = vadd.f32 %v1438, %v22
  %v1447 = vadd.f32 %v1439, %v23
  %v1448 = vadd.f32 %v1440, %v24
  %v1449 = vmax.f32 %v1445, 0.0
  %v1450 = vmax.f32 %v1446, 0.0
  %v1451 = vmax.f32 %v1447, 0.0
  %v1452 = vmax.f32 %v1448, 0.0
  %vm1453 = vcmask 1043456
  %vm1454 = vcmask 523268
  %vm1455 = vmor %vm1454, %vm1453
  %1456 = vst.msk [vmem:[%s5] sm:$0xff] %vm1455, %v1449
  %1457 = vst.msk [vmem:[%s5 + $0x8] sm:$0xff] %vm1455, %v1450
  %1458 = vst.msk [vmem:[%s5 + $0x10] sm:$0xff] %vm1455, %v1451
  %1459 = vst.msk [vmem:[%s5 + $0x18] sm:$0xff] %vm1455, %v1452
  // Predicated region
  $region22: #{corrformer_forward.66} parent=0 // pred_check
    _
  $region23: #{corrformer_forward.66} parent=0 // pred_check_branch
    %1461 = sbr.rel (0) target = $region25
  $region24: #{corrformer_forward.66} parent=0 // pred_region
    _
  $region25: #{corrformer_forward.66} parent=0 // pred_fallthru
    _
  // Predicated region
  $region26: #{corrformer_forward.66} parent=0 // pred_check
    _
  $region27: #{corrformer_forward.66} parent=0 // pred_check_branch
    %1463 = sbr.rel (0) target = $region29
  $region28: #{corrformer_forward.66} parent=0 // pred_region
    _
  $region29: #{corrformer_forward.66} parent=0 // pred_fallthru
    _

// kernel: corrformer_forward.68
$region0: #{corrformer_forward.68}
  #allocation0 [shape = 'u32[]', space=smem, size = 0x4, offset = 0x4, fixed_abs, tag = 'smem constant byte address 0x4 - core index']
  #allocation1 [shape = 'u32[144,128]{1,0:T(1,128)}', space=vmem, size = 0x12000, scoped, tag = 'internal scratch']
  %s0 = inlined_call_operand.vmem [shape: f32[12,256], index: 0, kind: input, shape index: {}]
  %s1 = inlined_call_operand.vmem [shape: f32[12,256], index: 1, kind: input, shape index: {}]
  %s2 = inlined_call_operand.vmem [shape: f32[12,256], index: 2, kind: output, shape index: {0}]
  %s3 = inlined_call_operand.vmem [shape: f32[12,256], index: 3, kind: output, shape index: {1}]
  %4 = xla_tuple %s2, %s3
  %s5 = sld [smem:[#allocation0]]
  $region193: #{corrformer_forward.68} parent=0
    _
  %s7 = ssub.s32 1, %s5
  %s8 = scalar_select 0, %s7, %s5
  $region1: #{corrformer_forward.68} parent=0
    #allocation2 [shape = 'u8[16384]{0}', space=vmem, size = 0x4000, scoped, tag = 'input window, operand 0']
    #allocation3 [shape = 'u8[16384]{0}', space=vmem, size = 0x4000, scoped, tag = 'input window, operand 1']
    #allocation4 [shape = 'u8[16384]{0}', space=vmem, size = 0x4000, scoped, tag = 'output window, operand 0']
    #allocation5 [shape = 'u8[16384]{0}', space=vmem, size = 0x4000, scoped, tag = 'output window, operand 1']
    loop: start=0, step=1, limit=4
    $region2: #{corrformer_forward.68} parent=1 // loop_pre_header
      _
    $region3: #{corrformer_forward.68} parent=1 // loop_header
      %s10 = sphi 0, %s14
      %p11 = scmp.ge.s32.totalorder %s10, 4
      %s20 = sphi 0, %s22
      %s23 = sphi 0, %s20
      %s24 = sphi 0, %s23
      %s40 = sphi 0, %s24
      %s46 = sphi 0, %s48
      %s49 = sphi 0, %s46
      %s50 = sphi 0, %s49
      %s66 = sphi 0, %s50
      %s72 = sphi 0, %s74
      %s75 = sphi 0, %s72
      %s76 = sphi 0, %s75
      %s92 = sphi 0, %s76
      %s98 = sphi 0, %s100
      %s101 = sphi 0, %s98
      %s102 = sphi 0, %s101
      %s118 = sphi 0, %s102
    $region4: #{corrformer_forward.68} parent=1 // loop_header_branch
      %13 = sbr.rel (%p11) target = $region8
    $region5: #{corrformer_forward.68} parent=1 // loop_body
      %s15 = ssub.s32 %s10, 1
      %s16 = ssub.s32 %s10, 2
      %s17 = sadd.s32 %s10, 1
      %s18 = ssub.s32 %s10, %s17
      %p19 = scmp.eq.s32.totalorder %s18, 0
      %s21 = sadd.s32 %s20, 1
      %s22 = scalar_select %p19, %s20, %s21
      %p25 = pneg %p19
      %p26 = scmp.eq.s32.totalorder %s10, 1
      %p27 = por %p25, %p26
      %p28 = scmp.ne.s32.totalorder %s20, %s23
      %p29 = scmp.eq.s32.totalorder %s10, 0
      %p30 = por %p28, %p29
      %p31 = scmp.ne.s32.totalorder %s20, %s23
      %p32 = scmp.eq.s32.totalorder %s15, 1
      %p33 = por %p31, %p32
      %p34 = scmp.ne.s32.totalorder %s23, %s24
      %p35 = scmp.eq.s32.totalorder %s15, 0
      %p36 = por %p34, %p35
      %p37 = scmp.ne.s32.totalorder %s23, %s24
      %p38 = scmp.eq.s32.totalorder %s16, 1
      %p39 = por %p37, %p38
      %p41 = scmp.ne.s32.totalorder %s24, %s40
      %p42 = scmp.eq.s32.totalorder %s16, 0
      %p43 = por %p41, %p42
      %s44 = ssub.s32 %s10, %s17
      %p45 = scmp.eq.s32.totalorder %s44, 0
      %s47 = sadd.s32 %s46, 1
      %s48 = scalar_select %p45, %s46, %s47
      %p51 = pneg %p45
      %p52 = scmp.eq.s32.totalorder %s10, 1
      %p53 = por %p51, %p52
      %p54 = scmp.ne.s32.totalorder %s46, %s49
      %p55 = scmp.eq.s32.totalorder %s10, 0
      %p56 = por %p54, %p55
      %p57 = scmp.ne.s32.totalorder %s46, %s49
      %p58 = scmp.eq.s32.totalorder %s15, 1
      %p59 = por %p57, %p58
      %p60 = scmp.ne.s32.totalorder %s49, %s50
      %p61 = scmp.eq.s32.totalorder %s15, 0
      %p62 = por %p60, %p61
      %p63 = scmp.ne.s32.totalorder %s49, %s50
      %p64 = scmp.eq.s32.totalorder %s16, 1
      %p65 = por %p63, %p64
      %p67 = scmp.ne.s32.totalorder %s50, %s66
      %p68 = scmp.eq.s32.totalorder %s16, 0
      %p69 = por %p67, %p68
      %s70 = ssub.s32 %s10, %s17
      %p71 = scmp.eq.s32.totalorder %s70, 0
      %s73 = sadd.s32 %s72, 1
      %s74 = scalar_select %p71, %s72, %s73
      %p77 = pneg %p71
      %p78 = scmp.eq.s32.totalorder %s10, 1
      %p79 = por %p77, %p78
      %p80 = scmp.ne.s32.totalorder %s72, %s75
      %p81 = scmp.eq.s32.totalorder %s10, 0
      %p82 = por %p80, %p81
      %p83 = scmp.ne.s32.totalorder %s72, %s75
      %p84 = scmp.eq.s32.totalorder %s15, 1
      %p85 = por %p83, %p84
      %p86 = scmp.ne.s32.totalorder %s75, %s76
      %p87 = scmp.eq.s32.totalorder %s15, 0
      %p88 = por %p86, %p87
      %p89 = scmp.ne.s32.totalorder %s75, %s76
      %p90 = scmp.eq.s32.totalorder %s16, 1
      %p91 = por %p89, %p90
      %p93 = scmp.ne.s32.totalorder %s76, %s92
      %p94 = scmp.eq.s32.totalorder %s16, 0
      %p95 = por %p93, %p94
      %s96 = ssub.s32 %s10, %s17
      %p97 = scmp.eq.s32.totalorder %s96, 0
      %s99 = sadd.s32 %s98, 1
      %s100 = scalar_select %p97, %s98, %s99
      %p103 = pneg %p97
      %p104 = scmp.eq.s32.totalorder %s10, 1
      %p105 = por %p103, %p104
      %p106 = scmp.ne.s32.totalorder %s98, %s101
      %p107 = scmp.eq.s32.totalorder %s10, 0
      %p108 = por %p106, %p107
      %p109 = scmp.ne.s32.totalorder %s98, %s101
      %p110 = scmp.eq.s32.totalorder %s15, 1
      %p111 = por %p109, %p110
      %p112 = scmp.ne.s32.totalorder %s101, %s102
      %p113 = scmp.eq.s32.totalorder %s15, 0
      %p114 = por %p112, %p113
      %p115 = scmp.ne.s32.totalorder %s101, %s102
      %p116 = scmp.eq.s32.totalorder %s16, 1
      %p117 = por %p115, %p116
      %p119 = scmp.ne.s32.totalorder %s102, %s118
      %p120 = scmp.eq.s32.totalorder %s16, 0
      %p121 = por %p119, %p120
      %p122 = scmp.le.s32.totalorder 1, %s10
      %p123 = scmp.lt.s32.totalorder %s10, 3
      %p124 = pnand %p122, %p123
      %p125 = pneg %p124
      // Predicated region
      $region9: #{corrformer_forward.68} parent=5 // pred_check
        _
      $region10: #{corrformer_forward.68} parent=5 // pred_check_branch
        %127 = sbr.rel (%p124) target = $region12
      $region11: #{corrformer_forward.68} parent=5 // pred_region
        %s128 = ssub.s32 %s10, 1
      $region12: #{corrformer_forward.68} parent=5 // pred_fallthru
        _
      %p129 = scmp.lt.s32.totalorder %s10, 2
      // Predicated region
      $region13: #{corrformer_forward.68} parent=5 // pred_check
        %p130 = pneg %p129
      $region14: #{corrformer_forward.68} parent=5 // pred_check_branch
        %132 = sbr.rel (%p130) target = $region16
      $region15: #{corrformer_forward.68} parent=5 // pred_region
        // Predicated region
        $region17: #{corrformer_forward.68} parent=15 // pred_check
          %p133 = pneg %p30
        $region18: #{corrformer_forward.68} parent=15 // pred_check_branch
          %135 = sbr.rel (%p133) target = $region20
        $region19: #{corrformer_forward.68} parent=15 // pred_region
          %s136 = sand.u32 %s20, 1
          %s137 = sand.u32 %s20, 1
          %s138 = smul.addr %s137, 16
          %s139 = scalar_lea.vmem [#allocation2], %s138
          %s140 = smul.addr %s10, 8
          %s141 = scalar_lea.vmem %s0, %s140
          // Predicated region
          $region21: #{corrformer_forward.68} parent=19 // pred_check
            _
          $region22: #{corrformer_forward.68} parent=19 // pred_check_branch
            %143 = sbr.rel (0) target = $region24
          $region23: #{corrformer_forward.68} parent=19 // pred_region
            // Predicated region
            $region25: #{corrformer_forward.68} parent=23 // pred_check
              _
            $region26: #{corrformer_forward.68} parent=23 // pred_check_branch
              %145 = sbr.rel (0) target = $region28
            $region27: #{corrformer_forward.68} parent=23 // pred_region
              // Predicated region
              $region40: #{corrformer_forward.68} parent=27 // pred_check
                _
              $region41: #{corrformer_forward.68} parent=27 // pred_check_branch
                %163 = sbr.rel (0) target = $region43
              $region42: #{corrformer_forward.68} parent=27 // pred_region
                loop: start=0, step=1, limit=1
                $region44: #{corrformer_forward.68} parent=42 // loop_pre_header
                  _
                $region45: #{corrformer_forward.68} parent=42 // loop_header
                  %s165 = sphi 0, %s169
                  %p166 = scmp.ge.s32.totalorder %s165, 1
                  %s170 = sphi %s141, %s141
                  %s171 = sphi %s139, %s139
                $region46: #{corrformer_forward.68} parent=42 // loop_header_branch
                  %168 = sbr.rel (%p166) target = $region50
                $region47: #{corrformer_forward.68} parent=42 // loop_body
                  %v172 = vld [vmem:[%s170] sm:$0xff]
                  %173 = vst [vmem:[%s171] sm:$0xff] %v172
                  %v174 = vld [vmem:[%s170 + $0x10] sm:$0xff]
                  %175 = vst [vmem:[%s171 + $0x8] sm:$0xff] %v174
                $region48: #{corrformer_forward.68} parent=42 // loop_footer
                  %s169 = sadd.s32 1, %s165
                $region49: #{corrformer_forward.68} parent=42 // loop_footer_branch
                  %164 = sbr.rel target = $region45
                $region50: #{corrformer_forward.68} parent=42 // loop_exit
                  _
              $region43: #{corrformer_forward.68} parent=27 // pred_fallthru
                _
              // Predicated region
              $region51: #{corrformer_forward.68} parent=27 // pred_check
                _
              $region52: #{corrformer_forward.68} parent=27 // pred_check_branch
                %177 = sbr.rel target = $region54
              $region53: #{corrformer_forward.68} parent=27 // pred_region
                _
              $region54: #{corrformer_forward.68} parent=27 // pred_fallthru
                _
            $region28: #{corrformer_forward.68} parent=23 // pred_fallthru
              _
            // Predicated region
            $region29: #{corrformer_forward.68} parent=23 // pred_check
              _
            $region30: #{corrformer_forward.68} parent=23 // pred_check_branch
              %147 = sbr.rel target = $region32
            $region31: #{corrformer_forward.68} parent=23 // pred_region
              %s149 = ssub.s32 256, 1
              loop: start=0, step=1, limit=1
              $region33: #{corrformer_forward.68} parent=31 // loop_pre_header
                _
              $region34: #{corrformer_forward.68} parent=31 // loop_header
                %s151 = sphi 0, %s155
                %p152 = scmp.ge.s32.totalorder %s151, 1
                %s156 = sphi %s141, %s141
                %s157 = sphi %s139, %s139
              $region35: #{corrformer_forward.68} parent=31 // loop_header_branch
                %154 = sbr.rel (%p152) target = $region39
              $region36: #{corrformer_forward.68} parent=31 // loop_body
                %v158 = vld [vmem:[%s156] sm:%s149]
                %159 = vst [vmem:[%s157] sm:%s149] %v158
                %v160 = vld [vmem:[%s156 + $0x10] sm:%s149]
                %161 = vst [vmem:[%s157 + $0x8] sm:%s149] %v160
              $region37: #{corrformer_forward.68} parent=31 // loop_footer
                %s155 = sadd.s32 1, %s151
              $region38: #{corrformer_forward.68} parent=31 // loop_footer_branch
                %150 = sbr.rel target = $region34
              $region39: #{corrformer_forward.68} parent=31 // loop_exit
                _
            $region32: #{corrformer_forward.68} parent=23 // pred_fallthru
              _
          $region24: #{corrformer_forward.68} parent=19 // pred_fallthru
            _
          %178 = vnop
        $region20: #{corrformer_forward.68} parent=15 // pred_fallthru
          _
        // Predicated region
        $region55: #{corrformer_forward.68} parent=15 // pred_check
          %p179 = pneg %p56
        $region56: #{corrformer_forward.68} parent=15 // pred_check_branch
          %181 = sbr.rel (%p179) target = $region58
        $region57: #{corrformer_forward.68} parent=15 // pred_region
          %s182 = sand.u32 %s46, 1
          %s183 = sand.u32 %s46, 1
          %s184 = smul.addr %s183, 16
          %s185 = scalar_lea.vmem [#allocation3], %s184
          %s186 = smul.addr %s10, 8
          %s187 = scalar_lea.vmem %s1, %s186
          // Predicated region
          $region59: #{corrformer_forward.68} parent=57 // pred_check
            _
          $region60: #{corrformer_forward.68} parent=57 // pred_check_branch
            %189 = sbr.rel (0) target = $region62
          $region61: #{corrformer_forward.68} parent=57 // pred_region
            // Predicated region
            $region63: #{corrformer_forward.68} parent=61 // pred_check
              _
            $region64: #{corrformer_forward.68} parent=61 // pred_check_branch
              %191 = sbr.rel (0) target = $region66
            $region65: #{corrformer_forward.68} parent=61 // pred_region
              // Predicated region
              $region78: #{corrformer_forward.68} parent=65 // pred_check
                _
              $region79: #{corrformer_forward.68} parent=65 // pred_check_branch
                %209 = sbr.rel (0) target = $region81
              $region80: #{corrformer_forward.68} parent=65 // pred_region
                loop: start=0, step=1, limit=1
                $region82: #{corrformer_forward.68} parent=80 // loop_pre_header
                  _
                $region83: #{corrformer_forward.68} parent=80 // loop_header
                  %s211 = sphi 0, %s215
                  %p212 = scmp.ge.s32.totalorder %s211, 1
                  %s216 = sphi %s187, %s187
                  %s217 = sphi %s185, %s185
                $region84: #{corrformer_forward.68} parent=80 // loop_header_branch
                  %214 = sbr.rel (%p212) target = $region88
                $region85: #{corrformer_forward.68} parent=80 // loop_body
                  %v218 = vld [vmem:[%s216] sm:$0xff]
                  %219 = vst [vmem:[%s217] sm:$0xff] %v218
                  %v220 = vld [vmem:[%s216 + $0x10] sm:$0xff]
                  %221 = vst [vmem:[%s217 + $0x8] sm:$0xff] %v220
                $region86: #{corrformer_forward.68} parent=80 // loop_footer
                  %s215 = sadd.s32 1, %s211
                $region87: #{corrformer_forward.68} parent=80 // loop_footer_branch
                  %210 = sbr.rel target = $region83
                $region88: #{corrformer_forward.68} parent=80 // loop_exit
                  _
              $region81: #{corrformer_forward.68} parent=65 // pred_fallthru
                _
              // Predicated region
              $region89: #{corrformer_forward.68} parent=65 // pred_check
                _
              $region90: #{corrformer_forward.68} parent=65 // pred_check_branch
                %223 = sbr.rel target = $region92
              $region91: #{corrformer_forward.68} parent=65 // pred_region
                _
              $region92: #{corrformer_forward.68} parent=65 // pred_fallthru
                _
            $region66: #{corrformer_forward.68} parent=61 // pred_fallthru
              _
            // Predicated region
            $region67: #{corrformer_forward.68} parent=61 // pred_check
              _
            $region68: #{corrformer_forward.68} parent=61 // pred_check_branch
              %193 = sbr.rel target = $region70
            $region69: #{corrformer_forward.68} parent=61 // pred_region
              %s195 = ssub.s32 256, 1
              loop: start=0, step=1, limit=1
              $region71: #{corrformer_forward.68} parent=69 // loop_pre_header
                _
              $region72: #{corrformer_forward.68} parent=69 // loop_header
                %s197 = sphi 0, %s201
                %p198 = scmp.ge.s32.totalorder %s197, 1
                %s202 = sphi %s187, %s187
                %s203 = sphi %s185, %s185
              $region73: #{corrformer_forward.68} parent=69 // loop_header_branch
                %200 = sbr.rel (%p198) target = $region77
              $region74: #{corrformer_forward.68} parent=69 // loop_body
                %v204 = vld [vmem:[%s202] sm:%s195]
                %205 = vst [vmem:[%s203] sm:%s195] %v204
                %v206 = vld [vmem:[%s202 + $0x10] sm:%s195]
                %207 = vst [vmem:[%s203 + $0x8] sm:%s195] %v206
              $region75: #{corrformer_forward.68} parent=69 // loop_footer
                %s201 = sadd.s32 1, %s197
              $region76: #{corrformer_forward.68} parent=69 // loop_footer_branch
                %196 = sbr.rel target = $region72
              $region77: #{corrformer_forward.68} parent=69 // loop_exit
                _
            $region70: #{corrformer_forward.68} parent=61 // pred_fallthru
              _
          $region62: #{corrformer_forward.68} parent=57 // pred_fallthru
            _
          %224 = vnop
        $region58: #{corrformer_forward.68} parent=15 // pred_fallthru
          _
      $region16: #{corrformer_forward.68} parent=5 // pred_fallthru
        _
      %p225 = scmp.le.s32.totalorder 1, %s10
      %p226 = scmp.lt.s32.totalorder %s10, 3
      %p227 = pnand %p225, %p226
      %p228 = pneg %p227
      // Predicated region
      $region93: #{corrformer_forward.68} parent=5 // pred_check
        _
      $region94: #{corrformer_forward.68} parent=5 // pred_check_branch
        %230 = sbr.rel (%p227) target = $region96
      $region95: #{corrformer_forward.68} parent=5 // pred_region
        %s231 = ssub.s32 %s10, 1
        %s232 = sand.u32 %s23, 1
        %s233 = sand.u32 %s23, 1
        %s234 = smul.addr %s233, 16
        %s235 = scalar_lea.vmem [#allocation2], %s234
        // Predicated region
        $region97: #{corrformer_forward.68} parent=95 // pred_check
          %p236 = pneg %p36
        $region98: #{corrformer_forward.68} parent=95 // pred_check_branch
          %238 = sbr.rel (%p236) target = $region100
        $region99: #{corrformer_forward.68} parent=95 // pred_region
          _
        $region100: #{corrformer_forward.68} parent=95 // pred_fallthru
          _
        %s239 = sand.u32 %s49, 1
        %s240 = sand.u32 %s49, 1
        %s241 = smul.addr %s240, 16
        %s242 = scalar_lea.vmem [#allocation3], %s241
        // Predicated region
        $region101: #{corrformer_forward.68} parent=95 // pred_check
          %p243 = pneg %p62
        $region102: #{corrformer_forward.68} parent=95 // pred_check_branch
          %245 = sbr.rel (%p243) target = $region104
        $region103: #{corrformer_forward.68} parent=95 // pred_region
          _
        $region104: #{corrformer_forward.68} parent=95 // pred_fallthru
          _
        %s246 = sand.u32 %s23, 1
        %s247 = sand.u32 %s23, 1
        %s248 = smul.addr %s247, 16
        %s249 = scalar_lea.vmem [#allocation2], %s248
        %p250 = pneg %p36
        %p251 = pneg %p33
        %s252 = sand.u32 %s49, 1
        %s253 = sand.u32 %s49, 1
        %s254 = smul.addr %s253, 16
        %s255 = scalar_lea.vmem [#allocation3], %s254
        %p256 = pneg %p62
        %p257 = pneg %p59
        %p258 = pneg %p88
        %p259 = pneg %p85
        %s260 = sand.u32 %s75, 1
        %s261 = sand.u32 %s75, 1
        %s262 = smul.addr %s261, 16
        %s263 = scalar_lea.vmem [#allocation4], %s262
        %p264 = pneg %p114
        %p265 = pneg %p111
        %s266 = sand.u32 %s101, 1
        %s267 = sand.u32 %s101, 1
        %s268 = smul.addr %s267, 16
        %s269 = scalar_lea.vmem [#allocation5], %s268
        %v270 = vld [vmem:[%s235] sm:$0xff]
        %v271 = vld [vmem:[%s235 + $0x8] sm:$0xf]
        %v272 = vld [vmem:[%s242] sm:$0xff]
        %v273 = vld [vmem:[%s242 + $0x8] sm:$0xf]
        %v274 = vadd.f32 %v270, %v272
        %v275 = vadd.f32 %v271, %v273
        %vm278 = vcmask 1046528
        %v279 = vrot.slane %v274, 1
        %v280 = vrot.slane %v275, 1
        %v281 = vsel %vm278, %v279, %v280
        %vm284 = vcmask 1042432
        %v285 = vsel %vm284, %v280, %v275
        %vm286 = vcmask 1040384
        %v287 = vrot.slane %v274, 7
        %v288 = vrot.slane %v275, 7
        %v289 = vsel %vm286, %v287, %v288
        %v292 = vsel %vm286, %v274, %v287
        %v293 = vadd.f32 %v274, %v281
        %v294 = vadd.f32 %v275, %v285
        %v295 = vadd.f32 %v293, %v292
        %v296 = vadd.f32 %v294, %v289
        %v297 = vlaneseq
        %v298 = vshrl.u32 %v297, 7
        %v299 = vsub.s32 0, %v298
        %v300 = vrot.slane %v274, %v299
        %v301 = vlaneseq
        %v302 = vshrl.u32 %v301, 7
        %v303 = vsub.s32 3, %v302
        %v304 = vrot.slane %v275, %v303
        %vm305 = vcmask 1045504
        %v306 = vrot.slane %v274, 2
        %v307 = vrot.slane %v275, 2
        %v308 = vsel %vm305, %v306, %v307
        %vm311 = vcmask 1041408
        %v312 = vsel %vm311, %v307, %v304
        %v313 = vrot.slane %v274, 6
        %v314 = vrot.slane %v275, 6
        %v315 = vsel %vm311, %v313, %v314
        %v318 = vsel %vm311, %v300, %v313
        %v319 = vadd.f32 %v295, %v308
        %v320 = vadd.f32 %v296, %v312
        %v321 = vadd.f32 %v319, %v318
        %v322 = vadd.f32 %v320, %v315
        %v323 = vmul.f32 %v321, 0.2
        %v324 = vmul.f32 %v322, 0.2
        %325 = vst [vmem:[%s269] sm:$0xff] %v323
        %326 = vst [vmem:[%s269 + $0x8] sm:$0xf] %v324
        %v327 = vsub.f32 %v274, %v323
        %v328 = vsub.f32 %v275, %v324
        %329 = vst [vmem:[%s263] sm:$0xff] %v327
        %330 = vst [vmem:[%s263 + $0x8] sm:$0xf] %v328
        %s331 = sand.u32 %s75, 1
        %s332 = sand.u32 %s75, 1
        %s333 = smul.addr %s332, 16
        %s334 = scalar_lea.vmem [#allocation4], %s333
        %s335 = sand.u32 %s101, 1
        %s336 = sand.u32 %s101, 1
        %s337 = smul.addr %s336, 16
        %s338 = scalar_lea.vmem [#allocation5], %s337
        // Predicated region
        $region105: #{corrformer_forward.68} parent=95 // pred_check
          %p339 = pneg %p85
        $region106: #{corrformer_forward.68} parent=95 // pred_check_branch
          %341 = sbr.rel (%p339) target = $region108
        $region107: #{corrformer_forward.68} parent=95 // pred_region
          %s342 = smul.addr %s15, 8
          %s343 = scalar_lea.vmem %s2, %s342
          // Predicated region
          $region109: #{corrformer_forward.68} parent=107 // pred_check
            _
          $region110: #{corrformer_forward.68} parent=107 // pred_check_branch
            %345 = sbr.rel (0) target = $region112
          $region111: #{corrformer_forward.68} parent=107 // pred_region
            // Predicated region
            $region113: #{corrformer_forward.68} parent=111 // pred_check
              _
            $region114: #{corrformer_forward.68} parent=111 // pred_check_branch
              %347 = sbr.rel (0) target = $region116
            $region115: #{corrformer_forward.68} parent=111 // pred_region
              // Predicated region
              $region128: #{corrformer_forward.68} parent=115 // pred_check
                _
              $region129: #{corrformer_forward.68} parent=115 // pred_check_branch
                %365 = sbr.rel (0) target = $region131
              $region130: #{corrformer_forward.68} parent=115 // pred_region
                loop: start=0, step=1, limit=1
                $region132: #{corrformer_forward.68} parent=130 // loop_pre_header
                  _
                $region133: #{corrformer_forward.68} parent=130 // loop_header
                  %s367 = sphi 0, %s371
                  %p368 = scmp.ge.s32.totalorder %s367, 1
                  %s372 = sphi %s334, %s334
                  %s373 = sphi %s343, %s343
                $region134: #{corrformer_forward.68} parent=130 // loop_header_branch
                  %370 = sbr.rel (%p368) target = $region138
                $region135: #{corrformer_forward.68} parent=130 // loop_body
                  %v374 = vld [vmem:[%s372] sm:$0xff]
                  %375 = vst [vmem:[%s373] sm:$0xff] %v374
                  %v376 = vld [vmem:[%s372 + $0x8] sm:$0xff]
                  %377 = vst [vmem:[%s373 + $0x10] sm:$0xff] %v376
                $region136: #{corrformer_forward.68} parent=130 // loop_footer
                  %s371 = sadd.s32 1, %s367
                $region137: #{corrformer_forward.68} parent=130 // loop_footer_branch
                  %366 = sbr.rel target = $region133
                $region138: #{corrformer_forward.68} parent=130 // loop_exit
                  _
              $region131: #{corrformer_forward.68} parent=115 // pred_fallthru
                _
              // Predicated region
              $region139: #{corrformer_forward.68} parent=115 // pred_check
                _
              $region140: #{corrformer_forward.68} parent=115 // pred_check_branch
                %379 = sbr.rel target = $region142
              $region141: #{corrformer_forward.68} parent=115 // pred_region
                _
              $region142: #{corrformer_forward.68} parent=115 // pred_fallthru
                _
            $region116: #{corrformer_forward.68} parent=111 // pred_fallthru
              _
            // Predicated region
            $region117: #{corrformer_forward.68} parent=111 // pred_check
              _
            $region118: #{corrformer_forward.68} parent=111 // pred_check_branch
              %349 = sbr.rel target = $region120
            $region119: #{corrformer_forward.68} parent=111 // pred_region
              %s351 = ssub.s32 256, 1
              loop: start=0, step=1, limit=1
              $region121: #{corrformer_forward.68} parent=119 // loop_pre_header
                _
              $region122: #{corrformer_forward.68} parent=119 // loop_header
                %s353 = sphi 0, %s357
                %p354 = scmp.ge.s32.totalorder %s353, 1
                %s358 = sphi %s334, %s334
                %s359 = sphi %s343, %s343
              $region123: #{corrformer_forward.68} parent=119 // loop_header_branch
                %356 = sbr.rel (%p354) target = $region127
              $region124: #{corrformer_forward.68} parent=119 // loop_body
                %v360 = vld [vmem:[%s358] sm:%s351]
                %361 = vst [vmem:[%s359] sm:%s351] %v360
                %v362 = vld [vmem:[%s358 + $0x8] sm:%s351]
                %363 = vst [vmem:[%s359 + $0x10] sm:%s351] %v362
              $region125: #{corrformer_forward.68} parent=119 // loop_footer
                %s357 = sadd.s32 1, %s353
              $region126: #{corrformer_forward.68} parent=119 // loop_footer_branch
                %352 = sbr.rel target = $region122
              $region127: #{corrformer_forward.68} parent=119 // loop_exit
                _
            $region120: #{corrformer_forward.68} parent=111 // pred_fallthru
              _
          $region112: #{corrformer_forward.68} parent=107 // pred_fallthru
            _
          %380 = vnop
        $region108: #{corrformer_forward.68} parent=95 // pred_fallthru
          _
        // Predicated region
        $region143: #{corrformer_forward.68} parent=95 // pred_check
          %p381 = pneg %p111
        $region144: #{corrformer_forward.68} parent=95 // pred_check_branch
          %383 = sbr.rel (%p381) target = $region146
        $region145: #{corrformer_forward.68} parent=95 // pred_region
          %s384 = smul.addr %s15, 8
          %s385 = scalar_lea.vmem %s3, %s384
          // Predicated region
          $region147: #{corrformer_forward.68} parent=145 // pred_check
            _
          $region148: #{corrformer_forward.68} parent=145 // pred_check_branch
            %387 = sbr.rel (0) target = $region150
          $region149: #{corrformer_forward.68} parent=145 // pred_region
            // Predicated region
            $region151: #{corrformer_forward.68} parent=149 // pred_check
              _
            $region152: #{corrformer_forward.68} parent=149 // pred_check_branch
              %389 = sbr.rel (0) target = $region154
            $region153: #{corrformer_forward.68} parent=149 // pred_region
              // Predicated region
              $region166: #{corrformer_forward.68} parent=153 // pred_check
                _
              $region167: #{corrformer_forward.68} parent=153 // pred_check_branch
                %407 = sbr.rel (0) target = $region169
              $region168: #{corrformer_forward.68} parent=153 // pred_region
                loop: start=0, step=1, limit=1
                $region170: #{corrformer_forward.68} parent=168 // loop_pre_header
                  _
                $region171: #{corrformer_forward.68} parent=168 // loop_header
                  %s409 = sphi 0, %s413
                  %p410 = scmp.ge.s32.totalorder %s409, 1
                  %s414 = sphi %s338, %s338
                  %s415 = sphi %s385, %s385
                $region172: #{corrformer_forward.68} parent=168 // loop_header_branch
                  %412 = sbr.rel (%p410) target = $region176
                $region173: #{corrformer_forward.68} parent=168 // loop_body
                  %v416 = vld [vmem:[%s414] sm:$0xff]
                  %417 = vst [vmem:[%s415] sm:$0xff] %v416
                  %v418 = vld [vmem:[%s414 + $0x8] sm:$0xff]
                  %419 = vst [vmem:[%s415 + $0x10] sm:$0xff] %v418
                $region174: #{corrformer_forward.68} parent=168 // loop_footer
                  %s413 = sadd.s32 1, %s409
                $region175: #{corrformer_forward.68} parent=168 // loop_footer_branch
                  %408 = sbr.rel target = $region171
                $region176: #{corrformer_forward.68} parent=168 // loop_exit
                  _
              $region169: #{corrformer_forward.68} parent=153 // pred_fallthru
                _
              // Predicated region
              $region177: #{corrformer_forward.68} parent=153 // pred_check
                _
              $region178: #{corrformer_forward.68} parent=153 // pred_check_branch
                %421 = sbr.rel target = $region180
              $region179: #{corrformer_forward.68} parent=153 // pred_region
                _
              $region180: #{corrformer_forward.68} parent=153 // pred_fallthru
                _
            $region154: #{corrformer_forward.68} parent=149 // pred_fallthru
              _
            // Predicated region
            $region155: #{corrformer_forward.68} parent=149 // pred_check
              _
            $region156: #{corrformer_forward.68} parent=149 // pred_check_branch
              %391 = sbr.rel target = $region158
            $region157: #{corrformer_forward.68} parent=149 // pred_region
              %s393 = ssub.s32 256, 1
              loop: start=0, step=1, limit=1
              $region159: #{corrformer_forward.68} parent=157 // loop_pre_header
                _
              $region160: #{corrformer_forward.68} parent=157 // loop_header
                %s395 = sphi 0, %s399
                %p396 = scmp.ge.s32.totalorder %s395, 1
                %s400 = sphi %s338, %s338
                %s401 = sphi %s385, %s385
              $region161: #{corrformer_forward.68} parent=157 // loop_header_branch
                %398 = sbr.rel (%p396) target = $region165
              $region162: #{corrformer_forward.68} parent=157 // loop_body
                %v402 = vld [vmem:[%s400] sm:%s393]
                %403 = vst [vmem:[%s401] sm:%s393] %v402
                %v404 = vld [vmem:[%s400 + $0x8] sm:%s393]
                %405 = vst [vmem:[%s401 + $0x10] sm:%s393] %v404
              $region163: #{corrformer_forward.68} parent=157 // loop_footer
                %s399 = sadd.s32 1, %s395
              $region164: #{corrformer_forward.68} parent=157 // loop_footer_branch
                %394 = sbr.rel target = $region160
              $region165: #{corrformer_forward.68} parent=157 // loop_exit
                _
            $region158: #{corrformer_forward.68} parent=149 // pred_fallthru
              _
          $region150: #{corrformer_forward.68} parent=145 // pred_fallthru
            _
          %422 = vnop
        $region146: #{corrformer_forward.68} parent=95 // pred_fallthru
          _
      $region96: #{corrformer_forward.68} parent=5 // pred_fallthru
        _
      %p423 = scmp.le.s32.totalorder 2, %s10
      // Predicated region
      $region181: #{corrformer_forward.68} parent=5 // pred_check
        %p424 = pneg %p423
      $region182: #{corrformer_forward.68} parent=5 // pred_check_branch
        %426 = sbr.rel (%p424) target = $region184
      $region183: #{corrformer_forward.68} parent=5 // pred_region
        %s427 = ssub.s32 %s10, 2
        // Predicated region
        $region185: #{corrformer_forward.68} parent=183 // pred_check
          %p428 = pneg %p91
        $region186: #{corrformer_forward.68} parent=183 // pred_check_branch
          %430 = sbr.rel (%p428) target = $region188
        $region187: #{corrformer_forward.68} parent=183 // pred_region
          %s431 = sand.u32 %s76, 1
          %s432 = sand.u32 %s76, 1
          %s433 = smul.addr %s432, 16
          %s434 = scalar_lea.vmem [#allocation4], %s433
        $region188: #{corrformer_forward.68} parent=183 // pred_fallthru
          _
        // Predicated region
        $region189: #{corrformer_forward.68} parent=183 // pred_check
          %p435 = pneg %p117
        $region190: #{corrformer_forward.68} parent=183 // pred_check_branch
          %437 = sbr.rel (%p435) target = $region192
        $region191: #{corrformer_forward.68} parent=183 // pred_region
          %s438 = sand.u32 %s102, 1
          %s439 = sand.u32 %s102, 1
          %s440 = smul.addr %s439, 16
          %s441 = scalar_lea.vmem [#allocation5], %s440
        $region192: #{corrformer_forward.68} parent=183 // pred_fallthru
          _
      $region184: #{corrformer_forward.68} parent=5 // pred_fallthru
        _
    $region6: #{corrformer_forward.68} parent=1 // loop_footer
      %s14 = sadd.s32 1, %s10
    $region7: #{corrformer_forward.68} parent=1 // loop_footer_branch
      %9 = sbr.rel target = $region3
    $region8: #{corrformer_forward.68} parent=1 // loop_exit
      _

// kernel: corrformer_forward.54
$region0: #{corrformer_forward.54}
  #allocation0 [shape = 'u32[]', space=smem, size = 0x4, offset = 0x4, fixed_abs, tag = 'smem constant byte address 0x4 - core index']
  #allocation1 [shape = 'u32[144,128]{1,0:T(1,128)}', space=vmem, size = 0x12000, scoped, tag = 'internal scratch']
  %s0 = inlined_call_operand.vmem [shape: f32[12,256], index: 0, kind: input, shape index: {}]
  %s1 = inlined_call_operand.vmem [shape: f32[12,256], index: 1, kind: input, shape index: {}]
  %s2 = inlined_call_operand.vmem [shape: f32[12,256], index: 2, kind: output, shape index: {0}]
  %s3 = inlined_call_operand.hbm [shape: f32[12,256], index: 3, kind: output, shape index: {1}]
  %4 = xla_tuple %s2, %s3
  %s5 = sld [smem:[#allocation0]]
  $region159: #{corrformer_forward.54} parent=0
    _
  %s7 = ssub.s32 1, %s5
  %s8 = scalar_select 0, %s7, %s5
  $region1: #{corrformer_forward.54} parent=0
    #allocation2 [shape = 'u8[16384]{0}', space=vmem, size = 0x4000, scoped, tag = 'input window, operand 0']
    #allocation3 [shape = 'u8[16384]{0}', space=vmem, size = 0x4000, scoped, tag = 'input window, operand 1']
    #allocation4 [shape = 'u8[16384]{0}', space=vmem, size = 0x4000, scoped, tag = 'output window, operand 0']
    #allocation5 [shape = 'u8[16384]{0}', space=vmem, size = 0x4000, scoped, tag = 'output window, operand 1']
    #allocation6 [shape = 's32[2]{0}', space=sflag, size = 0x8, scoped, tag = 'scoped memory for corrformer_forward.54']
    %9 = vsyncpa [#allocation6], 0
    %s10 = scalar_lea.sflag [#allocation6], 1
    %11 = vsyncpa %s10, 0
    loop: start=0, step=1, limit=4
    $region2: #{corrformer_forward.54} parent=1 // loop_pre_header
      _
    $region3: #{corrformer_forward.54} parent=1 // loop_header
      %s13 = sphi 0, %s17
      %p14 = scmp.ge.s32.totalorder %s13, 4
      %s23 = sphi 0, %s25
      %s26 = sphi 0, %s23
      %s27 = sphi 0, %s26
      %s43 = sphi 0, %s27
      %s49 = sphi 0, %s51
      %s52 = sphi 0, %s49
      %s53 = sphi 0, %s52
      %s69 = sphi 0, %s53
      %s75 = sphi 0, %s77
      %s78 = sphi 0, %s75
      %s79 = sphi 0, %s78
      %s95 = sphi 0, %s79
      %s101 = sphi 0, %s103
      %s104 = sphi 0, %s101
      %s105 = sphi 0, %s104
      %s121 = sphi 0, %s105
    $region4: #{corrformer_forward.54} parent=1 // loop_header_branch
      %16 = sbr.rel (%p14) target = $region8
    $region5: #{corrformer_forward.54} parent=1 // loop_body
      %s18 = ssub.s32 %s13, 1
      %s19 = ssub.s32 %s13, 2
      %s20 = sadd.s32 %s13, 1
      %s21 = ssub.s32 %s13, %s20
      %p22 = scmp.eq.s32.totalorder %s21, 0
      %s24 = sadd.s32 %s23, 1
      %s25 = scalar_select %p22, %s23, %s24
      %p28 = pneg %p22
      %p29 = scmp.eq.s32.totalorder %s13, 1
      %p30 = por %p28, %p29
      %p31 = scmp.ne.s32.totalorder %s23, %s26
      %p32 = scmp.eq.s32.totalorder %s13, 0
      %p33 = por %p31, %p32
      %p34 = scmp.ne.s32.totalorder %s23, %s26
      %p35 = scmp.eq.s32.totalorder %s18, 1
      %p36 = por %p34, %p35
      %p37 = scmp.ne.s32.totalorder %s26, %s27
      %p38 = scmp.eq.s32.totalorder %s18, 0
      %p39 = por %p37, %p38
      %p40 = scmp.ne.s32.totalorder %s26, %s27
      %p41 = scmp.eq.s32.totalorder %s19, 1
      %p42 = por %p40, %p41
      %p44 = scmp.ne.s32.totalorder %s27, %s43
      %p45 = scmp.eq.s32.totalorder %s19, 0
      %p46 = por %p44, %p45
      %s47 = ssub.s32 %s13, %s20
      %p48 = scmp.eq.s32.totalorder %s47, 0
      %s50 = sadd.s32 %s49, 1
      %s51 = scalar_select %p48, %s49, %s50
      %p54 = pneg %p48
      %p55 = scmp.eq.s32.totalorder %s13, 1
      %p56 = por %p54, %p55
      %p57 = scmp.ne.s32.totalorder %s49, %s52
      %p58 = scmp.eq.s32.totalorder %s13, 0
      %p59 = por %p57, %p58
      %p60 = scmp.ne.s32.totalorder %s49, %s52
      %p61 = scmp.eq.s32.totalorder %s18, 1
      %p62 = por %p60, %p61
      %p63 = scmp.ne.s32.totalorder %s52, %s53
      %p64 = scmp.eq.s32.totalorder %s18, 0
      %p65 = por %p63, %p64
      %p66 = scmp.ne.s32.totalorder %s52, %s53
      %p67 = scmp.eq.s32.totalorder %s19, 1
      %p68 = por %p66, %p67
      %p70 = scmp.ne.s32.totalorder %s53, %s69
      %p71 = scmp.eq.s32.totalorder %s19, 0
      %p72 = por %p70, %p71
      %s73 = ssub.s32 %s13, %s20
      %p74 = scmp.eq.s32.totalorder %s73, 0
      %s76 = sadd.s32 %s75, 1
      %s77 = scalar_select %p74, %s75, %s76
      %p80 = pneg %p74
      %p81 = scmp.eq.s32.totalorder %s13, 1
      %p82 = por %p80, %p81
      %p83 = scmp.ne.s32.totalorder %s75, %s78
      %p84 = scmp.eq.s32.totalorder %s13, 0
      %p85 = por %p83, %p84
      %p86 = scmp.ne.s32.totalorder %s75, %s78
      %p87 = scmp.eq.s32.totalorder %s18, 1
      %p88 = por %p86, %p87
      %p89 = scmp.ne.s32.totalorder %s78, %s79
      %p90 = scmp.eq.s32.totalorder %s18, 0
      %p91 = por %p89, %p90
      %p92 = scmp.ne.s32.totalorder %s78, %s79
      %p93 = scmp.eq.s32.totalorder %s19, 1
      %p94 = por %p92, %p93
      %p96 = scmp.ne.s32.totalorder %s79, %s95
      %p97 = scmp.eq.s32.totalorder %s19, 0
      %p98 = por %p96, %p97
      %s99 = ssub.s32 %s13, %s20
      %p100 = scmp.eq.s32.totalorder %s99, 0
      %s102 = sadd.s32 %s101, 1
      %s103 = scalar_select %p100, %s101, %s102
      %p106 = pneg %p100
      %p107 = scmp.eq.s32.totalorder %s13, 1
      %p108 = por %p106, %p107
      %p109 = scmp.ne.s32.totalorder %s101, %s104
      %p110 = scmp.eq.s32.totalorder %s13, 0
      %p111 = por %p109, %p110
      %p112 = scmp.ne.s32.totalorder %s101, %s104
      %p113 = scmp.eq.s32.totalorder %s18, 1
      %p114 = por %p112, %p113
      %p115 = scmp.ne.s32.totalorder %s104, %s105
      %p116 = scmp.eq.s32.totalorder %s18, 0
      %p117 = por %p115, %p116
      %p118 = scmp.ne.s32.totalorder %s104, %s105
      %p119 = scmp.eq.s32.totalorder %s19, 1
      %p120 = por %p118, %p119
      %p122 = scmp.ne.s32.totalorder %s105, %s121
      %p123 = scmp.eq.s32.totalorder %s19, 0
      %p124 = por %p122, %p123
      %p125 = scmp.le.s32.totalorder 1, %s13
      %p126 = scmp.lt.s32.totalorder %s13, 3
      %p127 = pnand %p125, %p126
      %p128 = pneg %p127
      // Predicated region
      $region9: #{corrformer_forward.54} parent=5 // pred_check
        _
      $region10: #{corrformer_forward.54} parent=5 // pred_check_branch
        %130 = sbr.rel (%p127) target = $region12
      $region11: #{corrformer_forward.54} parent=5 // pred_region
        %s131 = ssub.s32 %s13, 1
      $region12: #{corrformer_forward.54} parent=5 // pred_fallthru
        _
      %p132 = scmp.lt.s32.totalorder %s13, 2
      // Predicated region
      $region13: #{corrformer_forward.54} parent=5 // pred_check
        %p133 = pneg %p132
      $region14: #{corrformer_forward.54} parent=5 // pred_check_branch
        %135 = sbr.rel (%p133) target = $region16
      $region15: #{corrformer_forward.54} parent=5 // pred_region
        // Predicated region
        $region17: #{corrformer_forward.54} parent=15 // pred_check
          %p136 = pneg %p33
        $region18: #{corrformer_forward.54} parent=15 // pred_check_branch
          %138 = sbr.rel (%p136) target = $region20
        $region19: #{corrformer_forward.54} parent=15 // pred_region
          %s139 = sand.u32 %s23, 1
          %s140 = sand.u32 %s23, 1
          %s141 = smul.addr %s140, 16
          %s142 = scalar_lea.vmem [#allocation2], %s141
          %s143 = smul.addr %s13, 8
          %s144 = scalar_lea.vmem %s0, %s143
          // Predicated region
          $region21: #{corrformer_forward.54} parent=19 // pred_check
            _
          $region22: #{corrformer_forward.54} parent=19 // pred_check_branch
            %146 = sbr.rel (0) target = $region24
          $region23: #{corrformer_forward.54} parent=19 // pred_region
            // Predicated region
            $region25: #{corrformer_forward.54} parent=23 // pred_check
              _
            $region26: #{corrformer_forward.54} parent=23 // pred_check_branch
              %148 = sbr.rel (0) target = $region28
            $region27: #{corrformer_forward.54} parent=23 // pred_region
              // Predicated region
              $region40: #{corrformer_forward.54} parent=27 // pred_check
                _
              $region41: #{corrformer_forward.54} parent=27 // pred_check_branch
                %166 = sbr.rel (0) target = $region43
              $region42: #{corrformer_forward.54} parent=27 // pred_region
                loop: start=0, step=1, limit=1
                $region44: #{corrformer_forward.54} parent=42 // loop_pre_header
                  _
                $region45: #{corrformer_forward.54} parent=42 // loop_header
                  %s168 = sphi 0, %s172
                  %p169 = scmp.ge.s32.totalorder %s168, 1
                  %s173 = sphi %s144, %s144
                  %s174 = sphi %s142, %s142
                $region46: #{corrformer_forward.54} parent=42 // loop_header_branch
                  %171 = sbr.rel (%p169) target = $region50
                $region47: #{corrformer_forward.54} parent=42 // loop_body
                  %v175 = vld [vmem:[%s173] sm:$0xff]
                  %176 = vst [vmem:[%s174] sm:$0xff] %v175
                  %v177 = vld [vmem:[%s173 + $0x10] sm:$0xff]
                  %178 = vst [vmem:[%s174 + $0x8] sm:$0xff] %v177
                $region48: #{corrformer_forward.54} parent=42 // loop_footer
                  %s172 = sadd.s32 1, %s168
                $region49: #{corrformer_forward.54} parent=42 // loop_footer_branch
                  %167 = sbr.rel target = $region45
                $region50: #{corrformer_forward.54} parent=42 // loop_exit
                  _
              $region43: #{corrformer_forward.54} parent=27 // pred_fallthru
                _
              // Predicated region
              $region51: #{corrformer_forward.54} parent=27 // pred_check
                _
              $region52: #{corrformer_forward.54} parent=27 // pred_check_branch
                %180 = sbr.rel target = $region54
              $region53: #{corrformer_forward.54} parent=27 // pred_region
                _
              $region54: #{corrformer_forward.54} parent=27 // pred_fallthru
                _
            $region28: #{corrformer_forward.54} parent=23 // pred_fallthru
              _
            // Predicated region
            $region29: #{corrformer_forward.54} parent=23 // pred_check
              _
            $region30: #{corrformer_forward.54} parent=23 // pred_check_branch
              %150 = sbr.rel target = $region32
            $region31: #{corrformer_forward.54} parent=23 // pred_region
              %s152 = ssub.s32 256, 1
              loop: start=0, step=1, limit=1
              $region33: #{corrformer_forward.54} parent=31 // loop_pre_header
                _
              $region34: #{corrformer_forward.54} parent=31 // loop_header
                %s154 = sphi 0, %s158
                %p155 = scmp.ge.s32.totalorder %s154, 1
                %s159 = sphi %s144, %s144
                %s160 = sphi %s142, %s142
              $region35: #{corrformer_forward.54} parent=31 // loop_header_branch
                %157 = sbr.rel (%p155) target = $region39
              $region36: #{corrformer_forward.54} parent=31 // loop_body
                %v161 = vld [vmem:[%s159] sm:%s152]
                %162 = vst [vmem:[%s160] sm:%s152] %v161
                %v163 = vld [vmem:[%s159 + $0x10] sm:%s152]
                %164 = vst [vmem:[%s160 + $0x8] sm:%s152] %v163
              $region37: #{corrformer_forward.54} parent=31 // loop_footer
                %s158 = sadd.s32 1, %s154
              $region38: #{corrformer_forward.54} parent=31 // loop_footer_branch
                %153 = sbr.rel target = $region34
              $region39: #{corrformer_forward.54} parent=31 // loop_exit
                _
            $region32: #{corrformer_forward.54} parent=23 // pred_fallthru
              _
          $region24: #{corrformer_forward.54} parent=19 // pred_fallthru
            _
          %181 = vnop
        $region20: #{corrformer_forward.54} parent=15 // pred_fallthru
          _
        // Predicated region
        $region55: #{corrformer_forward.54} parent=15 // pred_check
          %p182 = pneg %p59
        $region56: #{corrformer_forward.54} parent=15 // pred_check_branch
          %184 = sbr.rel (%p182) target = $region58
        $region57: #{corrformer_forward.54} parent=15 // pred_region
          %s185 = sand.u32 %s49, 1
          %s186 = sand.u32 %s49, 1
          %s187 = smul.addr %s186, 16
          %s188 = scalar_lea.vmem [#allocation3], %s187
          %s189 = smul.addr %s13, 8
          %s190 = scalar_lea.vmem %s1, %s189
          // Predicated region
          $region59: #{corrformer_forward.54} parent=57 // pred_check
            _
          $region60: #{corrformer_forward.54} parent=57 // pred_check_branch
            %192 = sbr.rel (0) target = $region62
          $region61: #{corrformer_forward.54} parent=57 // pred_region
            // Predicated region
            $region63: #{corrformer_forward.54} parent=61 // pred_check
              _
            $region64: #{corrformer_forward.54} parent=61 // pred_check_branch
              %194 = sbr.rel (0) target = $region66
            $region65: #{corrformer_forward.54} parent=61 // pred_region
              // Predicated region
              $region78: #{corrformer_forward.54} parent=65 // pred_check
                _
              $region79: #{corrformer_forward.54} parent=65 // pred_check_branch
                %212 = sbr.rel (0) target = $region81
              $region80: #{corrformer_forward.54} parent=65 // pred_region
                loop: start=0, step=1, limit=1
                $region82: #{corrformer_forward.54} parent=80 // loop_pre_header
                  _
                $region83: #{corrformer_forward.54} parent=80 // loop_header
                  %s214 = sphi 0, %s218
                  %p215 = scmp.ge.s32.totalorder %s214, 1
                  %s219 = sphi %s190, %s190
                  %s220 = sphi %s188, %s188
                $region84: #{corrformer_forward.54} parent=80 // loop_header_branch
                  %217 = sbr.rel (%p215) target = $region88
                $region85: #{corrformer_forward.54} parent=80 // loop_body
                  %v221 = vld [vmem:[%s219] sm:$0xff]
                  %222 = vst [vmem:[%s220] sm:$0xff] %v221
                  %v223 = vld [vmem:[%s219 + $0x10] sm:$0xff]
                  %224 = vst [vmem:[%s220 + $0x8] sm:$0xff] %v223
                $region86: #{corrformer_forward.54} parent=80 // loop_footer
                  %s218 = sadd.s32 1, %s214
                $region87: #{corrformer_forward.54} parent=80 // loop_footer_branch
                  %213 = sbr.rel target = $region83
                $region88: #{corrformer_forward.54} parent=80 // loop_exit
                  _
              $region81: #{corrformer_forward.54} parent=65 // pred_fallthru
                _
              // Predicated region
              $region89: #{corrformer_forward.54} parent=65 // pred_check
                _
              $region90: #{corrformer_forward.54} parent=65 // pred_check_branch
                %226 = sbr.rel target = $region92
              $region91: #{corrformer_forward.54} parent=65 // pred_region
                _
              $region92: #{corrformer_forward.54} parent=65 // pred_fallthru
                _
            $region66: #{corrformer_forward.54} parent=61 // pred_fallthru
              _
            // Predicated region
            $region67: #{corrformer_forward.54} parent=61 // pred_check
              _
            $region68: #{corrformer_forward.54} parent=61 // pred_check_branch
              %196 = sbr.rel target = $region70
            $region69: #{corrformer_forward.54} parent=61 // pred_region
              %s198 = ssub.s32 256, 1
              loop: start=0, step=1, limit=1
              $region71: #{corrformer_forward.54} parent=69 // loop_pre_header
                _
              $region72: #{corrformer_forward.54} parent=69 // loop_header
                %s200 = sphi 0, %s204
                %p201 = scmp.ge.s32.totalorder %s200, 1
                %s205 = sphi %s190, %s190
                %s206 = sphi %s188, %s188
              $region73: #{corrformer_forward.54} parent=69 // loop_header_branch
                %203 = sbr.rel (%p201) target = $region77
              $region74: #{corrformer_forward.54} parent=69 // loop_body
                %v207 = vld [vmem:[%s205] sm:%s198]
                %208 = vst [vmem:[%s206] sm:%s198] %v207
                %v209 = vld [vmem:[%s205 + $0x10] sm:%s198]
                %210 = vst [vmem:[%s206 + $0x8] sm:%s198] %v209
              $region75: #{corrformer_forward.54} parent=69 // loop_footer
                %s204 = sadd.s32 1, %s200
              $region76: #{corrformer_forward.54} parent=69 // loop_footer_branch
                %199 = sbr.rel target = $region72
              $region77: #{corrformer_forward.54} parent=69 // loop_exit
                _
            $region70: #{corrformer_forward.54} parent=61 // pred_fallthru
              _
          $region62: #{corrformer_forward.54} parent=57 // pred_fallthru
            _
          %227 = vnop
        $region58: #{corrformer_forward.54} parent=15 // pred_fallthru
          _
      $region16: #{corrformer_forward.54} parent=5 // pred_fallthru
        _
      %p228 = scmp.le.s32.totalorder 1, %s13
      %p229 = scmp.lt.s32.totalorder %s13, 3
      %p230 = pnand %p228, %p229
      %p231 = pneg %p230
      // Predicated region
      $region93: #{corrformer_forward.54} parent=5 // pred_check
        _
      $region94: #{corrformer_forward.54} parent=5 // pred_check_branch
        %233 = sbr.rel (%p230) target = $region96
      $region95: #{corrformer_forward.54} parent=5 // pred_region
        %s234 = ssub.s32 %s13, 1
        %s235 = sand.u32 %s26, 1
        %s236 = sand.u32 %s26, 1
        %s237 = smul.addr %s236, 16
        %s238 = scalar_lea.vmem [#allocation2], %s237
        // Predicated region
        $region97: #{corrformer_forward.54} parent=95 // pred_check
          %p239 = pneg %p39
        $region98: #{corrformer_forward.54} parent=95 // pred_check_branch
          %241 = sbr.rel (%p239) target = $region100
        $region99: #{corrformer_forward.54} parent=95 // pred_region
          _
        $region100: #{corrformer_forward.54} parent=95 // pred_fallthru
          _
        %s242 = sand.u32 %s52, 1
        %s243 = sand.u32 %s52, 1
        %s244 = smul.addr %s243, 16
        %s245 = scalar_lea.vmem [#allocation3], %s244
        // Predicated region
        $region101: #{corrformer_forward.54} parent=95 // pred_check
          %p246 = pneg %p65
        $region102: #{corrformer_forward.54} parent=95 // pred_check_branch
          %248 = sbr.rel (%p246) target = $region104
        $region103: #{corrformer_forward.54} parent=95 // pred_region
          _
        $region104: #{corrformer_forward.54} parent=95 // pred_fallthru
          _
        %s249 = sand.u32 %s26, 1
        %s250 = sand.u32 %s26, 1
        %s251 = smul.addr %s250, 16
        %s252 = scalar_lea.vmem [#allocation2], %s251
        %p253 = pneg %p39
        %p254 = pneg %p36
        %s255 = sand.u32 %s52, 1
        %s256 = sand.u32 %s52, 1
        %s257 = smul.addr %s256, 16
        %s258 = scalar_lea.vmem [#allocation3], %s257
        %p259 = pneg %p65
        %p260 = pneg %p62
        %p261 = pneg %p91
        %p262 = pneg %p88
        %s263 = sand.u32 %s78, 1
        %s264 = sand.u32 %s78, 1
        %s265 = smul.addr %s264, 16
        %s266 = scalar_lea.vmem [#allocation4], %s265
        %p267 = pneg %p117
        %p268 = pneg %p114
        %s269 = sand.u32 %s104, 1
        %s270 = scalar_lea.sflag [#allocation6], %s269
        %s271 = sand.u32 %s104, 1
        %s272 = smul.addr %s271, 16
        %s273 = scalar_lea.vmem [#allocation5], %s272
        %v274 = vld [vmem:[%s238] sm:$0xff]
        %v275 = vld [vmem:[%s238 + $0x8] sm:$0xf]
        %v276 = vld [vmem:[%s245] sm:$0xff]
        %v277 = vld [vmem:[%s245 + $0x8] sm:$0xf]
        %v278 = vadd.f32 %v274, %v276
        %v279 = vadd.f32 %v275, %v277
        %vm282 = vcmask 1046528
        %v283 = vrot.slane %v278, 1
        %v284 = vrot.slane %v279, 1
        %v285 = vsel %vm282, %v283, %v284
        %vm288 = vcmask 1042432
        %v289 = vsel %vm288, %v284, %v279
        %vm290 = vcmask 1040384
        %v291 = vrot.slane %v278, 7
        %v292 = vrot.slane %v279, 7
        %v293 = vsel %vm290, %v291, %v292
        %v296 = vsel %vm290, %v278, %v291
        %v297 = vadd.f32 %v278, %v285
        %v298 = vadd.f32 %v279, %v289
        %v299 = vadd.f32 %v297, %v296
        %v300 = vadd.f32 %v298, %v293
        %v301 = vlaneseq
        %v302 = vshrl.u32 %v301, 7
        %v303 = vsub.s32 0, %v302
        %v304 = vrot.slane %v278, %v303
        %v305 = vlaneseq
        %v306 = vshrl.u32 %v305, 7
        %v307 = vsub.s32 3, %v306
        %v308 = vrot.slane %v279, %v307
        %vm309 = vcmask 1045504
        %v310 = vrot.slane %v278, 2
        %v311 = vrot.slane %v279, 2
        %v312 = vsel %vm309, %v310, %v311
        %vm315 = vcmask 1041408
        %v316 = vsel %vm315, %v311, %v308
        %v317 = vrot.slane %v278, 6
        %v318 = vrot.slane %v279, 6
        %v319 = vsel %vm315, %v317, %v318
        %v322 = vsel %vm315, %v304, %v317
        %v323 = vadd.f32 %v299, %v312
        %v324 = vadd.f32 %v300, %v316
        %v325 = vadd.f32 %v323, %v322
        %v326 = vadd.f32 %v324, %v319
        %v327 = vmul.f32 %v325, 0.2
        %v328 = vmul.f32 %v326, 0.2
        %329 = vst [vmem:[%s273] sm:$0xff] %v327
        %330 = vst [vmem:[%s273 + $0x8] sm:$0xf] %v328
        %v331 = vsub.f32 %v278, %v327
        %v332 = vsub.f32 %v279, %v328
        %333 = vst [vmem:[%s266] sm:$0xff] %v331
        %334 = vst [vmem:[%s266 + $0x8] sm:$0xf] %v332
        %s335 = sand.u32 %s78, 1
        %s336 = sand.u32 %s78, 1
        %s337 = smul.addr %s336, 16
        %s338 = scalar_lea.vmem [#allocation4], %s337
        %s339 = sand.u32 %s104, 1
        %s340 = scalar_lea.sflag [#allocation6], %s339
        %s341 = sand.u32 %s104, 1
        %s342 = smul.addr %s341, 16
        %s343 = scalar_lea.vmem [#allocation5], %s342
        // Predicated region
        $region105: #{corrformer_forward.54} parent=95 // pred_check
          %p344 = pneg %p88
        $region106: #{corrformer_forward.54} parent=95 // pred_check_branch
          %346 = sbr.rel (%p344) target = $region108
        $region107: #{corrformer_forward.54} parent=95 // pred_region
          %s347 = smul.addr %s18, 8
          %s348 = scalar_lea.vmem %s2, %s347
          // Predicated region
          $region109: #{corrformer_forward.54} parent=107 // pred_check
            _
          $region110: #{corrformer_forward.54} parent=107 // pred_check_branch
            %350 = sbr.rel (0) target = $region112
          $region111: #{corrformer_forward.54} parent=107 // pred_region
            // Predicated region
            $region113: #{corrformer_forward.54} parent=111 // pred_check
              _
            $region114: #{corrformer_forward.54} parent=111 // pred_check_branch
              %352 = sbr.rel (0) target = $region116
            $region115: #{corrformer_forward.54} parent=111 // pred_region
              // Predicated region
              $region128: #{corrformer_forward.54} parent=115 // pred_check
                _
              $region129: #{corrformer_forward.54} parent=115 // pred_check_branch
                %370 = sbr.rel (0) target = $region131
              $region130: #{corrformer_forward.54} parent=115 // pred_region
                loop: start=0, step=1, limit=1
                $region132: #{corrformer_forward.54} parent=130 // loop_pre_header
                  _
                $region133: #{corrformer_forward.54} parent=130 // loop_header
                  %s372 = sphi 0, %s376
                  %p373 = scmp.ge.s32.totalorder %s372, 1
                  %s377 = sphi %s338, %s338
                  %s378 = sphi %s348, %s348
                $region134: #{corrformer_forward.54} parent=130 // loop_header_branch
                  %375 = sbr.rel (%p373) target = $region138
                $region135: #{corrformer_forward.54} parent=130 // loop_body
                  %v379 = vld [vmem:[%s377] sm:$0xff]
                  %380 = vst [vmem:[%s378] sm:$0xff] %v379
                  %v381 = vld [vmem:[%s377 + $0x8] sm:$0xff]
                  %382 = vst [vmem:[%s378 + $0x10] sm:$0xff] %v381
                $region136: #{corrformer_forward.54} parent=130 // loop_footer
                  %s376 = sadd.s32 1, %s372
                $region137: #{corrformer_forward.54} parent=130 // loop_footer_branch
                  %371 = sbr.rel target = $region133
                $region138: #{corrformer_forward.54} parent=130 // loop_exit
                  _
              $region131: #{corrformer_forward.54} parent=115 // pred_fallthru
                _
              // Predicated region
              $region139: #{corrformer_forward.54} parent=115 // pred_check
                _
              $region140: #{corrformer_forward.54} parent=115 // pred_check_branch
                %384 = sbr.rel target = $region142
              $region141: #{corrformer_forward.54} parent=115 // pred_region
                _
              $region142: #{corrformer_forward.54} parent=115 // pred_fallthru
                _
            $region116: #{corrformer_forward.54} parent=111 // pred_fallthru
              _
            // Predicated region
            $region117: #{corrformer_forward.54} parent=111 // pred_check
              _
            $region118: #{corrformer_forward.54} parent=111 // pred_check_branch
              %354 = sbr.rel target = $region120
            $region119: #{corrformer_forward.54} parent=111 // pred_region
              %s356 = ssub.s32 256, 1
              loop: start=0, step=1, limit=1
              $region121: #{corrformer_forward.54} parent=119 // loop_pre_header
                _
              $region122: #{corrformer_forward.54} parent=119 // loop_header
                %s358 = sphi 0, %s362
                %p359 = scmp.ge.s32.totalorder %s358, 1
                %s363 = sphi %s338, %s338
                %s364 = sphi %s348, %s348
              $region123: #{corrformer_forward.54} parent=119 // loop_header_branch
                %361 = sbr.rel (%p359) target = $region127
              $region124: #{corrformer_forward.54} parent=119 // loop_body
                %v365 = vld [vmem:[%s363] sm:%s356]
                %366 = vst [vmem:[%s364] sm:%s356] %v365
                %v367 = vld [vmem:[%s363 + $0x8] sm:%s356]
                %368 = vst [vmem:[%s364 + $0x10] sm:%s356] %v367
              $region125: #{corrformer_forward.54} parent=119 // loop_footer
                %s362 = sadd.s32 1, %s358
              $region126: #{corrformer_forward.54} parent=119 // loop_footer_branch
                %357 = sbr.rel target = $region122
              $region127: #{corrformer_forward.54} parent=119 // loop_exit
                _
            $region120: #{corrformer_forward.54} parent=111 // pred_fallthru
              _
          $region112: #{corrformer_forward.54} parent=107 // pred_fallthru
            _
          %385 = vnop
        $region108: #{corrformer_forward.54} parent=95 // pred_fallthru
          _
        // Predicated region
        $region143: #{corrformer_forward.54} parent=95 // pred_check
          %p386 = pneg %p114
        $region144: #{corrformer_forward.54} parent=95 // pred_check_branch
          %388 = sbr.rel (%p386) target = $region146
        $region145: #{corrformer_forward.54} parent=95 // pred_region
          %s390 = ssub.s32 256, 256
          %391 = vsyncadd %s340, %s390
          %s392 = smul.addr %s18, 128
          %s393 = scalar_lea.hbm %s3, %s392
          %s394 = sshll.u32 %s343, 4
          %s395 = int_to_ptr.vmem [resolvable:$true] %s394
          %400 = dma.vmem_to_hbm [thread:$0]  %s395, 256, %s393, %s340, 128, 256, 8
        $region146: #{corrformer_forward.54} parent=95 // pred_fallthru
          _
      $region96: #{corrformer_forward.54} parent=5 // pred_fallthru
        _
      %p401 = scmp.le.s32.totalorder 2, %s13
      // Predicated region
      $region147: #{corrformer_forward.54} parent=5 // pred_check
        %p402 = pneg %p401
      $region148: #{corrformer_forward.54} parent=5 // pred_check_branch
        %404 = sbr.rel (%p402) target = $region150
      $region149: #{corrformer_forward.54} parent=5 // pred_region
        %s405 = ssub.s32 %s13, 2
        // Predicated region
        $region151: #{corrformer_forward.54} parent=149 // pred_check
          %p406 = pneg %p94
        $region152: #{corrformer_forward.54} parent=149 // pred_check_branch
          %408 = sbr.rel (%p406) target = $region154
        $region153: #{corrformer_forward.54} parent=149 // pred_region
          %s409 = sand.u32 %s79, 1
          %s410 = sand.u32 %s79, 1
          %s411 = smul.addr %s410, 16
          %s412 = scalar_lea.vmem [#allocation4], %s411
        $region154: #{corrformer_forward.54} parent=149 // pred_fallthru
          _
        // Predicated region
        $region155: #{corrformer_forward.54} parent=149 // pred_check
          %p413 = pneg %p120
        $region156: #{corrformer_forward.54} parent=149 // pred_check_branch
          %415 = sbr.rel (%p413) target = $region158
        $region157: #{corrformer_forward.54} parent=149 // pred_region
          %s416 = sand.u32 %s105, 1
          %s417 = scalar_lea.sflag [#allocation6], %s416
          %s418 = sand.u32 %s105, 1
          %s419 = smul.addr %s418, 16
          %s420 = scalar_lea.vmem [#allocation5], %s419
          %421 = dma.done %s417, 256
        $region158: #{corrformer_forward.54} parent=149 // pred_fallthru
          _
      $region150: #{corrformer_forward.54} parent=5 // pred_fallthru
        _
    $region6: #{corrformer_forward.54} parent=1 // loop_footer
      %s17 = sadd.s32 1, %s13
    $region7: #{corrformer_forward.54} parent=1 // loop_footer_branch
      %12 = sbr.rel target = $region3
    $region8: #{corrformer_forward.54} parent=1 // loop_exit
      _
    %422 = vsyncpa [#allocation6], 1
    %s423 = scalar_lea.sflag [#allocation6], 1
    %424 = vsyncpa %s423, 1

// kernel: corrformer_forward.56
$region0: #{corrformer_forward.56}
  #allocation0 [shape = 'u32[]', space=smem, size = 0x4, offset = 0x4, fixed_abs, tag = 'smem constant byte address 0x4 - core index']
  #allocation1 [shape = 'u32[144,128]{1,0:T(1,128)}', space=vmem, size = 0x12000, scoped, tag = 'internal scratch']
  %s0 = inlined_call_operand.vmem [shape: f32[12,256], index: 0, kind: input, shape index: {}]
  %s1 = inlined_call_operand.vmem [shape: f32[12,256], index: 1, kind: output, shape index: {0}]
  %s2 = inlined_call_operand.hbm [shape: f32[12,256], index: 2, kind: output, shape index: {1}]
  %3 = xla_tuple %s1, %s2
  %s4 = sld [smem:[#allocation0]]
  $region117: #{corrformer_forward.56} parent=0
    _
  %s6 = ssub.s32 1, %s4
  %s7 = scalar_select 0, %s6, %s4
  $region1: #{corrformer_forward.56} parent=0
    #allocation2 [shape = 'u8[16384]{0}', space=vmem, size = 0x4000, scoped, tag = 'input window, operand 0']
    #allocation3 [shape = 'u8[16384]{0}', space=vmem, size = 0x4000, scoped, tag = 'output window, operand 0']
    #allocation4 [shape = 'u8[16384]{0}', space=vmem, size = 0x4000, scoped, tag = 'output window, operand 1']
    #allocation5 [shape = 's32[2]{0}', space=sflag, size = 0x8, scoped, tag = 'scoped memory for corrformer_forward.56']
    %8 = vsyncpa [#allocation5], 0
    %s9 = scalar_lea.sflag [#allocation5], 1
    %10 = vsyncpa %s9, 0
    loop: start=0, step=1, limit=4
    $region2: #{corrformer_forward.56} parent=1 // loop_pre_header
      _
    $region3: #{corrformer_forward.56} parent=1 // loop_header
      %s12 = sphi 0, %s16
      %p13 = scmp.ge.s32.totalorder %s12, 4
      %s22 = sphi 0, %s24
      %s25 = sphi 0, %s22
      %s26 = sphi 0, %s25
      %s42 = sphi 0, %s26
      %s48 = sphi 0, %s50
      %s51 = sphi 0, %s48
      %s52 = sphi 0, %s51
      %s68 = sphi 0, %s52
      %s74 = sphi 0, %s76
      %s77 = sphi 0, %s74
      %s78 = sphi 0, %s77
      %s94 = sphi 0, %s78
    $region4: #{corrformer_forward.56} parent=1 // loop_header_branch
      %15 = sbr.rel (%p13) target = $region8
    $region5: #{corrformer_forward.56} parent=1 // loop_body
      %s17 = ssub.s32 %s12, 1
      %s18 = ssub.s32 %s12, 2
      %s19 = sadd.s32 %s12, 1
      %s20 = ssub.s32 %s12, %s19
      %p21 = scmp.eq.s32.totalorder %s20, 0
      %s23 = sadd.s32 %s22, 1
      %s24 = scalar_select %p21, %s22, %s23
      %p27 = pneg %p21
      %p28 = scmp.eq.s32.totalorder %s12, 1
      %p29 = por %p27, %p28
      %p30 = scmp.ne.s32.totalorder %s22, %s25
      %p31 = scmp.eq.s32.totalorder %s12, 0
      %p32 = por %p30, %p31
      %p33 = scmp.ne.s32.totalorder %s22, %s25
      %p34 = scmp.eq.s32.totalorder %s17, 1
      %p35 = por %p33, %p34
      %p36 = scmp.ne.s32.totalorder %s25, %s26
      %p37 = scmp.eq.s32.totalorder %s17, 0
      %p38 = por %p36, %p37
      %p39 = scmp.ne.s32.totalorder %s25, %s26
      %p40 = scmp.eq.s32.totalorder %s18, 1
      %p41 = por %p39, %p40
      %p43 = scmp.ne.s32.totalorder %s26, %s42
      %p44 = scmp.eq.s32.totalorder %s18, 0
      %p45 = por %p43, %p44
      %s46 = ssub.s32 %s12, %s19
      %p47 = scmp.eq.s32.totalorder %s46, 0
      %s49 = sadd.s32 %s48, 1
      %s50 = scalar_select %p47, %s48, %s49
      %p53 = pneg %p47
      %p54 = scmp.eq.s32.totalorder %s12, 1
      %p55 = por %p53, %p54
      %p56 = scmp.ne.s32.totalorder %s48, %s51
      %p57 = scmp.eq.s32.totalorder %s12, 0
      %p58 = por %p56, %p57
      %p59 = scmp.ne.s32.totalorder %s48, %s51
      %p60 = scmp.eq.s32.totalorder %s17, 1
      %p61 = por %p59, %p60
      %p62 = scmp.ne.s32.totalorder %s51, %s52
      %p63 = scmp.eq.s32.totalorder %s17, 0
      %p64 = por %p62, %p63
      %p65 = scmp.ne.s32.totalorder %s51, %s52
      %p66 = scmp.eq.s32.totalorder %s18, 1
      %p67 = por %p65, %p66
      %p69 = scmp.ne.s32.totalorder %s52, %s68
      %p70 = scmp.eq.s32.totalorder %s18, 0
      %p71 = por %p69, %p70
      %s72 = ssub.s32 %s12, %s19
      %p73 = scmp.eq.s32.totalorder %s72, 0
      %s75 = sadd.s32 %s74, 1
      %s76 = scalar_select %p73, %s74, %s75
      %p79 = pneg %p73
      %p80 = scmp.eq.s32.totalorder %s12, 1
      %p81 = por %p79, %p80
      %p82 = scmp.ne.s32.totalorder %s74, %s77
      %p83 = scmp.eq.s32.totalorder %s12, 0
      %p84 = por %p82, %p83
      %p85 = scmp.ne.s32.totalorder %s74, %s77
      %p86 = scmp.eq.s32.totalorder %s17, 1
      %p87 = por %p85, %p86
      %p88 = scmp.ne.s32.totalorder %s77, %s78
      %p89 = scmp.eq.s32.totalorder %s17, 0
      %p90 = por %p88, %p89
      %p91 = scmp.ne.s32.totalorder %s77, %s78
      %p92 = scmp.eq.s32.totalorder %s18, 1
      %p93 = por %p91, %p92
      %p95 = scmp.ne.s32.totalorder %s78, %s94
      %p96 = scmp.eq.s32.totalorder %s18, 0
      %p97 = por %p95, %p96
      %p98 = scmp.le.s32.totalorder 1, %s12
      %p99 = scmp.lt.s32.totalorder %s12, 3
      %p100 = pnand %p98, %p99
      %p101 = pneg %p100
      // Predicated region
      $region9: #{corrformer_forward.56} parent=5 // pred_check
        _
      $region10: #{corrformer_forward.56} parent=5 // pred_check_branch
        %103 = sbr.rel (%p100) target = $region12
      $region11: #{corrformer_forward.56} parent=5 // pred_region
        %s104 = ssub.s32 %s12, 1
      $region12: #{corrformer_forward.56} parent=5 // pred_fallthru
        _
      %p105 = scmp.lt.s32.totalorder %s12, 2
      // Predicated region
      $region13: #{corrformer_forward.56} parent=5 // pred_check
        %p106 = pneg %p105
      $region14: #{corrformer_forward.56} parent=5 // pred_check_branch
        %108 = sbr.rel (%p106) target = $region16
      $region15: #{corrformer_forward.56} parent=5 // pred_region
        // Predicated region
        $region17: #{corrformer_forward.56} parent=15 // pred_check
          %p109 = pneg %p32
        $region18: #{corrformer_forward.56} parent=15 // pred_check_branch
          %111 = sbr.rel (%p109) target = $region20
        $region19: #{corrformer_forward.56} parent=15 // pred_region
          %s112 = sand.u32 %s22, 1
          %s113 = sand.u32 %s22, 1
          %s114 = smul.addr %s113, 16
          %s115 = scalar_lea.vmem [#allocation2], %s114
          %s116 = smul.addr %s12, 8
          %s117 = scalar_lea.vmem %s0, %s116
          // Predicated region
          $region21: #{corrformer_forward.56} parent=19 // pred_check
            _
          $region22: #{corrformer_forward.56} parent=19 // pred_check_branch
            %119 = sbr.rel (0) target = $region24
          $region23: #{corrformer_forward.56} parent=19 // pred_region
            // Predicated region
            $region25: #{corrformer_forward.56} parent=23 // pred_check
              _
            $region26: #{corrformer_forward.56} parent=23 // pred_check_branch
              %121 = sbr.rel (0) target = $region28
            $region27: #{corrformer_forward.56} parent=23 // pred_region
              // Predicated region
              $region40: #{corrformer_forward.56} parent=27 // pred_check
                _
              $region41: #{corrformer_forward.56} parent=27 // pred_check_branch
                %139 = sbr.rel (0) target = $region43
              $region42: #{corrformer_forward.56} parent=27 // pred_region
                loop: start=0, step=1, limit=1
                $region44: #{corrformer_forward.56} parent=42 // loop_pre_header
                  _
                $region45: #{corrformer_forward.56} parent=42 // loop_header
                  %s141 = sphi 0, %s145
                  %p142 = scmp.ge.s32.totalorder %s141, 1
                  %s146 = sphi %s117, %s117
                  %s147 = sphi %s115, %s115
                $region46: #{corrformer_forward.56} parent=42 // loop_header_branch
                  %144 = sbr.rel (%p142) target = $region50
                $region47: #{corrformer_forward.56} parent=42 // loop_body
                  %v148 = vld [vmem:[%s146] sm:$0xff]
                  %149 = vst [vmem:[%s147] sm:$0xff] %v148
                  %v150 = vld [vmem:[%s146 + $0x10] sm:$0xff]
                  %151 = vst [vmem:[%s147 + $0x8] sm:$0xff] %v150
                $region48: #{corrformer_forward.56} parent=42 // loop_footer
                  %s145 = sadd.s32 1, %s141
                $region49: #{corrformer_forward.56} parent=42 // loop_footer_branch
                  %140 = sbr.rel target = $region45
                $region50: #{corrformer_forward.56} parent=42 // loop_exit
                  _
              $region43: #{corrformer_forward.56} parent=27 // pred_fallthru
                _
              // Predicated region
              $region51: #{corrformer_forward.56} parent=27 // pred_check
                _
              $region52: #{corrformer_forward.56} parent=27 // pred_check_branch
                %153 = sbr.rel target = $region54
              $region53: #{corrformer_forward.56} parent=27 // pred_region
                _
              $region54: #{corrformer_forward.56} parent=27 // pred_fallthru
                _
            $region28: #{corrformer_forward.56} parent=23 // pred_fallthru
              _
            // Predicated region
            $region29: #{corrformer_forward.56} parent=23 // pred_check
              _
            $region30: #{corrformer_forward.56} parent=23 // pred_check_branch
              %123 = sbr.rel target = $region32
            $region31: #{corrformer_forward.56} parent=23 // pred_region
              %s125 = ssub.s32 256, 1
              loop: start=0, step=1, limit=1
              $region33: #{corrformer_forward.56} parent=31 // loop_pre_header
                _
              $region34: #{corrformer_forward.56} parent=31 // loop_header
                %s127 = sphi 0, %s131
                %p128 = scmp.ge.s32.totalorder %s127, 1
                %s132 = sphi %s117, %s117
                %s133 = sphi %s115, %s115
              $region35: #{corrformer_forward.56} parent=31 // loop_header_branch
                %130 = sbr.rel (%p128) target = $region39
              $region36: #{corrformer_forward.56} parent=31 // loop_body
                %v134 = vld [vmem:[%s132] sm:%s125]
                %135 = vst [vmem:[%s133] sm:%s125] %v134
                %v136 = vld [vmem:[%s132 + $0x10] sm:%s125]
                %137 = vst [vmem:[%s133 + $0x8] sm:%s125] %v136
              $region37: #{corrformer_forward.56} parent=31 // loop_footer
                %s131 = sadd.s32 1, %s127
              $region38: #{corrformer_forward.56} parent=31 // loop_footer_branch
                %126 = sbr.rel target = $region34
              $region39: #{corrformer_forward.56} parent=31 // loop_exit
                _
            $region32: #{corrformer_forward.56} parent=23 // pred_fallthru
              _
          $region24: #{corrformer_forward.56} parent=19 // pred_fallthru
            _
          %154 = vnop
        $region20: #{corrformer_forward.56} parent=15 // pred_fallthru
          _
      $region16: #{corrformer_forward.56} parent=5 // pred_fallthru
        _
      %p155 = scmp.le.s32.totalorder 1, %s12
      %p156 = scmp.lt.s32.totalorder %s12, 3
      %p157 = pnand %p155, %p156
      %p158 = pneg %p157
      // Predicated region
      $region55: #{corrformer_forward.56} parent=5 // pred_check
        _
      $region56: #{corrformer_forward.56} parent=5 // pred_check_branch
        %160 = sbr.rel (%p157) target = $region58
      $region57: #{corrformer_forward.56} parent=5 // pred_region
        %s161 = ssub.s32 %s12, 1
        %s162 = sand.u32 %s25, 1
        %s163 = sand.u32 %s25, 1
        %s164 = smul.addr %s163, 16
        %s165 = scalar_lea.vmem [#allocation2], %s164
        // Predicated region
        $region59: #{corrformer_forward.56} parent=57 // pred_check
          %p166 = pneg %p38
        $region60: #{corrformer_forward.56} parent=57 // pred_check_branch
          %168 = sbr.rel (%p166) target = $region62
        $region61: #{corrformer_forward.56} parent=57 // pred_region
          _
        $region62: #{corrformer_forward.56} parent=57 // pred_fallthru
          _
        %s169 = sand.u32 %s25, 1
        %s170 = sand.u32 %s25, 1
        %s171 = smul.addr %s170, 16
        %s172 = scalar_lea.vmem [#allocation2], %s171
        %p173 = pneg %p38
        %p174 = pneg %p35
        %p175 = pneg %p64
        %p176 = pneg %p61
        %s177 = sand.u32 %s51, 1
        %s178 = sand.u32 %s51, 1
        %s179 = smul.addr %s178, 16
        %s180 = scalar_lea.vmem [#allocation3], %s179
        %p181 = pneg %p90
        %p182 = pneg %p87
        %s183 = sand.u32 %s77, 1
        %s184 = scalar_lea.sflag [#allocation5], %s183
        %s185 = sand.u32 %s77, 1
        %s186 = smul.addr %s185, 16
        %s187 = scalar_lea.vmem [#allocation4], %s186
        %v188 = vld [vmem:[%s165] sm:$0xff]
        %v189 = vld [vmem:[%s165 + $0x8] sm:$0xf]
        %vm192 = vcmask 1046528
        %v193 = vrot.slane %v188, 1
        %v194 = vrot.slane %v189, 1
        %v195 = vsel %vm192, %v193, %v194
        %vm198 = vcmask 1042432
        %v199 = vsel %vm198, %v194, %v189
        %vm200 = vcmask 1040384
        %v201 = vrot.slane %v188, 7
        %v202 = vrot.slane %v189, 7
        %v203 = vsel %vm200, %v201, %v202
        %v206 = vsel %vm200, %v188, %v201
        %v207 = vadd.f32 %v188, %v195
        %v208 = vadd.f32 %v189, %v199
        %v209 = vadd.f32 %v207, %v206
        %v210 = vadd.f32 %v208, %v203
        %v211 = vlaneseq
        %v212 = vshrl.u32 %v211, 7
        %v213 = vsub.s32 0, %v212
        %v214 = vrot.slane %v188, %v213
        %v215 = vlaneseq
        %v216 = vshrl.u32 %v215, 7
        %v217 = vsub.s32 3, %v216
        %v218 = vrot.slane %v189, %v217
        %vm219 = vcmask 1045504
        %v220 = vrot.slane %v188, 2
        %v221 = vrot.slane %v189, 2
        %v222 = vsel %vm219, %v220, %v221
        %vm225 = vcmask 1041408
        %v226 = vsel %vm225, %v221, %v218
        %v227 = vrot.slane %v188, 6
        %v228 = vrot.slane %v189, 6
        %v229 = vsel %vm225, %v227, %v228
        %v232 = vsel %vm225, %v214, %v227
        %v233 = vadd.f32 %v209, %v222
        %v234 = vadd.f32 %v210, %v226
        %v235 = vadd.f32 %v233, %v232
        %v236 = vadd.f32 %v234, %v229
        %v237 = vmul.f32 %v235, 0.2
        %v238 = vmul.f32 %v236, 0.2
        %239 = vst [vmem:[%s187] sm:$0xff] %v237
        %240 = vst [vmem:[%s187 + $0x8] sm:$0xf] %v238
        %v241 = vsub.f32 %v188, %v237
        %v242 = vsub.f32 %v189, %v238
        %243 = vst [vmem:[%s180] sm:$0xff] %v241
        %244 = vst [vmem:[%s180 + $0x8] sm:$0xf] %v242
        %s245 = sand.u32 %s51, 1
        %s246 = sand.u32 %s51, 1
        %s247 = smul.addr %s246, 16
        %s248 = scalar_lea.vmem [#allocation3], %s247
        %s249 = sand.u32 %s77, 1
        %s250 = scalar_lea.sflag [#allocation5], %s249
        %s251 = sand.u32 %s77, 1
        %s252 = smul.addr %s251, 16
        %s253 = scalar_lea.vmem [#allocation4], %s252
        // Predicated region
        $region63: #{corrformer_forward.56} parent=57 // pred_check
          %p254 = pneg %p61
        $region64: #{corrformer_forward.56} parent=57 // pred_check_branch
          %256 = sbr.rel (%p254) target = $region66
        $region65: #{corrformer_forward.56} parent=57 // pred_region
          %s257 = smul.addr %s17, 8
          %s258 = scalar_lea.vmem %s1, %s257
          // Predicated region
          $region67: #{corrformer_forward.56} parent=65 // pred_check
            _
          $region68: #{corrformer_forward.56} parent=65 // pred_check_branch
            %260 = sbr.rel (0) target = $region70
          $region69: #{corrformer_forward.56} parent=65 // pred_region
            // Predicated region
            $region71: #{corrformer_forward.56} parent=69 // pred_check
              _
            $region72: #{corrformer_forward.56} parent=69 // pred_check_branch
              %262 = sbr.rel (0) target = $region74
            $region73: #{corrformer_forward.56} parent=69 // pred_region
              // Predicated region
              $region86: #{corrformer_forward.56} parent=73 // pred_check
                _
              $region87: #{corrformer_forward.56} parent=73 // pred_check_branch
                %280 = sbr.rel (0) target = $region89
              $region88: #{corrformer_forward.56} parent=73 // pred_region
                loop: start=0, step=1, limit=1
                $region90: #{corrformer_forward.56} parent=88 // loop_pre_header
                  _
                $region91: #{corrformer_forward.56} parent=88 // loop_header
                  %s282 = sphi 0, %s286
                  %p283 = scmp.ge.s32.totalorder %s282, 1
                  %s287 = sphi %s248, %s248
                  %s288 = sphi %s258, %s258
                $region92: #{corrformer_forward.56} parent=88 // loop_header_branch
                  %285 = sbr.rel (%p283) target = $region96
                $region93: #{corrformer_forward.56} parent=88 // loop_body
                  %v289 = vld [vmem:[%s287] sm:$0xff]
                  %290 = vst [vmem:[%s288] sm:$0xff] %v289
                  %v291 = vld [vmem:[%s287 + $0x8] sm:$0xff]
                  %292 = vst [vmem:[%s288 + $0x10] sm:$0xff] %v291
                $region94: #{corrformer_forward.56} parent=88 // loop_footer
                  %s286 = sadd.s32 1, %s282
                $region95: #{corrformer_forward.56} parent=88 // loop_footer_branch
                  %281 = sbr.rel target = $region91
                $region96: #{corrformer_forward.56} parent=88 // loop_exit
                  _
              $region89: #{corrformer_forward.56} parent=73 // pred_fallthru
                _
              // Predicated region
              $region97: #{corrformer_forward.56} parent=73 // pred_check
                _
              $region98: #{corrformer_forward.56} parent=73 // pred_check_branch
                %294 = sbr.rel target = $region100
              $region99: #{corrformer_forward.56} parent=73 // pred_region
                _
              $region100: #{corrformer_forward.56} parent=73 // pred_fallthru
                _
            $region74: #{corrformer_forward.56} parent=69 // pred_fallthru
              _
            // Predicated region
            $region75: #{corrformer_forward.56} parent=69 // pred_check
              _
            $region76: #{corrformer_forward.56} parent=69 // pred_check_branch
              %264 = sbr.rel target = $region78
            $region77: #{corrformer_forward.56} parent=69 // pred_region
              %s266 = ssub.s32 256, 1
              loop: start=0, step=1, limit=1
              $region79: #{corrformer_forward.56} parent=77 // loop_pre_header
                _
              $region80: #{corrformer_forward.56} parent=77 // loop_header
                %s268 = sphi 0, %s272
                %p269 = scmp.ge.s32.totalorder %s268, 1
                %s273 = sphi %s248, %s248
                %s274 = sphi %s258, %s258
              $region81: #{corrformer_forward.56} parent=77 // loop_header_branch
                %271 = sbr.rel (%p269) target = $region85
              $region82: #{corrformer_forward.56} parent=77 // loop_body
                %v275 = vld [vmem:[%s273] sm:%s266]
                %276 = vst [vmem:[%s274] sm:%s266] %v275
                %v277 = vld [vmem:[%s273 + $0x8] sm:%s266]
                %278 = vst [vmem:[%s274 + $0x10] sm:%s266] %v277
              $region83: #{corrformer_forward.56} parent=77 // loop_footer
                %s272 = sadd.s32 1, %s268
              $region84: #{corrformer_forward.56} parent=77 // loop_footer_branch
                %267 = sbr.rel target = $region80
              $region85: #{corrformer_forward.56} parent=77 // loop_exit
                _
            $region78: #{corrformer_forward.56} parent=69 // pred_fallthru
              _
          $region70: #{corrformer_forward.56} parent=65 // pred_fallthru
            _
          %295 = vnop
        $region66: #{corrformer_forward.56} parent=57 // pred_fallthru
          _
        // Predicated region
        $region101: #{corrformer_forward.56} parent=57 // pred_check
          %p296 = pneg %p87
        $region102: #{corrformer_forward.56} parent=57 // pred_check_branch
          %298 = sbr.rel (%p296) target = $region104
        $region103: #{corrformer_forward.56} parent=57 // pred_region
          %s300 = ssub.s32 256, 256
          %301 = vsyncadd %s250, %s300
          %s302 = smul.addr %s17, 128
          %s303 = scalar_lea.hbm %s2, %s302
          %s304 = sshll.u32 %s253, 4
          %s305 = int_to_ptr.vmem [resolvable:$true] %s304
          %310 = dma.vmem_to_hbm [thread:$0]  %s305, 256, %s303, %s250, 128, 256, 8
        $region104: #{corrformer_forward.56} parent=57 // pred_fallthru
          _
      $region58: #{corrformer_forward.56} parent=5 // pred_fallthru
        _
      %p311 = scmp.le.s32.totalorder 2, %s12
      // Predicated region
      $region105: #{corrformer_forward.56} parent=5 // pred_check
        %p312 = pneg %p311
      $region106: #{corrformer_forward.56} parent=5 // pred_check_branch
        %314 = sbr.rel (%p312) target = $region108
      $region107: #{corrformer_forward.56} parent=5 // pred_region
        %s315 = ssub.s32 %s12, 2
        // Predicated region
        $region109: #{corrformer_forward.56} parent=107 // pred_check
          %p316 = pneg %p67
        $region110: #{corrformer_forward.56} parent=107 // pred_check_branch
          %318 = sbr.rel (%p316) target = $region112
        $region111: #{corrformer_forward.56} parent=107 // pred_region
          %s319 = sand.u32 %s52, 1
          %s320 = sand.u32 %s52, 1
          %s321 = smul.addr %s320, 16
          %s322 = scalar_lea.vmem [#allocation3], %s321
        $region112: #{corrformer_forward.56} parent=107 // pred_fallthru
          _
        // Predicated region
        $region113: #{corrformer_forward.56} parent=107 // pred_check
          %p323 = pneg %p93
        $region114: #{corrformer_forward.56} parent=107 // pred_check_branch
          %325 = sbr.rel (%p323) target = $region116
        $region115: #{corrformer_forward.56} parent=107 // pred_region
          %s326 = sand.u32 %s78, 1
          %s327 = scalar_lea.sflag [#allocation5], %s326
          %s328 = sand.u32 %s78, 1
          %s329 = smul.addr %s328, 16
          %s330 = scalar_lea.vmem [#allocation4], %s329
          %331 = dma.done %s327, 256
        $region116: #{corrformer_forward.56} parent=107 // pred_fallthru
          _
      $region108: #{corrformer_forward.56} parent=5 // pred_fallthru
        _
    $region6: #{corrformer_forward.56} parent=1 // loop_footer
      %s16 = sadd.s32 1, %s12
    $region7: #{corrformer_forward.56} parent=1 // loop_footer_branch
      %11 = sbr.rel target = $region3
    $region8: #{corrformer_forward.56} parent=1 // loop_exit
      _
    %332 = vsyncpa [#allocation5], 1
    %s333 = scalar_lea.sflag [#allocation5], 1
    %334 = vsyncpa %s333, 1

// kernel: corrformer_forward.55
$region0: #{corrformer_forward.55}
  #allocation0 [shape = 'u32[]', space=smem, size = 0x4, offset = 0x4, fixed_abs, tag = 'smem constant byte address 0x4 - core index']
  #allocation1 [shape = 'u32[144,128]{1,0:T(1,128)}', space=vmem, size = 0x12000, scoped, tag = 'internal scratch']
  %s0 = inlined_call_operand.vmem [shape: f32[96,32], index: 0, kind: input, shape index: {}]
  %s1 = inlined_call_operand.vmem [shape: bf16[32,64], index: 1, kind: input, shape index: {}]
  %s2 = inlined_call_operand.vmem [shape: bf16[64,32], index: 2, kind: input, shape index: {}]
  %s3 = inlined_call_operand.vmem [shape: f32[96,32], index: 3, kind: output, shape index: {}]
  %s4 = sld [smem:[#allocation0]]
  $region22: #{corrformer_forward.55} parent=0
    _
  %s6 = ssub.s32 1, %s4
  %s7 = scalar_select 0, %s6, %s4
  // Predicated region
  $region2: #{corrformer_forward.55} parent=0 // pred_check
    _
  $region3: #{corrformer_forward.55} parent=0 // pred_check_branch
    %9 = sbr.rel (0) target = $region5
  $region4: #{corrformer_forward.55} parent=0 // pred_region
    _
  $region5: #{corrformer_forward.55} parent=0 // pred_fallthru
    _
  // Predicated region
  $region6: #{corrformer_forward.55} parent=0 // pred_check
    _
  $region7: #{corrformer_forward.55} parent=0 // pred_check_branch
    %11 = sbr.rel (0) target = $region9
  $region8: #{corrformer_forward.55} parent=0 // pred_region
    _
  $region9: #{corrformer_forward.55} parent=0 // pred_fallthru
    _
  // Predicated region
  $region10: #{corrformer_forward.55} parent=0 // pred_check
    _
  $region11: #{corrformer_forward.55} parent=0 // pred_check_branch
    %13 = sbr.rel (0) target = $region13
  $region12: #{corrformer_forward.55} parent=0 // pred_region
    _
  $region13: #{corrformer_forward.55} parent=0 // pred_fallthru
    _
  %v15 = vld [vmem:[%s0] sm:$0xff]
  %v16 = vld [vmem:[%s0 + $0x8] sm:$0xff]
  %v17 = vld [vmem:[%s0 + $0x10] sm:$0xff]
  %v18 = vld [vmem:[%s0 + $0x18] sm:$0xff]
  %v19 = vld [vmem:[%s0 + $0x20] sm:$0xff]
  %v20 = vld [vmem:[%s0 + $0x28] sm:$0xff]
  %v21 = vld [vmem:[%s0 + $0x30] sm:$0xff]
  %v22 = vld [vmem:[%s0 + $0x38] sm:$0xff]
  %v23 = vld [vmem:[%s0 + $0x40] sm:$0xff]
  %v24 = vld [vmem:[%s0 + $0x48] sm:$0xff]
  %v25 = vld [vmem:[%s0 + $0x50] sm:$0xff]
  %v26 = vld [vmem:[%s0 + $0x58] sm:$0xff]
  %v27 = vpack.c.bf16 %v16, %v15
  %v28 = vpack.c.bf16 %v18, %v17
  %v29 = vpack.c.bf16 %v20, %v19
  %v30 = vpack.c.bf16 %v22, %v21
  %v31 = vpack.c.bf16 %v24, %v23
  %v32 = vpack.c.bf16 %v26, %v25
  %v33 = vld [vmem:[%s1] sm:$0xf]
  %v34 = vld [vmem:[%s1 + $0x4] sm:$0xf]
  %v35 = vld [vmem:[%s1 + $0x8] sm:$0xf]
  %v36 = vld [vmem:[%s1 + $0xc] sm:$0xf]
  %v41 = vunpack.c.l.b16 %v33
  %v42 = vunpack.c.l.b16 %v34
  %v43 = vunpack.c.l.b16 %v35
  %v44 = vunpack.c.l.b16 %v36
  %v45 = vpack.c.b16 %v42, %v41
  %v46 = vpack.c.b16 %v44, %v43
  %vm49 = vcmask 261120
  %v51 = vsel %vm49, %v27, 0
  %v54 = vsel %vm49, %v28, 0
  %v57 = vsel %vm49, %v29, 0
  %v60 = vsel %vm49, %v30, 0
  %v63 = vsel %vm49, %v31, 0
  %v66 = vsel %vm49, %v32, 0
  %68 = vmatprep.subr.bf16.mxu0 0
  %69 = vmatpush1.bf16.msra.mxu0 0
  %70 = vmatprep.subr.bf16.mxu0 0
  %71 = vmatpush1.bf16.msra.mxu0 0
  %72 = vmatprep.subr.bf16.mxu0 0
  %73 = vmatpush1.bf16.msra.mxu0 0
  %74 = vmatprep.subr.bf16.mxu0 0
  %75 = vmatpush1.bf16.msra.mxu0 0
  %76 = vmatprep.subr.bf16.mxu0 0
  %77 = vmatpush1.bf16.msra.mxu0 0
  %78 = vmatprep.subr.bf16.mxu0 0
  %79 = vmatpush1.bf16.msra.mxu0 0
  %80 = vmatprep.subr.bf16.mxu0 0
  %81 = vmatpush1.bf16.msra.mxu0 %v46
  %82 = vmatprep.subr.bf16.mxu0 0
  %83 = vmatpush1.bf16.msra.mxu0 %v45
  %84 = vmatprep.subr.bf16.mxu0 0
  %85 = vmatpush2.bf16.msra.mxu0 0
  %86 = vmatprep.subr.bf16.mxu0 0
  %87 = vmatpush2.bf16.msra.mxu0 0
  %88 = vmatprep.subr.bf16.mxu0 0
  %89 = vmatpush2.bf16.msra.mxu0 0
  %90 = vmatprep.subr.bf16.mxu0 0
  %91 = vmatpush2.bf16.msra.mxu0 0
  %92 = vmatprep.subr.bf16.mxu0 0
  %93 = vmatpush2.bf16.msra.mxu0 0
  %94 = vmatprep.subr.bf16.mxu0 0
  %95 = vmatpush2.bf16.msra.mxu0 0
  %96 = vmatprep.subr.bf16.mxu0 0
  %97 = vmatpush2.bf16.msra.mxu0 0
  %98 = vmatprep.subr.bf16.mxu0 0
  %99 = vmatpush2.bf16.msra.mxu0 0
  %100 = vmatprep.mubr.bf16.mxu0 0
  %101 = vmatmul.mubr.bf16.gmra.mxu0 %v51
  %v102 = vpop.f32.mrf.mxu0
  %v103 = vadd.f32 0.0, %v102
  %v104 = vpop.f32.mrf.mxu0
  %v105 = vpop.f32.mrf.mxu0
  %v106 = vadd.f32 0.0, %v105
  %v107 = vpop.f32.mrf.mxu0
  %108 = vmatprep.mubr.bf16.mxu0 0
  %109 = vmatmul.mubr.bf16.gmra.mxu0 %v54
  %v110 = vpop.f32.mrf.mxu0
  %v111 = vadd.f32 0.0, %v110
  %v112 = vpop.f32.mrf.mxu0
  %v113 = vpop.f32.mrf.mxu0
  %v114 = vadd.f32 0.0, %v113
  %v115 = vpop.f32.mrf.mxu0
  %116 = vmatprep.mubr.bf16.mxu0 0
  %117 = vmatmul.mubr.bf16.gmra.mxu0 %v57
  %v118 = vpop.f32.mrf.mxu0
  %v119 = vadd.f32 0.0, %v118
  %v120 = vpop.f32.mrf.mxu0
  %v121 = vpop.f32.mrf.mxu0
  %v122 = vadd.f32 0.0, %v121
  %v123 = vpop.f32.mrf.mxu0
  %124 = vmatprep.mubr.bf16.mxu0 0
  %125 = vmatmul.mubr.bf16.gmra.mxu0 %v60
  %v126 = vpop.f32.mrf.mxu0
  %v127 = vadd.f32 0.0, %v126
  %v128 = vpop.f32.mrf.mxu0
  %v129 = vpop.f32.mrf.mxu0
  %v130 = vadd.f32 0.0, %v129
  %v131 = vpop.f32.mrf.mxu0
  %132 = vmatprep.mubr.bf16.mxu0 0
  %133 = vmatmul.mubr.bf16.gmra.mxu0 %v63
  %v134 = vpop.f32.mrf.mxu0
  %v135 = vadd.f32 0.0, %v134
  %v136 = vpop.f32.mrf.mxu0
  %v137 = vpop.f32.mrf.mxu0
  %v138 = vadd.f32 0.0, %v137
  %v139 = vpop.f32.mrf.mxu0
  %140 = vmatprep.mubr.bf16.mxu0 0
  %141 = vmatmul.mubr.bf16.gmra.mxu0 %v66
  %v142 = vpop.f32.mrf.mxu0
  %v143 = vadd.f32 0.0, %v142
  %v144 = vpop.f32.mrf.mxu0
  %v145 = vpop.f32.mrf.mxu0
  %v146 = vadd.f32 0.0, %v145
  %v147 = vpop.f32.mrf.mxu0
  %148 = vdwg.mxu0
  %v149 = vmul.f32 %v103, %v103
  %v150 = vmul.f32 %v106, %v106
  %v151 = vmul.f32 %v111, %v111
  %v152 = vmul.f32 %v114, %v114
  %v153 = vmul.f32 %v119, %v119
  %v154 = vmul.f32 %v122, %v122
  %v155 = vmul.f32 %v127, %v127
  %v156 = vmul.f32 %v130, %v130
  %v157 = vmul.f32 %v135, %v135
  %v158 = vmul.f32 %v138, %v138
  %v159 = vmul.f32 %v143, %v143
  %v160 = vmul.f32 %v146, %v146
  %v161 = vmul.f32 %v103, %v149
  %v162 = vmul.f32 %v106, %v150
  %v163 = vmul.f32 %v111, %v151
  %v164 = vmul.f32 %v114, %v152
  %v165 = vmul.f32 %v119, %v153
  %v166 = vmul.f32 %v122, %v154
  %v167 = vmul.f32 %v127, %v155
  %v168 = vmul.f32 %v130, %v156
  %v169 = vmul.f32 %v135, %v157
  %v170 = vmul.f32 %v138, %v158
  %v171 = vmul.f32 %v143, %v159
  %v172 = vmul.f32 %v146, %v160
  %v173 = vmul.f32 %v161, 0.044715
  %v174 = vmul.f32 %v162, 0.044715
  %v175 = vmul.f32 %v163, 0.044715
  %v176 = vmul.f32 %v164, 0.044715
  %v177 = vmul.f32 %v165, 0.044715
  %v178 = vmul.f32 %v166, 0.044715
  %v179 = vmul.f32 %v167, 0.044715
  %v180 = vmul.f32 %v168, 0.044715
  %v181 = vmul.f32 %v169, 0.044715
  %v182 = vmul.f32 %v170, 0.044715
  %v183 = vmul.f32 %v171, 0.044715
  %v184 = vmul.f32 %v172, 0.044715
  %v185 = vadd.f32 %v103, %v173
  %v186 = vadd.f32 %v106, %v174
  %v187 = vadd.f32 %v111, %v175
  %v188 = vadd.f32 %v114, %v176
  %v189 = vadd.f32 %v119, %v177
  %v190 = vadd.f32 %v122, %v178
  %v191 = vadd.f32 %v127, %v179
  %v192 = vadd.f32 %v130, %v180
  %v193 = vadd.f32 %v135, %v181
  %v194 = vadd.f32 %v138, %v182
  %v195 = vadd.f32 %v143, %v183
  %v196 = vadd.f32 %v146, %v184
  %v197 = vmul.f32 %v185, 0.7978846
  %v198 = vmul.f32 %v186, 0.7978846
  %v199 = vmul.f32 %v187, 0.7978846
  %v200 = vmul.f32 %v188, 0.7978846
  %v201 = vmul.f32 %v189, 0.7978846
  %v202 = vmul.f32 %v190, 0.7978846
  %v203 = vmul.f32 %v191, 0.7978846
  %v204 = vmul.f32 %v192, 0.7978846
  %v205 = vmul.f32 %v193, 0.7978846
  %v206 = vmul.f32 %v194, 0.7978846
  %v207 = vmul.f32 %v195, 0.7978846
  %v208 = vmul.f32 %v196, 0.7978846
  %v209 = vtanh.pop %v197
  %v210 = vtanh.pop %v198
  %v211 = vtanh.pop %v199
  %v212 = vtanh.pop %v200
  %v213 = vtanh.pop %v201
  %v214 = vtanh.pop %v202
  %v215 = vtanh.pop %v203
  %v216 = vtanh.pop %v204
  %v217 = vtanh.pop %v205
  %v218 = vtanh.pop %v206
  %v219 = vtanh.pop %v207
  %v220 = vtanh.pop %v208
  %v221 = vadd.f32 %v209, 1.0
  %v222 = vadd.f32 %v210, 1.0
  %v223 = vadd.f32 %v211, 1.0
  %v224 = vadd.f32 %v212, 1.0
  %v225 = vadd.f32 %v213, 1.0
  %v226 = vadd.f32 %v214, 1.0
  %v227 = vadd.f32 %v215, 1.0
  %v228 = vadd.f32 %v216, 1.0
  %v229 = vadd.f32 %v217, 1.0
  %v230 = vadd.f32 %v218, 1.0
  %v231 = vadd.f32 %v219, 1.0
  %v232 = vadd.f32 %v220, 1.0
  %v233 = vmul.f32 %v221, 0.5
  %v234 = vmul.f32 %v222, 0.5
  %v235 = vmul.f32 %v223, 0.5
  %v236 = vmul.f32 %v224, 0.5
  %v237 = vmul.f32 %v225, 0.5
  %v238 = vmul.f32 %v226, 0.5
  %v239 = vmul.f32 %v227, 0.5
  %v240 = vmul.f32 %v228, 0.5
  %v241 = vmul.f32 %v229, 0.5
  %v242 = vmul.f32 %v230, 0.5
  %v243 = vmul.f32 %v231, 0.5
  %v244 = vmul.f32 %v232, 0.5
  %v245 = vmul.f32 %v103, %v233
  %v246 = vmul.f32 %v106, %v234
  %v247 = vmul.f32 %v111, %v235
  %v248 = vmul.f32 %v114, %v236
  %v249 = vmul.f32 %v119, %v237
  %v250 = vmul.f32 %v122, %v238
  %v251 = vmul.f32 %v127, %v239
  %v252 = vmul.f32 %v130, %v240
  %v253 = vmul.f32 %v135, %v241
  %v254 = vmul.f32 %v138, %v242
  %v255 = vmul.f32 %v143, %v243
  %v256 = vmul.f32 %v146, %v244
  %v257 = vpack.c.bf16 %v246, %v245
  %v258 = vpack.c.bf16 %v248, %v247
  %v259 = vpack.c.bf16 %v250, %v249
  %v260 = vpack.c.bf16 %v252, %v251
  %v261 = vpack.c.bf16 %v254, %v253
  %v262 = vpack.c.bf16 %v256, %v255
  %v263 = vld [vmem:[%s2] sm:$0xf]
  %v264 = vld [vmem:[%s2 + $0x4] sm:$0xf]
  %v265 = vld [vmem:[%s2 + $0x8] sm:$0xf]
  %v266 = vld [vmem:[%s2 + $0xc] sm:$0xf]
  %v267 = vld [vmem:[%s2 + $0x10] sm:$0xf]
  %v268 = vld [vmem:[%s2 + $0x14] sm:$0xf]
  %v269 = vld [vmem:[%s2 + $0x18] sm:$0xf]
  %v270 = vld [vmem:[%s2 + $0x1c] sm:$0xf]
  %v279 = vunpack.c.l.b16 %v263
  %v280 = vunpack.c.l.b16 %v264
  %v281 = vunpack.c.l.b16 %v265
  %v282 = vunpack.c.l.b16 %v266
  %v283 = vunpack.c.l.b16 %v267
  %v284 = vunpack.c.l.b16 %v268
  %v285 = vunpack.c.l.b16 %v269
  %v286 = vunpack.c.l.b16 %v270
  %v287 = vpack.c.b16 %v280, %v279
  %v288 = vpack.c.b16 %v282, %v281
  %v289 = vpack.c.b16 %v284, %v283
  %v290 = vpack.c.b16 %v286, %v285
  %vm295 = vcmask 523264
  %v297 = vsel %vm295, %v257, 0
  %v300 = vsel %vm295, %v258, 0
  %v303 = vsel %vm295, %v259, 0
  %v306 = vsel %vm295, %v260, 0
  %v309 = vsel %vm295, %v261, 0
  %v312 = vsel %vm295, %v262, 0
  %314 = vmatprep.subr.bf16.mxu0 0
  %315 = vmatpush1.bf16.msra.mxu0 0
  %316 = vmatprep.subr.bf16.mxu0 0
  %317 = vmatpush1.bf16.msra.mxu0 0
  %318 = vmatprep.subr.bf16.mxu0 0
  %319 = vmatpush1.bf16.msra.mxu0 0
  %320 = vmatprep.subr.bf16.mxu0 0
  %321 = vmatpush1.bf16.msra.mxu0 0
  %322 = vmatprep.subr.bf16.mxu0 0
  %323 = vmatpush1.bf16.msra.mxu0 %v290
  %324 = vmatprep.subr.bf16.mxu0 0
  %325 = vmatpush1.bf16.msra.mxu0 %v289
  %326 = vmatprep.subr.bf16.mxu0 0
  %327 = vmatpush1.bf16.msra.mxu0 %v288
  %328 = vmatprep.subr.bf16.mxu0 0
  %329 = vmatpush1.bf16.msra.mxu0 %v287
  %330 = vmatprep.subr.bf16.mxu0 0
  %331 = vmatpush2.bf16.msra.mxu0 0
  %332 = vmatprep.subr.bf16.mxu0 0
  %333 = vmatpush2.bf16.msra.mxu0 0
  %334 = vmatprep.subr.bf16.mxu0 0
  %335 = vmatpush2.bf16.msra.mxu0 0
  %336 = vmatprep.subr.bf16.mxu0 0
  %337 = vmatpush2.bf16.msra.mxu0 0
  %338 = vmatprep.subr.bf16.mxu0 0
  %339 = vmatpush2.bf16.msra.mxu0 0
  %340 = vmatprep.subr.bf16.mxu0 0
  %341 = vmatpush2.bf16.msra.mxu0 0
  %342 = vmatprep.subr.bf16.mxu0 0
  %343 = vmatpush2.bf16.msra.mxu0 0
  %344 = vmatprep.subr.bf16.mxu0 0
  %345 = vmatpush2.bf16.msra.mxu0 0
  %346 = vmatprep.mubr.bf16.mxu0 0
  %347 = vmatmul.mubr.bf16.gmra.mxu0 %v297
  %v348 = vpop.f32.mrf.mxu0
  %v349 = vadd.f32 0.0, %v348
  %v350 = vpop.f32.mrf.mxu0
  %v351 = vpop.f32.mrf.mxu0
  %v352 = vadd.f32 0.0, %v351
  %v353 = vpop.f32.mrf.mxu0
  %354 = vmatprep.mubr.bf16.mxu0 0
  %355 = vmatmul.mubr.bf16.gmra.mxu0 %v300
  %v356 = vpop.f32.mrf.mxu0
  %v357 = vadd.f32 0.0, %v356
  %v358 = vpop.f32.mrf.mxu0
  %v359 = vpop.f32.mrf.mxu0
  %v360 = vadd.f32 0.0, %v359
  %v361 = vpop.f32.mrf.mxu0
  %362 = vmatprep.mubr.bf16.mxu0 0
  %363 = vmatmul.mubr.bf16.gmra.mxu0 %v303
  %v364 = vpop.f32.mrf.mxu0
  %v365 = vadd.f32 0.0, %v364
  %v366 = vpop.f32.mrf.mxu0
  %v367 = vpop.f32.mrf.mxu0
  %v368 = vadd.f32 0.0, %v367
  %v369 = vpop.f32.mrf.mxu0
  %370 = vmatprep.mubr.bf16.mxu0 0
  %371 = vmatmul.mubr.bf16.gmra.mxu0 %v306
  %v372 = vpop.f32.mrf.mxu0
  %v373 = vadd.f32 0.0, %v372
  %v374 = vpop.f32.mrf.mxu0
  %v375 = vpop.f32.mrf.mxu0
  %v376 = vadd.f32 0.0, %v375
  %v377 = vpop.f32.mrf.mxu0
  %378 = vmatprep.mubr.bf16.mxu0 0
  %379 = vmatmul.mubr.bf16.gmra.mxu0 %v309
  %v380 = vpop.f32.mrf.mxu0
  %v381 = vadd.f32 0.0, %v380
  %v382 = vpop.f32.mrf.mxu0
  %v383 = vpop.f32.mrf.mxu0
  %v384 = vadd.f32 0.0, %v383
  %v385 = vpop.f32.mrf.mxu0
  %386 = vmatprep.mubr.bf16.mxu0 0
  %387 = vmatmul.mubr.bf16.gmra.mxu0 %v312
  %v388 = vpop.f32.mrf.mxu0
  %v389 = vadd.f32 0.0, %v388
  %v390 = vpop.f32.mrf.mxu0
  %v391 = vpop.f32.mrf.mxu0
  %v392 = vadd.f32 0.0, %v391
  %v393 = vpop.f32.mrf.mxu0
  %394 = vdwg.mxu0
  %v395 = vadd.f32 %v15, %v349
  %v396 = vadd.f32 %v16, %v352
  %v397 = vadd.f32 %v17, %v357
  %v398 = vadd.f32 %v18, %v360
  %v399 = vadd.f32 %v19, %v365
  %v400 = vadd.f32 %v20, %v368
  %v401 = vadd.f32 %v21, %v373
  %v402 = vadd.f32 %v22, %v376
  %v403 = vadd.f32 %v23, %v381
  %v404 = vadd.f32 %v24, %v384
  %v405 = vadd.f32 %v25, %v389
  %v406 = vadd.f32 %v26, %v392
  %407 = vst.msk [vmem:[%s3] sm:$0xff] %vm49, %v395
  %408 = vst.msk [vmem:[%s3 + $0x8] sm:$0xff] %vm49, %v396
  %409 = vst.msk [vmem:[%s3 + $0x10] sm:$0xff] %vm49, %v397
  %410 = vst.msk [vmem:[%s3 + $0x18] sm:$0xff] %vm49, %v398
  %411 = vst.msk [vmem:[%s3 + $0x20] sm:$0xff] %vm49, %v399
  %412 = vst.msk [vmem:[%s3 + $0x28] sm:$0xff] %vm49, %v400
  %413 = vst.msk [vmem:[%s3 + $0x30] sm:$0xff] %vm49, %v401
  %414 = vst.msk [vmem:[%s3 + $0x38] sm:$0xff] %vm49, %v402
  %415 = vst.msk [vmem:[%s3 + $0x40] sm:$0xff] %vm49, %v403
  %416 = vst.msk [vmem:[%s3 + $0x48] sm:$0xff] %vm49, %v404
  %417 = vst.msk [vmem:[%s3 + $0x50] sm:$0xff] %vm49, %v405
  %418 = vst.msk [vmem:[%s3 + $0x58] sm:$0xff] %vm49, %v406
  // Predicated region
  $region14: #{corrformer_forward.55} parent=0 // pred_check
    _
  $region15: #{corrformer_forward.55} parent=0 // pred_check_branch
    %420 = sbr.rel (0) target = $region17
  $region16: #{corrformer_forward.55} parent=0 // pred_region
    _
  $region17: #{corrformer_forward.55} parent=0 // pred_fallthru
    _
  // Predicated region
  $region18: #{corrformer_forward.55} parent=0 // pred_check
    _
  $region19: #{corrformer_forward.55} parent=0 // pred_check_branch
    %422 = sbr.rel (0) target = $region21
  $region20: #{corrformer_forward.55} parent=0 // pred_region
    _
  $region21: #{corrformer_forward.55} parent=0 // pred_fallthru
    _

// kernel: corrformer_forward.57
$region0: #{corrformer_forward.57}
  #allocation0 [shape = 'u32[]', space=smem, size = 0x4, offset = 0x4, fixed_abs, tag = 'smem constant byte address 0x4 - core index']
  #allocation1 [shape = 'u32[144,128]{1,0:T(1,128)}', space=vmem, size = 0x12000, scoped, tag = 'internal scratch']
  %s0 = inlined_call_operand.vmem [shape: f32[8,12,32], index: 0, kind: input, shape index: {}]
  %s1 = inlined_call_operand.vmem [shape: f32[1,1,32], index: 1, kind: input, shape index: {}]
  %s2 = inlined_call_operand.vmem [shape: f32[1,1,32], index: 2, kind: input, shape index: {}]
  %s3 = inlined_call_operand.vmem [shape: f32[8,12,32], index: 3, kind: output, shape index: {}]
  %s4 = sld [smem:[#allocation0]]
  $region22: #{corrformer_forward.57} parent=0
    _
  %s6 = ssub.s32 1, %s4
  %s7 = scalar_select 0, %s6, %s4
  // Predicated region
  $region2: #{corrformer_forward.57} parent=0 // pred_check
    _
  $region3: #{corrformer_forward.57} parent=0 // pred_check_branch
    %9 = sbr.rel (0) target = $region5
  $region4: #{corrformer_forward.57} parent=0 // pred_region
    _
  $region5: #{corrformer_forward.57} parent=0 // pred_fallthru
    _
  // Predicated region
  $region6: #{corrformer_forward.57} parent=0 // pred_check
    _
  $region7: #{corrformer_forward.57} parent=0 // pred_check_branch
    %11 = sbr.rel (0) target = $region9
  $region8: #{corrformer_forward.57} parent=0 // pred_region
    _
  $region9: #{corrformer_forward.57} parent=0 // pred_fallthru
    _
  // Predicated region
  $region10: #{corrformer_forward.57} parent=0 // pred_check
    _
  $region11: #{corrformer_forward.57} parent=0 // pred_check_branch
    %13 = sbr.rel (0) target = $region13
  $region12: #{corrformer_forward.57} parent=0 // pred_region
    _
  $region13: #{corrformer_forward.57} parent=0 // pred_fallthru
    _
  %v14 = vld [vmem:[%s0] sm:$0xff]
  %v15 = vld [vmem:[%s0 + $0x8] sm:$0xf]
  %v16 = vld [vmem:[%s0 + $0x10] sm:$0xff]
  %v17 = vld [vmem:[%s0 + $0x18] sm:$0xf]
  %v18 = vld [vmem:[%s0 + $0x20] sm:$0xff]
  %v19 = vld [vmem:[%s0 + $0x28] sm:$0xf]
  %v20 = vld [vmem:[%s0 + $0x30] sm:$0xff]
  %v21 = vld [vmem:[%s0 + $0x38] sm:$0xf]
  %v22 = vld [vmem:[%s0 + $0x40] sm:$0xff]
  %v23 = vld [vmem:[%s0 + $0x48] sm:$0xf]
  %v24 = vld [vmem:[%s0 + $0x50] sm:$0xff]
  %v25 = vld [vmem:[%s0 + $0x58] sm:$0xf]
  %v26 = vld [vmem:[%s0 + $0x60] sm:$0xff]
  %v27 = vld [vmem:[%s0 + $0x68] sm:$0xf]
  %v28 = vld [vmem:[%s0 + $0x70] sm:$0xff]
  %v29 = vld [vmem:[%s0 + $0x78] sm:$0xf]
  %vm30 = vcmask 261120
  %v31 = vsel %vm30, %v14, 0.0
  %32 = vadd.xlane.f32.xlu0 %v31
  %v33 = vpop.xlane.xlu0 %32
  %vm34 = vcmask 257024
  %v35 = vsel %vm34, %v15, 0.0
  %36 = vadd.xlane.f32.xlu0 %v35
  %v37 = vpop.xlane.xlu0 %36
  %v38 = vsel %vm30, %v16, 0.0
  %39 = vadd.xlane.f32.xlu0 %v38
  %v40 = vpop.xlane.xlu0 %39
  %v41 = vsel %vm34, %v17, 0.0
  %42 = vadd.xlane.f32.xlu0 %v41
  %v43 = vpop.xlane.xlu0 %42
  %v44 = vsel %vm30, %v18, 0.0
  %45 = vadd.xlane.f32.xlu0 %v44
  %v46 = vpop.xlane.xlu0 %45
  %v47 = vsel %vm34, %v19, 0.0
  %48 = vadd.xlane.f32.xlu0 %v47
  %v49 = vpop.xlane.xlu0 %48
  %v50 = vsel %vm30, %v20, 0.0
  %51 = vadd.xlane.f32.xlu0 %v50
  %v52 = vpop.xlane.xlu0 %51
  %v53 = vsel %vm34, %v21, 0.0
  %54 = vadd.xlane.f32.xlu0 %v53
  %v55 = vpop.xlane.xlu0 %54
  %v56 = vsel %vm30, %v22, 0.0
  %57 = vadd.xlane.f32.xlu0 %v56
  %v58 = vpop.xlane.xlu0 %57
  %v59 = vsel %vm34, %v23, 0.0
  %60 = vadd.xlane.f32.xlu0 %v59
  %v61 = vpop.xlane.xlu0 %60
  %v62 = vsel %vm30, %v24, 0.0
  %63 = vadd.xlane.f32.xlu0 %v62
  %v64 = vpop.xlane.xlu0 %63
  %v65 = vsel %vm34, %v25, 0.0
  %66 = vadd.xlane.f32.xlu0 %v65
  %v67 = vpop.xlane.xlu0 %66
  %v68 = vsel %vm30, %v26, 0.0
  %69 = vadd.xlane.f32.xlu0 %v68
  %v70 = vpop.xlane.xlu0 %69
  %v71 = vsel %vm34, %v27, 0.0
  %72 = vadd.xlane.f32.xlu0 %v71
  %v73 = vpop.xlane.xlu0 %72
  %v74 = vsel %vm30, %v28, 0.0
  %75 = vadd.xlane.f32.xlu0 %v74
  %v76 = vpop.xlane.xlu0 %75
  %v77 = vsel %vm34, %v29, 0.0
  %78 = vadd.xlane.f32.xlu0 %v77
  %v79 = vpop.xlane.xlu0 %78
  %v80 = vrcp.pop 32.0
  %v81 = vmul.f32 %v33, %v80
  %v82 = vmul.f32 %v37, %v80
  %v83 = vmul.f32 %v40, %v80
  %v84 = vmul.f32 %v43, %v80
  %v85 = vmul.f32 %v46, %v80
  %v86 = vmul.f32 %v49, %v80
  %v87 = vmul.f32 %v52, %v80
  %v88 = vmul.f32 %v55, %v80
  %v89 = vmul.f32 %v58, %v80
  %v90 = vmul.f32 %v61, %v80
  %v91 = vmul.f32 %v64, %v80
  %v92 = vmul.f32 %v67, %v80
  %v93 = vmul.f32 %v70, %v80
  %v94 = vmul.f32 %v73, %v80
  %v95 = vmul.f32 %v76, %v80
  %v96 = vmul.f32 %v79, %v80
  %v97 = vsub.f32 %v14, %v81
  %v98 = vsub.f32 %v15, %v82
  %v99 = vsub.f32 %v16, %v83
  %v100 = vsub.f32 %v17, %v84
  %v101 = vsub.f32 %v18, %v85
  %v102 = vsub.f32 %v19, %v86
  %v103 = vsub.f32 %v20, %v87
  %v104 = vsub.f32 %v21, %v88
  %v105 = vsub.f32 %v22, %v89
  %v106 = vsub.f32 %v23, %v90
  %v107 = vsub.f32 %v24, %v91
  %v108 = vsub.f32 %v25, %v92
  %v109 = vsub.f32 %v26, %v93
  %v110 = vsub.f32 %v27, %v94
  %v111 = vsub.f32 %v28, %v95
  %v112 = vsub.f32 %v29, %v96
  %v113 = vmul.f32 %v97, %v97
  %v114 = vmul.f32 %v98, %v98
  %v115 = vmul.f32 %v99, %v99
  %v116 = vmul.f32 %v100, %v100
  %v117 = vmul.f32 %v101, %v101
  %v118 = vmul.f32 %v102, %v102
  %v119 = vmul.f32 %v103, %v103
  %v120 = vmul.f32 %v104, %v104
  %v121 = vmul.f32 %v105, %v105
  %v122 = vmul.f32 %v106, %v106
  %v123 = vmul.f32 %v107, %v107
  %v124 = vmul.f32 %v108, %v108
  %v125 = vmul.f32 %v109, %v109
  %v126 = vmul.f32 %v110, %v110
  %v127 = vmul.f32 %v111, %v111
  %v128 = vmul.f32 %v112, %v112
  %v129 = vsel %vm30, %v113, 0.0
  %130 = vadd.xlane.f32.xlu0 %v129
  %v131 = vpop.xlane.xlu0 %130
  %v132 = vsel %vm34, %v114, 0.0
  %133 = vadd.xlane.f32.xlu0 %v132
  %v134 = vpop.xlane.xlu0 %133
  %v135 = vsel %vm30, %v115, 0.0
  %136 = vadd.xlane.f32.xlu0 %v135
  %v137 = vpop.xlane.xlu0 %136
  %v138 = vsel %vm34, %v116, 0.0
  %139 = vadd.xlane.f32.xlu0 %v138
  %v140 = vpop.xlane.xlu0 %139
  %v141 = vsel %vm30, %v117, 0.0
  %142 = vadd.xlane.f32.xlu0 %v141
  %v143 = vpop.xlane.xlu0 %142
  %v144 = vsel %vm34, %v118, 0.0
  %145 = vadd.xlane.f32.xlu0 %v144
  %v146 = vpop.xlane.xlu0 %145
  %v147 = vsel %vm30, %v119, 0.0
  %148 = vadd.xlane.f32.xlu0 %v147
  %v149 = vpop.xlane.xlu0 %148
  %v150 = vsel %vm34, %v120, 0.0
  %151 = vadd.xlane.f32.xlu0 %v150
  %v152 = vpop.xlane.xlu0 %151
  %v153 = vsel %vm30, %v121, 0.0
  %154 = vadd.xlane.f32.xlu0 %v153
  %v155 = vpop.xlane.xlu0 %154
  %v156 = vsel %vm34, %v122, 0.0
  %157 = vadd.xlane.f32.xlu0 %v156
  %v158 = vpop.xlane.xlu0 %157
  %v159 = vsel %vm30, %v123, 0.0
  %160 = vadd.xlane.f32.xlu0 %v159
  %v161 = vpop.xlane.xlu0 %160
  %v162 = vsel %vm34, %v124, 0.0
  %163 = vadd.xlane.f32.xlu0 %v162
  %v164 = vpop.xlane.xlu0 %163
  %v165 = vsel %vm30, %v125, 0.0
  %166 = vadd.xlane.f32.xlu0 %v165
  %v167 = vpop.xlane.xlu0 %166
  %v168 = vsel %vm34, %v126, 0.0
  %169 = vadd.xlane.f32.xlu0 %v168
  %v170 = vpop.xlane.xlu0 %169
  %v171 = vsel %vm30, %v127, 0.0
  %172 = vadd.xlane.f32.xlu0 %v171
  %v173 = vpop.xlane.xlu0 %172
  %v174 = vsel %vm34, %v128, 0.0
  %175 = vadd.xlane.f32.xlu0 %v174
  %v176 = vpop.xlane.xlu0 %175
  %v177 = vmul.f32 %v131, %v80
  %v178 = vmul.f32 %v134, %v80
  %v179 = vmul.f32 %v137, %v80
  %v180 = vmul.f32 %v140, %v80
  %v181 = vmul.f32 %v143, %v80
  %v182 = vmul.f32 %v146, %v80
  %v183 = vmul.f32 %v149, %v80
  %v184 = vmul.f32 %v152, %v80
  %v185 = vmul.f32 %v155, %v80
  %v186 = vmul.f32 %v158, %v80
  %v187 = vmul.f32 %v161, %v80
  %v188 = vmul.f32 %v164, %v80
  %v189 = vmul.f32 %v167, %v80
  %v190 = vmul.f32 %v170, %v80
  %v191 = vmul.f32 %v173, %v80
  %v192 = vmul.f32 %v176, %v80
  %v193 = vadd.f32 %v177, 1e-05
  %v194 = vadd.f32 %v178, 1e-05
  %v195 = vadd.f32 %v179, 1e-05
  %v196 = vadd.f32 %v180, 1e-05
  %v197 = vadd.f32 %v181, 1e-05
  %v198 = vadd.f32 %v182, 1e-05
  %v199 = vadd.f32 %v183, 1e-05
  %v200 = vadd.f32 %v184, 1e-05
  %v201 = vadd.f32 %v185, 1e-05
  %v202 = vadd.f32 %v186, 1e-05
  %v203 = vadd.f32 %v187, 1e-05
  %v204 = vadd.f32 %v188, 1e-05
  %v205 = vadd.f32 %v189, 1e-05
  %v206 = vadd.f32 %v190, 1e-05
  %v207 = vadd.f32 %v191, 1e-05
  %v208 = vadd.f32 %v192, 1e-05
  %v209 = vrsqrt.pop %v193
  %v210 = vrsqrt.pop %v194
  %v211 = vrsqrt.pop %v195
  %v212 = vrsqrt.pop %v196
  %v213 = vrsqrt.pop %v197
  %v214 = vrsqrt.pop %v198
  %v215 = vrsqrt.pop %v199
  %v216 = vrsqrt.pop %v200
  %v217 = vrsqrt.pop %v201
  %v218 = vrsqrt.pop %v202
  %v219 = vrsqrt.pop %v203
  %v220 = vrsqrt.pop %v204
  %v221 = vrsqrt.pop %v205
  %v222 = vrsqrt.pop %v206
  %v223 = vrsqrt.pop %v207
  %v224 = vrsqrt.pop %v208
  %v225 = vmul.f32 %v97, %v209
  %v226 = vmul.f32 %v98, %v210
  %v227 = vmul.f32 %v99, %v211
  %v228 = vmul.f32 %v100, %v212
  %v229 = vmul.f32 %v101, %v213
  %v230 = vmul.f32 %v102, %v214
  %v231 = vmul.f32 %v103, %v215
  %v232 = vmul.f32 %v104, %v216
  %v233 = vmul.f32 %v105, %v217
  %v234 = vmul.f32 %v106, %v218
  %v235 = vmul.f32 %v107, %v219
  %v236 = vmul.f32 %v108, %v220
  %v237 = vmul.f32 %v109, %v221
  %v238 = vmul.f32 %v110, %v222
  %v239 = vmul.f32 %v111, %v223
  %v240 = vmul.f32 %v112, %v224
  %v241 = vld [vmem:[%s1] sm:$0x1]
  %v243 = vlaneseq
  %v244 = vshrl.u32 %v243, 7
  %v245 = vsub.s32 0, %v244
  %v246 = vrot.slane %v241, %v245
  %v248 = vmul.f32 %v225, %v246
  %v249 = vmul.f32 %v226, %v246
  %v250 = vmul.f32 %v227, %v246
  %v251 = vmul.f32 %v228, %v246
  %v252 = vmul.f32 %v229, %v246
  %v253 = vmul.f32 %v230, %v246
  %v254 = vmul.f32 %v231, %v246
  %v255 = vmul.f32 %v232, %v246
  %v256 = vmul.f32 %v233, %v246
  %v257 = vmul.f32 %v234, %v246
  %v258 = vmul.f32 %v235, %v246
  %v259 = vmul.f32 %v236, %v246
  %v260 = vmul.f32 %v237, %v246
  %v261 = vmul.f32 %v238, %v246
  %v262 = vmul.f32 %v239, %v246
  %v263 = vmul.f32 %v240, %v246
  %v264 = vld [vmem:[%s2] sm:$0x1]
  %v266 = vlaneseq
  %v267 = vshrl.u32 %v266, 7
  %v268 = vsub.s32 0, %v267
  %v269 = vrot.slane %v264, %v268
  %v271 = vadd.f32 %v248, %v269
  %v272 = vadd.f32 %v249, %v269
  %v273 = vadd.f32 %v250, %v269
  %v274 = vadd.f32 %v251, %v269
  %v275 = vadd.f32 %v252, %v269
  %v276 = vadd.f32 %v253, %v269
  %v277 = vadd.f32 %v254, %v269
  %v278 = vadd.f32 %v255, %v269
  %v279 = vadd.f32 %v256, %v269
  %v280 = vadd.f32 %v257, %v269
  %v281 = vadd.f32 %v258, %v269
  %v282 = vadd.f32 %v259, %v269
  %v283 = vadd.f32 %v260, %v269
  %v284 = vadd.f32 %v261, %v269
  %v285 = vadd.f32 %v262, %v269
  %v286 = vadd.f32 %v263, %v269
  %v287 = vsel %vm30, %v271, 0.0
  %v288 = vsel %vm34, %v272, 0.0
  %v289 = vadd.f32 %v287, %v288
  %v290 = vrot.slane %v289, 4
  %v291 = vadd.f32 %v289, %v290
  %v292 = vrot.slane %v291, 2
  %v293 = vadd.f32 %v291, %v292
  %v294 = vrot.slane %v293, 1
  %v295 = vadd.f32 %v293, %v294
  %v296 = vsel %vm30, %v273, 0.0
  %v297 = vsel %vm34, %v274, 0.0
  %v298 = vadd.f32 %v296, %v297
  %v299 = vrot.slane %v298, 4
  %v300 = vadd.f32 %v298, %v299
  %v301 = vrot.slane %v300, 2
  %v302 = vadd.f32 %v300, %v301
  %v303 = vrot.slane %v302, 1
  %v304 = vadd.f32 %v302, %v303
  %v305 = vsel %vm30, %v275, 0.0
  %v306 = vsel %vm34, %v276, 0.0
  %v307 = vadd.f32 %v305, %v306
  %v308 = vrot.slane %v307, 4
  %v309 = vadd.f32 %v307, %v308
  %v310 = vrot.slane %v309, 2
  %v311 = vadd.f32 %v309, %v310
  %v312 = vrot.slane %v311, 1
  %v313 = vadd.f32 %v311, %v312
  %v314 = vsel %vm30, %v277, 0.0
  %v315 = vsel %vm34, %v278, 0.0
  %v316 = vadd.f32 %v314, %v315
  %v317 = vrot.slane %v316, 4
  %v318 = vadd.f32 %v316, %v317
  %v319 = vrot.slane %v318, 2
  %v320 = vadd.f32 %v318, %v319
  %v321 = vrot.slane %v320, 1
  %v322 = vadd.f32 %v320, %v321
  %v323 = vsel %vm30, %v279, 0.0
  %v324 = vsel %vm34, %v280, 0.0
  %v325 = vadd.f32 %v323, %v324
  %v326 = vrot.slane %v325, 4
  %v327 = vadd.f32 %v325, %v326
  %v328 = vrot.slane %v327, 2
  %v329 = vadd.f32 %v327, %v328
  %v330 = vrot.slane %v329, 1
  %v331 = vadd.f32 %v329, %v330
  %v332 = vsel %vm30, %v281, 0.0
  %v333 = vsel %vm34, %v282, 0.0
  %v334 = vadd.f32 %v332, %v333
  %v335 = vrot.slane %v334, 4
  %v336 = vadd.f32 %v334, %v335
  %v337 = vrot.slane %v336, 2
  %v338 = vadd.f32 %v336, %v337
  %v339 = vrot.slane %v338, 1
  %v340 = vadd.f32 %v338, %v339
  %v341 = vsel %vm30, %v283, 0.0
  %v342 = vsel %vm34, %v284, 0.0
  %v343 = vadd.f32 %v341, %v342
  %v344 = vrot.slane %v343, 4
  %v345 = vadd.f32 %v343, %v344
  %v346 = vrot.slane %v345, 2
  %v347 = vadd.f32 %v345, %v346
  %v348 = vrot.slane %v347, 1
  %v349 = vadd.f32 %v347, %v348
  %v350 = vsel %vm30, %v285, 0.0
  %v351 = vsel %vm34, %v286, 0.0
  %v352 = vadd.f32 %v350, %v351
  %v353 = vrot.slane %v352, 4
  %v354 = vadd.f32 %v352, %v353
  %v355 = vrot.slane %v354, 2
  %v356 = vadd.f32 %v354, %v355
  %v357 = vrot.slane %v356, 1
  %v358 = vadd.f32 %v356, %v357
  %v359 = vrcp.pop 12.0
  %v360 = vmul.f32 %v295, %v359
  %v361 = vmul.f32 %v304, %v359
  %v362 = vmul.f32 %v313, %v359
  %v363 = vmul.f32 %v322, %v359
  %v364 = vmul.f32 %v331, %v359
  %v365 = vmul.f32 %v340, %v359
  %v366 = vmul.f32 %v349, %v359
  %v367 = vmul.f32 %v358, %v359
  %v368 = vsub.f32 %v271, %v360
  %v369 = vsub.f32 %v272, %v360
  %v370 = vsub.f32 %v273, %v361
  %v371 = vsub.f32 %v274, %v361
  %v372 = vsub.f32 %v275, %v362
  %v373 = vsub.f32 %v276, %v362
  %v374 = vsub.f32 %v277, %v363
  %v375 = vsub.f32 %v278, %v363
  %v376 = vsub.f32 %v279, %v364
  %v377 = vsub.f32 %v280, %v364
  %v378 = vsub.f32 %v281, %v365
  %v379 = vsub.f32 %v282, %v365
  %v380 = vsub.f32 %v283, %v366
  %v381 = vsub.f32 %v284, %v366
  %v382 = vsub.f32 %v285, %v367
  %v383 = vsub.f32 %v286, %v367
  %384 = vst.msk [vmem:[%s3] sm:$0xff] %vm30, %v368
  %385 = vst.msk [vmem:[%s3 + $0x8] sm:$0xf] %vm34, %v369
  %386 = vst.msk [vmem:[%s3 + $0x10] sm:$0xff] %vm30, %v370
  %387 = vst.msk [vmem:[%s3 + $0x18] sm:$0xf] %vm34, %v371
  %388 = vst.msk [vmem:[%s3 + $0x20] sm:$0xff] %vm30, %v372
  %389 = vst.msk [vmem:[%s3 + $0x28] sm:$0xf] %vm34, %v373
  %390 = vst.msk [vmem:[%s3 + $0x30] sm:$0xff] %vm30, %v374
  %391 = vst.msk [vmem:[%s3 + $0x38] sm:$0xf] %vm34, %v375
  %392 = vst.msk [vmem:[%s3 + $0x40] sm:$0xff] %vm30, %v376
  %393 = vst.msk [vmem:[%s3 + $0x48] sm:$0xf] %vm34, %v377
  %394 = vst.msk [vmem:[%s3 + $0x50] sm:$0xff] %vm30, %v378
  %395 = vst.msk [vmem:[%s3 + $0x58] sm:$0xf] %vm34, %v379
  %396 = vst.msk [vmem:[%s3 + $0x60] sm:$0xff] %vm30, %v380
  %397 = vst.msk [vmem:[%s3 + $0x68] sm:$0xf] %vm34, %v381
  %398 = vst.msk [vmem:[%s3 + $0x70] sm:$0xff] %vm30, %v382
  %399 = vst.msk [vmem:[%s3 + $0x78] sm:$0xf] %vm34, %v383
  // Predicated region
  $region14: #{corrformer_forward.57} parent=0 // pred_check
    _
  $region15: #{corrformer_forward.57} parent=0 // pred_check_branch
    %401 = sbr.rel (0) target = $region17
  $region16: #{corrformer_forward.57} parent=0 // pred_region
    _
  $region17: #{corrformer_forward.57} parent=0 // pred_fallthru
    _
  // Predicated region
  $region18: #{corrformer_forward.57} parent=0 // pred_check
    _
  $region19: #{corrformer_forward.57} parent=0 // pred_check_branch
    %403 = sbr.rel (0) target = $region21
  $region20: #{corrformer_forward.57} parent=0 // pred_region
    _
  $region21: #{corrformer_forward.57} parent=0 // pred_fallthru
    _

// kernel: corrformer_forward.70
$region0: #{corrformer_forward.70}
  #allocation0 [shape = 'u32[]', space=smem, size = 0x4, offset = 0x4, fixed_abs, tag = 'smem constant byte address 0x4 - core index']
  #allocation1 [shape = 'u32[144,128]{1,0:T(1,128)}', space=vmem, size = 0x12000, scoped, tag = 'internal scratch']
  %s0 = inlined_call_operand.vmem [shape: bf16[96,32], index: 0, kind: input, shape index: {}]
  %s1 = inlined_call_operand.vmem [shape: bf16[32,64], index: 1, kind: input, shape index: {}]
  %s2 = inlined_call_operand.vmem [shape: f32[1,64], index: 2, kind: input, shape index: {}]
  %s3 = inlined_call_operand.vmem [shape: f32[96,64], index: 3, kind: output, shape index: {}]
  %s4 = sld [smem:[#allocation0]]
  $region22: #{corrformer_forward.70} parent=0
    _
  %s6 = ssub.s32 1, %s4
  %s7 = scalar_select 0, %s6, %s4
  // Predicated region
  $region2: #{corrformer_forward.70} parent=0 // pred_check
    _
  $region3: #{corrformer_forward.70} parent=0 // pred_check_branch
    %9 = sbr.rel (0) target = $region5
  $region4: #{corrformer_forward.70} parent=0 // pred_region
    _
  $region5: #{corrformer_forward.70} parent=0 // pred_fallthru
    _
  // Predicated region
  $region6: #{corrformer_forward.70} parent=0 // pred_check
    _
  $region7: #{corrformer_forward.70} parent=0 // pred_check_branch
    %11 = sbr.rel (0) target = $region9
  $region8: #{corrformer_forward.70} parent=0 // pred_region
    _
  $region9: #{corrformer_forward.70} parent=0 // pred_fallthru
    _
  // Predicated region
  $region10: #{corrformer_forward.70} parent=0 // pred_check
    _
  $region11: #{corrformer_forward.70} parent=0 // pred_check_branch
    %13 = sbr.rel (0) target = $region13
  $region12: #{corrformer_forward.70} parent=0 // pred_region
    _
  $region13: #{corrformer_forward.70} parent=0 // pred_fallthru
    _
  %v15 = vld [vmem:[%s0] sm:$0xf]
  %v16 = vld [vmem:[%s0 + $0x4] sm:$0xf]
  %v17 = vld [vmem:[%s0 + $0x8] sm:$0xf]
  %v18 = vld [vmem:[%s0 + $0xc] sm:$0xf]
  %v19 = vld [vmem:[%s0 + $0x10] sm:$0xf]
  %v20 = vld [vmem:[%s0 + $0x14] sm:$0xf]
  %v21 = vld [vmem:[%s0 + $0x18] sm:$0xf]
  %v22 = vld [vmem:[%s0 + $0x1c] sm:$0xf]
  %v23 = vld [vmem:[%s0 + $0x20] sm:$0xf]
  %v24 = vld [vmem:[%s0 + $0x24] sm:$0xf]
  %v25 = vld [vmem:[%s0 + $0x28] sm:$0xf]
  %v26 = vld [vmem:[%s0 + $0x2c] sm:$0xf]
  %v27 = vld [vmem:[%s1] sm:$0xf]
  %v28 = vld [vmem:[%s1 + $0x4] sm:$0xf]
  %v29 = vld [vmem:[%s1 + $0x8] sm:$0xf]
  %v30 = vld [vmem:[%s1 + $0xc] sm:$0xf]
  %v31 = vld [vmem:[%s2] sm:$0x1]
  %v33 = vlaneseq
  %v34 = vshrl.u32 %v33, 7
  %v35 = vsub.s32 0, %v34
  %v36 = vrot.slane %v31, %v35
  %v50 = vunpack.c.l.b16 %v15
  %v51 = vunpack.c.l.b16 %v16
  %v52 = vunpack.c.l.b16 %v17
  %v53 = vunpack.c.l.b16 %v18
  %v54 = vunpack.c.l.b16 %v19
  %v55 = vunpack.c.l.b16 %v20
  %v56 = vunpack.c.l.b16 %v21
  %v57 = vunpack.c.l.b16 %v22
  %v58 = vunpack.c.l.b16 %v23
  %v59 = vunpack.c.l.b16 %v24
  %v60 = vunpack.c.l.b16 %v25
  %v61 = vunpack.c.l.b16 %v26
  %v62 = vpack.c.b16 %v51, %v50
  %v63 = vpack.c.b16 %v53, %v52
  %v64 = vpack.c.b16 %v55, %v54
  %v65 = vpack.c.b16 %v57, %v56
  %v66 = vpack.c.b16 %v59, %v58
  %v67 = vpack.c.b16 %v61, %v60
  %v72 = vunpack.c.l.b16 %v27
  %v73 = vunpack.c.l.b16 %v28
  %v74 = vunpack.c.l.b16 %v29
  %v75 = vunpack.c.l.b16 %v30
  %v76 = vpack.c.b16 %v73, %v72
  %v77 = vpack.c.b16 %v75, %v74
  %vm80 = vcmask 261120
  %v82 = vsel %vm80, %v62, 0
  %v85 = vsel %vm80, %v63, 0
  %v88 = vsel %vm80, %v64, 0
  %v91 = vsel %vm80, %v65, 0
  %v94 = vsel %vm80, %v66, 0
  %v97 = vsel %vm80, %v67, 0
  %99 = vmatprep.subr.bf16.mxu0 0
  %100 = vmatpush1.bf16.msra.mxu0 0
  %101 = vmatprep.subr.bf16.mxu0 0
  %102 = vmatpush1.bf16.msra.mxu0 0
  %103 = vmatprep.subr.bf16.mxu0 0
  %104 = vmatpush1.bf16.msra.mxu0 0
  %105 = vmatprep.subr.bf16.mxu0 0
  %106 = vmatpush1.bf16.msra.mxu0 0
  %107 = vmatprep.subr.bf16.mxu0 0
  %108 = vmatpush1.bf16.msra.mxu0 0
  %109 = vmatprep.subr.bf16.mxu0 0
  %110 = vmatpush1.bf16.msra.mxu0 0
  %111 = vmatprep.subr.bf16.mxu0 0
  %112 = vmatpush1.bf16.msra.mxu0 %v77
  %113 = vmatprep.subr.bf16.mxu0 0
  %114 = vmatpush1.bf16.msra.mxu0 %v76
  %115 = vmatprep.subr.bf16.mxu0 0
  %116 = vmatpush2.bf16.msra.mxu0 0
  %117 = vmatprep.subr.bf16.mxu0 0
  %118 = vmatpush2.bf16.msra.mxu0 0
  %119 = vmatprep.subr.bf16.mxu0 0
  %120 = vmatpush2.bf16.msra.mxu0 0
  %121 = vmatprep.subr.bf16.mxu0 0
  %122 = vmatpush2.bf16.msra.mxu0 0
  %123 = vmatprep.subr.bf16.mxu0 0
  %124 = vmatpush2.bf16.msra.mxu0 0
  %125 = vmatprep.subr.bf16.mxu0 0
  %126 = vmatpush2.bf16.msra.mxu0 0
  %127 = vmatprep.subr.bf16.mxu0 0
  %128 = vmatpush2.bf16.msra.mxu0 0
  %129 = vmatprep.subr.bf16.mxu0 0
  %130 = vmatpush2.bf16.msra.mxu0 0
  %131 = vmatprep.mubr.bf16.mxu0 0
  %132 = vmatmul.mubr.bf16.gmra.mxu0 %v82
  %v133 = vpop.f32.mrf.mxu0
  %v134 = vadd.f32 %v36, %v133
  %v135 = vpop.f32.mrf.mxu0
  %v136 = vpop.f32.mrf.mxu0
  %v137 = vadd.f32 %v36, %v136
  %v138 = vpop.f32.mrf.mxu0
  %139 = vmatprep.mubr.bf16.mxu0 0
  %140 = vmatmul.mubr.bf16.gmra.mxu0 %v85
  %v141 = vpop.f32.mrf.mxu0
  %v142 = vadd.f32 %v36, %v141
  %v143 = vpop.f32.mrf.mxu0
  %v144 = vpop.f32.mrf.mxu0
  %v145 = vadd.f32 %v36, %v144
  %v146 = vpop.f32.mrf.mxu0
  %147 = vmatprep.mubr.bf16.mxu0 0
  %148 = vmatmul.mubr.bf16.gmra.mxu0 %v88
  %v149 = vpop.f32.mrf.mxu0
  %v150 = vadd.f32 %v36, %v149
  %v151 = vpop.f32.mrf.mxu0
  %v152 = vpop.f32.mrf.mxu0
  %v153 = vadd.f32 %v36, %v152
  %v154 = vpop.f32.mrf.mxu0
  %155 = vmatprep.mubr.bf16.mxu0 0
  %156 = vmatmul.mubr.bf16.gmra.mxu0 %v91
  %v157 = vpop.f32.mrf.mxu0
  %v158 = vadd.f32 %v36, %v157
  %v159 = vpop.f32.mrf.mxu0
  %v160 = vpop.f32.mrf.mxu0
  %v161 = vadd.f32 %v36, %v160
  %v162 = vpop.f32.mrf.mxu0
  %163 = vmatprep.mubr.bf16.mxu0 0
  %164 = vmatmul.mubr.bf16.gmra.mxu0 %v94
  %v165 = vpop.f32.mrf.mxu0
  %v166 = vadd.f32 %v36, %v165
  %v167 = vpop.f32.mrf.mxu0
  %v168 = vpop.f32.mrf.mxu0
  %v169 = vadd.f32 %v36, %v168
  %v170 = vpop.f32.mrf.mxu0
  %171 = vmatprep.mubr.bf16.mxu0 0
  %172 = vmatmul.mubr.bf16.gmra.mxu0 %v97
  %v173 = vpop.f32.mrf.mxu0
  %v174 = vadd.f32 %v36, %v173
  %v175 = vpop.f32.mrf.mxu0
  %v176 = vpop.f32.mrf.mxu0
  %v177 = vadd.f32 %v36, %v176
  %v178 = vpop.f32.mrf.mxu0
  %179 = vdwg.mxu0
  %vm180 = vcmask 523264
  %181 = vst.msk [vmem:[%s3] sm:$0xff] %vm180, %v134
  %182 = vst.msk [vmem:[%s3 + $0x8] sm:$0xff] %vm180, %v137
  %183 = vst.msk [vmem:[%s3 + $0x10] sm:$0xff] %vm180, %v142
  %184 = vst.msk [vmem:[%s3 + $0x18] sm:$0xff] %vm180, %v145
  %185 = vst.msk [vmem:[%s3 + $0x20] sm:$0xff] %vm180, %v150
  %186 = vst.msk [vmem:[%s3 + $0x28] sm:$0xff] %vm180, %v153
  %187 = vst.msk [vmem:[%s3 + $0x30] sm:$0xff] %vm180, %v158
  %188 = vst.msk [vmem:[%s3 + $0x38] sm:$0xff] %vm180, %v161
  %189 = vst.msk [vmem:[%s3 + $0x40] sm:$0xff] %vm180, %v166
  %190 = vst.msk [vmem:[%s3 + $0x48] sm:$0xff] %vm180, %v169
  %191 = vst.msk [vmem:[%s3 + $0x50] sm:$0xff] %vm180, %v174
  %192 = vst.msk [vmem:[%s3 + $0x58] sm:$0xff] %vm180, %v177
  // Predicated region
  $region14: #{corrformer_forward.70} parent=0 // pred_check
    _
  $region15: #{corrformer_forward.70} parent=0 // pred_check_branch
    %194 = sbr.rel (0) target = $region17
  $region16: #{corrformer_forward.70} parent=0 // pred_region
    _
  $region17: #{corrformer_forward.70} parent=0 // pred_fallthru
    _
  // Predicated region
  $region18: #{corrformer_forward.70} parent=0 // pred_check
    _
  $region19: #{corrformer_forward.70} parent=0 // pred_check_branch
    %196 = sbr.rel (0) target = $region21
  $region20: #{corrformer_forward.70} parent=0 // pred_region
    _
  $region21: #{corrformer_forward.70} parent=0 // pred_fallthru
    _

// kernel: corrformer_forward.82
$region0: #{corrformer_forward.82}
  #allocation0 [shape = 'u32[]', space=smem, size = 0x4, offset = 0x4, fixed_abs, tag = 'smem constant byte address 0x4 - core index']
  #allocation1 [shape = 'u32[144,128]{1,0:T(1,128)}', space=vmem, size = 0x12000, scoped, tag = 'internal scratch']
  %s0 = inlined_call_operand.vmem [shape: f32[12,256], index: 0, kind: input, shape index: {}]
  %s1 = inlined_call_operand.vmem [shape: f32[12,256], index: 1, kind: output, shape index: {0}]
  %s2 = inlined_call_operand.vmem [shape: f32[12,256], index: 2, kind: output, shape index: {1}]
  %3 = xla_tuple %s1, %s2
  %s4 = sld [smem:[#allocation0]]
  $region151: #{corrformer_forward.82} parent=0
    _
  %s6 = ssub.s32 1, %s4
  %s7 = scalar_select 0, %s6, %s4
  $region1: #{corrformer_forward.82} parent=0
    #allocation2 [shape = 'u8[16384]{0}', space=vmem, size = 0x4000, scoped, tag = 'input window, operand 0']
    #allocation3 [shape = 'u8[16384]{0}', space=vmem, size = 0x4000, scoped, tag = 'output window, operand 0']
    #allocation4 [shape = 'u8[16384]{0}', space=vmem, size = 0x4000, scoped, tag = 'output window, operand 1']
    loop: start=0, step=1, limit=4
    $region2: #{corrformer_forward.82} parent=1 // loop_pre_header
      _
    $region3: #{corrformer_forward.82} parent=1 // loop_header
      %s9 = sphi 0, %s13
      %p10 = scmp.ge.s32.totalorder %s9, 4
      %s19 = sphi 0, %s21
      %s22 = sphi 0, %s19
      %s23 = sphi 0, %s22
      %s39 = sphi 0, %s23
      %s45 = sphi 0, %s47
      %s48 = sphi 0, %s45
      %s49 = sphi 0, %s48
      %s65 = sphi 0, %s49
      %s71 = sphi 0, %s73
      %s74 = sphi 0, %s71
      %s75 = sphi 0, %s74
      %s91 = sphi 0, %s75
    $region4: #{corrformer_forward.82} parent=1 // loop_header_branch
      %12 = sbr.rel (%p10) target = $region8
    $region5: #{corrformer_forward.82} parent=1 // loop_body
      %s14 = ssub.s32 %s9, 1
      %s15 = ssub.s32 %s9, 2
      %s16 = sadd.s32 %s9, 1
      %s17 = ssub.s32 %s9, %s16
      %p18 = scmp.eq.s32.totalorder %s17, 0
      %s20 = sadd.s32 %s19, 1
      %s21 = scalar_select %p18, %s19, %s20
      %p24 = pneg %p18
      %p25 = scmp.eq.s32.totalorder %s9, 1
      %p26 = por %p24, %p25
      %p27 = scmp.ne.s32.totalorder %s19, %s22
      %p28 = scmp.eq.s32.totalorder %s9, 0
      %p29 = por %p27, %p28
      %p30 = scmp.ne.s32.totalorder %s19, %s22
      %p31 = scmp.eq.s32.totalorder %s14, 1
      %p32 = por %p30, %p31
      %p33 = scmp.ne.s32.totalorder %s22, %s23
      %p34 = scmp.eq.s32.totalorder %s14, 0
      %p35 = por %p33, %p34
      %p36 = scmp.ne.s32.totalorder %s22, %s23
      %p37 = scmp.eq.s32.totalorder %s15, 1
      %p38 = por %p36, %p37
      %p40 = scmp.ne.s32.totalorder %s23, %s39
      %p41 = scmp.eq.s32.totalorder %s15, 0
      %p42 = por %p40, %p41
      %s43 = ssub.s32 %s9, %s16
      %p44 = scmp.eq.s32.totalorder %s43, 0
      %s46 = sadd.s32 %s45, 1
      %s47 = scalar_select %p44, %s45, %s46
      %p50 = pneg %p44
      %p51 = scmp.eq.s32.totalorder %s9, 1
      %p52 = por %p50, %p51
      %p53 = scmp.ne.s32.totalorder %s45, %s48
      %p54 = scmp.eq.s32.totalorder %s9, 0
      %p55 = por %p53, %p54
      %p56 = scmp.ne.s32.totalorder %s45, %s48
      %p57 = scmp.eq.s32.totalorder %s14, 1
      %p58 = por %p56, %p57
      %p59 = scmp.ne.s32.totalorder %s48, %s49
      %p60 = scmp.eq.s32.totalorder %s14, 0
      %p61 = por %p59, %p60
      %p62 = scmp.ne.s32.totalorder %s48, %s49
      %p63 = scmp.eq.s32.totalorder %s15, 1
      %p64 = por %p62, %p63
      %p66 = scmp.ne.s32.totalorder %s49, %s65
      %p67 = scmp.eq.s32.totalorder %s15, 0
      %p68 = por %p66, %p67
      %s69 = ssub.s32 %s9, %s16
      %p70 = scmp.eq.s32.totalorder %s69, 0
      %s72 = sadd.s32 %s71, 1
      %s73 = scalar_select %p70, %s71, %s72
      %p76 = pneg %p70
      %p77 = scmp.eq.s32.totalorder %s9, 1
      %p78 = por %p76, %p77
      %p79 = scmp.ne.s32.totalorder %s71, %s74
      %p80 = scmp.eq.s32.totalorder %s9, 0
      %p81 = por %p79, %p80
      %p82 = scmp.ne.s32.totalorder %s71, %s74
      %p83 = scmp.eq.s32.totalorder %s14, 1
      %p84 = por %p82, %p83
      %p85 = scmp.ne.s32.totalorder %s74, %s75
      %p86 = scmp.eq.s32.totalorder %s14, 0
      %p87 = por %p85, %p86
      %p88 = scmp.ne.s32.totalorder %s74, %s75
      %p89 = scmp.eq.s32.totalorder %s15, 1
      %p90 = por %p88, %p89
      %p92 = scmp.ne.s32.totalorder %s75, %s91
      %p93 = scmp.eq.s32.totalorder %s15, 0
      %p94 = por %p92, %p93
      %p95 = scmp.le.s32.totalorder 1, %s9
      %p96 = scmp.lt.s32.totalorder %s9, 3
      %p97 = pnand %p95, %p96
      %p98 = pneg %p97
      // Predicated region
      $region9: #{corrformer_forward.82} parent=5 // pred_check
        _
      $region10: #{corrformer_forward.82} parent=5 // pred_check_branch
        %100 = sbr.rel (%p97) target = $region12
      $region11: #{corrformer_forward.82} parent=5 // pred_region
        %s101 = ssub.s32 %s9, 1
      $region12: #{corrformer_forward.82} parent=5 // pred_fallthru
        _
      %p102 = scmp.lt.s32.totalorder %s9, 2
      // Predicated region
      $region13: #{corrformer_forward.82} parent=5 // pred_check
        %p103 = pneg %p102
      $region14: #{corrformer_forward.82} parent=5 // pred_check_branch
        %105 = sbr.rel (%p103) target = $region16
      $region15: #{corrformer_forward.82} parent=5 // pred_region
        // Predicated region
        $region17: #{corrformer_forward.82} parent=15 // pred_check
          %p106 = pneg %p29
        $region18: #{corrformer_forward.82} parent=15 // pred_check_branch
          %108 = sbr.rel (%p106) target = $region20
        $region19: #{corrformer_forward.82} parent=15 // pred_region
          %s109 = sand.u32 %s19, 1
          %s110 = sand.u32 %s19, 1
          %s111 = smul.addr %s110, 16
          %s112 = scalar_lea.vmem [#allocation2], %s111
          %s113 = smul.addr %s9, 8
          %s114 = scalar_lea.vmem %s0, %s113
          // Predicated region
          $region21: #{corrformer_forward.82} parent=19 // pred_check
            _
          $region22: #{corrformer_forward.82} parent=19 // pred_check_branch
            %116 = sbr.rel (0) target = $region24
          $region23: #{corrformer_forward.82} parent=19 // pred_region
            // Predicated region
            $region25: #{corrformer_forward.82} parent=23 // pred_check
              _
            $region26: #{corrformer_forward.82} parent=23 // pred_check_branch
              %118 = sbr.rel (0) target = $region28
            $region27: #{corrformer_forward.82} parent=23 // pred_region
              // Predicated region
              $region40: #{corrformer_forward.82} parent=27 // pred_check
                _
              $region41: #{corrformer_forward.82} parent=27 // pred_check_branch
                %136 = sbr.rel (0) target = $region43
              $region42: #{corrformer_forward.82} parent=27 // pred_region
                loop: start=0, step=1, limit=1
                $region44: #{corrformer_forward.82} parent=42 // loop_pre_header
                  _
                $region45: #{corrformer_forward.82} parent=42 // loop_header
                  %s138 = sphi 0, %s142
                  %p139 = scmp.ge.s32.totalorder %s138, 1
                  %s143 = sphi %s114, %s114
                  %s144 = sphi %s112, %s112
                $region46: #{corrformer_forward.82} parent=42 // loop_header_branch
                  %141 = sbr.rel (%p139) target = $region50
                $region47: #{corrformer_forward.82} parent=42 // loop_body
                  %v145 = vld [vmem:[%s143] sm:$0xff]
                  %146 = vst [vmem:[%s144] sm:$0xff] %v145
                  %v147 = vld [vmem:[%s143 + $0x10] sm:$0xff]
                  %148 = vst [vmem:[%s144 + $0x8] sm:$0xff] %v147
                $region48: #{corrformer_forward.82} parent=42 // loop_footer
                  %s142 = sadd.s32 1, %s138
                $region49: #{corrformer_forward.82} parent=42 // loop_footer_branch
                  %137 = sbr.rel target = $region45
                $region50: #{corrformer_forward.82} parent=42 // loop_exit
                  _
              $region43: #{corrformer_forward.82} parent=27 // pred_fallthru
                _
              // Predicated region
              $region51: #{corrformer_forward.82} parent=27 // pred_check
                _
              $region52: #{corrformer_forward.82} parent=27 // pred_check_branch
                %150 = sbr.rel target = $region54
              $region53: #{corrformer_forward.82} parent=27 // pred_region
                _
              $region54: #{corrformer_forward.82} parent=27 // pred_fallthru
                _
            $region28: #{corrformer_forward.82} parent=23 // pred_fallthru
              _
            // Predicated region
            $region29: #{corrformer_forward.82} parent=23 // pred_check
              _
            $region30: #{corrformer_forward.82} parent=23 // pred_check_branch
              %120 = sbr.rel target = $region32
            $region31: #{corrformer_forward.82} parent=23 // pred_region
              %s122 = ssub.s32 256, 1
              loop: start=0, step=1, limit=1
              $region33: #{corrformer_forward.82} parent=31 // loop_pre_header
                _
              $region34: #{corrformer_forward.82} parent=31 // loop_header
                %s124 = sphi 0, %s128
                %p125 = scmp.ge.s32.totalorder %s124, 1
                %s129 = sphi %s114, %s114
                %s130 = sphi %s112, %s112
              $region35: #{corrformer_forward.82} parent=31 // loop_header_branch
                %127 = sbr.rel (%p125) target = $region39
              $region36: #{corrformer_forward.82} parent=31 // loop_body
                %v131 = vld [vmem:[%s129] sm:%s122]
                %132 = vst [vmem:[%s130] sm:%s122] %v131
                %v133 = vld [vmem:[%s129 + $0x10] sm:%s122]
                %134 = vst [vmem:[%s130 + $0x8] sm:%s122] %v133
              $region37: #{corrformer_forward.82} parent=31 // loop_footer
                %s128 = sadd.s32 1, %s124
              $region38: #{corrformer_forward.82} parent=31 // loop_footer_branch
                %123 = sbr.rel target = $region34
              $region39: #{corrformer_forward.82} parent=31 // loop_exit
                _
            $region32: #{corrformer_forward.82} parent=23 // pred_fallthru
              _
          $region24: #{corrformer_forward.82} parent=19 // pred_fallthru
            _
          %151 = vnop
        $region20: #{corrformer_forward.82} parent=15 // pred_fallthru
          _
      $region16: #{corrformer_forward.82} parent=5 // pred_fallthru
        _
      %p152 = scmp.le.s32.totalorder 1, %s9
      %p153 = scmp.lt.s32.totalorder %s9, 3
      %p154 = pnand %p152, %p153
      %p155 = pneg %p154
      // Predicated region
      $region55: #{corrformer_forward.82} parent=5 // pred_check
        _
      $region56: #{corrformer_forward.82} parent=5 // pred_check_branch
        %157 = sbr.rel (%p154) target = $region58
      $region57: #{corrformer_forward.82} parent=5 // pred_region
        %s158 = ssub.s32 %s9, 1
        %s159 = sand.u32 %s22, 1
        %s160 = sand.u32 %s22, 1
        %s161 = smul.addr %s160, 16
        %s162 = scalar_lea.vmem [#allocation2], %s161
        // Predicated region
        $region59: #{corrformer_forward.82} parent=57 // pred_check
          %p163 = pneg %p35
        $region60: #{corrformer_forward.82} parent=57 // pred_check_branch
          %165 = sbr.rel (%p163) target = $region62
        $region61: #{corrformer_forward.82} parent=57 // pred_region
          _
        $region62: #{corrformer_forward.82} parent=57 // pred_fallthru
          _
        %s166 = sand.u32 %s22, 1
        %s167 = sand.u32 %s22, 1
        %s168 = smul.addr %s167, 16
        %s169 = scalar_lea.vmem [#allocation2], %s168
        %p170 = pneg %p35
        %p171 = pneg %p32
        %p172 = pneg %p61
        %p173 = pneg %p58
        %s174 = sand.u32 %s48, 1
        %s175 = sand.u32 %s48, 1
        %s176 = smul.addr %s175, 16
        %s177 = scalar_lea.vmem [#allocation3], %s176
        %p178 = pneg %p87
        %p179 = pneg %p84
        %s180 = sand.u32 %s74, 1
        %s181 = sand.u32 %s74, 1
        %s182 = smul.addr %s181, 16
        %s183 = scalar_lea.vmem [#allocation4], %s182
        %v184 = vld [vmem:[%s162] sm:$0xff]
        %v185 = vld [vmem:[%s162 + $0x8] sm:$0xf]
        %vm188 = vcmask 1046528
        %v189 = vrot.slane %v184, 1
        %v190 = vrot.slane %v185, 1
        %v191 = vsel %vm188, %v189, %v190
        %vm194 = vcmask 1042432
        %v195 = vsel %vm194, %v190, %v185
        %vm196 = vcmask 1040384
        %v197 = vrot.slane %v184, 7
        %v198 = vrot.slane %v185, 7
        %v199 = vsel %vm196, %v197, %v198
        %v202 = vsel %vm196, %v184, %v197
        %v203 = vadd.f32 %v184, %v191
        %v204 = vadd.f32 %v185, %v195
        %v205 = vadd.f32 %v203, %v202
        %v206 = vadd.f32 %v204, %v199
        %v207 = vlaneseq
        %v208 = vshrl.u32 %v207, 7
        %v209 = vsub.s32 0, %v208
        %v210 = vrot.slane %v184, %v209
        %v211 = vlaneseq
        %v212 = vshrl.u32 %v211, 7
        %v213 = vsub.s32 3, %v212
        %v214 = vrot.slane %v185, %v213
        %vm215 = vcmask 1045504
        %v216 = vrot.slane %v184, 2
        %v217 = vrot.slane %v185, 2
        %v218 = vsel %vm215, %v216, %v217
        %vm221 = vcmask 1041408
        %v222 = vsel %vm221, %v217, %v214
        %v223 = vrot.slane %v184, 6
        %v224 = vrot.slane %v185, 6
        %v225 = vsel %vm221, %v223, %v224
        %v228 = vsel %vm221, %v210, %v223
        %v229 = vadd.f32 %v205, %v218
        %v230 = vadd.f32 %v206, %v222
        %v231 = vadd.f32 %v229, %v228
        %v232 = vadd.f32 %v230, %v225
        %v233 = vmul.f32 %v231, 0.2
        %v234 = vmul.f32 %v232, 0.2
        %235 = vst [vmem:[%s183] sm:$0xff] %v233
        %236 = vst [vmem:[%s183 + $0x8] sm:$0xf] %v234
        %v237 = vsub.f32 %v184, %v233
        %v238 = vsub.f32 %v185, %v234
        %239 = vst [vmem:[%s177] sm:$0xff] %v237
        %240 = vst [vmem:[%s177 + $0x8] sm:$0xf] %v238
        %s241 = sand.u32 %s48, 1
        %s242 = sand.u32 %s48, 1
        %s243 = smul.addr %s242, 16
        %s244 = scalar_lea.vmem [#allocation3], %s243
        %s245 = sand.u32 %s74, 1
        %s246 = sand.u32 %s74, 1
        %s247 = smul.addr %s246, 16
        %s248 = scalar_lea.vmem [#allocation4], %s247
        // Predicated region
        $region63: #{corrformer_forward.82} parent=57 // pred_check
          %p249 = pneg %p58
        $region64: #{corrformer_forward.82} parent=57 // pred_check_branch
          %251 = sbr.rel (%p249) target = $region66
        $region65: #{corrformer_forward.82} parent=57 // pred_region
          %s252 = smul.addr %s14, 8
          %s253 = scalar_lea.vmem %s1, %s252
          // Predicated region
          $region67: #{corrformer_forward.82} parent=65 // pred_check
            _
          $region68: #{corrformer_forward.82} parent=65 // pred_check_branch
            %255 = sbr.rel (0) target = $region70
          $region69: #{corrformer_forward.82} parent=65 // pred_region
            // Predicated region
            $region71: #{corrformer_forward.82} parent=69 // pred_check
              _
            $region72: #{corrformer_forward.82} parent=69 // pred_check_branch
              %257 = sbr.rel (0) target = $region74
            $region73: #{corrformer_forward.82} parent=69 // pred_region
              // Predicated region
              $region86: #{corrformer_forward.82} parent=73 // pred_check
                _
              $region87: #{corrformer_forward.82} parent=73 // pred_check_branch
                %275 = sbr.rel (0) target = $region89
              $region88: #{corrformer_forward.82} parent=73 // pred_region
                loop: start=0, step=1, limit=1
                $region90: #{corrformer_forward.82} parent=88 // loop_pre_header
                  _
                $region91: #{corrformer_forward.82} parent=88 // loop_header
                  %s277 = sphi 0, %s281
                  %p278 = scmp.ge.s32.totalorder %s277, 1
                  %s282 = sphi %s244, %s244
                  %s283 = sphi %s253, %s253
                $region92: #{corrformer_forward.82} parent=88 // loop_header_branch
                  %280 = sbr.rel (%p278) target = $region96
                $region93: #{corrformer_forward.82} parent=88 // loop_body
                  %v284 = vld [vmem:[%s282] sm:$0xff]
                  %285 = vst [vmem:[%s283] sm:$0xff] %v284
                  %v286 = vld [vmem:[%s282 + $0x8] sm:$0xff]
                  %287 = vst [vmem:[%s283 + $0x10] sm:$0xff] %v286
                $region94: #{corrformer_forward.82} parent=88 // loop_footer
                  %s281 = sadd.s32 1, %s277
                $region95: #{corrformer_forward.82} parent=88 // loop_footer_branch
                  %276 = sbr.rel target = $region91
                $region96: #{corrformer_forward.82} parent=88 // loop_exit
                  _
              $region89: #{corrformer_forward.82} parent=73 // pred_fallthru
                _
              // Predicated region
              $region97: #{corrformer_forward.82} parent=73 // pred_check
                _
              $region98: #{corrformer_forward.82} parent=73 // pred_check_branch
                %289 = sbr.rel target = $region100
              $region99: #{corrformer_forward.82} parent=73 // pred_region
                _
              $region100: #{corrformer_forward.82} parent=73 // pred_fallthru
                _
            $region74: #{corrformer_forward.82} parent=69 // pred_fallthru
              _
            // Predicated region
            $region75: #{corrformer_forward.82} parent=69 // pred_check
              _
            $region76: #{corrformer_forward.82} parent=69 // pred_check_branch
              %259 = sbr.rel target = $region78
            $region77: #{corrformer_forward.82} parent=69 // pred_region
              %s261 = ssub.s32 256, 1
              loop: start=0, step=1, limit=1
              $region79: #{corrformer_forward.82} parent=77 // loop_pre_header
                _
              $region80: #{corrformer_forward.82} parent=77 // loop_header
                %s263 = sphi 0, %s267
                %p264 = scmp.ge.s32.totalorder %s263, 1
                %s268 = sphi %s244, %s244
                %s269 = sphi %s253, %s253
              $region81: #{corrformer_forward.82} parent=77 // loop_header_branch
                %266 = sbr.rel (%p264) target = $region85
              $region82: #{corrformer_forward.82} parent=77 // loop_body
                %v270 = vld [vmem:[%s268] sm:%s261]
                %271 = vst [vmem:[%s269] sm:%s261] %v270
                %v272 = vld [vmem:[%s268 + $0x8] sm:%s261]
                %273 = vst [vmem:[%s269 + $0x10] sm:%s261] %v272
              $region83: #{corrformer_forward.82} parent=77 // loop_footer
                %s267 = sadd.s32 1, %s263
              $region84: #{corrformer_forward.82} parent=77 // loop_footer_branch
                %262 = sbr.rel target = $region80
              $region85: #{corrformer_forward.82} parent=77 // loop_exit
                _
            $region78: #{corrformer_forward.82} parent=69 // pred_fallthru
              _
          $region70: #{corrformer_forward.82} parent=65 // pred_fallthru
            _
          %290 = vnop
        $region66: #{corrformer_forward.82} parent=57 // pred_fallthru
          _
        // Predicated region
        $region101: #{corrformer_forward.82} parent=57 // pred_check
          %p291 = pneg %p84
        $region102: #{corrformer_forward.82} parent=57 // pred_check_branch
          %293 = sbr.rel (%p291) target = $region104
        $region103: #{corrformer_forward.82} parent=57 // pred_region
          %s294 = smul.addr %s14, 8
          %s295 = scalar_lea.vmem %s2, %s294
          // Predicated region
          $region105: #{corrformer_forward.82} parent=103 // pred_check
            _
          $region106: #{corrformer_forward.82} parent=103 // pred_check_branch
            %297 = sbr.rel (0) target = $region108
          $region107: #{corrformer_forward.82} parent=103 // pred_region
            // Predicated region
            $region109: #{corrformer_forward.82} parent=107 // pred_check
              _
            $region110: #{corrformer_forward.82} parent=107 // pred_check_branch
              %299 = sbr.rel (0) target = $region112
            $region111: #{corrformer_forward.82} parent=107 // pred_region
              // Predicated region
              $region124: #{corrformer_forward.82} parent=111 // pred_check
                _
              $region125: #{corrformer_forward.82} parent=111 // pred_check_branch
                %317 = sbr.rel (0) target = $region127
              $region126: #{corrformer_forward.82} parent=111 // pred_region
                loop: start=0, step=1, limit=1
                $region128: #{corrformer_forward.82} parent=126 // loop_pre_header
                  _
                $region129: #{corrformer_forward.82} parent=126 // loop_header
                  %s319 = sphi 0, %s323
                  %p320 = scmp.ge.s32.totalorder %s319, 1
                  %s324 = sphi %s248, %s248
                  %s325 = sphi %s295, %s295
                $region130: #{corrformer_forward.82} parent=126 // loop_header_branch
                  %322 = sbr.rel (%p320) target = $region134
                $region131: #{corrformer_forward.82} parent=126 // loop_body
                  %v326 = vld [vmem:[%s324] sm:$0xff]
                  %327 = vst [vmem:[%s325] sm:$0xff] %v326
                  %v328 = vld [vmem:[%s324 + $0x8] sm:$0xff]
                  %329 = vst [vmem:[%s325 + $0x10] sm:$0xff] %v328
                $region132: #{corrformer_forward.82} parent=126 // loop_footer
                  %s323 = sadd.s32 1, %s319
                $region133: #{corrformer_forward.82} parent=126 // loop_footer_branch
                  %318 = sbr.rel target = $region129
                $region134: #{corrformer_forward.82} parent=126 // loop_exit
                  _
              $region127: #{corrformer_forward.82} parent=111 // pred_fallthru
                _
              // Predicated region
              $region135: #{corrformer_forward.82} parent=111 // pred_check
                _
              $region136: #{corrformer_forward.82} parent=111 // pred_check_branch
                %331 = sbr.rel target = $region138
              $region137: #{corrformer_forward.82} parent=111 // pred_region
                _
              $region138: #{corrformer_forward.82} parent=111 // pred_fallthru
                _
            $region112: #{corrformer_forward.82} parent=107 // pred_fallthru
              _
            // Predicated region
            $region113: #{corrformer_forward.82} parent=107 // pred_check
              _
            $region114: #{corrformer_forward.82} parent=107 // pred_check_branch
              %301 = sbr.rel target = $region116
            $region115: #{corrformer_forward.82} parent=107 // pred_region
              %s303 = ssub.s32 256, 1
              loop: start=0, step=1, limit=1
              $region117: #{corrformer_forward.82} parent=115 // loop_pre_header
                _
              $region118: #{corrformer_forward.82} parent=115 // loop_header
                %s305 = sphi 0, %s309
                %p306 = scmp.ge.s32.totalorder %s305, 1
                %s310 = sphi %s248, %s248
                %s311 = sphi %s295, %s295
              $region119: #{corrformer_forward.82} parent=115 // loop_header_branch
                %308 = sbr.rel (%p306) target = $region123
              $region120: #{corrformer_forward.82} parent=115 // loop_body
                %v312 = vld [vmem:[%s310] sm:%s303]
                %313 = vst [vmem:[%s311] sm:%s303] %v312
                %v314 = vld [vmem:[%s310 + $0x8] sm:%s303]
                %315 = vst [vmem:[%s311 + $0x10] sm:%s303] %v314
              $region121: #{corrformer_forward.82} parent=115 // loop_footer
                %s309 = sadd.s32 1, %s305
              $region122: #{corrformer_forward.82} parent=115 // loop_footer_branch
                %304 = sbr.rel target = $region118
              $region123: #{corrformer_forward.82} parent=115 // loop_exit
                _
            $region116: #{corrformer_forward.82} parent=107 // pred_fallthru
              _
          $region108: #{corrformer_forward.82} parent=103 // pred_fallthru
            _
          %332 = vnop
        $region104: #{corrformer_forward.82} parent=57 // pred_fallthru
          _
      $region58: #{corrformer_forward.82} parent=5 // pred_fallthru
        _
      %p333 = scmp.le.s32.totalorder 2, %s9
      // Predicated region
      $region139: #{corrformer_forward.82} parent=5 // pred_check
        %p334 = pneg %p333
      $region140: #{corrformer_forward.82} parent=5 // pred_check_branch
        %336 = sbr.rel (%p334) target = $region142
      $region141: #{corrformer_forward.82} parent=5 // pred_region
        %s337 = ssub.s32 %s9, 2
        // Predicated region
        $region143: #{corrformer_forward.82} parent=141 // pred_check
          %p338 = pneg %p64
        $region144: #{corrformer_forward.82} parent=141 // pred_check_branch
          %340 = sbr.rel (%p338) target = $region146
        $region145: #{corrformer_forward.82} parent=141 // pred_region
          %s341 = sand.u32 %s49, 1
          %s342 = sand.u32 %s49, 1
          %s343 = smul.addr %s342, 16
          %s344 = scalar_lea.vmem [#allocation3], %s343
        $region146: #{corrformer_forward.82} parent=141 // pred_fallthru
          _
        // Predicated region
        $region147: #{corrformer_forward.82} parent=141 // pred_check
          %p345 = pneg %p90
        $region148: #{corrformer_forward.82} parent=141 // pred_check_branch
          %347 = sbr.rel (%p345) target = $region150
        $region149: #{corrformer_forward.82} parent=141 // pred_region
          %s348 = sand.u32 %s75, 1
          %s349 = sand.u32 %s75, 1
          %s350 = smul.addr %s349, 16
          %s351 = scalar_lea.vmem [#allocation4], %s350
        $region150: #{corrformer_forward.82} parent=141 // pred_fallthru
          _
      $region142: #{corrformer_forward.82} parent=5 // pred_fallthru
        _
    $region6: #{corrformer_forward.82} parent=1 // loop_footer
      %s13 = sadd.s32 1, %s9
    $region7: #{corrformer_forward.82} parent=1 // loop_footer_branch
      %8 = sbr.rel target = $region3
    $region8: #{corrformer_forward.82} parent=1 // loop_exit
      _

// kernel: corrformer_forward.85
$region0: #{corrformer_forward.85}
  #allocation0 [shape = 'u32[]', space=smem, size = 0x4, offset = 0x4, fixed_abs, tag = 'smem constant byte address 0x4 - core index']
  #allocation1 [shape = 'u32[144,128]{1,0:T(1,128)}', space=vmem, size = 0x12000, scoped, tag = 'internal scratch']
  %s0 = inlined_call_operand.vmem [shape: bf16[96,32], index: 0, kind: input, shape index: {}]
  %s1 = inlined_call_operand.vmem [shape: bf16[32,2], index: 1, kind: input, shape index: {}]
  %s2 = inlined_call_operand.vmem [shape: f32[1,2], index: 2, kind: input, shape index: {}]
  %s3 = inlined_call_operand.vmem [shape: f32[96,2], index: 3, kind: output, shape index: {}]
  %s4 = sld [smem:[#allocation0]]
  $region22: #{corrformer_forward.85} parent=0
    _
  %s6 = ssub.s32 1, %s4
  %s7 = scalar_select 0, %s6, %s4
  // Predicated region
  $region2: #{corrformer_forward.85} parent=0 // pred_check
    _
  $region3: #{corrformer_forward.85} parent=0 // pred_check_branch
    %9 = sbr.rel (0) target = $region5
  $region4: #{corrformer_forward.85} parent=0 // pred_region
    _
  $region5: #{corrformer_forward.85} parent=0 // pred_fallthru
    _
  // Predicated region
  $region6: #{corrformer_forward.85} parent=0 // pred_check
    _
  $region7: #{corrformer_forward.85} parent=0 // pred_check_branch
    %11 = sbr.rel (0) target = $region9
  $region8: #{corrformer_forward.85} parent=0 // pred_region
    _
  $region9: #{corrformer_forward.85} parent=0 // pred_fallthru
    _
  // Predicated region
  $region10: #{corrformer_forward.85} parent=0 // pred_check
    _
  $region11: #{corrformer_forward.85} parent=0 // pred_check_branch
    %13 = sbr.rel (0) target = $region13
  $region12: #{corrformer_forward.85} parent=0 // pred_region
    _
  $region13: #{corrformer_forward.85} parent=0 // pred_fallthru
    _
  %v15 = vld [vmem:[%s0] sm:$0xf]
  %v16 = vld [vmem:[%s0 + $0x4] sm:$0xf]
  %v17 = vld [vmem:[%s0 + $0x8] sm:$0xf]
  %v18 = vld [vmem:[%s0 + $0xc] sm:$0xf]
  %v19 = vld [vmem:[%s0 + $0x10] sm:$0xf]
  %v20 = vld [vmem:[%s0 + $0x14] sm:$0xf]
  %v21 = vld [vmem:[%s0 + $0x18] sm:$0xf]
  %v22 = vld [vmem:[%s0 + $0x1c] sm:$0xf]
  %v23 = vld [vmem:[%s0 + $0x20] sm:$0xf]
  %v24 = vld [vmem:[%s0 + $0x24] sm:$0xf]
  %v25 = vld [vmem:[%s0 + $0x28] sm:$0xf]
  %v26 = vld [vmem:[%s0 + $0x2c] sm:$0xf]
  %v27 = vld [vmem:[%s1] sm:$0xf]
  %v28 = vld [vmem:[%s1 + $0x4] sm:$0xf]
  %v29 = vld [vmem:[%s1 + $0x8] sm:$0xf]
  %v30 = vld [vmem:[%s1 + $0xc] sm:$0xf]
  %v31 = vld [vmem:[%s2] sm:$0x1]
  %v33 = vlaneseq
  %v34 = vshrl.u32 %v33, 7
  %v35 = vsub.s32 0, %v34
  %v36 = vrot.slane %v31, %v35
  %v50 = vunpack.c.l.b16 %v15
  %v51 = vunpack.c.l.b16 %v16
  %v52 = vunpack.c.l.b16 %v17
  %v53 = vunpack.c.l.b16 %v18
  %v54 = vunpack.c.l.b16 %v19
  %v55 = vunpack.c.l.b16 %v20
  %v56 = vunpack.c.l.b16 %v21
  %v57 = vunpack.c.l.b16 %v22
  %v58 = vunpack.c.l.b16 %v23
  %v59 = vunpack.c.l.b16 %v24
  %v60 = vunpack.c.l.b16 %v25
  %v61 = vunpack.c.l.b16 %v26
  %v62 = vpack.c.b16 %v51, %v50
  %v63 = vpack.c.b16 %v53, %v52
  %v64 = vpack.c.b16 %v55, %v54
  %v65 = vpack.c.b16 %v57, %v56
  %v66 = vpack.c.b16 %v59, %v58
  %v67 = vpack.c.b16 %v61, %v60
  %v72 = vunpack.c.l.b16 %v27
  %v73 = vunpack.c.l.b16 %v28
  %v74 = vunpack.c.l.b16 %v29
  %v75 = vunpack.c.l.b16 %v30
  %v76 = vpack.c.b16 %v73, %v72
  %v77 = vpack.c.b16 %v75, %v74
  %vm80 = vcmask 261120
  %v82 = vsel %vm80, %v62, 0
  %v85 = vsel %vm80, %v63, 0
  %v88 = vsel %vm80, %v64, 0
  %v91 = vsel %vm80, %v65, 0
  %v94 = vsel %vm80, %v66, 0
  %v97 = vsel %vm80, %v67, 0
  %99 = vmatprep.subr.bf16.mxu0 0
  %100 = vmatpush1.bf16.msra.mxu0 0
  %101 = vmatprep.subr.bf16.mxu0 0
  %102 = vmatpush1.bf16.msra.mxu0 0
  %103 = vmatprep.subr.bf16.mxu0 0
  %104 = vmatpush1.bf16.msra.mxu0 0
  %105 = vmatprep.subr.bf16.mxu0 0
  %106 = vmatpush1.bf16.msra.mxu0 0
  %107 = vmatprep.subr.bf16.mxu0 0
  %108 = vmatpush1.bf16.msra.mxu0 0
  %109 = vmatprep.subr.bf16.mxu0 0
  %110 = vmatpush1.bf16.msra.mxu0 0
  %111 = vmatprep.subr.bf16.mxu0 0
  %112 = vmatpush1.bf16.msra.mxu0 %v77
  %113 = vmatprep.subr.bf16.mxu0 0
  %114 = vmatpush1.bf16.msra.mxu0 %v76
  %115 = vmatprep.subr.bf16.mxu0 0
  %116 = vmatpush2.bf16.msra.mxu0 0
  %117 = vmatprep.subr.bf16.mxu0 0
  %118 = vmatpush2.bf16.msra.mxu0 0
  %119 = vmatprep.subr.bf16.mxu0 0
  %120 = vmatpush2.bf16.msra.mxu0 0
  %121 = vmatprep.subr.bf16.mxu0 0
  %122 = vmatpush2.bf16.msra.mxu0 0
  %123 = vmatprep.subr.bf16.mxu0 0
  %124 = vmatpush2.bf16.msra.mxu0 0
  %125 = vmatprep.subr.bf16.mxu0 0
  %126 = vmatpush2.bf16.msra.mxu0 0
  %127 = vmatprep.subr.bf16.mxu0 0
  %128 = vmatpush2.bf16.msra.mxu0 0
  %129 = vmatprep.subr.bf16.mxu0 0
  %130 = vmatpush2.bf16.msra.mxu0 0
  %131 = vmatprep.mubr.bf16.mxu0 0
  %132 = vmatmul.mubr.bf16.gmra.mxu0 %v82
  %v133 = vpop.f32.mrf.mxu0
  %v134 = vadd.f32 %v36, %v133
  %v135 = vpop.f32.mrf.mxu0
  %v136 = vpop.f32.mrf.mxu0
  %v137 = vadd.f32 %v36, %v136
  %v138 = vpop.f32.mrf.mxu0
  %139 = vmatprep.mubr.bf16.mxu0 0
  %140 = vmatmul.mubr.bf16.gmra.mxu0 %v85
  %v141 = vpop.f32.mrf.mxu0
  %v142 = vadd.f32 %v36, %v141
  %v143 = vpop.f32.mrf.mxu0
  %v144 = vpop.f32.mrf.mxu0
  %v145 = vadd.f32 %v36, %v144
  %v146 = vpop.f32.mrf.mxu0
  %147 = vmatprep.mubr.bf16.mxu0 0
  %148 = vmatmul.mubr.bf16.gmra.mxu0 %v88
  %v149 = vpop.f32.mrf.mxu0
  %v150 = vadd.f32 %v36, %v149
  %v151 = vpop.f32.mrf.mxu0
  %v152 = vpop.f32.mrf.mxu0
  %v153 = vadd.f32 %v36, %v152
  %v154 = vpop.f32.mrf.mxu0
  %155 = vmatprep.mubr.bf16.mxu0 0
  %156 = vmatmul.mubr.bf16.gmra.mxu0 %v91
  %v157 = vpop.f32.mrf.mxu0
  %v158 = vadd.f32 %v36, %v157
  %v159 = vpop.f32.mrf.mxu0
  %v160 = vpop.f32.mrf.mxu0
  %v161 = vadd.f32 %v36, %v160
  %v162 = vpop.f32.mrf.mxu0
  %163 = vmatprep.mubr.bf16.mxu0 0
  %164 = vmatmul.mubr.bf16.gmra.mxu0 %v94
  %v165 = vpop.f32.mrf.mxu0
  %v166 = vadd.f32 %v36, %v165
  %v167 = vpop.f32.mrf.mxu0
  %v168 = vpop.f32.mrf.mxu0
  %v169 = vadd.f32 %v36, %v168
  %v170 = vpop.f32.mrf.mxu0
  %171 = vmatprep.mubr.bf16.mxu0 0
  %172 = vmatmul.mubr.bf16.gmra.mxu0 %v97
  %v173 = vpop.f32.mrf.mxu0
  %v174 = vadd.f32 %v36, %v173
  %v175 = vpop.f32.mrf.mxu0
  %v176 = vpop.f32.mrf.mxu0
  %v177 = vadd.f32 %v36, %v176
  %v178 = vpop.f32.mrf.mxu0
  %179 = vdwg.mxu0
  %vm180 = vcmask 15360
  %181 = vst.msk [vmem:[%s3] sm:$0xff] %vm180, %v134
  %182 = vst.msk [vmem:[%s3 + $0x8] sm:$0xff] %vm180, %v137
  %183 = vst.msk [vmem:[%s3 + $0x10] sm:$0xff] %vm180, %v142
  %184 = vst.msk [vmem:[%s3 + $0x18] sm:$0xff] %vm180, %v145
  %185 = vst.msk [vmem:[%s3 + $0x20] sm:$0xff] %vm180, %v150
  %186 = vst.msk [vmem:[%s3 + $0x28] sm:$0xff] %vm180, %v153
  %187 = vst.msk [vmem:[%s3 + $0x30] sm:$0xff] %vm180, %v158
  %188 = vst.msk [vmem:[%s3 + $0x38] sm:$0xff] %vm180, %v161
  %189 = vst.msk [vmem:[%s3 + $0x40] sm:$0xff] %vm180, %v166
  %190 = vst.msk [vmem:[%s3 + $0x48] sm:$0xff] %vm180, %v169
  %191 = vst.msk [vmem:[%s3 + $0x50] sm:$0xff] %vm180, %v174
  %192 = vst.msk [vmem:[%s3 + $0x58] sm:$0xff] %vm180, %v177
  // Predicated region
  $region14: #{corrformer_forward.85} parent=0 // pred_check
    _
  $region15: #{corrformer_forward.85} parent=0 // pred_check_branch
    %194 = sbr.rel (0) target = $region17
  $region16: #{corrformer_forward.85} parent=0 // pred_region
    _
  $region17: #{corrformer_forward.85} parent=0 // pred_fallthru
    _
  // Predicated region
  $region18: #{corrformer_forward.85} parent=0 // pred_check
    _
  $region19: #{corrformer_forward.85} parent=0 // pred_check_branch
    %196 = sbr.rel (0) target = $region21
  $region20: #{corrformer_forward.85} parent=0 // pred_region
    _
  $region21: #{corrformer_forward.85} parent=0 // pred_fallthru
    _

// kernel: corrformer_forward.83
$region0: #{corrformer_forward.83}
  #allocation0 [shape = 'u32[]', space=smem, size = 0x4, offset = 0x4, fixed_abs, tag = 'smem constant byte address 0x4 - core index']
  #allocation1 [shape = 'u32[144,128]{1,0:T(1,128)}', space=vmem, size = 0x12000, scoped, tag = 'internal scratch']
  %s0 = inlined_call_operand.vmem [shape: f32[8,12,32], index: 0, kind: input, shape index: {}]
  %s1 = inlined_call_operand.vmem [shape: bf16[96,2], index: 1, kind: input, shape index: {}]
  %s2 = inlined_call_operand.vmem [shape: f32[8,12,2], index: 2, kind: output, shape index: {}]
  %s3 = sld [smem:[#allocation0]]
  $region18: #{corrformer_forward.83} parent=0
    _
  %s5 = ssub.s32 1, %s3
  %s6 = scalar_select 0, %s5, %s3
  // Predicated region
  $region2: #{corrformer_forward.83} parent=0 // pred_check
    _
  $region3: #{corrformer_forward.83} parent=0 // pred_check_branch
    %8 = sbr.rel (0) target = $region5
  $region4: #{corrformer_forward.83} parent=0 // pred_region
    _
  $region5: #{corrformer_forward.83} parent=0 // pred_fallthru
    _
  // Predicated region
  $region6: #{corrformer_forward.83} parent=0 // pred_check
    _
  $region7: #{corrformer_forward.83} parent=0 // pred_check_branch
    %10 = sbr.rel (0) target = $region9
  $region8: #{corrformer_forward.83} parent=0 // pred_region
    _
  $region9: #{corrformer_forward.83} parent=0 // pred_fallthru
    _
  %v12 = vld [vmem:[%s0] sm:$0xff]
  %v13 = vld [vmem:[%s0 + $0x8] sm:$0xf]
  %v14 = vld [vmem:[%s0 + $0x10] sm:$0xff]
  %v15 = vld [vmem:[%s0 + $0x18] sm:$0xf]
  %v16 = vld [vmem:[%s0 + $0x20] sm:$0xff]
  %v17 = vld [vmem:[%s0 + $0x28] sm:$0xf]
  %v18 = vld [vmem:[%s0 + $0x30] sm:$0xff]
  %v19 = vld [vmem:[%s0 + $0x38] sm:$0xf]
  %v20 = vld [vmem:[%s0 + $0x40] sm:$0xff]
  %v21 = vld [vmem:[%s0 + $0x48] sm:$0xf]
  %v22 = vld [vmem:[%s0 + $0x50] sm:$0xff]
  %v23 = vld [vmem:[%s0 + $0x58] sm:$0xf]
  %v24 = vld [vmem:[%s0 + $0x60] sm:$0xff]
  %v25 = vld [vmem:[%s0 + $0x68] sm:$0xf]
  %v26 = vld [vmem:[%s0 + $0x70] sm:$0xff]
  %v27 = vld [vmem:[%s0 + $0x78] sm:$0xf]
  %v36 = vrot.slane %v13, 3
  %v37 = vrot.slane %v15, 3
  %v38 = vrot.slane %v17, 3
  %v39 = vrot.slane %v19, 3
  %v40 = vrot.slane %v21, 3
  %v41 = vrot.slane %v23, 3
  %v42 = vrot.slane %v25, 3
  %v43 = vrot.slane %v27, 3
  %vm60 = vcmask 1040384
  %v61 = vrot.slane %v12, 7
  %v62 = vrot.slane %v13, 7
  %v63 = vsel %vm60, %v61, %v62
  %v64 = vrot.slane %v14, 7
  %v65 = vrot.slane %v15, 7
  %v66 = vsel %vm60, %v64, %v65
  %v67 = vrot.slane %v16, 7
  %v68 = vrot.slane %v17, 7
  %v69 = vsel %vm60, %v67, %v68
  %v70 = vrot.slane %v18, 7
  %v71 = vrot.slane %v19, 7
  %v72 = vsel %vm60, %v70, %v71
  %v73 = vrot.slane %v20, 7
  %v74 = vrot.slane %v21, 7
  %v75 = vsel %vm60, %v73, %v74
  %v76 = vrot.slane %v22, 7
  %v77 = vrot.slane %v23, 7
  %v78 = vsel %vm60, %v76, %v77
  %v79 = vrot.slane %v24, 7
  %v80 = vrot.slane %v25, 7
  %v81 = vsel %vm60, %v79, %v80
  %v82 = vrot.slane %v26, 7
  %v83 = vrot.slane %v27, 7
  %v84 = vsel %vm60, %v82, %v83
  %v101 = vsel %vm60, %v36, %v61
  %v102 = vsel %vm60, %v37, %v64
  %v103 = vsel %vm60, %v38, %v67
  %v104 = vsel %vm60, %v39, %v70
  %v105 = vsel %vm60, %v40, %v73
  %v106 = vsel %vm60, %v41, %v76
  %v107 = vsel %vm60, %v42, %v79
  %v108 = vsel %vm60, %v43, %v82
  %vm109 = vcmask 1046528
  %v110 = vrot.slane %v12, 1
  %v111 = vrot.slane %v13, 1
  %v112 = vsel %vm109, %v110, %v111
  %v113 = vrot.slane %v14, 1
  %v114 = vrot.slane %v15, 1
  %v115 = vsel %vm109, %v113, %v114
  %v116 = vrot.slane %v16, 1
  %v117 = vrot.slane %v17, 1
  %v118 = vsel %vm109, %v116, %v117
  %v119 = vrot.slane %v18, 1
  %v120 = vrot.slane %v19, 1
  %v121 = vsel %vm109, %v119, %v120
  %v122 = vrot.slane %v20, 1
  %v123 = vrot.slane %v21, 1
  %v124 = vsel %vm109, %v122, %v123
  %v125 = vrot.slane %v22, 1
  %v126 = vrot.slane %v23, 1
  %v127 = vsel %vm109, %v125, %v126
  %v128 = vrot.slane %v24, 1
  %v129 = vrot.slane %v25, 1
  %v130 = vsel %vm109, %v128, %v129
  %v131 = vrot.slane %v26, 1
  %v132 = vrot.slane %v27, 1
  %v133 = vsel %vm109, %v131, %v132
  %v142 = vrot.slane %v12, 5
  %v143 = vrot.slane %v14, 5
  %v144 = vrot.slane %v16, 5
  %v145 = vrot.slane %v18, 5
  %v146 = vrot.slane %v20, 5
  %v147 = vrot.slane %v22, 5
  %v148 = vrot.slane %v24, 5
  %v149 = vrot.slane %v26, 5
  %vm158 = vcmask 1042432
  %v159 = vsel %vm158, %v111, %v142
  %v160 = vsel %vm158, %v114, %v143
  %v161 = vsel %vm158, %v117, %v144
  %v162 = vsel %vm158, %v120, %v145
  %v163 = vsel %vm158, %v123, %v146
  %v164 = vsel %vm158, %v126, %v147
  %v165 = vsel %vm158, %v129, %v148
  %v166 = vsel %vm158, %v132, %v149
  %167 = vrot.lane.b32.xlu0 %v12, 32
  %v168 = vpop.permute.xlu0 %167
  %169 = vrot.lane.b32.xlu0 %v13, 32
  %v170 = vpop.permute.xlu0 %169
  %171 = vrot.lane.b32.xlu0 %v14, 32
  %v172 = vpop.permute.xlu0 %171
  %173 = vrot.lane.b32.xlu0 %v15, 32
  %v174 = vpop.permute.xlu0 %173
  %175 = vrot.lane.b32.xlu0 %v16, 32
  %v176 = vpop.permute.xlu0 %175
  %177 = vrot.lane.b32.xlu0 %v17, 32
  %v178 = vpop.permute.xlu0 %177
  %179 = vrot.lane.b32.xlu0 %v18, 32
  %v180 = vpop.permute.xlu0 %179
  %181 = vrot.lane.b32.xlu0 %v19, 32
  %v182 = vpop.permute.xlu0 %181
  %183 = vrot.lane.b32.xlu0 %v20, 32
  %v184 = vpop.permute.xlu0 %183
  %185 = vrot.lane.b32.xlu0 %v21, 32
  %v186 = vpop.permute.xlu0 %185
  %187 = vrot.lane.b32.xlu0 %v22, 32
  %v188 = vpop.permute.xlu0 %187
  %189 = vrot.lane.b32.xlu0 %v23, 32
  %v190 = vpop.permute.xlu0 %189
  %191 = vrot.lane.b32.xlu0 %v24, 32
  %v192 = vpop.permute.xlu0 %191
  %193 = vrot.lane.b32.xlu0 %v25, 32
  %v194 = vpop.permute.xlu0 %193
  %195 = vrot.lane.b32.xlu0 %v26, 32
  %v196 = vpop.permute.xlu0 %195
  %197 = vrot.lane.b32.xlu0 %v27, 32
  %v198 = vpop.permute.xlu0 %197
  %223 = vrot.lane.b32.xlu0 %v112, 64
  %v224 = vpop.permute.xlu0 %223
  %225 = vrot.lane.b32.xlu0 %v159, 64
  %v226 = vpop.permute.xlu0 %225
  %227 = vrot.lane.b32.xlu0 %v115, 64
  %v228 = vpop.permute.xlu0 %227
  %229 = vrot.lane.b32.xlu0 %v160, 64
  %v230 = vpop.permute.xlu0 %229
  %231 = vrot.lane.b32.xlu0 %v118, 64
  %v232 = vpop.permute.xlu0 %231
  %233 = vrot.lane.b32.xlu0 %v161, 64
  %v234 = vpop.permute.xlu0 %233
  %235 = vrot.lane.b32.xlu0 %v121, 64
  %v236 = vpop.permute.xlu0 %235
  %237 = vrot.lane.b32.xlu0 %v162, 64
  %v238 = vpop.permute.xlu0 %237
  %239 = vrot.lane.b32.xlu0 %v124, 64
  %v240 = vpop.permute.xlu0 %239
  %241 = vrot.lane.b32.xlu0 %v163, 64
  %v242 = vpop.permute.xlu0 %241
  %243 = vrot.lane.b32.xlu0 %v127, 64
  %v244 = vpop.permute.xlu0 %243
  %245 = vrot.lane.b32.xlu0 %v164, 64
  %v246 = vpop.permute.xlu0 %245
  %247 = vrot.lane.b32.xlu0 %v130, 64
  %v248 = vpop.permute.xlu0 %247
  %249 = vrot.lane.b32.xlu0 %v165, 64
  %v250 = vpop.permute.xlu0 %249
  %251 = vrot.lane.b32.xlu0 %v133, 64
  %v252 = vpop.permute.xlu0 %251
  %253 = vrot.lane.b32.xlu0 %v166, 64
  %v254 = vpop.permute.xlu0 %253
  %vm271 = vcmask 261120
  %v272 = vsel %vm271, %v101, %v168
  %v273 = vsel %vm271, %v63, %v170
  %v274 = vsel %vm271, %v102, %v172
  %v275 = vsel %vm271, %v66, %v174
  %v276 = vsel %vm271, %v103, %v176
  %v277 = vsel %vm271, %v69, %v178
  %v278 = vsel %vm271, %v104, %v180
  %v279 = vsel %vm271, %v72, %v182
  %v280 = vsel %vm271, %v105, %v184
  %v281 = vsel %vm271, %v75, %v186
  %v282 = vsel %vm271, %v106, %v188
  %v283 = vsel %vm271, %v78, %v190
  %v284 = vsel %vm271, %v107, %v192
  %v285 = vsel %vm271, %v81, %v194
  %v286 = vsel %vm271, %v108, %v196
  %v287 = vsel %vm271, %v84, %v198
  %vm288 = vcmask 523264
  %v289 = vsel %vm288, %v272, %v224
  %v290 = vsel %vm288, %v273, %v226
  %v291 = vsel %vm288, %v274, %v228
  %v292 = vsel %vm288, %v275, %v230
  %v293 = vsel %vm288, %v276, %v232
  %v294 = vsel %vm288, %v277, %v234
  %v295 = vsel %vm288, %v278, %v236
  %v296 = vsel %vm288, %v279, %v238
  %v297 = vsel %vm288, %v280, %v240
  %v298 = vsel %vm288, %v281, %v242
  %v299 = vsel %vm288, %v282, %v244
  %v300 = vsel %vm288, %v283, %v246
  %v301 = vsel %vm288, %v284, %v248
  %v302 = vsel %vm288, %v285, %v250
  %v303 = vsel %vm288, %v286, %v252
  %v304 = vsel %vm288, %v287, %v254
  %v321 = vcombine.high %v289, %v289
  %v322 = vcombine.high %v291, %v291
  %v323 = vcombine.high %v293, %v293
  %v324 = vcombine.high %v295, %v295
  %v325 = vcombine.high %v297, %v297
  %v326 = vcombine.high %v299, %v299
  %v327 = vcombine.high %v301, %v301
  %v328 = vcombine.high %v303, %v303
  %v329 = vcombine.low %v289, %v321
  %v330 = vcombine.low %v290, %v291
  %v331 = vcombine.low %v322, %v292
  %v332 = vcombine.low %v293, %v323
  %v333 = vcombine.low %v294, %v295
  %v334 = vcombine.low %v324, %v296
  %v335 = vcombine.low %v297, %v325
  %v336 = vcombine.low %v298, %v299
  %v337 = vcombine.low %v326, %v300
  %v338 = vcombine.low %v301, %v327
  %v339 = vcombine.low %v302, %v303
  %v340 = vcombine.low %v328, %v304
  %v353 = vpack.c.bf16 %v330, %v329
  %v354 = vpack.c.bf16 %v332, %v331
  %v355 = vpack.c.bf16 %v334, %v333
  %v356 = vpack.c.bf16 %v336, %v335
  %v357 = vpack.c.bf16 %v338, %v337
  %v358 = vpack.c.bf16 %v340, %v339
  %v359 = vld [vmem:[%s1] sm:$0xf]
  %v360 = vld [vmem:[%s1 + $0x4] sm:$0xf]
  %v361 = vld [vmem:[%s1 + $0x8] sm:$0xf]
  %v362 = vld [vmem:[%s1 + $0xc] sm:$0xf]
  %v363 = vld [vmem:[%s1 + $0x10] sm:$0xf]
  %v364 = vld [vmem:[%s1 + $0x14] sm:$0xf]
  %v365 = vld [vmem:[%s1 + $0x18] sm:$0xf]
  %v366 = vld [vmem:[%s1 + $0x1c] sm:$0xf]
  %v367 = vld [vmem:[%s1 + $0x20] sm:$0xf]
  %v368 = vld [vmem:[%s1 + $0x24] sm:$0xf]
  %v369 = vld [vmem:[%s1 + $0x28] sm:$0xf]
  %v370 = vld [vmem:[%s1 + $0x2c] sm:$0xf]
  %v383 = vunpack.c.l.b16 %v359
  %v384 = vunpack.c.l.b16 %v360
  %v385 = vunpack.c.l.b16 %v361
  %v386 = vunpack.c.l.b16 %v362
  %v387 = vunpack.c.l.b16 %v363
  %v388 = vunpack.c.l.b16 %v364
  %v389 = vunpack.c.l.b16 %v365
  %v390 = vunpack.c.l.b16 %v366
  %v391 = vunpack.c.l.b16 %v367
  %v392 = vunpack.c.l.b16 %v368
  %v393 = vunpack.c.l.b16 %v369
  %v394 = vunpack.c.l.b16 %v370
  %v395 = vpack.c.b16 %v384, %v383
  %v396 = vpack.c.b16 %v386, %v385
  %v397 = vpack.c.b16 %v388, %v387
  %v398 = vpack.c.b16 %v390, %v389
  %v399 = vpack.c.b16 %v392, %v391
  %v400 = vpack.c.b16 %v394, %v393
  %vm407 = vcmask 785408
  %v409 = vsel %vm407, %v353, 0
  %v412 = vsel %vm407, %v354, 0
  %v415 = vsel %vm407, %v355, 0
  %v418 = vsel %vm407, %v356, 0
  %v421 = vsel %vm407, %v357, 0
  %v424 = vsel %vm407, %v358, 0
  %426 = vmatprep.subr.bf16.mxu0 0
  %427 = vmatpush1.bf16.msra.mxu0 0
  %428 = vmatprep.subr.bf16.mxu0 0
  %429 = vmatpush1.bf16.msra.mxu0 0
  %430 = vmatprep.subr.bf16.mxu0 0
  %431 = vmatpush1.bf16.msra.mxu0 %v400
  %432 = vmatprep.subr.bf16.mxu0 0
  %433 = vmatpush1.bf16.msra.mxu0 %v399
  %434 = vmatprep.subr.bf16.mxu0 0
  %435 = vmatpush1.bf16.msra.mxu0 %v398
  %436 = vmatprep.subr.bf16.mxu0 0
  %437 = vmatpush1.bf16.msra.mxu0 %v397
  %438 = vmatprep.subr.bf16.mxu0 0
  %439 = vmatpush1.bf16.msra.mxu0 %v396
  %440 = vmatprep.subr.bf16.mxu0 0
  %441 = vmatpush1.bf16.msra.mxu0 %v395
  %442 = vmatprep.subr.bf16.mxu0 0
  %443 = vmatpush2.bf16.msra.mxu0 0
  %444 = vmatprep.subr.bf16.mxu0 0
  %445 = vmatpush2.bf16.msra.mxu0 0
  %446 = vmatprep.subr.bf16.mxu0 0
  %447 = vmatpush2.bf16.msra.mxu0 0
  %448 = vmatprep.subr.bf16.mxu0 0
  %449 = vmatpush2.bf16.msra.mxu0 0
  %450 = vmatprep.subr.bf16.mxu0 0
  %451 = vmatpush2.bf16.msra.mxu0 0
  %452 = vmatprep.subr.bf16.mxu0 0
  %453 = vmatpush2.bf16.msra.mxu0 0
  %454 = vmatprep.subr.bf16.mxu0 0
  %455 = vmatpush2.bf16.msra.mxu0 0
  %456 = vmatprep.subr.bf16.mxu0 0
  %457 = vmatpush2.bf16.msra.mxu0 0
  %458 = vmatprep.mubr.bf16.mxu0 0
  %459 = vmatmul.mubr.bf16.gmra.mxu0 %v409
  %v460 = vpop.f32.mrf.mxu0
  %v461 = vadd.f32 0.0, %v460
  %v462 = vpop.f32.mrf.mxu0
  %v463 = vpop.f32.mrf.mxu0
  %v464 = vadd.f32 0.0, %v463
  %v465 = vpop.f32.mrf.mxu0
  %466 = vmatprep.mubr.bf16.mxu0 0
  %467 = vmatmul.mubr.bf16.gmra.mxu0 %v412
  %v468 = vpop.f32.mrf.mxu0
  %v469 = vadd.f32 0.0, %v468
  %v470 = vpop.f32.mrf.mxu0
  %v471 = vpop.f32.mrf.mxu0
  %v472 = vadd.f32 0.0, %v471
  %v473 = vpop.f32.mrf.mxu0
  %474 = vmatprep.mubr.bf16.mxu0 0
  %475 = vmatmul.mubr.bf16.gmra.mxu0 %v415
  %v476 = vpop.f32.mrf.mxu0
  %v477 = vadd.f32 0.0, %v476
  %v478 = vpop.f32.mrf.mxu0
  %v479 = vpop.f32.mrf.mxu0
  %v480 = vadd.f32 0.0, %v479
  %v481 = vpop.f32.mrf.mxu0
  %482 = vmatprep.mubr.bf16.mxu0 0
  %483 = vmatmul.mubr.bf16.gmra.mxu0 %v418
  %v484 = vpop.f32.mrf.mxu0
  %v485 = vadd.f32 0.0, %v484
  %v486 = vpop.f32.mrf.mxu0
  %v487 = vpop.f32.mrf.mxu0
  %v488 = vadd.f32 0.0, %v487
  %v489 = vpop.f32.mrf.mxu0
  %490 = vmatprep.mubr.bf16.mxu0 0
  %491 = vmatmul.mubr.bf16.gmra.mxu0 %v421
  %v492 = vpop.f32.mrf.mxu0
  %v493 = vadd.f32 0.0, %v492
  %v494 = vpop.f32.mrf.mxu0
  %v495 = vpop.f32.mrf.mxu0
  %v496 = vadd.f32 0.0, %v495
  %v497 = vpop.f32.mrf.mxu0
  %498 = vmatprep.mubr.bf16.mxu0 0
  %499 = vmatmul.mubr.bf16.gmra.mxu0 %v424
  %v500 = vpop.f32.mrf.mxu0
  %v501 = vadd.f32 0.0, %v500
  %v502 = vpop.f32.mrf.mxu0
  %v503 = vpop.f32.mrf.mxu0
  %v504 = vadd.f32 0.0, %v503
  %v505 = vpop.f32.mrf.mxu0
  %506 = vdwg.mxu0
  %v519 = vcombine.high %v461, %v461
  %v520 = vcombine.high %v464, %v464
  %v521 = vcombine.high %v469, %v469
  %v522 = vcombine.high %v472, %v472
  %v523 = vcombine.high %v477, %v477
  %v524 = vcombine.high %v480, %v480
  %v525 = vcombine.high %v485, %v485
  %v526 = vcombine.high %v488, %v488
  %v527 = vcombine.high %v493, %v493
  %v528 = vcombine.high %v496, %v496
  %v529 = vcombine.high %v501, %v501
  %v530 = vcombine.high %v504, %v504
  %v535 = vcombine.low %v461, %v519
  %v536 = vcombine.low %v520, %v469
  %v537 = vcombine.low %v472, %v522
  %v538 = vcombine.low %v523, %v480
  %v539 = vcombine.low %v485, %v525
  %v540 = vcombine.low %v526, %v493
  %v541 = vcombine.low %v496, %v528
  %v542 = vcombine.low %v529, %v504
  %vm551 = vcmask 15360
  %552 = vst.msk [vmem:[%s2] sm:$0xff] %vm551, %v535
  %vm553 = vcmask 11264
  %554 = vst.msk [vmem:[%s2 + $0x8] sm:$0xf] %vm553, %v464
  %555 = vst.msk [vmem:[%s2 + $0x10] sm:$0xff] %vm551, %v536
  %556 = vst.msk [vmem:[%s2 + $0x18] sm:$0xf] %vm553, %v521
  %557 = vst.msk [vmem:[%s2 + $0x20] sm:$0xff] %vm551, %v537
  %558 = vst.msk [vmem:[%s2 + $0x28] sm:$0xf] %vm553, %v477
  %559 = vst.msk [vmem:[%s2 + $0x30] sm:$0xff] %vm551, %v538
  %560 = vst.msk [vmem:[%s2 + $0x38] sm:$0xf] %vm553, %v524
  %561 = vst.msk [vmem:[%s2 + $0x40] sm:$0xff] %vm551, %v539
  %562 = vst.msk [vmem:[%s2 + $0x48] sm:$0xf] %vm553, %v488
  %563 = vst.msk [vmem:[%s2 + $0x50] sm:$0xff] %vm551, %v540
  %564 = vst.msk [vmem:[%s2 + $0x58] sm:$0xf] %vm553, %v527
  %565 = vst.msk [vmem:[%s2 + $0x60] sm:$0xff] %vm551, %v541
  %566 = vst.msk [vmem:[%s2 + $0x68] sm:$0xf] %vm553, %v501
  %567 = vst.msk [vmem:[%s2 + $0x70] sm:$0xff] %vm551, %v542
  %568 = vst.msk [vmem:[%s2 + $0x78] sm:$0xf] %vm553, %v530
  // Predicated region
  $region10: #{corrformer_forward.83} parent=0 // pred_check
    _
  $region11: #{corrformer_forward.83} parent=0 // pred_check_branch
    %570 = sbr.rel (0) target = $region13
  $region12: #{corrformer_forward.83} parent=0 // pred_region
    _
  $region13: #{corrformer_forward.83} parent=0 // pred_fallthru
    _
  // Predicated region
  $region14: #{corrformer_forward.83} parent=0 // pred_check
    _
  $region15: #{corrformer_forward.83} parent=0 // pred_check_branch
    %572 = sbr.rel (0) target = $region17
  $region16: #{corrformer_forward.83} parent=0 // pred_region
    _
  $region17: #{corrformer_forward.83} parent=0 // pred_fallthru
    _

</llo_original>
